<compile_context>
chip_gen: v7x
topology: tpu7x:2x2x1
jax: 0.10.0
libtpu: 0.0.40
codegen_flags: <defaults>
</compile_context>

<pallas_src>
import math
import jax
import jax.numpy as jnp
from jax import lax
from jax.experimental import pallas as pl
from jax.experimental.pallas import tpu as pltpu


# ----------------------------------------------------------------------------
# helpers
# ----------------------------------------------------------------------------
def _rup(x, m):
    return ((x + m - 1) // m) * m


def _pick_tile(padded, cands=(512, 384, 256, 128)):
    for c in cands:
        if padded % c == 0:
            return c
    return 128


# ----------------------------------------------------------------------------
# one-time probe: strided lane roll (per-row shift = shift + row) available & correct?
# ----------------------------------------------------------------------------
_ROLL_PROBE = None


def _strided_roll_supported():
    global _ROLL_PROBE
    if _ROLL_PROBE is not None:
        return _ROLL_PROBE
    try:
        def kern(x_ref, o_ref):
            shift = pl.program_id(0) + 127   # dynamic amount; wraps for rows >= 1
            o_ref[...] = pltpu.roll(x_ref[...], shift, axis=1, stride=1, stride_axis=0)

        x = jnp.tile(jnp.arange(128, dtype=jnp.float32)[None, :], (8, 1))
        out = pl.pallas_call(
            kern,
            out_shape=jax.ShapeDtypeStruct((8, 128), jnp.float32),
            grid=(1,),
            in_specs=[pl.BlockSpec((8, 128), lambda i: (0, 0))],
            out_specs=pl.BlockSpec((8, 128), lambda i: (0, 0)),
        )(x)
        expect = jnp.stack([jnp.roll(x[i], 127 + i) for i in range(8)])
        _ROLL_PROBE = bool(jnp.allclose(out, expect))
    except Exception:
        _ROLL_PROBE = False
    return _ROLL_PROBE


# ----------------------------------------------------------------------------
# Pallas kernels
# ----------------------------------------------------------------------------
def _make_matmul_kernel(act, has_bias):
    def kernel(*refs):
        if has_bias:
            a_ref, b_ref, bias_ref, o_ref, acc_ref = refs
        else:
            a_ref, b_ref, o_ref, acc_ref = refs

        @pl.when(pl.program_id(2) == 0)
        def _():
            acc_ref[...] = jnp.zeros_like(acc_ref)

        acc_ref[...] += jnp.dot(a_ref[...], b_ref[...],
                                preferred_element_type=jnp.float32)

        @pl.when(pl.program_id(2) == pl.num_programs(2) - 1)
        def _():
            y = acc_ref[...]
            if has_bias:
                y = y + bias_ref[...]
            if act == "relu":
                y = jnp.maximum(y, 0.0)
            elif act == "tanh":
                y = jnp.tanh(y)
            o_ref[...] = y.astype(o_ref.dtype)

    return kernel


def pallas_matmul(a, b, bias=None, act=None, out_dtype=jnp.bfloat16):
    """a (M,K) @ b (K,N) [+bias][+act] -> (M,N) out_dtype.
    bf16 MXU inputs, f32 VMEM accumulation, fused epilogue, divisor-based tiles."""
    M, K = a.shape
    K2, N = b.shape
    assert K == K2
    Mp8 = _rup(M, 8)
    Kp = _rup(K, 128)
    Np = _rup(N, 128)
    tm = min(256, Mp8)
    tn = min(_pick_tile(Np), Np)
    tk = min(_pick_tile(Kp), Kp)
    Mp = _rup(M, tm)

    ap = a.astype(jnp.bfloat16)
    bp = b.astype(jnp.bfloat16)
    if (Mp, Kp) != (M, K):
        ap = jnp.pad(ap, ((0, Mp - M), (0, Kp - K)))
    if (Kp, Np) != (K, N):
        bp = jnp.pad(bp, ((0, Kp - K), (0, Np - N)))

    has_bias = bias is not None
    inputs = [ap, bp]
    in_specs = [
        pl.BlockSpec((tm, tk), lambda i, j, k: (i, k)),
        pl.BlockSpec((tk, tn), lambda i, j, k: (k, j)),
    ]
    if has_bias:
        bz = bias.astype(jnp.float32).reshape(1, N)
        if Np != N:
            bz = jnp.pad(bz, ((0, 0), (0, Np - N)))
        inputs.append(bz)
        in_specs.append(pl.BlockSpec((1, tn), lambda i, j, k: (0, j)))

    out_bytes = jnp.dtype(out_dtype).itemsize
    est = (2 * (tm * tk + tk * tn) * 2 + 2 * tn * 4
           + 2 * tm * tn * out_bytes + tm * tn * 4 + (4 << 20))
    vmem = int(min(max(est, 32 << 20), 100 << 20))

    out = pl.pallas_call(
        _make_matmul_kernel(act, has_bias),
        out_shape=jax.ShapeDtypeStruct((Mp, Np), out_dtype),
        grid_spec=pltpu.PrefetchScalarGridSpec(
            num_scalar_prefetch=0,
            grid=(Mp // tm, Np // tn, Kp // tk),
            in_specs=in_specs,
            out_specs=pl.BlockSpec((tm, tn), lambda i, j, k: (i, j)),
            scratch_shapes=[pltpu.VMEM((tm, tn), jnp.float32)],
        ),
        compiler_params=pltpu.CompilerParams(
            dimension_semantics=("parallel", "parallel", "arbitrary"),
            vmem_limit_bytes=vmem),
    )(*inputs)
    if (Mp, Np) != (M, N):
        out = out[:M, :N]
    return out


def pallas_rel_attention(q, k, v, pe_proj, bias_u, bias_v, mask_b1t, scale, H, bd=None):
    """Fused relative-position attention.
    q, k, v: (B, T, D) bf16 lane-dense.  pe_proj: (R_pad, D) bf16, rows >= 2T-1 zero.
    bias_u/bias_v: (1, D) f32.  mask_b1t: (B, 1, T) f32, 1 = valid key.
    If bd is None: q_v@pe^T + rel_shift is computed in-kernel (strided pltpu.roll);
    otherwise bd is a precomputed (B, H, T, T) bf16 tensor (fallback).
    Output (B, T, D) bf16; scores never leave VMEM."""
    B, T, D = q.shape
    dh = D // H
    R_pad = pe_proj.shape[0]
    fused = bd is None

    tq = min(256, _rup(T, 8))
    T_pad = _rup(T, tq)
    nq = T_pad // tq
    if T_pad != T:
        q = jnp.pad(q, ((0, 0), (0, T_pad - T), (0, 0)))
        if not fused:
            bd = jnp.pad(bd, ((0, 0), (0, 0), (0, T_pad - T), (0, 0)))

    def kern(*refs):
        if fused:
            q_ref, k_ref, v_ref, pe_ref, bu_ref, bv_ref, m_ref, o_ref = refs
        else:
            q_ref, k_ref, v_ref, bd_ref, bu_ref, bv_ref, m_ref, o_ref = refs
        q0 = pl.program_id(1) * tq
        qf = q_ref[0].astype(jnp.float32)                       # (tq, D)
        qu = (qf + bu_ref[...]).astype(jnp.bfloat16)
        if fused:
            qv_ = (qf + bv_ref[...]).astype(jnp.bfloat16)
        kk = k_ref[0]                                           # (T, D) bf16
        vv = v_ref[0]
        mrow = m_ref[0]                                         # (1, T) f32
        neg = (mrow - 1.0) * 1e30
        outs = []
        for h in range(H):
            sl = slice(h * dh, (h + 1) * dh)
            s = lax.dot_general(qu[:, sl], kk[:, sl],
                                (((1,), (1,)), ((), ())),
                                preferred_element_type=jnp.float32)          # (tq, T)
            if fused:
                sb_full = lax.dot_general(qv_[:, sl], pe_ref[:, sl],
                                          (((1,), (1,)), ((), ())),
                                          preferred_element_type=jnp.float32)  # (tq, R_pad)
                # rel_shift: row (q0+ii) needs source column j + (T-1) - (q0+ii)
                shift = lax.rem(q0 + (R_pad - (T - 1)), R_pad)
                sb = pltpu.roll(sb_full, shift, axis=1,
                                stride=1, stride_axis=0)[:, :T]
            else:
                sb = bd_ref[0, h].astype(jnp.float32)
            s = (s + sb) * scale + neg
            mx = jnp.max(s, axis=-1, keepdims=True)
            e = jnp.exp(s - mx) * mrow                          # masked keys -> exactly 0
            denom = jnp.maximum(jnp.sum(e, axis=-1, keepdims=True), 1e-30)
            p = e * pl.reciprocal(denom, approx=True)
            outs.append(jnp.dot(p.astype(jnp.bfloat16), vv[:, sl],
                                preferred_element_type=jnp.float32))
        o_ref[0] = jnp.concatenate(outs, axis=-1).astype(o_ref.dtype)

    in_arrays = [q, k, v]
    in_specs = [
        pl.BlockSpec((1, tq, D), lambda b, qi: (b, qi, 0)),
        pl.BlockSpec((1, T, D), lambda b, qi: (b, 0, 0)),
        pl.BlockSpec((1, T, D), lambda b, qi: (b, 0, 0)),
    ]
    if fused:
        in_arrays.append(pe_proj)
        in_specs.append(pl.BlockSpec((R_pad, D), lambda b, qi: (0, 0)))
    else:
        in_arrays.append(bd.astype(jnp.bfloat16))
        in_specs.append(pl.BlockSpec((1, H, tq, T), lambda b, qi: (b, 0, qi, 0)))
    in_arrays += [bias_u, bias_v, mask_b1t]
    in_specs += [
        pl.BlockSpec((1, D), lambda b, qi: (0, 0)),
        pl.BlockSpec((1, D), lambda b, qi: (0, 0)),
        pl.BlockSpec((1, 1, T), lambda b, qi: (b, 0, 0)),
    ]

    # explicit VMEM budget: double-buffered blocks + per-head score/exp temporaries
    blk = 2 * (tq * D * 2 + 2 * T * D * 2
               + (R_pad * D * 2 if fused else H * tq * T * 2)
               + tq * D * 2 + 2 * D * 4 + T * 4)
    scratch = 4 * tq * max(T, R_pad) * 4
    vmem = int(min(max(blk + scratch + (8 << 20), 32 << 20), 100 << 20))

    out = pl.pallas_call(
        kern,
        out_shape=jax.ShapeDtypeStruct((B, T_pad, D), jnp.bfloat16),
        grid=(B, nq),
        in_specs=in_specs,
        out_specs=pl.BlockSpec((1, tq, D), lambda b, qi: (b, qi, 0)),
        compiler_params=pltpu.CompilerParams(
            dimension_semantics=("parallel", "parallel"),
            vmem_limit_bytes=vmem),
    )(*in_arrays)
    return out[:, :T] if T_pad != T else out


def _make_ln_kernel():
    def kern(x_ref, g_ref, b_ref, o_ref):
        x = x_ref[...].astype(jnp.float32)
        mu = jnp.mean(x, axis=-1, keepdims=True)
        xc = x - mu
        var = jnp.mean(xc * xc, axis=-1, keepdims=True)
        y = xc * lax.rsqrt(var + 1e-5) * g_ref[...] + b_ref[...]
        o_ref[...] = y.astype(o_ref.dtype)
    return kern


def pallas_layer_norm(x, g, b, out_dtype=jnp.bfloat16):
    shp = x.shape
    D = shp[-1]
    x2 = x.reshape(-1, D)
    N = x2.shape[0]
    BR = min(1024, _rup(N, 8))
    Np = _rup(N, BR)
    if Np != N:
        x2 = jnp.pad(x2, ((0, Np - N), (0, 0)))
    out = pl.pallas_call(
        _make_ln_kernel(),
        out_shape=jax.ShapeDtypeStruct((Np, D), out_dtype),
        grid=(Np // BR,),
        in_specs=[
            pl.BlockSpec((BR, D), lambda i: (i, 0)),
            pl.BlockSpec((1, D), lambda i: (0, 0)),
            pl.BlockSpec((1, D), lambda i: (0, 0)),
        ],
        out_specs=pl.BlockSpec((BR, D), lambda i: (i, 0)),
        compiler_params=pltpu.CompilerParams(dimension_semantics=("parallel",)),
    )(x2, g.reshape(1, D).astype(jnp.float32), b.reshape(1, D).astype(jnp.float32))
    return out[:N].reshape(shp)


def pallas_depthwise_conv(x, w, bias):
    """Depthwise 'same' conv with fused bias: x (B,T,C) (any dtype), w (K,C), bias (C,).
    Input DMA'd as bf16, f32 accumulation; output (B,T,C) f32."""
    B, T, C = x.shape
    K = w.shape[0]
    padl = (K - 1) // 2
    xp = jnp.pad(x.astype(jnp.bfloat16), ((0, 0), (padl, K - 1 - padl), (0, 0)))

    def kern(x_ref, w_ref, b_ref, o_ref):
        # TODO(synk): per-tap static slices start at non-8-aligned sublanes; an XLU roll per
        # tap would avoid possible relayout copies (left as a follow-up).
        acc = jnp.zeros(o_ref.shape, jnp.float32) + b_ref[...][None]
        for k in range(K):
            acc = acc + (x_ref[0, k:k + T, :].astype(jnp.float32)[None]
                         * w_ref[k:k + 1, :][None])
        o_ref[...] = acc

    return pl.pallas_call(
        kern,
        out_shape=jax.ShapeDtypeStruct((B, T, C), jnp.float32),
        grid=(B,),
        in_specs=[
            pl.BlockSpec((1, T + K - 1, C), lambda b: (b, 0, 0)),
            pl.BlockSpec((K, C), lambda b: (0, 0)),
            pl.BlockSpec((1, C), lambda b: (0, 0)),
        ],
        out_specs=pl.BlockSpec((1, T, C), lambda b: (b, 0, 0)),
        compiler_params=pltpu.CompilerParams(dimension_semantics=("parallel",)),
    )(xp, w.astype(jnp.float32), bias.reshape(1, C).astype(jnp.float32))


# ----------------------------------------------------------------------------
# Thin wrappers (glue)
# ----------------------------------------------------------------------------
def linear(x, W, b=None, act=None, out_dtype=jnp.bfloat16):
    shp = x.shape
    y = pallas_matmul(x.reshape(-1, shp[-1]), W, bias=b, act=act, out_dtype=out_dtype)
    return y.reshape(*shp[:-1], W.shape[1])


def conv1d(x, W, b, ksize, act=None, out_dtype=jnp.bfloat16):
    """x (B,T,Cin), W (ksize*Cin, Cout) -> (B,T,Cout), 'same' padding.
    TODO(synk): im2col amplifies input reads by ksize; a tap-accumulating reduction axis in
    the matmul kernel would read x once (left as a follow-up)."""
    B, T, Cin = x.shape
    padl = (ksize - 1) // 2
    xp = jnp.pad(x.astype(jnp.bfloat16), ((0, 0), (padl, ksize - 1 - padl), (0, 0)))
    patches = jnp.concatenate([xp[:, k:k + T, :] for k in range(ksize)], axis=-1)
    y = pallas_matmul(patches.reshape(B * T, ksize * Cin), W, bias=b, act=act,
                      out_dtype=out_dtype)
    return y.reshape(B, T, -1)


def batch_norm_train(x, g, b, eps=1e-5):
    # TODO(synk): running statistics are not tracked (training-mode batch stats only);
    # the global reduction stays in XLA.
    x = x.astype(jnp.float32)
    mu = jnp.mean(x, axis=(0, 1), keepdims=True)
    var = jnp.mean((x - mu) ** 2, axis=(0, 1), keepdims=True)
    return (x - mu) * lax.rsqrt(var + eps) * g + b


# ----------------------------------------------------------------------------
# Conformer blocks
# ----------------------------------------------------------------------------
def rel_positional_encoding(T, d):
    pos = jnp.arange(T - 1, -T, -1, dtype=jnp.float32)            # (2T-1,)
    div = jnp.exp(jnp.arange(0, d, 2, dtype=jnp.float32) * (-(math.log(10000.0) / d)))
    ang = pos[:, None] * div[None, :]
    pe = jnp.zeros((2 * T - 1, d), jnp.float32)
    pe = pe.at[:, 0::2].set(jnp.sin(ang))
    pe = pe.at[:, 1::2].set(jnp.cos(ang))
    return pe                                                      # (2T-1, d)


def rel_shift(x):
    b, h, t, _ = x.shape                                           # last dim = 2t-1
    zero_pad = jnp.zeros((b, h, t, 1), x.dtype)
    xp = jnp.concatenate([zero_pad, x], axis=-1)                   # (b,h,t,2t)
    xp = xp.reshape(b, h, 2 * t, t)
    x = xp[:, :, 1:].reshape(b, h, t, 2 * t - 1)
    return x[:, :, :, :t]


def rel_mhsa(x, pe_raw, mask_f, p):
    B, T, D = x.shape
    H = p["pos_bias_u"].shape[0]                                   # static from weight shape
    dh = D // H
    W, bias = p["qkv"]["W"], p["qkv"]["b"]
    # separate lane-dense bf16 projections (no head reshapes / transposes)
    q = linear(x, W[:, :D], bias[:D])
    k = linear(x, W[:, D:2 * D], bias[D:2 * D])
    v = linear(x, W[:, 2 * D:], bias[2 * D:])

    R = 2 * T - 1
    R_pad = max(_rup(R, 128), 128)
    pe = pallas_matmul(pe_raw, p["pos_W"])                          # (2T-1, D) bf16, no bias
    pe = jnp.pad(pe, ((0, R_pad - R), (0, 0)))

    bu = p["pos_bias_u"].reshape(1, D).astype(jnp.float32)
    bv = p["pos_bias_v"].reshape(1, D).astype(jnp.float32)
    scale = 1.0 / math.sqrt(dh)

    if _strided_roll_supported():
        bd = None                                                   # fully fused path
    else:
        # fallback: relative term + rel_shift in plain JAX (bf16), fed per q-tile
        qv = (q.astype(jnp.float32) + bv).reshape(B, T, H, dh)
        peh = pe[:R].astype(jnp.float32).reshape(R, H, dh)
        bd = rel_shift(jnp.einsum('bthd,rhd->bhtr', qv, peh)).astype(jnp.bfloat16)

    att = pallas_rel_attention(q, k, v, pe, bu, bv, mask_f, scale, H, bd=bd)  # (B,T,D) bf16
    return linear(att, p["out"]["W"], p["out"]["b"])


def feed_forward(x, p):
    # positionwise_layer_type='conv1d' with kernel 1 == two Linears with ReLU (fused epilogue)
    h = linear(x, p["w1"]["W"], p["w1"]["b"], act="relu")
    return linear(h, p["w2"]["W"], p["w2"]["b"])


def conv_module(x, p):
    y = linear(x, p["pw1"]["W"], p["pw1"]["b"])                    # pointwise conv (k=1) -> 2C
    a, g = jnp.split(y, 2, axis=-1)
    y = a * jax.nn.sigmoid(g)                                      # GLU (bf16)
    y = pallas_depthwise_conv(y, p["dw_W"], p["dw_b"])             # depthwise conv + bias (f32)
    y = batch_norm_train(y, p["bn"]["g"], p["bn"]["b"])
    y = y * jax.nn.sigmoid(y)                                      # Swish
    return linear(y, p["pw2"]["W"], p["pw2"]["b"])                 # pointwise conv


def conformer_block(x, pe_raw, mask_f, p):
    x = x + 0.5 * feed_forward(
        pallas_layer_norm(x, p["norm_ff_macaron"]["g"], p["norm_ff_macaron"]["b"]),
        p["ff_macaron"])
    x = x + rel_mhsa(pallas_layer_norm(x, p["norm_mha"]["g"], p["norm_mha"]["b"]),
                     pe_raw, mask_f, p["mha"])
    x = x + conv_module(pallas_layer_norm(x, p["norm_conv"]["g"], p["norm_conv"]["b"]),
                        p["conv"])
    x = x + 0.5 * feed_forward(
        pallas_layer_norm(x, p["norm_ff"]["g"], p["norm_ff"]["b"]), p["ff"])
    return pallas_layer_norm(x, p["norm_final"]["g"], p["norm_final"]["b"],
                             out_dtype=jnp.float32)


def conformer(x, mask_b1t, p, utt_emb=None, lang_ids=None):
    if "embed" in p:
        h = linear(x, p["embed"]["l1"]["W"], p["embed"]["l1"]["b"], act="tanh")
        h = linear(h, p["embed"]["l2"]["W"], p["embed"]["l2"]["b"], out_dtype=jnp.float32)
    else:
        h = x
    if lang_ids is not None and "lang_emb" in p:
        h = h + p["lang_emb"][lang_ids][:, None, :]
    B, T, D = h.shape
    h = h * math.sqrt(D)                                           # scaled rel positional enc
    pe_raw = rel_positional_encoding(T, D)
    mask_f = mask_b1t.astype(jnp.float32)                          # (B,1,T), 1 = valid
    for blk in p["blocks"]:
        h = conformer_block(h, pe_raw, mask_f, blk)
    h = pallas_layer_norm(h, p["after_norm"]["g"], p["after_norm"]["b"],
                          out_dtype=jnp.float32)
    if utt_emb is not None and "utt_proj" in p:
        n = jnp.maximum(jnp.linalg.norm(utt_emb, axis=-1, keepdims=True), 1e-12)
        ue = utt_emb / n
        hs = jnp.concatenate(
            [h, jnp.broadcast_to(ue[:, None, :], (B, T, ue.shape[-1]))], axis=-1)
        h = linear(hs, p["utt_proj"]["W"], p["utt_proj"]["b"], out_dtype=jnp.float32)
    return h


# ----------------------------------------------------------------------------
# Variance adaptors, length regulator, postnet
# ----------------------------------------------------------------------------
def variance_predictor(x, pad_mask_bt1, p):
    # TODO(synk): dropout treated as identity (deterministic forward).
    h = x
    for layer in p["convs"]:
        ks = layer["conv"]["W"].shape[0] // h.shape[-1]            # static kernel size
        h = conv1d(h, layer["conv"]["W"], layer["conv"]["b"], ks, act="relu")
        h = pallas_layer_norm(h, layer["ln"]["g"], layer["ln"]["b"])
    out = linear(h, p["linear"]["W"], p["linear"]["b"], out_dtype=jnp.float32)   # (B,T,1)
    return jnp.where(pad_mask_bt1, 0.0, out)


def duration_predictor(x, pad_mask_bt, p):
    h = x
    for layer in p["convs"]:
        ks = layer["conv"]["W"].shape[0] // h.shape[-1]
        h = conv1d(h, layer["conv"]["W"], layer["conv"]["b"], ks, act="relu")
        h = pallas_layer_norm(h, layer["ln"]["g"], layer["ln"]["b"])
    out = linear(h, p["linear"]["W"], p["linear"]["b"], out_dtype=jnp.float32)[..., 0]
    return jnp.where(pad_mask_bt, 0.0, out)                        # (B,T) log-domain durations


def length_regulator(enc, durs, Lmax):
    # TODO(synk): data-dependent repeat implemented as a gather in plain JAX (no Pallas equiv).
    T = enc.shape[1]

    def one(e, d):
        csum = jnp.cumsum(d)
        pos = jnp.arange(Lmax)
        idx = jnp.searchsorted(csum, pos, side="right")
        valid = pos < csum[-1]
        idx = jnp.clip(idx, 0, T - 1)
        return e[idx] * valid[:, None].astype(e.dtype)

    return jax.vmap(one)(enc, durs)


def postnet(x, p):
    h = x
    n = len(p["layers"])
    for i, layer in enumerate(p["layers"]):
        ks = layer["conv"]["W"].shape[0] // h.shape[-1]
        h = conv1d(h, layer["conv"]["W"], None, ks, out_dtype=jnp.float32)
        h = batch_norm_train(h, layer["bn"]["g"], layer["bn"]["b"])
        if i < n - 1:
            h = jnp.tanh(h)
    return h


# ----------------------------------------------------------------------------
# Masks & loss (FastSpeech2Loss with use_weighted_masking=True)
# ----------------------------------------------------------------------------
def make_non_pad_mask(lens, T):
    return jnp.arange(T)[None, :] < lens[:, None]


def fastspeech2_loss(after_outs, before_outs, d_outs, p_outs, e_outs,
                     ys, ds, ps, es, ilens, olens):
    Lmax = ys.shape[1]
    Tmax = ds.shape[1]
    l1 = jnp.abs(before_outs - ys) + jnp.abs(after_outs - ys)
    dur_l = (d_outs - jnp.log(ds.astype(jnp.float32) + 1.0)) ** 2
    pitch_l = (p_outs - ps) ** 2
    energy_l = (e_outs - es) ** 2

    out_masks = make_non_pad_mask(olens, Lmax)[..., None]
    out_w = out_masks.astype(jnp.float32) / jnp.sum(out_masks, axis=1, keepdims=True)
    out_w = out_w / (ys.shape[0] * ys.shape[2])
    dur_masks = make_non_pad_mask(ilens, Tmax)
    dur_w = dur_masks.astype(jnp.float32) / jnp.sum(dur_masks, axis=1, keepdims=True)
    dur_w = dur_w / ds.shape[0]

    l1_loss = jnp.sum(l1 * out_w * out_masks)
    duration_loss = jnp.sum(dur_l * dur_w * dur_masks)
    pitch_loss = jnp.sum(pitch_l * dur_w[..., None] * dur_masks[..., None])
    energy_loss = jnp.sum(energy_l * dur_w[..., None] * dur_masks[..., None])
    return l1_loss, duration_loss, pitch_loss, energy_loss


# ----------------------------------------------------------------------------
# FastSpeech2 forward
# ----------------------------------------------------------------------------
def fastspeech2_forward(params, text_tensors, text_lengths, gold_speech, speech_lengths,
                        gold_durations, gold_pitch, gold_energy, utterance_embedding,
                        lang_ids):
    B, Tmax, _ = text_tensors.shape
    Lmax = gold_speech.shape[1]
    odim = gold_speech.shape[2]

    text_masks = make_non_pad_mask(text_lengths, Tmax)[:, None, :]           # (B,1,T)
    encoded = conformer(text_tensors, text_masks, params["encoder"],
                        utt_emb=utterance_embedding, lang_ids=lang_ids)

    d_masks = ~make_non_pad_mask(text_lengths, Tmax)                          # (B,T) True at pad
    # stop_gradient_from_pitch_predictor=True, stop_gradient_from_energy_predictor=False
    pitch_pred = variance_predictor(lax.stop_gradient(encoded), d_masks[..., None],
                                    params["pitch_predictor"])
    energy_pred = variance_predictor(encoded, d_masks[..., None], params["energy_predictor"])
    d_outs = duration_predictor(encoded, d_masks, params["duration_predictor"])

    # Conv1d(1, adim, k=1) == broadcast outer product (VPU, no padded-K matmul)
    p_embs = gold_pitch * params["pitch_embed"]["W"].reshape(1, 1, -1) \
        + params["pitch_embed"]["b"]
    e_embs = gold_energy * params["energy_embed"]["W"].reshape(1, 1, -1) \
        + params["energy_embed"]["b"]
    encoded = encoded + e_embs + p_embs
    encoded = length_regulator(encoded, gold_durations, Lmax)

    h_masks = make_non_pad_mask(speech_lengths, Lmax)[:, None, :]
    zs = conformer(encoded, h_masks, params["decoder"])

    before_outs = linear(zs, params["feat_out"]["W"], params["feat_out"]["b"],
                         out_dtype=jnp.float32).reshape(B, -1, odim)
    after_outs = before_outs + postnet(before_outs, params["postnet"])

    l1, dur, pit, ene = fastspeech2_loss(
        after_outs, before_outs, d_outs, pitch_pred, energy_pred,
        gold_speech, gold_durations, gold_pitch, gold_energy, text_lengths, speech_lengths)
    return l1 + dur + pit + ene


# ----------------------------------------------------------------------------
# Deterministic parameter init (synthetic, xavier-uniform style).
# The params pytree contains ONLY arrays (and None); static hyper-params
# (heads, kernel sizes, tanh flags) are derived from weight shapes / layer index.
# ----------------------------------------------------------------------------
class RNG:
    def __init__(self, key):
        self.key = key

    def next(self):
        self.key, sub = jax.random.split(self.key)
        return sub


def init_linear(rng, din, dout, bias=True):
    s = math.sqrt(6.0 / (din + dout))
    W = jax.random.uniform(rng.next(), (din, dout), jnp.float32, -s, s)
    return {"W": W, "b": jnp.zeros((dout,), jnp.float32) if bias else None}


def init_conv(rng, cin, cout, k, bias=True):
    s = math.sqrt(6.0 / (cin * k + cout))
    W = jax.random.uniform(rng.next(), (k * cin, cout), jnp.float32, -s, s)
    return {"W": W, "b": jnp.zeros((cout,), jnp.float32) if bias else None}


def init_ln(d):
    return {"g": jnp.ones((d,), jnp.float32), "b": jnp.zeros((d,), jnp.float32)}


def init_conformer_block(rng, d, units, H, cnn_k):
    s = math.sqrt(3.0 / d)
    return {
        "norm_ff_macaron": init_ln(d),
        "ff_macaron": {"w1": init_linear(rng, d, units), "w2": init_linear(rng, units, d)},
        "norm_mha": init_ln(d),
        "mha": {
            "qkv": init_linear(rng, d, 3 * d),               # fused W_q|W_k|W_v
            "pos_W": jax.random.uniform(rng.next(), (d, d), jnp.float32, -s, s),
            "out": init_linear(rng, d, d),
            "pos_bias_u": 0.02 * jax.random.normal(rng.next(), (H, d // H), jnp.float32),
            "pos_bias_v": 0.02 * jax.random.normal(rng.next(), (H, d // H), jnp.float32),
        },
        "norm_conv": init_ln(d),
        "conv": {
            "pw1": init_linear(rng, d, 2 * d),
            "dw_W": 0.1 * jax.random.normal(rng.next(), (cnn_k, d), jnp.float32),
            "dw_b": jnp.zeros((d,), jnp.float32),
            "bn": init_ln(d),
            "pw2": init_linear(rng, d, d),
        },
        "norm_ff": init_ln(d),
        "ff": {"w1": init_linear(rng, d, units), "w2": init_linear(rng, units, d)},
        "norm_final": init_ln(d),
    }


def init_predictor(rng, idim, n_layers, chans, k):
    convs = []
    for i in range(n_layers):
        cin = idim if i == 0 else chans
        convs.append({"conv": init_conv(rng, cin, chans, k), "ln": init_ln(chans)})
    return {"convs": convs, "linear": init_linear(rng, chans, 1)}


def init_params(rng, cfg):
    d, H = cfg["adim"], cfg["aheads"]
    enc = {
        "embed": {"l1": init_linear(rng, cfg["idim"], 100), "l2": init_linear(rng, 100, d)},
        "lang_emb": 0.02 * jax.random.normal(rng.next(), (cfg["lang_embs"], d), jnp.float32),
        "blocks": [init_conformer_block(rng, d, cfg["eunits"], H, cfg["enc_cnn_k"])
                   for _ in range(cfg["elayers"])],
        "after_norm": init_ln(d),
        "utt_proj": init_linear(rng, d + cfg["utt_dim"], d),
    }
    dec = {
        "blocks": [init_conformer_block(rng, d, cfg["dunits"], H, cfg["dec_cnn_k"])
                   for _ in range(cfg["dlayers"])],
        "after_norm": init_ln(d),
    }
    post_layers = []
    for i in range(cfg["postnet_layers"]):
        cin = cfg["odim"] if i == 0 else cfg["postnet_chans"]
        cout = cfg["postnet_chans"] if i < cfg["postnet_layers"] - 1 else cfg["odim"]
        post_layers.append({
            "conv": init_conv(rng, cin, cout, cfg["postnet_filts"], bias=False),
            "bn": init_ln(cout),
        })
    return {
        "encoder": enc,
        "decoder": dec,
        "duration_predictor": init_predictor(rng, d, 2, 32, 3),
        "pitch_predictor": init_predictor(rng, d, 2, 32, 5),
        "energy_predictor": init_predictor(rng, d, 2, 32, 3),
        "pitch_embed": init_linear(rng, 1, d),    # Conv1d(1, adim, kernel=1) == Linear(1, adim)
        "energy_embed": init_linear(rng, 1, d),
        "feat_out": init_linear(rng, d, cfg["odim"] * 1),
        "postnet": {"layers": post_layers},
    }


# ----------------------------------------------------------------------------
# main
# ----------------------------------------------------------------------------
if __name__ == "__main__":
    cfg = dict(idim=20, odim=16, adim=32, aheads=2, elayers=2, eunits=64,
               dlayers=2, dunits=64, postnet_layers=3, postnet_chans=32, postnet_filts=5,
               enc_cnn_k=7, dec_cnn_k=7, utt_dim=16, lang_embs=8)

    # resolve the strided-roll capability once, outside jit
    _strided_roll_supported()

    key = jax.random.PRNGKey(0)
    rng = RNG(key)
    params = init_params(rng, cfg)

    B, Tmax, Lmax = 2, 8, 16
    k1, k2, k3, k4, k5 = jax.random.split(jax.random.PRNGKey(0), 5)
    text_tensors = jax.random.normal(k1, (B, Tmax, cfg["idim"]), jnp.float32)
    text_lengths = jnp.array([8, 6], dtype=jnp.int32)
    gold_durations = jnp.array([[2, 2, 2, 2, 2, 2, 2, 2],
                                [3, 3, 2, 2, 2, 2, 0, 0]], dtype=jnp.int32)
    speech_lengths = jnp.array([16, 14], dtype=jnp.int32)
    gold_speech = jax.random.normal(k2, (B, Lmax, cfg["odim"]), jnp.float32)
    gold_pitch = jax.random.normal(k3, (B, Tmax, 1), jnp.float32)
    gold_energy = jax.random.normal(k4, (B, Tmax, 1), jnp.float32)
    utterance_embedding = jax.random.normal(k5, (B, cfg["utt_dim"]), jnp.float32)
    lang_ids = jnp.array([0, 3], dtype=jnp.int32)

    fwd = jax.jit(fastspeech2_forward)
    loss = fwd(params, text_tensors, text_lengths, gold_speech, speech_lengths,
               gold_durations, gold_pitch, gold_energy, utterance_embedding, lang_ids)
    loss = jax.block_until_ready(loss)
    assert jnp.isfinite(loss), "loss is not finite"
    print("KERNEL_OK")
</pallas_src>

<mosaic_0001>
module attributes {stable_mosaic.version = 11 : i64} {
  func.func @kern(%arg0: i32, %arg1: memref<8x128xf32, #tpu.memory_space<vmem>>, %arg2: memref<8x128xf32, #tpu.memory_space<vmem>>) attributes {dimension_semantics = [#tpu.dimension_semantics<arbitrary>], iteration_bounds = array<i64: 1>, scalar_prefetch = 0 : i64, scratch_operands = 0 : i64, tpu.core_type = #tpu.core_type<tc>, window_params = [{pipeline_mode = #tpu.pipeline_mode<synchronous>, transform_indices = @transform_0, window_bounds = array<i64: 8, 128>}, {pipeline_mode = #tpu.pipeline_mode<synchronous>, transform_indices = @transform_1, window_bounds = array<i64: 8, 128>}]} {
    %c127_i32 = arith.constant 127 : i32
    %0 = arith.addi %arg0, %c127_i32 : i32
    %c0 = arith.constant 0 : index
    %c0_0 = arith.constant 0 : index
    %1 = vector.load %arg1[%c0, %c0_0] : memref<8x128xf32, #tpu.memory_space<vmem>>, vector<8x128xf32>
    %2 = tpu.dynamic_rotate %1 by %0 dim 1 {stride = 1 : si32, stride_dimension = 0 : si32} : vector<8x128xf32>, i32 -> vector<8x128xf32>
    %c0_1 = arith.constant 0 : index
    %c0_2 = arith.constant 0 : index
    %3 = vector.load %arg2[%c0_1, %c0_2] : memref<8x128xf32, #tpu.memory_space<vmem>>, vector<8x128xf32>
    tpu.vector_store %arg2[%c0_1, %c0_2], %2 {strides = array<i32>} : memref<8x128xf32, #tpu.memory_space<vmem>>, vector<8x128xf32>,
    return
  }
  func.func @transform_0(%arg0: i32) -> (i32, i32) {
    %c0_i32 = arith.constant 0 : i32
    %c0_i32_0 = arith.constant 0 : i32
    %c0_i32_1 = arith.constant 0 : i32
    return %c0_i32, %c0_i32_0 : i32, i32
  }
  func.func @transform_1(%arg0: i32) -> (i32, i32) {
    %c0_i32 = arith.constant 0 : i32
    %c0_i32_0 = arith.constant 0 : i32
    %c0_i32_1 = arith.constant 0 : i32
    return %c0_i32, %c0_i32_0 : i32, i32
  }
}

module attributes {stable_mosaic.version = 11 : i64} {
  func.func @kernel(%arg0: i32, %arg1: i32, %arg2: i32, %arg3: memref<16x128xbf16, #tpu.memory_space<vmem>>, %arg4: memref<128x128xbf16, #tpu.memory_space<vmem>>, %arg5: memref<16x128xbf16, #tpu.memory_space<vmem>>, %arg6: memref<16x128xf32, #tpu.memory_space<vmem>>) attributes {dimension_semantics = [#tpu.dimension_semantics<parallel>, #tpu.dimension_semantics<parallel>, #tpu.dimension_semantics<arbitrary>], iteration_bounds = array<i64: 1, 1, 1>, scalar_prefetch = 0 : i64, scratch_operands = 1 : i64, tpu.core_type = #tpu.core_type<tc>, window_params = [{transform_indices = @transform_0, window_bounds = array<i64: 16, 128>}, {transform_indices = @transform_1, window_bounds = array<i64: 128, 128>}, {transform_indices = @transform_2, window_bounds = array<i64: 16, 128>}]} {
    %c0_i32 = arith.constant 0 : i32
    %0 = arith.cmpi eq, %arg2, %c0_i32 : i32
    %1 = arith.extui %0 : i1 to i32
    %c0_i32_0 = arith.constant 0 : i32
    %2 = arith.cmpi ne, %1, %c0_i32_0 : i32
    scf.if %2 {
      %cst_10 = arith.constant 0.000000e+00 : f32
      %12 = vector.broadcast %cst_10 : f32 to vector<16x128xf32>
      %c0_11 = arith.constant 0 : index
      %c0_12 = arith.constant 0 : index
      %13 = vector.load %arg6[%c0_11, %c0_12] : memref<16x128xf32, #tpu.memory_space<vmem>>, vector<16x128xf32>
      tpu.vector_store %arg6[%c0_11, %c0_12], %12 {strides = array<i32>} : memref<16x128xf32, #tpu.memory_space<vmem>>, vector<16x128xf32>,
    } else {
    }
    %c0 = arith.constant 0 : index
    %c0_1 = arith.constant 0 : index
    %3 = vector.load %arg6[%c0, %c0_1] : memref<16x128xf32, #tpu.memory_space<vmem>>, vector<16x128xf32>
    %c0_2 = arith.constant 0 : index
    %c0_3 = arith.constant 0 : index
    %4 = vector.load %arg3[%c0_2, %c0_3] : memref<16x128xbf16, #tpu.memory_space<vmem>>, vector<16x128xbf16>
    %c0_4 = arith.constant 0 : index
    %c0_5 = arith.constant 0 : index
    %5 = vector.load %arg4[%c0_4, %c0_5] : memref<128x128xbf16, #tpu.memory_space<vmem>>, vector<128x128xbf16>
    %cst = arith.constant dense<0.000000e+00> : vector<16x128xf32>
    %6 = tpu.matmul %4, %5, %cst {dimension_numbers = #tpu.dot_dimension_numbers<[1], [0], [0], [1], [0, 0, 1, 1], [], []>} : vector<16x128xbf16>, vector<128x128xbf16>, vector<16x128xf32> -> vector<16x128xf32>
    %7 = arith.addf %3, %6 : vector<16x128xf32>
    %c0_6 = arith.constant 0 : index
    %c0_7 = arith.constant 0 : index
    %8 = vector.load %arg6[%c0_6, %c0_7] : memref<16x128xf32, #tpu.memory_space<vmem>>, vector<16x128xf32>
    tpu.vector_store %arg6[%c0_6, %c0_7], %7 {strides = array<i32>} : memref<16x128xf32, #tpu.memory_space<vmem>>, vector<16x128xf32>,
    %c0_i32_8 = arith.constant 0 : i32
    %9 = arith.cmpi eq, %arg2, %c0_i32_8 : i32
    %10 = arith.extui %9 : i1 to i32
    %c0_i32_9 = arith.constant 0 : i32
    %11 = arith.cmpi ne, %10, %c0_i32_9 : i32
    scf.if %11 {
      %c0_10 = arith.constant 0 : index
      %c0_11 = arith.constant 0 : index
      %12 = vector.load %arg6[%c0_10, %c0_11] : memref<16x128xf32, #tpu.memory_space<vmem>>, vector<16x128xf32>
      %13 = arith.truncf %12 : vector<16x128xf32> to vector<16x128xbf16>
      %c0_12 = arith.constant 0 : index
      %c0_13 = arith.constant 0 : index
      %14 = vector.load %arg5[%c0_12, %c0_13] : memref<16x128xbf16, #tpu.memory_space<vmem>>, vector<16x128xbf16>
      tpu.vector_store %arg5[%c0_12, %c0_13], %13 {strides = array<i32>} : memref<16x128xbf16, #tpu.memory_space<vmem>>, vector<16x128xbf16>,
    } else {
    }
    return
  }
  func.func @transform_0(%arg0: i32, %arg1: i32, %arg2: i32) -> (i32, i32) {
    %c0_i32 = arith.constant 0 : i32
    return %arg0, %arg2 : i32, i32
  }
  func.func @transform_1(%arg0: i32, %arg1: i32, %arg2: i32) -> (i32, i32) {
    %c0_i32 = arith.constant 0 : i32
    return %arg2, %arg1 : i32, i32
  }
  func.func @transform_2(%arg0: i32, %arg1: i32, %arg2: i32) -> (i32, i32) {
    %c0_i32 = arith.constant 0 : i32
    return %arg0, %arg1 : i32, i32
  }
}

module attributes {stable_mosaic.version = 11 : i64} {
  func.func @kernel(%arg0: i32, %arg1: i32, %arg2: i32, %arg3: memref<16x128xbf16, #tpu.memory_space<vmem>>, %arg4: memref<128x128xbf16, #tpu.memory_space<vmem>>, %arg5: memref<1x128xf32, #tpu.memory_space<vmem>>, %arg6: memref<16x128xbf16, #tpu.memory_space<vmem>>, %arg7: memref<16x128xf32, #tpu.memory_space<vmem>>) attributes {dimension_semantics = [#tpu.dimension_semantics<parallel>, #tpu.dimension_semantics<parallel>, #tpu.dimension_semantics<arbitrary>], iteration_bounds = array<i64: 1, 1, 1>, scalar_prefetch = 0 : i64, scratch_operands = 1 : i64, tpu.core_type = #tpu.core_type<tc>, window_params = [{transform_indices = @transform_0, window_bounds = array<i64: 16, 128>}, {transform_indices = @transform_1, window_bounds = array<i64: 128, 128>}, {transform_indices = @transform_2, window_bounds = array<i64: 1, 128>}, {transform_indices = @transform_3, window_bounds = array<i64: 16, 128>}]} {
    %c0_i32 = arith.constant 0 : i32
    %0 = arith.cmpi eq, %arg2, %c0_i32 : i32
    %1 = arith.extui %0 : i1 to i32
    %c0_i32_0 = arith.constant 0 : i32
    %2 = arith.cmpi ne, %1, %c0_i32_0 : i32
    scf.if %2 {
      %cst_10 = arith.constant 0.000000e+00 : f32
      %12 = vector.broadcast %cst_10 : f32 to vector<16x128xf32>
      %c0_11 = arith.constant 0 : index
      %c0_12 = arith.constant 0 : index
      %13 = vector.load %arg7[%c0_11, %c0_12] : memref<16x128xf32, #tpu.memory_space<vmem>>, vector<16x128xf32>
      tpu.vector_store %arg7[%c0_11, %c0_12], %12 {strides = array<i32>} : memref<16x128xf32, #tpu.memory_space<vmem>>, vector<16x128xf32>,
    } else {
    }
    %c0 = arith.constant 0 : index
    %c0_1 = arith.constant 0 : index
    %3 = vector.load %arg7[%c0, %c0_1] : memref<16x128xf32, #tpu.memory_space<vmem>>, vector<16x128xf32>
    %c0_2 = arith.constant 0 : index
    %c0_3 = arith.constant 0 : index
    %4 = vector.load %arg3[%c0_2, %c0_3] : memref<16x128xbf16, #tpu.memory_space<vmem>>, vector<16x128xbf16>
    %c0_4 = arith.constant 0 : index
    %c0_5 = arith.constant 0 : index
    %5 = vector.load %arg4[%c0_4, %c0_5] : memref<128x128xbf16, #tpu.memory_space<vmem>>, vector<128x128xbf16>
    %cst = arith.constant dense<0.000000e+00> : vector<16x128xf32>
    %6 = tpu.matmul %4, %5, %cst {dimension_numbers = #tpu.dot_dimension_numbers<[1], [0], [0], [1], [0, 0, 1, 1], [], []>} : vector<16x128xbf16>, vector<128x128xbf16>, vector<16x128xf32> -> vector<16x128xf32>
    %7 = arith.addf %3, %6 : vector<16x128xf32>
    %c0_6 = arith.constant 0 : index
    %c0_7 = arith.constant 0 : index
    %8 = vector.load %arg7[%c0_6, %c0_7] : memref<16x128xf32, #tpu.memory_space<vmem>>, vector<16x128xf32>
    tpu.vector_store %arg7[%c0_6, %c0_7], %7 {strides = array<i32>} : memref<16x128xf32, #tpu.memory_space<vmem>>, vector<16x128xf32>,
    %c0_i32_8 = arith.constant 0 : i32
    %9 = arith.cmpi eq, %arg2, %c0_i32_8 : i32
    %10 = arith.extui %9 : i1 to i32
    %c0_i32_9 = arith.constant 0 : i32
    %11 = arith.cmpi ne, %10, %c0_i32_9 : i32
    scf.if %11 {
      %c0_10 = arith.constant 0 : index
      %c0_11 = arith.constant 0 : index
      %12 = vector.load %arg7[%c0_10, %c0_11] : memref<16x128xf32, #tpu.memory_space<vmem>>, vector<16x128xf32>
      %c0_12 = arith.constant 0 : index
      %c0_13 = arith.constant 0 : index
      %13 = vector.load %arg5[%c0_12, %c0_13] : memref<1x128xf32, #tpu.memory_space<vmem>>, vector<1x128xf32>
      %14 = vector.broadcast %13 : vector<1x128xf32> to vector<16x128xf32>
      %15 = arith.addf %12, %14 : vector<16x128xf32>
      %16 = math.tanh %15 : vector<16x128xf32>
      %17 = arith.truncf %16 : vector<16x128xf32> to vector<16x128xbf16>
      %c0_14 = arith.constant 0 : index
      %c0_15 = arith.constant 0 : index
      %18 = vector.load %arg6[%c0_14, %c0_15] : memref<16x128xbf16, #tpu.memory_space<vmem>>, vector<16x128xbf16>
      tpu.vector_store %arg6[%c0_14, %c0_15], %17 {strides = array<i32>} : memref<16x128xbf16, #tpu.memory_space<vmem>>, vector<16x128xbf16>,
    } else {
    }
    return
  }
  func.func @transform_0(%arg0: i32, %arg1: i32, %arg2: i32) -> (i32, i32) {
    %c0_i32 = arith.constant 0 : i32
    return %arg0, %arg2 : i32, i32
  }
  func.func @transform_1(%arg0: i32, %arg1: i32, %arg2: i32) -> (i32, i32) {
    %c0_i32 = arith.constant 0 : i32
    return %arg2, %arg1 : i32, i32
  }
  func.func @transform_2(%arg0: i32, %arg1: i32, %arg2: i32) -> (i32, i32) {
    %c0_i32 = arith.constant 0 : i32
    %c0_i32_0 = arith.constant 0 : i32
    return %c0_i32, %arg1 : i32, i32
  }
  func.func @transform_3(%arg0: i32, %arg1: i32, %arg2: i32) -> (i32, i32) {
    %c0_i32 = arith.constant 0 : i32
    return %arg0, %arg1 : i32, i32
  }
}

module attributes {stable_mosaic.version = 11 : i64} {
  func.func @kernel(%arg0: i32, %arg1: i32, %arg2: i32, %arg3: memref<16x128xbf16, #tpu.memory_space<vmem>>, %arg4: memref<128x128xbf16, #tpu.memory_space<vmem>>, %arg5: memref<1x128xf32, #tpu.memory_space<vmem>>, %arg6: memref<16x128xf32, #tpu.memory_space<vmem>>, %arg7: memref<16x128xf32, #tpu.memory_space<vmem>>) attributes {dimension_semantics = [#tpu.dimension_semantics<parallel>, #tpu.dimension_semantics<parallel>, #tpu.dimension_semantics<arbitrary>], iteration_bounds = array<i64: 1, 1, 1>, scalar_prefetch = 0 : i64, scratch_operands = 1 : i64, tpu.core_type = #tpu.core_type<tc>, window_params = [{transform_indices = @transform_0, window_bounds = array<i64: 16, 128>}, {transform_indices = @transform_1, window_bounds = array<i64: 128, 128>}, {transform_indices = @transform_2, window_bounds = array<i64: 1, 128>}, {transform_indices = @transform_3, window_bounds = array<i64: 16, 128>}]} {
    %c0_i32 = arith.constant 0 : i32
    %0 = arith.cmpi eq, %arg2, %c0_i32 : i32
    %1 = arith.extui %0 : i1 to i32
    %c0_i32_0 = arith.constant 0 : i32
    %2 = arith.cmpi ne, %1, %c0_i32_0 : i32
    scf.if %2 {
      %cst_10 = arith.constant 0.000000e+00 : f32
      %12 = vector.broadcast %cst_10 : f32 to vector<16x128xf32>
      %c0_11 = arith.constant 0 : index
      %c0_12 = arith.constant 0 : index
      %13 = vector.load %arg7[%c0_11, %c0_12] : memref<16x128xf32, #tpu.memory_space<vmem>>, vector<16x128xf32>
      tpu.vector_store %arg7[%c0_11, %c0_12], %12 {strides = array<i32>} : memref<16x128xf32, #tpu.memory_space<vmem>>, vector<16x128xf32>,
    } else {
    }
    %c0 = arith.constant 0 : index
    %c0_1 = arith.constant 0 : index
    %3 = vector.load %arg7[%c0, %c0_1] : memref<16x128xf32, #tpu.memory_space<vmem>>, vector<16x128xf32>
    %c0_2 = arith.constant 0 : index
    %c0_3 = arith.constant 0 : index
    %4 = vector.load %arg3[%c0_2, %c0_3] : memref<16x128xbf16, #tpu.memory_space<vmem>>, vector<16x128xbf16>
    %c0_4 = arith.constant 0 : index
    %c0_5 = arith.constant 0 : index
    %5 = vector.load %arg4[%c0_4, %c0_5] : memref<128x128xbf16, #tpu.memory_space<vmem>>, vector<128x128xbf16>
    %cst = arith.constant dense<0.000000e+00> : vector<16x128xf32>
    %6 = tpu.matmul %4, %5, %cst {dimension_numbers = #tpu.dot_dimension_numbers<[1], [0], [0], [1], [0, 0, 1, 1], [], []>} : vector<16x128xbf16>, vector<128x128xbf16>, vector<16x128xf32> -> vector<16x128xf32>
    %7 = arith.addf %3, %6 : vector<16x128xf32>
    %c0_6 = arith.constant 0 : index
    %c0_7 = arith.constant 0 : index
    %8 = vector.load %arg7[%c0_6, %c0_7] : memref<16x128xf32, #tpu.memory_space<vmem>>, vector<16x128xf32>
    tpu.vector_store %arg7[%c0_6, %c0_7], %7 {strides = array<i32>} : memref<16x128xf32, #tpu.memory_space<vmem>>, vector<16x128xf32>,
    %c0_i32_8 = arith.constant 0 : i32
    %9 = arith.cmpi eq, %arg2, %c0_i32_8 : i32
    %10 = arith.extui %9 : i1 to i32
    %c0_i32_9 = arith.constant 0 : i32
    %11 = arith.cmpi ne, %10, %c0_i32_9 : i32
    scf.if %11 {
      %c0_10 = arith.constant 0 : index
      %c0_11 = arith.constant 0 : index
      %12 = vector.load %arg7[%c0_10, %c0_11] : memref<16x128xf32, #tpu.memory_space<vmem>>, vector<16x128xf32>
      %c0_12 = arith.constant 0 : index
      %c0_13 = arith.constant 0 : index
      %13 = vector.load %arg5[%c0_12, %c0_13] : memref<1x128xf32, #tpu.memory_space<vmem>>, vector<1x128xf32>
      %14 = vector.broadcast %13 : vector<1x128xf32> to vector<16x128xf32>
      %15 = arith.addf %12, %14 : vector<16x128xf32>
      %c0_14 = arith.constant 0 : index
      %c0_15 = arith.constant 0 : index
      %16 = vector.load %arg6[%c0_14, %c0_15] : memref<16x128xf32, #tpu.memory_space<vmem>>, vector<16x128xf32>
      tpu.vector_store %arg6[%c0_14, %c0_15], %15 {strides = array<i32>} : memref<16x128xf32, #tpu.memory_space<vmem>>, vector<16x128xf32>,
    } else {
    }
    return
  }
  func.func @transform_0(%arg0: i32, %arg1: i32, %arg2: i32) -> (i32, i32) {
    %c0_i32 = arith.constant 0 : i32
    return %arg0, %arg2 : i32, i32
  }
  func.func @transform_1(%arg0: i32, %arg1: i32, %arg2: i32) -> (i32, i32) {
    %c0_i32 = arith.constant 0 : i32
    return %arg2, %arg1 : i32, i32
  }
  func.func @transform_2(%arg0: i32, %arg1: i32, %arg2: i32) -> (i32, i32) {
    %c0_i32 = arith.constant 0 : i32
    %c0_i32_0 = arith.constant 0 : i32
    return %c0_i32, %arg1 : i32, i32
  }
  func.func @transform_3(%arg0: i32, %arg1: i32, %arg2: i32) -> (i32, i32) {
    %c0_i32 = arith.constant 0 : i32
    return %arg0, %arg1 : i32, i32
  }
}

module attributes {stable_mosaic.version = 11 : i64} {
  func.func @kern(%arg0: i32, %arg1: memref<16x32xf32, #tpu.memory_space<vmem>>, %arg2: memref<1x32xf32, #tpu.memory_space<vmem>>, %arg3: memref<1x32xf32, #tpu.memory_space<vmem>>, %arg4: memref<16x32xbf16, #tpu.memory_space<vmem>>) attributes {dimension_semantics = [#tpu.dimension_semantics<parallel>], iteration_bounds = array<i64: 1>, scalar_prefetch = 0 : i64, scratch_operands = 0 : i64, tpu.core_type = #tpu.core_type<tc>, window_params = [{transform_indices = @transform_0, window_bounds = array<i64: 16, 32>}, {pipeline_mode = #tpu.pipeline_mode<synchronous>, transform_indices = @transform_1, window_bounds = array<i64: 1, 32>}, {pipeline_mode = #tpu.pipeline_mode<synchronous>, transform_indices = @transform_2, window_bounds = array<i64: 1, 32>}, {transform_indices = @transform_3, window_bounds = array<i64: 16, 32>}]} {
    %c0 = arith.constant 0 : index
    %c0_0 = arith.constant 0 : index
    %0 = vector.load %arg1[%c0, %c0_0] : memref<16x32xf32, #tpu.memory_space<vmem>>, vector<16x32xf32>
    %cst = arith.constant dense<0.000000e+00> : vector<16xf32>
    %1 = vector.multi_reduction <add>, %0, %cst [1] : vector<16x32xf32> to vector<16xf32>
    %2 = vector.shape_cast %1 : vector<16xf32> to vector<16x1xf32>
    %cst_1 = arith.constant 3.200000e+01 : f32
    %3 = vector.broadcast %cst_1 : f32 to vector<16x1xf32>
    %4 = arith.divf %2, %3 : vector<16x1xf32>
    %5 = vector.broadcast %4 : vector<16x1xf32> to vector<16x32xf32>
    %6 = arith.subf %0, %5 : vector<16x32xf32>
    %7 = arith.mulf %6, %6 : vector<16x32xf32>
    %cst_2 = arith.constant dense<0.000000e+00> : vector<16xf32>
    %8 = vector.multi_reduction <add>, %7, %cst_2 [1] : vector<16x32xf32> to vector<16xf32>
    %9 = vector.shape_cast %8 : vector<16xf32> to vector<16x1xf32>
    %cst_3 = arith.constant 3.200000e+01 : f32
    %10 = vector.broadcast %cst_3 : f32 to vector<16x1xf32>
    %11 = arith.divf %9, %10 : vector<16x1xf32>
    %cst_4 = arith.constant 9.99999974E-6 : f32
    %12 = vector.broadcast %cst_4 : f32 to vector<16x1xf32>
    %13 = arith.addf %11, %12 : vector<16x1xf32>
    %14 = math.rsqrt %13 : vector<16x1xf32>
    %15 = vector.broadcast %14 : vector<16x1xf32> to vector<16x32xf32>
    %16 = arith.mulf %6, %15 : vector<16x32xf32>
    %c0_5 = arith.constant 0 : index
    %c0_6 = arith.constant 0 : index
    %17 = vector.load %arg2[%c0_5, %c0_6] : memref<1x32xf32, #tpu.memory_space<vmem>>, vector<1x32xf32>
    %18 = vector.broadcast %17 : vector<1x32xf32> to vector<16x32xf32>
    %19 = arith.mulf %16, %18 : vector<16x32xf32>
    %c0_7 = arith.constant 0 : index
    %c0_8 = arith.constant 0 : index
    %20 = vector.load %arg3[%c0_7, %c0_8] : memref<1x32xf32, #tpu.memory_space<vmem>>, vector<1x32xf32>
    %21 = vector.broadcast %20 : vector<1x32xf32> to vector<16x32xf32>
    %22 = arith.addf %19, %21 : vector<16x32xf32>
    %23 = arith.truncf %22 : vector<16x32xf32> to vector<16x32xbf16>
    %c0_9 = arith.constant 0 : index
    %c0_10 = arith.constant 0 : index
    %24 = vector.load %arg4[%c0_9, %c0_10] : memref<16x32xbf16, #tpu.memory_space<vmem>>, vector<16x32xbf16>
    tpu.vector_store %arg4[%c0_9, %c0_10], %23 {strides = array<i32>} : memref<16x32xbf16, #tpu.memory_space<vmem>>, vector<16x32xbf16>,
    return
  }
  func.func @transform_0(%arg0: i32) -> (i32, i32) {
    %c0_i32 = arith.constant 0 : i32
    %c0_i32_0 = arith.constant 0 : i32
    return %arg0, %c0_i32 : i32, i32
  }
  func.func @transform_1(%arg0: i32) -> (i32, i32) {
    %c0_i32 = arith.constant 0 : i32
    %c0_i32_0 = arith.constant 0 : i32
    %c0_i32_1 = arith.constant 0 : i32
    return %c0_i32, %c0_i32_0 : i32, i32
  }
  func.func @transform_2(%arg0: i32) -> (i32, i32) {
    %c0_i32 = arith.constant 0 : i32
    %c0_i32_0 = arith.constant 0 : i32
    %c0_i32_1 = arith.constant 0 : i32
    return %c0_i32, %c0_i32_0 : i32, i32
  }
  func.func @transform_3(%arg0: i32) -> (i32, i32) {
    %c0_i32 = arith.constant 0 : i32
    %c0_i32_0 = arith.constant 0 : i32
    return %arg0, %c0_i32 : i32, i32
  }
}

module attributes {stable_mosaic.version = 11 : i64} {
  func.func @kernel(%arg0: i32, %arg1: i32, %arg2: i32, %arg3: memref<16x128xbf16, #tpu.memory_space<vmem>>, %arg4: memref<128x128xbf16, #tpu.memory_space<vmem>>, %arg5: memref<1x128xf32, #tpu.memory_space<vmem>>, %arg6: memref<16x128xbf16, #tpu.memory_space<vmem>>, %arg7: memref<16x128xf32, #tpu.memory_space<vmem>>) attributes {dimension_semantics = [#tpu.dimension_semantics<parallel>, #tpu.dimension_semantics<parallel>, #tpu.dimension_semantics<arbitrary>], iteration_bounds = array<i64: 1, 1, 1>, scalar_prefetch = 0 : i64, scratch_operands = 1 : i64, tpu.core_type = #tpu.core_type<tc>, window_params = [{transform_indices = @transform_0, window_bounds = array<i64: 16, 128>}, {transform_indices = @transform_1, window_bounds = array<i64: 128, 128>}, {transform_indices = @transform_2, window_bounds = array<i64: 1, 128>}, {transform_indices = @transform_3, window_bounds = array<i64: 16, 128>}]} {
    %c0_i32 = arith.constant 0 : i32
    %0 = arith.cmpi eq, %arg2, %c0_i32 : i32
    %1 = arith.extui %0 : i1 to i32
    %c0_i32_0 = arith.constant 0 : i32
    %2 = arith.cmpi ne, %1, %c0_i32_0 : i32
    scf.if %2 {
      %cst_10 = arith.constant 0.000000e+00 : f32
      %12 = vector.broadcast %cst_10 : f32 to vector<16x128xf32>
      %c0_11 = arith.constant 0 : index
      %c0_12 = arith.constant 0 : index
      %13 = vector.load %arg7[%c0_11, %c0_12] : memref<16x128xf32, #tpu.memory_space<vmem>>, vector<16x128xf32>
      tpu.vector_store %arg7[%c0_11, %c0_12], %12 {strides = array<i32>} : memref<16x128xf32, #tpu.memory_space<vmem>>, vector<16x128xf32>,
    } else {
    }
    %c0 = arith.constant 0 : index
    %c0_1 = arith.constant 0 : index
    %3 = vector.load %arg7[%c0, %c0_1] : memref<16x128xf32, #tpu.memory_space<vmem>>, vector<16x128xf32>
    %c0_2 = arith.constant 0 : index
    %c0_3 = arith.constant 0 : index
    %4 = vector.load %arg3[%c0_2, %c0_3] : memref<16x128xbf16, #tpu.memory_space<vmem>>, vector<16x128xbf16>
    %c0_4 = arith.constant 0 : index
    %c0_5 = arith.constant 0 : index
    %5 = vector.load %arg4[%c0_4, %c0_5] : memref<128x128xbf16, #tpu.memory_space<vmem>>, vector<128x128xbf16>
    %cst = arith.constant dense<0.000000e+00> : vector<16x128xf32>
    %6 = tpu.matmul %4, %5, %cst {dimension_numbers = #tpu.dot_dimension_numbers<[1], [0], [0], [1], [0, 0, 1, 1], [], []>} : vector<16x128xbf16>, vector<128x128xbf16>, vector<16x128xf32> -> vector<16x128xf32>
    %7 = arith.addf %3, %6 : vector<16x128xf32>
    %c0_6 = arith.constant 0 : index
    %c0_7 = arith.constant 0 : index
    %8 = vector.load %arg7[%c0_6, %c0_7] : memref<16x128xf32, #tpu.memory_space<vmem>>, vector<16x128xf32>
    tpu.vector_store %arg7[%c0_6, %c0_7], %7 {strides = array<i32>} : memref<16x128xf32, #tpu.memory_space<vmem>>, vector<16x128xf32>,
    %c0_i32_8 = arith.constant 0 : i32
    %9 = arith.cmpi eq, %arg2, %c0_i32_8 : i32
    %10 = arith.extui %9 : i1 to i32
    %c0_i32_9 = arith.constant 0 : i32
    %11 = arith.cmpi ne, %10, %c0_i32_9 : i32
    scf.if %11 {
      %c0_10 = arith.constant 0 : index
      %c0_11 = arith.constant 0 : index
      %12 = vector.load %arg7[%c0_10, %c0_11] : memref<16x128xf32, #tpu.memory_space<vmem>>, vector<16x128xf32>
      %c0_12 = arith.constant 0 : index
      %c0_13 = arith.constant 0 : index
      %13 = vector.load %arg5[%c0_12, %c0_13] : memref<1x128xf32, #tpu.memory_space<vmem>>, vector<1x128xf32>
      %14 = vector.broadcast %13 : vector<1x128xf32> to vector<16x128xf32>
      %15 = arith.addf %12, %14 : vector<16x128xf32>
      %cst_14 = arith.constant 0.000000e+00 : f32
      %16 = vector.broadcast %cst_14 : f32 to vector<16x128xf32>
      %17 = arith.maximumf %15, %16 : vector<16x128xf32>
      %18 = arith.truncf %17 : vector<16x128xf32> to vector<16x128xbf16>
      %c0_15 = arith.constant 0 : index
      %c0_16 = arith.constant 0 : index
      %19 = vector.load %arg6[%c0_15, %c0_16] : memref<16x128xbf16, #tpu.memory_space<vmem>>, vector<16x128xbf16>
      tpu.vector_store %arg6[%c0_15, %c0_16], %18 {strides = array<i32>} : memref<16x128xbf16, #tpu.memory_space<vmem>>, vector<16x128xbf16>,
    } else {
    }
    return
  }
  func.func @transform_0(%arg0: i32, %arg1: i32, %arg2: i32) -> (i32, i32) {
    %c0_i32 = arith.constant 0 : i32
    return %arg0, %arg2 : i32, i32
  }
  func.func @transform_1(%arg0: i32, %arg1: i32, %arg2: i32) -> (i32, i32) {
    %c0_i32 = arith.constant 0 : i32
    return %arg2, %arg1 : i32, i32
  }
  func.func @transform_2(%arg0: i32, %arg1: i32, %arg2: i32) -> (i32, i32) {
    %c0_i32 = arith.constant 0 : i32
    %c0_i32_0 = arith.constant 0 : i32
    return %c0_i32, %arg1 : i32, i32
  }
  func.func @transform_3(%arg0: i32, %arg1: i32, %arg2: i32) -> (i32, i32) {
    %c0_i32 = arith.constant 0 : i32
    return %arg0, %arg1 : i32, i32
  }
}

module attributes {stable_mosaic.version = 11 : i64} {
  func.func @kernel(%arg0: i32, %arg1: i32, %arg2: i32, %arg3: memref<16x128xbf16, #tpu.memory_space<vmem>>, %arg4: memref<128x128xbf16, #tpu.memory_space<vmem>>, %arg5: memref<1x128xf32, #tpu.memory_space<vmem>>, %arg6: memref<16x128xbf16, #tpu.memory_space<vmem>>, %arg7: memref<16x128xf32, #tpu.memory_space<vmem>>) attributes {dimension_semantics = [#tpu.dimension_semantics<parallel>, #tpu.dimension_semantics<parallel>, #tpu.dimension_semantics<arbitrary>], iteration_bounds = array<i64: 1, 1, 1>, scalar_prefetch = 0 : i64, scratch_operands = 1 : i64, tpu.core_type = #tpu.core_type<tc>, window_params = [{transform_indices = @transform_0, window_bounds = array<i64: 16, 128>}, {transform_indices = @transform_1, window_bounds = array<i64: 128, 128>}, {transform_indices = @transform_2, window_bounds = array<i64: 1, 128>}, {transform_indices = @transform_3, window_bounds = array<i64: 16, 128>}]} {
    %c0_i32 = arith.constant 0 : i32
    %0 = arith.cmpi eq, %arg2, %c0_i32 : i32
    %1 = arith.extui %0 : i1 to i32
    %c0_i32_0 = arith.constant 0 : i32
    %2 = arith.cmpi ne, %1, %c0_i32_0 : i32
    scf.if %2 {
      %cst_10 = arith.constant 0.000000e+00 : f32
      %12 = vector.broadcast %cst_10 : f32 to vector<16x128xf32>
      %c0_11 = arith.constant 0 : index
      %c0_12 = arith.constant 0 : index
      %13 = vector.load %arg7[%c0_11, %c0_12] : memref<16x128xf32, #tpu.memory_space<vmem>>, vector<16x128xf32>
      tpu.vector_store %arg7[%c0_11, %c0_12], %12 {strides = array<i32>} : memref<16x128xf32, #tpu.memory_space<vmem>>, vector<16x128xf32>,
    } else {
    }
    %c0 = arith.constant 0 : index
    %c0_1 = arith.constant 0 : index
    %3 = vector.load %arg7[%c0, %c0_1] : memref<16x128xf32, #tpu.memory_space<vmem>>, vector<16x128xf32>
    %c0_2 = arith.constant 0 : index
    %c0_3 = arith.constant 0 : index
    %4 = vector.load %arg3[%c0_2, %c0_3] : memref<16x128xbf16, #tpu.memory_space<vmem>>, vector<16x128xbf16>
    %c0_4 = arith.constant 0 : index
    %c0_5 = arith.constant 0 : index
    %5 = vector.load %arg4[%c0_4, %c0_5] : memref<128x128xbf16, #tpu.memory_space<vmem>>, vector<128x128xbf16>
    %cst = arith.constant dense<0.000000e+00> : vector<16x128xf32>
    %6 = tpu.matmul %4, %5, %cst {dimension_numbers = #tpu.dot_dimension_numbers<[1], [0], [0], [1], [0, 0, 1, 1], [], []>} : vector<16x128xbf16>, vector<128x128xbf16>, vector<16x128xf32> -> vector<16x128xf32>
    %7 = arith.addf %3, %6 : vector<16x128xf32>
    %c0_6 = arith.constant 0 : index
    %c0_7 = arith.constant 0 : index
    %8 = vector.load %arg7[%c0_6, %c0_7] : memref<16x128xf32, #tpu.memory_space<vmem>>, vector<16x128xf32>
    tpu.vector_store %arg7[%c0_6, %c0_7], %7 {strides = array<i32>} : memref<16x128xf32, #tpu.memory_space<vmem>>, vector<16x128xf32>,
    %c0_i32_8 = arith.constant 0 : i32
    %9 = arith.cmpi eq, %arg2, %c0_i32_8 : i32
    %10 = arith.extui %9 : i1 to i32
    %c0_i32_9 = arith.constant 0 : i32
    %11 = arith.cmpi ne, %10, %c0_i32_9 : i32
    scf.if %11 {
      %c0_10 = arith.constant 0 : index
      %c0_11 = arith.constant 0 : index
      %12 = vector.load %arg7[%c0_10, %c0_11] : memref<16x128xf32, #tpu.memory_space<vmem>>, vector<16x128xf32>
      %c0_12 = arith.constant 0 : index
      %c0_13 = arith.constant 0 : index
      %13 = vector.load %arg5[%c0_12, %c0_13] : memref<1x128xf32, #tpu.memory_space<vmem>>, vector<1x128xf32>
      %14 = vector.broadcast %13 : vector<1x128xf32> to vector<16x128xf32>
      %15 = arith.addf %12, %14 : vector<16x128xf32>
      %16 = arith.truncf %15 : vector<16x128xf32> to vector<16x128xbf16>
      %c0_14 = arith.constant 0 : index
      %c0_15 = arith.constant 0 : index
      %17 = vector.load %arg6[%c0_14, %c0_15] : memref<16x128xbf16, #tpu.memory_space<vmem>>, vector<16x128xbf16>
      tpu.vector_store %arg6[%c0_14, %c0_15], %16 {strides = array<i32>} : memref<16x128xbf16, #tpu.memory_space<vmem>>, vector<16x128xbf16>,
    } else {
    }
    return
  }
  func.func @transform_0(%arg0: i32, %arg1: i32, %arg2: i32) -> (i32, i32) {
    %c0_i32 = arith.constant 0 : i32
    return %arg0, %arg2 : i32, i32
  }
  func.func @transform_1(%arg0: i32, %arg1: i32, %arg2: i32) -> (i32, i32) {
    %c0_i32 = arith.constant 0 : i32
    return %arg2, %arg1 : i32, i32
  }
  func.func @transform_2(%arg0: i32, %arg1: i32, %arg2: i32) -> (i32, i32) {
    %c0_i32 = arith.constant 0 : i32
    %c0_i32_0 = arith.constant 0 : i32
    return %c0_i32, %arg1 : i32, i32
  }
  func.func @transform_3(%arg0: i32, %arg1: i32, %arg2: i32) -> (i32, i32) {
    %c0_i32 = arith.constant 0 : i32
    return %arg0, %arg1 : i32, i32
  }
}

module attributes {stable_mosaic.version = 11 : i64} {
  func.func @kern(%arg0: i32, %arg1: i32, %arg2: memref<1x8x32xbf16, #tpu.memory_space<vmem>>, %arg3: memref<1x8x32xbf16, #tpu.memory_space<vmem>>, %arg4: memref<1x8x32xbf16, #tpu.memory_space<vmem>>, %arg5: memref<1x2x8x8xbf16, #tpu.memory_space<vmem>>, %arg6: memref<1x32xf32, #tpu.memory_space<vmem>>, %arg7: memref<1x32xf32, #tpu.memory_space<vmem>>, %arg8: memref<1x1x8xf32, #tpu.memory_space<vmem>>, %arg9: memref<1x8x32xbf16, #tpu.memory_space<vmem>>) attributes {dimension_semantics = [#tpu.dimension_semantics<parallel>, #tpu.dimension_semantics<parallel>], iteration_bounds = array<i64: 2, 1>, scalar_prefetch = 0 : i64, scratch_operands = 0 : i64, tpu.core_type = #tpu.core_type<tc>, window_params = [{transform_indices = @transform_0, window_bounds = array<i64: 1, 8, 32>}, {transform_indices = @transform_1, window_bounds = array<i64: 1, 8, 32>}, {transform_indices = @transform_2, window_bounds = array<i64: 1, 8, 32>}, {transform_indices = @transform_3, window_bounds = array<i64: 1, 2, 8, 8>}, {pipeline_mode = #tpu.pipeline_mode<synchronous>, transform_indices = @transform_4, window_bounds = array<i64: 1, 32>}, {pipeline_mode = #tpu.pipeline_mode<synchronous>, transform_indices = @transform_5, window_bounds = array<i64: 1, 32>}, {transform_indices = @transform_6, window_bounds = array<i64: 1, 1, 8>}, {transform_indices = @transform_7, window_bounds = array<i64: 1, 8, 32>}]} {
    %c0 = arith.constant 0 : index
    %c0_0 = arith.constant 0 : index
    %c0_1 = arith.constant 0 : index
    %0 = vector.load %arg2[%c0, %c0_0, %c0_1] : memref<1x8x32xbf16, #tpu.memory_space<vmem>>, vector<1x8x32xbf16>
    %1 = vector.shape_cast %0 : vector<1x8x32xbf16> to vector<8x32xbf16>
    %2 = arith.extf %1 : vector<8x32xbf16> to vector<8x32xf32>
    %c0_2 = arith.constant 0 : index
    %c0_3 = arith.constant 0 : index
    %3 = vector.load %arg6[%c0_2, %c0_3] : memref<1x32xf32, #tpu.memory_space<vmem>>, vector<1x32xf32>
    %4 = vector.broadcast %3 : vector<1x32xf32> to vector<8x32xf32>
    %5 = arith.addf %2, %4 : vector<8x32xf32>
    %6 = arith.truncf %5 : vector<8x32xf32> to vector<8x32xbf16>
    %c0_4 = arith.constant 0 : index
    %c0_5 = arith.constant 0 : index
    %c0_6 = arith.constant 0 : index
    %7 = vector.load %arg3[%c0_4, %c0_5, %c0_6] : memref<1x8x32xbf16, #tpu.memory_space<vmem>>, vector<1x8x32xbf16>
    %8 = vector.shape_cast %7 : vector<1x8x32xbf16> to vector<8x32xbf16>
    %c0_7 = arith.constant 0 : index
    %c0_8 = arith.constant 0 : index
    %c0_9 = arith.constant 0 : index
    %9 = vector.load %arg4[%c0_7, %c0_8, %c0_9] : memref<1x8x32xbf16, #tpu.memory_space<vmem>>, vector<1x8x32xbf16>
    %10 = vector.shape_cast %9 : vector<1x8x32xbf16> to vector<8x32xbf16>
    %c0_10 = arith.constant 0 : index
    %c0_11 = arith.constant 0 : index
    %c0_12 = arith.constant 0 : index
    %11 = vector.load %arg8[%c0_10, %c0_11, %c0_12] : memref<1x1x8xf32, #tpu.memory_space<vmem>>, vector<1x1x8xf32>
    %12 = vector.shape_cast %11 : vector<1x1x8xf32> to vector<1x8xf32>
    %cst = arith.constant 1.000000e+00 : f32
    %13 = vector.broadcast %cst : f32 to vector<1x8xf32>
    %14 = arith.subf %12, %13 : vector<1x8xf32>
    %cst_13 = arith.constant 1.000000e+30 : f32
    %15 = vector.broadcast %cst_13 : f32 to vector<1x8xf32>
    %16 = arith.mulf %14, %15 : vector<1x8xf32>
    %17 = vector.extract_strided_slice %6 {offsets = [0, 0], sizes = [8, 16], strides = [1, 1]} : vector<8x32xbf16> to vector<8x16xbf16>
    %18 = vector.extract_strided_slice %8 {offsets = [0, 0], sizes = [8, 16], strides = [1, 1]} : vector<8x32xbf16> to vector<8x16xbf16>
    %cst_14 = arith.constant dense<0.000000e+00> : vector<8x8xf32>
    %19 = tpu.matmul %17, %18, %cst_14 {dimension_numbers = #tpu.dot_dimension_numbers<[1], [1], [0], [0], [0, 0, 1, 0], [], []>} : vector<8x16xbf16>, vector<8x16xbf16>, vector<8x8xf32> -> vector<8x8xf32>
    %c0_15 = arith.constant 0 : index
    %c0_16 = arith.constant 0 : index
    %c0_17 = arith.constant 0 : index
    %c0_18 = arith.constant 0 : index
    %20 = vector.load %arg5[%c0_15, %c0_16, %c0_17, %c0_18] : memref<1x2x8x8xbf16, #tpu.memory_space<vmem>>, vector<1x1x8x8xbf16>
    %21 = vector.shape_cast %20 : vector<1x1x8x8xbf16> to vector<8x8xbf16>
    %22 = arith.extf %21 : vector<8x8xbf16> to vector<8x8xf32>
    %23 = arith.addf %19, %22 : vector<8x8xf32>
    %cst_19 = arith.constant 2.500000e-01 : f32
    %24 = vector.broadcast %cst_19 : f32 to vector<8x8xf32>
    %25 = arith.mulf %23, %24 : vector<8x8xf32>
    %26 = vector.broadcast %16 : vector<1x8xf32> to vector<8x8xf32>
    %27 = arith.addf %25, %26 : vector<8x8xf32>
    %cst_20 = arith.constant dense<0xFF800000> : vector<8xf32>
    %28 = vector.multi_reduction <maximumf>, %27, %cst_20 [1] : vector<8x8xf32> to vector<8xf32>
    %29 = vector.shape_cast %28 : vector<8xf32> to vector<8x1xf32>
    %30 = vector.broadcast %29 : vector<8x1xf32> to vector<8x8xf32>
    %31 = arith.subf %27, %30 : vector<8x8xf32>
    %32 = math.exp %31 : vector<8x8xf32>
    %33 = vector.broadcast %12 : vector<1x8xf32> to vector<8x8xf32>
    %34 = arith.mulf %32, %33 : vector<8x8xf32>
    %cst_21 = arith.constant dense<0.000000e+00> : vector<8xf32>
    %35 = vector.multi_reduction <add>, %34, %cst_21 [1] : vector<8x8xf32> to vector<8xf32>
    %36 = vector.shape_cast %35 : vector<8xf32> to vector<8x1xf32>
    %cst_22 = arith.constant 1.000000e-30 : f32
    %37 = vector.broadcast %cst_22 : f32 to vector<8x1xf32>
    %38 = arith.maximumf %36, %37 : vector<8x1xf32>
    %39 = tpu.reciprocal %38 {approx = true} : vector<8x1xf32> -> vector<8x1xf32>
    %40 = vector.broadcast %39 : vector<8x1xf32> to vector<8x8xf32>
    %41 = arith.mulf %34, %40 : vector<8x8xf32>
    %42 = arith.truncf %41 : vector<8x8xf32> to vector<8x8xbf16>
    %43 = vector.extract_strided_slice %10 {offsets = [0, 0], sizes = [8, 16], strides = [1, 1]} : vector<8x32xbf16> to vector<8x16xbf16>
    %cst_23 = arith.constant dense<0.000000e+00> : vector<8x16xf32>
    %44 = tpu.matmul %42, %43, %cst_23 {dimension_numbers = #tpu.dot_dimension_numbers<[1], [0], [0], [1], [0, 0, 1, 1], [], []>} : vector<8x8xbf16>, vector<8x16xbf16>, vector<8x16xf32> -> vector<8x16xf32>
    %45 = vector.extract_strided_slice %6 {offsets = [0, 16], sizes = [8, 16], strides = [1, 1]} : vector<8x32xbf16> to vector<8x16xbf16>
    %46 = vector.extract_strided_slice %8 {offsets = [0, 16], sizes = [8, 16], strides = [1, 1]} : vector<8x32xbf16> to vector<8x16xbf16>
    %cst_24 = arith.constant dense<0.000000e+00> : vector<8x8xf32>
    %47 = tpu.matmul %45, %46, %cst_24 {dimension_numbers = #tpu.dot_dimension_numbers<[1], [1], [0], [0], [0, 0, 1, 0], [], []>} : vector<8x16xbf16>, vector<8x16xbf16>, vector<8x8xf32> -> vector<8x8xf32>
    %c0_25 = arith.constant 0 : index
    %c1 = arith.constant 1 : index
    %c0_26 = arith.constant 0 : index
    %c0_27 = arith.constant 0 : index
    %48 = vector.load %arg5[%c0_25, %c1, %c0_26, %c0_27] : memref<1x2x8x8xbf16, #tpu.memory_space<vmem>>, vector<1x1x8x8xbf16>
    %49 = vector.shape_cast %48 : vector<1x1x8x8xbf16> to vector<8x8xbf16>
    %50 = arith.extf %49 : vector<8x8xbf16> to vector<8x8xf32>
    %51 = arith.addf %47, %50 : vector<8x8xf32>
    %cst_28 = arith.constant 2.500000e-01 : f32
    %52 = vector.broadcast %cst_28 : f32 to vector<8x8xf32>
    %53 = arith.mulf %51, %52 : vector<8x8xf32>
    %54 = vector.broadcast %16 : vector<1x8xf32> to vector<8x8xf32>
    %55 = arith.addf %53, %54 : vector<8x8xf32>
    %cst_29 = arith.constant dense<0xFF800000> : vector<8xf32>
    %56 = vector.multi_reduction <maximumf>, %55, %cst_29 [1] : vector<8x8xf32> to vector<8xf32>
    %57 = vector.shape_cast %56 : vector<8xf32> to vector<8x1xf32>
    %58 = vector.broadcast %57 : vector<8x1xf32> to vector<8x8xf32>
    %59 = arith.subf %55, %58 : vector<8x8xf32>
    %60 = math.exp %59 : vector<8x8xf32>
    %61 = vector.broadcast %12 : vector<1x8xf32> to vector<8x8xf32>
    %62 = arith.mulf %60, %61 : vector<8x8xf32>
    %cst_30 = arith.constant dense<0.000000e+00> : vector<8xf32>
    %63 = vector.multi_reduction <add>, %62, %cst_30 [1] : vector<8x8xf32> to vector<8xf32>
    %64 = vector.shape_cast %63 : vector<8xf32> to vector<8x1xf32>
    %cst_31 = arith.constant 1.000000e-30 : f32
    %65 = vector.broadcast %cst_31 : f32 to vector<8x1xf32>
    %66 = arith.maximumf %64, %65 : vector<8x1xf32>
    %67 = tpu.reciprocal %66 {approx = true} : vector<8x1xf32> -> vector<8x1xf32>
    %68 = vector.broadcast %67 : vector<8x1xf32> to vector<8x8xf32>
    %69 = arith.mulf %62, %68 : vector<8x8xf32>
    %70 = arith.truncf %69 : vector<8x8xf32> to vector<8x8xbf16>
    %71 = vector.extract_strided_slice %10 {offsets = [0, 16], sizes = [8, 16], strides = [1, 1]} : vector<8x32xbf16> to vector<8x16xbf16>
    %cst_32 = arith.constant dense<0.000000e+00> : vector<8x16xf32>
    %72 = tpu.matmul %70, %71, %cst_32 {dimension_numbers = #tpu.dot_dimension_numbers<[1], [0], [0], [1], [0, 0, 1, 1], [], []>} : vector<8x8xbf16>, vector<8x16xbf16>, vector<8x16xf32> -> vector<8x16xf32>
    %73 = tpu.concatenate %44, %72 in 1 : vector<8x16xf32>, vector<8x16xf32> -> vector<8x32xf32>
    %74 = arith.truncf %73 : vector<8x32xf32> to vector<8x32xbf16>
    %c0_33 = arith.constant 0 : index
    %c0_34 = arith.constant 0 : index
    %c0_35 = arith.constant 0 : index
    %75 = vector.load %arg9[%c0_33, %c0_34, %c0_35] : memref<1x8x32xbf16, #tpu.memory_space<vmem>>, vector<1x8x32xbf16>
    %76 = vector.shape_cast %75 : vector<1x8x32xbf16> to vector<8x32xbf16>
    %77 = vector.shape_cast %74 : vector<8x32xbf16> to vector<1x8x32xbf16>
    tpu.vector_store %arg9[%c0_33, %c0_34, %c0_35], %77 {strides = array<i32>} : memref<1x8x32xbf16, #tpu.memory_space<vmem>>, vector<1x8x32xbf16>,
    return
  }
  func.func @transform_0(%arg0: i32, %arg1: i32) -> (i32, i32, i32) {
    %c0_i32 = arith.constant 0 : i32
    %c0_i32_0 = arith.constant 0 : i32
    return %arg0, %arg1, %c0_i32 : i32, i32, i32
  }
  func.func @transform_1(%arg0: i32, %arg1: i32) -> (i32, i32, i32) {
    %c0_i32 = arith.constant 0 : i32
    %c0_i32_0 = arith.constant 0 : i32
    %c0_i32_1 = arith.constant 0 : i32
    return %arg0, %c0_i32, %c0_i32_0 : i32, i32, i32
  }
  func.func @transform_2(%arg0: i32, %arg1: i32) -> (i32, i32, i32) {
    %c0_i32 = arith.constant 0 : i32
    %c0_i32_0 = arith.constant 0 : i32
    %c0_i32_1 = arith.constant 0 : i32
    return %arg0, %c0_i32, %c0_i32_0 : i32, i32, i32
  }
  func.func @transform_3(%arg0: i32, %arg1: i32) -> (i32, i32, i32, i32) {
    %c0_i32 = arith.constant 0 : i32
    %c0_i32_0 = arith.constant 0 : i32
    %c0_i32_1 = arith.constant 0 : i32
    return %arg0, %c0_i32, %arg1, %c0_i32_0 : i32, i32, i32, i32
  }
  func.func @transform_4(%arg0: i32, %arg1: i32) -> (i32, i32) {
    %c0_i32 = arith.constant 0 : i32
    %c0_i32_0 = arith.constant 0 : i32
    %c0_i32_1 = arith.constant 0 : i32
    return %c0_i32, %c0_i32_0 : i32, i32
  }
  func.func @transform_5(%arg0: i32, %arg1: i32) -> (i32, i32) {
    %c0_i32 = arith.constant 0 : i32
    %c0_i32_0 = arith.constant 0 : i32
    %c0_i32_1 = arith.constant 0 : i32
    return %c0_i32, %c0_i32_0 : i32, i32
  }
  func.func @transform_6(%arg0: i32, %arg1: i32) -> (i32, i32, i32) {
    %c0_i32 = arith.constant 0 : i32
    %c0_i32_0 = arith.constant 0 : i32
    %c0_i32_1 = arith.constant 0 : i32
    return %arg0, %c0_i32, %c0_i32_0 : i32, i32, i32
  }
  func.func @transform_7(%arg0: i32, %arg1: i32) -> (i32, i32, i32) {
    %c0_i32 = arith.constant 0 : i32
    %c0_i32_0 = arith.constant 0 : i32
    return %arg0, %arg1, %c0_i32 : i32, i32, i32
  }
}

module attributes {stable_mosaic.version = 11 : i64} {
  func.func @kern(%arg0: i32, %arg1: memref<1x14x32xbf16, #tpu.memory_space<vmem>>, %arg2: memref<7x32xf32, #tpu.memory_space<vmem>>, %arg3: memref<1x32xf32, #tpu.memory_space<vmem>>, %arg4: memref<1x8x32xf32, #tpu.memory_space<vmem>>) attributes {dimension_semantics = [#tpu.dimension_semantics<parallel>], iteration_bounds = array<i64: 2>, scalar_prefetch = 0 : i64, scratch_operands = 0 : i64, tpu.core_type = #tpu.core_type<tc>, window_params = [{transform_indices = @transform_0, window_bounds = array<i64: 1, 14, 32>}, {pipeline_mode = #tpu.pipeline_mode<synchronous>, transform_indices = @transform_1, window_bounds = array<i64: 7, 32>}, {pipeline_mode = #tpu.pipeline_mode<synchronous>, transform_indices = @transform_2, window_bounds = array<i64: 1, 32>}, {transform_indices = @transform_3, window_bounds = array<i64: 1, 8, 32>}]} {
    %cst = arith.constant 0.000000e+00 : f32
    %0 = vector.broadcast %cst : f32 to vector<1x8x32xf32>
    %c0 = arith.constant 0 : index
    %c0_0 = arith.constant 0 : index
    %1 = vector.load %arg3[%c0, %c0_0] : memref<1x32xf32, #tpu.memory_space<vmem>>, vector<1x32xf32>
    %2 = vector.shape_cast %1 : vector<1x32xf32> to vector<1x1x32xf32>
    %3 = vector.broadcast %2 : vector<1x1x32xf32> to vector<1x8x32xf32>
    %4 = arith.addf %0, %3 : vector<1x8x32xf32>
    %c0_1 = arith.constant 0 : index
    %c0_2 = arith.constant 0 : index
    %c0_3 = arith.constant 0 : index
    %5 = vector.load %arg1[%c0_1, %c0_2, %c0_3] : memref<1x14x32xbf16, #tpu.memory_space<vmem>>, vector<1x8x32xbf16>
    %6 = vector.shape_cast %5 : vector<1x8x32xbf16> to vector<8x32xbf16>
    %7 = arith.extf %6 : vector<8x32xbf16> to vector<8x32xf32>
    %8 = vector.shape_cast %7 : vector<8x32xf32> to vector<1x8x32xf32>
    %c0_4 = arith.constant 0 : index
    %c0_5 = arith.constant 0 : index
    %9 = vector.load %arg2[%c0_4, %c0_5] : memref<7x32xf32, #tpu.memory_space<vmem>>, vector<1x32xf32>
    %10 = vector.shape_cast %9 : vector<1x32xf32> to vector<1x1x32xf32>
    %11 = vector.broadcast %10 : vector<1x1x32xf32> to vector<1x8x32xf32>
    %12 = arith.mulf %8, %11 : vector<1x8x32xf32>
    %13 = arith.addf %4, %12 : vector<1x8x32xf32>
    %c0_6 = arith.constant 0 : index
    %c1 = arith.constant 1 : index
    %c0_7 = arith.constant 0 : index
    %14 = vector.load %arg1[%c0_6, %c1, %c0_7] : memref<1x14x32xbf16, #tpu.memory_space<vmem>>, vector<1x8x32xbf16>
    %15 = vector.shape_cast %14 : vector<1x8x32xbf16> to vector<8x32xbf16>
    %16 = arith.extf %15 : vector<8x32xbf16> to vector<8x32xf32>
    %17 = vector.shape_cast %16 : vector<8x32xf32> to vector<1x8x32xf32>
    %c1_8 = arith.constant 1 : index
    %c0_9 = arith.constant 0 : index
    %18 = vector.load %arg2[%c1_8, %c0_9] : memref<7x32xf32, #tpu.memory_space<vmem>>, vector<1x32xf32>
    %19 = vector.shape_cast %18 : vector<1x32xf32> to vector<1x1x32xf32>
    %20 = vector.broadcast %19 : vector<1x1x32xf32> to vector<1x8x32xf32>
    %21 = arith.mulf %17, %20 : vector<1x8x32xf32>
    %22 = arith.addf %13, %21 : vector<1x8x32xf32>
    %c0_10 = arith.constant 0 : index
    %c2 = arith.constant 2 : index
    %c0_11 = arith.constant 0 : index
    %23 = vector.load %arg1[%c0_10, %c2, %c0_11] : memref<1x14x32xbf16, #tpu.memory_space<vmem>>, vector<1x8x32xbf16>
    %24 = vector.shape_cast %23 : vector<1x8x32xbf16> to vector<8x32xbf16>
    %25 = arith.extf %24 : vector<8x32xbf16> to vector<8x32xf32>
    %26 = vector.shape_cast %25 : vector<8x32xf32> to vector<1x8x32xf32>
    %c2_12 = arith.constant 2 : index
    %c0_13 = arith.constant 0 : index
    %27 = vector.load %arg2[%c2_12, %c0_13] : memref<7x32xf32, #tpu.memory_space<vmem>>, vector<1x32xf32>
    %28 = vector.shape_cast %27 : vector<1x32xf32> to vector<1x1x32xf32>
    %29 = vector.broadcast %28 : vector<1x1x32xf32> to vector<1x8x32xf32>
    %30 = arith.mulf %26, %29 : vector<1x8x32xf32>
    %31 = arith.addf %22, %30 : vector<1x8x32xf32>
    %c0_14 = arith.constant 0 : index
    %c3 = arith.constant 3 : index
    %c0_15 = arith.constant 0 : index
    %32 = vector.load %arg1[%c0_14, %c3, %c0_15] : memref<1x14x32xbf16, #tpu.memory_space<vmem>>, vector<1x8x32xbf16>
    %33 = vector.shape_cast %32 : vector<1x8x32xbf16> to vector<8x32xbf16>
    %34 = arith.extf %33 : vector<8x32xbf16> to vector<8x32xf32>
    %35 = vector.shape_cast %34 : vector<8x32xf32> to vector<1x8x32xf32>
    %c3_16 = arith.constant 3 : index
    %c0_17 = arith.constant 0 : index
    %36 = vector.load %arg2[%c3_16, %c0_17] : memref<7x32xf32, #tpu.memory_space<vmem>>, vector<1x32xf32>
    %37 = vector.shape_cast %36 : vector<1x32xf32> to vector<1x1x32xf32>
    %38 = vector.broadcast %37 : vector<1x1x32xf32> to vector<1x8x32xf32>
    %39 = arith.mulf %35, %38 : vector<1x8x32xf32>
    %40 = arith.addf %31, %39 : vector<1x8x32xf32>
    %c0_18 = arith.constant 0 : index
    %c4 = arith.constant 4 : index
    %c0_19 = arith.constant 0 : index
    %41 = vector.load %arg1[%c0_18, %c4, %c0_19] : memref<1x14x32xbf16, #tpu.memory_space<vmem>>, vector<1x8x32xbf16>
    %42 = vector.shape_cast %41 : vector<1x8x32xbf16> to vector<8x32xbf16>
    %43 = arith.extf %42 : vector<8x32xbf16> to vector<8x32xf32>
    %44 = vector.shape_cast %43 : vector<8x32xf32> to vector<1x8x32xf32>
    %c4_20 = arith.constant 4 : index
    %c0_21 = arith.constant 0 : index
    %45 = vector.load %arg2[%c4_20, %c0_21] : memref<7x32xf32, #tpu.memory_space<vmem>>, vector<1x32xf32>
    %46 = vector.shape_cast %45 : vector<1x32xf32> to vector<1x1x32xf32>
    %47 = vector.broadcast %46 : vector<1x1x32xf32> to vector<1x8x32xf32>
    %48 = arith.mulf %44, %47 : vector<1x8x32xf32>
    %49 = arith.addf %40, %48 : vector<1x8x32xf32>
    %c0_22 = arith.constant 0 : index
    %c5 = arith.constant 5 : index
    %c0_23 = arith.constant 0 : index
    %50 = vector.load %arg1[%c0_22, %c5, %c0_23] : memref<1x14x32xbf16, #tpu.memory_space<vmem>>, vector<1x8x32xbf16>
    %51 = vector.shape_cast %50 : vector<1x8x32xbf16> to vector<8x32xbf16>
    %52 = arith.extf %51 : vector<8x32xbf16> to vector<8x32xf32>
    %53 = vector.shape_cast %52 : vector<8x32xf32> to vector<1x8x32xf32>
    %c5_24 = arith.constant 5 : index
    %c0_25 = arith.constant 0 : index
    %54 = vector.load %arg2[%c5_24, %c0_25] : memref<7x32xf32, #tpu.memory_space<vmem>>, vector<1x32xf32>
    %55 = vector.shape_cast %54 : vector<1x32xf32> to vector<1x1x32xf32>
    %56 = vector.broadcast %55 : vector<1x1x32xf32> to vector<1x8x32xf32>
    %57 = arith.mulf %53, %56 : vector<1x8x32xf32>
    %58 = arith.addf %49, %57 : vector<1x8x32xf32>
    %c0_26 = arith.constant 0 : index
    %c6 = arith.constant 6 : index
    %c0_27 = arith.constant 0 : index
    %59 = vector.load %arg1[%c0_26, %c6, %c0_27] : memref<1x14x32xbf16, #tpu.memory_space<vmem>>, vector<1x8x32xbf16>
    %60 = vector.shape_cast %59 : vector<1x8x32xbf16> to vector<8x32xbf16>
    %61 = arith.extf %60 : vector<8x32xbf16> to vector<8x32xf32>
    %62 = vector.shape_cast %61 : vector<8x32xf32> to vector<1x8x32xf32>
    %c6_28 = arith.constant 6 : index
    %c0_29 = arith.constant 0 : index
    %63 = vector.load %arg2[%c6_28, %c0_29] : memref<7x32xf32, #tpu.memory_space<vmem>>, vector<1x32xf32>
    %64 = vector.shape_cast %63 : vector<1x32xf32> to vector<1x1x32xf32>
    %65 = vector.broadcast %64 : vector<1x1x32xf32> to vector<1x8x32xf32>
    %66 = arith.mulf %62, %65 : vector<1x8x32xf32>
    %67 = arith.addf %58, %66 : vector<1x8x32xf32>
    %c0_30 = arith.constant 0 : index
    %c0_31 = arith.constant 0 : index
    %c0_32 = arith.constant 0 : index
    %68 = vector.load %arg4[%c0_30, %c0_31, %c0_32] : memref<1x8x32xf32, #tpu.memory_space<vmem>>, vector<1x8x32xf32>
    tpu.vector_store %arg4[%c0_30, %c0_31, %c0_32], %67 {strides = array<i32>} : memref<1x8x32xf32, #tpu.memory_space<vmem>>, vector<1x8x32xf32>,
    return
  }
  func.func @transform_0(%arg0: i32) -> (i32, i32, i32) {
    %c0_i32 = arith.constant 0 : i32
    %c0_i32_0 = arith.constant 0 : i32
    %c0_i32_1 = arith.constant 0 : i32
    return %arg0, %c0_i32, %c0_i32_0 : i32, i32, i32
  }
  func.func @transform_1(%arg0: i32) -> (i32, i32) {
    %c0_i32 = arith.constant 0 : i32
    %c0_i32_0 = arith.constant 0 : i32
    %c0_i32_1 = arith.constant 0 : i32
    return %c0_i32, %c0_i32_0 : i32, i32
  }
  func.func @transform_2(%arg0: i32) -> (i32, i32) {
    %c0_i32 = arith.constant 0 : i32
    %c0_i32_0 = arith.constant 0 : i32
    %c0_i32_1 = arith.constant 0 : i32
    return %c0_i32, %c0_i32_0 : i32, i32
  }
  func.func @transform_3(%arg0: i32) -> (i32, i32, i32) {
    %c0_i32 = arith.constant 0 : i32
    %c0_i32_0 = arith.constant 0 : i32
    %c0_i32_1 = arith.constant 0 : i32
    return %arg0, %c0_i32, %c0_i32_0 : i32, i32, i32
  }
}

module attributes {stable_mosaic.version = 11 : i64} {
  func.func @kern(%arg0: i32, %arg1: memref<16x32xf32, #tpu.memory_space<vmem>>, %arg2: memref<1x32xf32, #tpu.memory_space<vmem>>, %arg3: memref<1x32xf32, #tpu.memory_space<vmem>>, %arg4: memref<16x32xf32, #tpu.memory_space<vmem>>) attributes {dimension_semantics = [#tpu.dimension_semantics<parallel>], iteration_bounds = array<i64: 1>, scalar_prefetch = 0 : i64, scratch_operands = 0 : i64, tpu.core_type = #tpu.core_type<tc>, window_params = [{transform_indices = @transform_0, window_bounds = array<i64: 16, 32>}, {pipeline_mode = #tpu.pipeline_mode<synchronous>, transform_indices = @transform_1, window_bounds = array<i64: 1, 32>}, {pipeline_mode = #tpu.pipeline_mode<synchronous>, transform_indices = @transform_2, window_bounds = array<i64: 1, 32>}, {transform_indices = @transform_3, window_bounds = array<i64: 16, 32>}]} {
    %c0 = arith.constant 0 : index
    %c0_0 = arith.constant 0 : index
    %0 = vector.load %arg1[%c0, %c0_0] : memref<16x32xf32, #tpu.memory_space<vmem>>, vector<16x32xf32>
    %cst = arith.constant dense<0.000000e+00> : vector<16xf32>
    %1 = vector.multi_reduction <add>, %0, %cst [1] : vector<16x32xf32> to vector<16xf32>
    %2 = vector.shape_cast %1 : vector<16xf32> to vector<16x1xf32>
    %cst_1 = arith.constant 3.200000e+01 : f32
    %3 = vector.broadcast %cst_1 : f32 to vector<16x1xf32>
    %4 = arith.divf %2, %3 : vector<16x1xf32>
    %5 = vector.broadcast %4 : vector<16x1xf32> to vector<16x32xf32>
    %6 = arith.subf %0, %5 : vector<16x32xf32>
    %7 = arith.mulf %6, %6 : vector<16x32xf32>
    %cst_2 = arith.constant dense<0.000000e+00> : vector<16xf32>
    %8 = vector.multi_reduction <add>, %7, %cst_2 [1] : vector<16x32xf32> to vector<16xf32>
    %9 = vector.shape_cast %8 : vector<16xf32> to vector<16x1xf32>
    %cst_3 = arith.constant 3.200000e+01 : f32
    %10 = vector.broadcast %cst_3 : f32 to vector<16x1xf32>
    %11 = arith.divf %9, %10 : vector<16x1xf32>
    %cst_4 = arith.constant 9.99999974E-6 : f32
    %12 = vector.broadcast %cst_4 : f32 to vector<16x1xf32>
    %13 = arith.addf %11, %12 : vector<16x1xf32>
    %14 = math.rsqrt %13 : vector<16x1xf32>
    %15 = vector.broadcast %14 : vector<16x1xf32> to vector<16x32xf32>
    %16 = arith.mulf %6, %15 : vector<16x32xf32>
    %c0_5 = arith.constant 0 : index
    %c0_6 = arith.constant 0 : index
    %17 = vector.load %arg2[%c0_5, %c0_6] : memref<1x32xf32, #tpu.memory_space<vmem>>, vector<1x32xf32>
    %18 = vector.broadcast %17 : vector<1x32xf32> to vector<16x32xf32>
    %19 = arith.mulf %16, %18 : vector<16x32xf32>
    %c0_7 = arith.constant 0 : index
    %c0_8 = arith.constant 0 : index
    %20 = vector.load %arg3[%c0_7, %c0_8] : memref<1x32xf32, #tpu.memory_space<vmem>>, vector<1x32xf32>
    %21 = vector.broadcast %20 : vector<1x32xf32> to vector<16x32xf32>
    %22 = arith.addf %19, %21 : vector<16x32xf32>
    %c0_9 = arith.constant 0 : index
    %c0_10 = arith.constant 0 : index
    %23 = vector.load %arg4[%c0_9, %c0_10] : memref<16x32xf32, #tpu.memory_space<vmem>>, vector<16x32xf32>
    tpu.vector_store %arg4[%c0_9, %c0_10], %22 {strides = array<i32>} : memref<16x32xf32, #tpu.memory_space<vmem>>, vector<16x32xf32>,
    return
  }
  func.func @transform_0(%arg0: i32) -> (i32, i32) {
    %c0_i32 = arith.constant 0 : i32
    %c0_i32_0 = arith.constant 0 : i32
    return %arg0, %c0_i32 : i32, i32
  }
  func.func @transform_1(%arg0: i32) -> (i32, i32) {
    %c0_i32 = arith.constant 0 : i32
    %c0_i32_0 = arith.constant 0 : i32
    %c0_i32_1 = arith.constant 0 : i32
    return %c0_i32, %c0_i32_0 : i32, i32
  }
  func.func @transform_2(%arg0: i32) -> (i32, i32) {
    %c0_i32 = arith.constant 0 : i32
    %c0_i32_0 = arith.constant 0 : i32
    %c0_i32_1 = arith.constant 0 : i32
    return %c0_i32, %c0_i32_0 : i32, i32
  }
  func.func @transform_3(%arg0: i32) -> (i32, i32) {
    %c0_i32 = arith.constant 0 : i32
    %c0_i32_0 = arith.constant 0 : i32
    return %arg0, %c0_i32 : i32, i32
  }
}

module attributes {stable_mosaic.version = 11 : i64} {
  func.func @kernel(%arg0: i32, %arg1: i32, %arg2: i32, %arg3: memref<16x256xbf16, #tpu.memory_space<vmem>>, %arg4: memref<256x128xbf16, #tpu.memory_space<vmem>>, %arg5: memref<1x128xf32, #tpu.memory_space<vmem>>, %arg6: memref<16x128xbf16, #tpu.memory_space<vmem>>, %arg7: memref<16x128xf32, #tpu.memory_space<vmem>>) attributes {dimension_semantics = [#tpu.dimension_semantics<parallel>, #tpu.dimension_semantics<parallel>, #tpu.dimension_semantics<arbitrary>], iteration_bounds = array<i64: 1, 1, 1>, scalar_prefetch = 0 : i64, scratch_operands = 1 : i64, tpu.core_type = #tpu.core_type<tc>, window_params = [{transform_indices = @transform_0, window_bounds = array<i64: 16, 256>}, {transform_indices = @transform_1, window_bounds = array<i64: 256, 128>}, {transform_indices = @transform_2, window_bounds = array<i64: 1, 128>}, {transform_indices = @transform_3, window_bounds = array<i64: 16, 128>}]} {
    %c0_i32 = arith.constant 0 : i32
    %0 = arith.cmpi eq, %arg2, %c0_i32 : i32
    %1 = arith.extui %0 : i1 to i32
    %c0_i32_0 = arith.constant 0 : i32
    %2 = arith.cmpi ne, %1, %c0_i32_0 : i32
    scf.if %2 {
      %cst_10 = arith.constant 0.000000e+00 : f32
      %12 = vector.broadcast %cst_10 : f32 to vector<16x128xf32>
      %c0_11 = arith.constant 0 : index
      %c0_12 = arith.constant 0 : index
      %13 = vector.load %arg7[%c0_11, %c0_12] : memref<16x128xf32, #tpu.memory_space<vmem>>, vector<16x128xf32>
      tpu.vector_store %arg7[%c0_11, %c0_12], %12 {strides = array<i32>} : memref<16x128xf32, #tpu.memory_space<vmem>>, vector<16x128xf32>,
    } else {
    }
    %c0 = arith.constant 0 : index
    %c0_1 = arith.constant 0 : index
    %3 = vector.load %arg7[%c0, %c0_1] : memref<16x128xf32, #tpu.memory_space<vmem>>, vector<16x128xf32>
    %c0_2 = arith.constant 0 : index
    %c0_3 = arith.constant 0 : index
    %4 = vector.load %arg3[%c0_2, %c0_3] : memref<16x256xbf16, #tpu.memory_space<vmem>>, vector<16x256xbf16>
    %c0_4 = arith.constant 0 : index
    %c0_5 = arith.constant 0 : index
    %5 = vector.load %arg4[%c0_4, %c0_5] : memref<256x128xbf16, #tpu.memory_space<vmem>>, vector<256x128xbf16>
    %cst = arith.constant dense<0.000000e+00> : vector<16x128xf32>
    %6 = tpu.matmul %4, %5, %cst {dimension_numbers = #tpu.dot_dimension_numbers<[1], [0], [0], [1], [0, 0, 1, 1], [], []>} : vector<16x256xbf16>, vector<256x128xbf16>, vector<16x128xf32> -> vector<16x128xf32>
    %7 = arith.addf %3, %6 : vector<16x128xf32>
    %c0_6 = arith.constant 0 : index
    %c0_7 = arith.constant 0 : index
    %8 = vector.load %arg7[%c0_6, %c0_7] : memref<16x128xf32, #tpu.memory_space<vmem>>, vector<16x128xf32>
    tpu.vector_store %arg7[%c0_6, %c0_7], %7 {strides = array<i32>} : memref<16x128xf32, #tpu.memory_space<vmem>>, vector<16x128xf32>,
    %c0_i32_8 = arith.constant 0 : i32
    %9 = arith.cmpi eq, %arg2, %c0_i32_8 : i32
    %10 = arith.extui %9 : i1 to i32
    %c0_i32_9 = arith.constant 0 : i32
    %11 = arith.cmpi ne, %10, %c0_i32_9 : i32
    scf.if %11 {
      %c0_10 = arith.constant 0 : index
      %c0_11 = arith.constant 0 : index
      %12 = vector.load %arg7[%c0_10, %c0_11] : memref<16x128xf32, #tpu.memory_space<vmem>>, vector<16x128xf32>
      %c0_12 = arith.constant 0 : index
      %c0_13 = arith.constant 0 : index
      %13 = vector.load %arg5[%c0_12, %c0_13] : memref<1x128xf32, #tpu.memory_space<vmem>>, vector<1x128xf32>
      %14 = vector.broadcast %13 : vector<1x128xf32> to vector<16x128xf32>
      %15 = arith.addf %12, %14 : vector<16x128xf32>
      %cst_14 = arith.constant 0.000000e+00 : f32
      %16 = vector.broadcast %cst_14 : f32 to vector<16x128xf32>
      %17 = arith.maximumf %15, %16 : vector<16x128xf32>
      %18 = arith.truncf %17 : vector<16x128xf32> to vector<16x128xbf16>
      %c0_15 = arith.constant 0 : index
      %c0_16 = arith.constant 0 : index
      %19 = vector.load %arg6[%c0_15, %c0_16] : memref<16x128xbf16, #tpu.memory_space<vmem>>, vector<16x128xbf16>
      tpu.vector_store %arg6[%c0_15, %c0_16], %18 {strides = array<i32>} : memref<16x128xbf16, #tpu.memory_space<vmem>>, vector<16x128xbf16>,
    } else {
    }
    return
  }
  func.func @transform_0(%arg0: i32, %arg1: i32, %arg2: i32) -> (i32, i32) {
    %c0_i32 = arith.constant 0 : i32
    return %arg0, %arg2 : i32, i32
  }
  func.func @transform_1(%arg0: i32, %arg1: i32, %arg2: i32) -> (i32, i32) {
    %c0_i32 = arith.constant 0 : i32
    return %arg2, %arg1 : i32, i32
  }
  func.func @transform_2(%arg0: i32, %arg1: i32, %arg2: i32) -> (i32, i32) {
    %c0_i32 = arith.constant 0 : i32
    %c0_i32_0 = arith.constant 0 : i32
    return %c0_i32, %arg1 : i32, i32
  }
  func.func @transform_3(%arg0: i32, %arg1: i32, %arg2: i32) -> (i32, i32) {
    %c0_i32 = arith.constant 0 : i32
    return %arg0, %arg1 : i32, i32
  }
}

module attributes {stable_mosaic.version = 11 : i64} {
  func.func @kern(%arg0: i32, %arg1: memref<16x32xbf16, #tpu.memory_space<vmem>>, %arg2: memref<1x32xf32, #tpu.memory_space<vmem>>, %arg3: memref<1x32xf32, #tpu.memory_space<vmem>>, %arg4: memref<16x32xbf16, #tpu.memory_space<vmem>>) attributes {dimension_semantics = [#tpu.dimension_semantics<parallel>], iteration_bounds = array<i64: 1>, scalar_prefetch = 0 : i64, scratch_operands = 0 : i64, tpu.core_type = #tpu.core_type<tc>, window_params = [{transform_indices = @transform_0, window_bounds = array<i64: 16, 32>}, {pipeline_mode = #tpu.pipeline_mode<synchronous>, transform_indices = @transform_1, window_bounds = array<i64: 1, 32>}, {pipeline_mode = #tpu.pipeline_mode<synchronous>, transform_indices = @transform_2, window_bounds = array<i64: 1, 32>}, {transform_indices = @transform_3, window_bounds = array<i64: 16, 32>}]} {
    %c0 = arith.constant 0 : index
    %c0_0 = arith.constant 0 : index
    %0 = vector.load %arg1[%c0, %c0_0] : memref<16x32xbf16, #tpu.memory_space<vmem>>, vector<16x32xbf16>
    %1 = arith.extf %0 : vector<16x32xbf16> to vector<16x32xf32>
    %cst = arith.constant dense<0.000000e+00> : vector<16xf32>
    %2 = vector.multi_reduction <add>, %1, %cst [1] : vector<16x32xf32> to vector<16xf32>
    %3 = vector.shape_cast %2 : vector<16xf32> to vector<16x1xf32>
    %cst_1 = arith.constant 3.200000e+01 : f32
    %4 = vector.broadcast %cst_1 : f32 to vector<16x1xf32>
    %5 = arith.divf %3, %4 : vector<16x1xf32>
    %6 = vector.broadcast %5 : vector<16x1xf32> to vector<16x32xf32>
    %7 = arith.subf %1, %6 : vector<16x32xf32>
    %8 = arith.mulf %7, %7 : vector<16x32xf32>
    %cst_2 = arith.constant dense<0.000000e+00> : vector<16xf32>
    %9 = vector.multi_reduction <add>, %8, %cst_2 [1] : vector<16x32xf32> to vector<16xf32>
    %10 = vector.shape_cast %9 : vector<16xf32> to vector<16x1xf32>
    %cst_3 = arith.constant 3.200000e+01 : f32
    %11 = vector.broadcast %cst_3 : f32 to vector<16x1xf32>
    %12 = arith.divf %10, %11 : vector<16x1xf32>
    %cst_4 = arith.constant 9.99999974E-6 : f32
    %13 = vector.broadcast %cst_4 : f32 to vector<16x1xf32>
    %14 = arith.addf %12, %13 : vector<16x1xf32>
    %15 = math.rsqrt %14 : vector<16x1xf32>
    %16 = vector.broadcast %15 : vector<16x1xf32> to vector<16x32xf32>
    %17 = arith.mulf %7, %16 : vector<16x32xf32>
    %c0_5 = arith.constant 0 : index
    %c0_6 = arith.constant 0 : index
    %18 = vector.load %arg2[%c0_5, %c0_6] : memref<1x32xf32, #tpu.memory_space<vmem>>, vector<1x32xf32>
    %19 = vector.broadcast %18 : vector<1x32xf32> to vector<16x32xf32>
    %20 = arith.mulf %17, %19 : vector<16x32xf32>
    %c0_7 = arith.constant 0 : index
    %c0_8 = arith.constant 0 : index
    %21 = vector.load %arg3[%c0_7, %c0_8] : memref<1x32xf32, #tpu.memory_space<vmem>>, vector<1x32xf32>
    %22 = vector.broadcast %21 : vector<1x32xf32> to vector<16x32xf32>
    %23 = arith.addf %20, %22 : vector<16x32xf32>
    %24 = arith.truncf %23 : vector<16x32xf32> to vector<16x32xbf16>
    %c0_9 = arith.constant 0 : index
    %c0_10 = arith.constant 0 : index
    %25 = vector.load %arg4[%c0_9, %c0_10] : memref<16x32xbf16, #tpu.memory_space<vmem>>, vector<16x32xbf16>
    tpu.vector_store %arg4[%c0_9, %c0_10], %24 {strides = array<i32>} : memref<16x32xbf16, #tpu.memory_space<vmem>>, vector<16x32xbf16>,
    return
  }
  func.func @transform_0(%arg0: i32) -> (i32, i32) {
    %c0_i32 = arith.constant 0 : i32
    %c0_i32_0 = arith.constant 0 : i32
    return %arg0, %c0_i32 : i32, i32
  }
  func.func @transform_1(%arg0: i32) -> (i32, i32) {
    %c0_i32 = arith.constant 0 : i32
    %c0_i32_0 = arith.constant 0 : i32
    %c0_i32_1 = arith.constant 0 : i32
    return %c0_i32, %c0_i32_0 : i32, i32
  }
  func.func @transform_2(%arg0: i32) -> (i32, i32) {
    %c0_i32 = arith.constant 0 : i32
    %c0_i32_0 = arith.constant 0 : i32
    %c0_i32_1 = arith.constant 0 : i32
    return %c0_i32, %c0_i32_0 : i32, i32
  }
  func.func @transform_3(%arg0: i32) -> (i32, i32) {
    %c0_i32 = arith.constant 0 : i32
    %c0_i32_0 = arith.constant 0 : i32
    return %arg0, %c0_i32 : i32, i32
  }
}

module attributes {stable_mosaic.version = 11 : i64} {
  func.func @kern(%arg0: i32, %arg1: memref<32x32xf32, #tpu.memory_space<vmem>>, %arg2: memref<1x32xf32, #tpu.memory_space<vmem>>, %arg3: memref<1x32xf32, #tpu.memory_space<vmem>>, %arg4: memref<32x32xbf16, #tpu.memory_space<vmem>>) attributes {dimension_semantics = [#tpu.dimension_semantics<parallel>], iteration_bounds = array<i64: 1>, scalar_prefetch = 0 : i64, scratch_operands = 0 : i64, tpu.core_type = #tpu.core_type<tc>, window_params = [{transform_indices = @transform_0, window_bounds = array<i64: 32, 32>}, {pipeline_mode = #tpu.pipeline_mode<synchronous>, transform_indices = @transform_1, window_bounds = array<i64: 1, 32>}, {pipeline_mode = #tpu.pipeline_mode<synchronous>, transform_indices = @transform_2, window_bounds = array<i64: 1, 32>}, {transform_indices = @transform_3, window_bounds = array<i64: 32, 32>}]} {
    %c0 = arith.constant 0 : index
    %c0_0 = arith.constant 0 : index
    %0 = vector.load %arg1[%c0, %c0_0] : memref<32x32xf32, #tpu.memory_space<vmem>>, vector<32x32xf32>
    %cst = arith.constant dense<0.000000e+00> : vector<32xf32>
    %1 = vector.multi_reduction <add>, %0, %cst [1] : vector<32x32xf32> to vector<32xf32>
    %2 = vector.shape_cast %1 : vector<32xf32> to vector<32x1xf32>
    %cst_1 = arith.constant 3.200000e+01 : f32
    %3 = vector.broadcast %cst_1 : f32 to vector<32x1xf32>
    %4 = arith.divf %2, %3 : vector<32x1xf32>
    %5 = vector.broadcast %4 : vector<32x1xf32> to vector<32x32xf32>
    %6 = arith.subf %0, %5 : vector<32x32xf32>
    %7 = arith.mulf %6, %6 : vector<32x32xf32>
    %cst_2 = arith.constant dense<0.000000e+00> : vector<32xf32>
    %8 = vector.multi_reduction <add>, %7, %cst_2 [1] : vector<32x32xf32> to vector<32xf32>
    %9 = vector.shape_cast %8 : vector<32xf32> to vector<32x1xf32>
    %cst_3 = arith.constant 3.200000e+01 : f32
    %10 = vector.broadcast %cst_3 : f32 to vector<32x1xf32>
    %11 = arith.divf %9, %10 : vector<32x1xf32>
    %cst_4 = arith.constant 9.99999974E-6 : f32
    %12 = vector.broadcast %cst_4 : f32 to vector<32x1xf32>
    %13 = arith.addf %11, %12 : vector<32x1xf32>
    %14 = math.rsqrt %13 : vector<32x1xf32>
    %15 = vector.broadcast %14 : vector<32x1xf32> to vector<32x32xf32>
    %16 = arith.mulf %6, %15 : vector<32x32xf32>
    %c0_5 = arith.constant 0 : index
    %c0_6 = arith.constant 0 : index
    %17 = vector.load %arg2[%c0_5, %c0_6] : memref<1x32xf32, #tpu.memory_space<vmem>>, vector<1x32xf32>
    %18 = vector.broadcast %17 : vector<1x32xf32> to vector<32x32xf32>
    %19 = arith.mulf %16, %18 : vector<32x32xf32>
    %c0_7 = arith.constant 0 : index
    %c0_8 = arith.constant 0 : index
    %20 = vector.load %arg3[%c0_7, %c0_8] : memref<1x32xf32, #tpu.memory_space<vmem>>, vector<1x32xf32>
    %21 = vector.broadcast %20 : vector<1x32xf32> to vector<32x32xf32>
    %22 = arith.addf %19, %21 : vector<32x32xf32>
    %23 = arith.truncf %22 : vector<32x32xf32> to vector<32x32xbf16>
    %c0_9 = arith.constant 0 : index
    %c0_10 = arith.constant 0 : index
    %24 = vector.load %arg4[%c0_9, %c0_10] : memref<32x32xbf16, #tpu.memory_space<vmem>>, vector<32x32xbf16>
    tpu.vector_store %arg4[%c0_9, %c0_10], %23 {strides = array<i32>} : memref<32x32xbf16, #tpu.memory_space<vmem>>, vector<32x32xbf16>,
    return
  }
  func.func @transform_0(%arg0: i32) -> (i32, i32) {
    %c0_i32 = arith.constant 0 : i32
    %c0_i32_0 = arith.constant 0 : i32
    return %arg0, %c0_i32 : i32, i32
  }
  func.func @transform_1(%arg0: i32) -> (i32, i32) {
    %c0_i32 = arith.constant 0 : i32
    %c0_i32_0 = arith.constant 0 : i32
    %c0_i32_1 = arith.constant 0 : i32
    return %c0_i32, %c0_i32_0 : i32, i32
  }
  func.func @transform_2(%arg0: i32) -> (i32, i32) {
    %c0_i32 = arith.constant 0 : i32
    %c0_i32_0 = arith.constant 0 : i32
    %c0_i32_1 = arith.constant 0 : i32
    return %c0_i32, %c0_i32_0 : i32, i32
  }
  func.func @transform_3(%arg0: i32) -> (i32, i32) {
    %c0_i32 = arith.constant 0 : i32
    %c0_i32_0 = arith.constant 0 : i32
    return %arg0, %c0_i32 : i32, i32
  }
}

module attributes {stable_mosaic.version = 11 : i64} {
  func.func @kernel(%arg0: i32, %arg1: i32, %arg2: i32, %arg3: memref<32x128xbf16, #tpu.memory_space<vmem>>, %arg4: memref<128x128xbf16, #tpu.memory_space<vmem>>, %arg5: memref<1x128xf32, #tpu.memory_space<vmem>>, %arg6: memref<32x128xbf16, #tpu.memory_space<vmem>>, %arg7: memref<32x128xf32, #tpu.memory_space<vmem>>) attributes {dimension_semantics = [#tpu.dimension_semantics<parallel>, #tpu.dimension_semantics<parallel>, #tpu.dimension_semantics<arbitrary>], iteration_bounds = array<i64: 1, 1, 1>, scalar_prefetch = 0 : i64, scratch_operands = 1 : i64, tpu.core_type = #tpu.core_type<tc>, window_params = [{transform_indices = @transform_0, window_bounds = array<i64: 32, 128>}, {transform_indices = @transform_1, window_bounds = array<i64: 128, 128>}, {transform_indices = @transform_2, window_bounds = array<i64: 1, 128>}, {transform_indices = @transform_3, window_bounds = array<i64: 32, 128>}]} {
    %c0_i32 = arith.constant 0 : i32
    %0 = arith.cmpi eq, %arg2, %c0_i32 : i32
    %1 = arith.extui %0 : i1 to i32
    %c0_i32_0 = arith.constant 0 : i32
    %2 = arith.cmpi ne, %1, %c0_i32_0 : i32
    scf.if %2 {
      %cst_10 = arith.constant 0.000000e+00 : f32
      %12 = vector.broadcast %cst_10 : f32 to vector<32x128xf32>
      %c0_11 = arith.constant 0 : index
      %c0_12 = arith.constant 0 : index
      %13 = vector.load %arg7[%c0_11, %c0_12] : memref<32x128xf32, #tpu.memory_space<vmem>>, vector<32x128xf32>
      tpu.vector_store %arg7[%c0_11, %c0_12], %12 {strides = array<i32>} : memref<32x128xf32, #tpu.memory_space<vmem>>, vector<32x128xf32>,
    } else {
    }
    %c0 = arith.constant 0 : index
    %c0_1 = arith.constant 0 : index
    %3 = vector.load %arg7[%c0, %c0_1] : memref<32x128xf32, #tpu.memory_space<vmem>>, vector<32x128xf32>
    %c0_2 = arith.constant 0 : index
    %c0_3 = arith.constant 0 : index
    %4 = vector.load %arg3[%c0_2, %c0_3] : memref<32x128xbf16, #tpu.memory_space<vmem>>, vector<32x128xbf16>
    %c0_4 = arith.constant 0 : index
    %c0_5 = arith.constant 0 : index
    %5 = vector.load %arg4[%c0_4, %c0_5] : memref<128x128xbf16, #tpu.memory_space<vmem>>, vector<128x128xbf16>
    %cst = arith.constant dense<0.000000e+00> : vector<32x128xf32>
    %6 = tpu.matmul %4, %5, %cst {dimension_numbers = #tpu.dot_dimension_numbers<[1], [0], [0], [1], [0, 0, 1, 1], [], []>} : vector<32x128xbf16>, vector<128x128xbf16>, vector<32x128xf32> -> vector<32x128xf32>
    %7 = arith.addf %3, %6 : vector<32x128xf32>
    %c0_6 = arith.constant 0 : index
    %c0_7 = arith.constant 0 : index
    %8 = vector.load %arg7[%c0_6, %c0_7] : memref<32x128xf32, #tpu.memory_space<vmem>>, vector<32x128xf32>
    tpu.vector_store %arg7[%c0_6, %c0_7], %7 {strides = array<i32>} : memref<32x128xf32, #tpu.memory_space<vmem>>, vector<32x128xf32>,
    %c0_i32_8 = arith.constant 0 : i32
    %9 = arith.cmpi eq, %arg2, %c0_i32_8 : i32
    %10 = arith.extui %9 : i1 to i32
    %c0_i32_9 = arith.constant 0 : i32
    %11 = arith.cmpi ne, %10, %c0_i32_9 : i32
    scf.if %11 {
      %c0_10 = arith.constant 0 : index
      %c0_11 = arith.constant 0 : index
      %12 = vector.load %arg7[%c0_10, %c0_11] : memref<32x128xf32, #tpu.memory_space<vmem>>, vector<32x128xf32>
      %c0_12 = arith.constant 0 : index
      %c0_13 = arith.constant 0 : index
      %13 = vector.load %arg5[%c0_12, %c0_13] : memref<1x128xf32, #tpu.memory_space<vmem>>, vector<1x128xf32>
      %14 = vector.broadcast %13 : vector<1x128xf32> to vector<32x128xf32>
      %15 = arith.addf %12, %14 : vector<32x128xf32>
      %16 = arith.truncf %15 : vector<32x128xf32> to vector<32x128xbf16>
      %c0_14 = arith.constant 0 : index
      %c0_15 = arith.constant 0 : index
      %17 = vector.load %arg6[%c0_14, %c0_15] : memref<32x128xbf16, #tpu.memory_space<vmem>>, vector<32x128xbf16>
      tpu.vector_store %arg6[%c0_14, %c0_15], %16 {strides = array<i32>} : memref<32x128xbf16, #tpu.memory_space<vmem>>, vector<32x128xbf16>,
    } else {
    }
    return
  }
  func.func @transform_0(%arg0: i32, %arg1: i32, %arg2: i32) -> (i32, i32) {
    %c0_i32 = arith.constant 0 : i32
    return %arg0, %arg2 : i32, i32
  }
  func.func @transform_1(%arg0: i32, %arg1: i32, %arg2: i32) -> (i32, i32) {
    %c0_i32 = arith.constant 0 : i32
    return %arg2, %arg1 : i32, i32
  }
  func.func @transform_2(%arg0: i32, %arg1: i32, %arg2: i32) -> (i32, i32) {
    %c0_i32 = arith.constant 0 : i32
    %c0_i32_0 = arith.constant 0 : i32
    return %c0_i32, %arg1 : i32, i32
  }
  func.func @transform_3(%arg0: i32, %arg1: i32, %arg2: i32) -> (i32, i32) {
    %c0_i32 = arith.constant 0 : i32
    return %arg0, %arg1 : i32, i32
  }
}

module attributes {stable_mosaic.version = 11 : i64} {
  func.func @kernel(%arg0: i32, %arg1: i32, %arg2: i32, %arg3: memref<32x128xbf16, #tpu.memory_space<vmem>>, %arg4: memref<128x128xbf16, #tpu.memory_space<vmem>>, %arg5: memref<1x128xf32, #tpu.memory_space<vmem>>, %arg6: memref<32x128xbf16, #tpu.memory_space<vmem>>, %arg7: memref<32x128xf32, #tpu.memory_space<vmem>>) attributes {dimension_semantics = [#tpu.dimension_semantics<parallel>, #tpu.dimension_semantics<parallel>, #tpu.dimension_semantics<arbitrary>], iteration_bounds = array<i64: 1, 1, 1>, scalar_prefetch = 0 : i64, scratch_operands = 1 : i64, tpu.core_type = #tpu.core_type<tc>, window_params = [{transform_indices = @transform_0, window_bounds = array<i64: 32, 128>}, {transform_indices = @transform_1, window_bounds = array<i64: 128, 128>}, {transform_indices = @transform_2, window_bounds = array<i64: 1, 128>}, {transform_indices = @transform_3, window_bounds = array<i64: 32, 128>}]} {
    %c0_i32 = arith.constant 0 : i32
    %0 = arith.cmpi eq, %arg2, %c0_i32 : i32
    %1 = arith.extui %0 : i1 to i32
    %c0_i32_0 = arith.constant 0 : i32
    %2 = arith.cmpi ne, %1, %c0_i32_0 : i32
    scf.if %2 {
      %cst_10 = arith.constant 0.000000e+00 : f32
      %12 = vector.broadcast %cst_10 : f32 to vector<32x128xf32>
      %c0_11 = arith.constant 0 : index
      %c0_12 = arith.constant 0 : index
      %13 = vector.load %arg7[%c0_11, %c0_12] : memref<32x128xf32, #tpu.memory_space<vmem>>, vector<32x128xf32>
      tpu.vector_store %arg7[%c0_11, %c0_12], %12 {strides = array<i32>} : memref<32x128xf32, #tpu.memory_space<vmem>>, vector<32x128xf32>,
    } else {
    }
    %c0 = arith.constant 0 : index
    %c0_1 = arith.constant 0 : index
    %3 = vector.load %arg7[%c0, %c0_1] : memref<32x128xf32, #tpu.memory_space<vmem>>, vector<32x128xf32>
    %c0_2 = arith.constant 0 : index
    %c0_3 = arith.constant 0 : index
    %4 = vector.load %arg3[%c0_2, %c0_3] : memref<32x128xbf16, #tpu.memory_space<vmem>>, vector<32x128xbf16>
    %c0_4 = arith.constant 0 : index
    %c0_5 = arith.constant 0 : index
    %5 = vector.load %arg4[%c0_4, %c0_5] : memref<128x128xbf16, #tpu.memory_space<vmem>>, vector<128x128xbf16>
    %cst = arith.constant dense<0.000000e+00> : vector<32x128xf32>
    %6 = tpu.matmul %4, %5, %cst {dimension_numbers = #tpu.dot_dimension_numbers<[1], [0], [0], [1], [0, 0, 1, 1], [], []>} : vector<32x128xbf16>, vector<128x128xbf16>, vector<32x128xf32> -> vector<32x128xf32>
    %7 = arith.addf %3, %6 : vector<32x128xf32>
    %c0_6 = arith.constant 0 : index
    %c0_7 = arith.constant 0 : index
    %8 = vector.load %arg7[%c0_6, %c0_7] : memref<32x128xf32, #tpu.memory_space<vmem>>, vector<32x128xf32>
    tpu.vector_store %arg7[%c0_6, %c0_7], %7 {strides = array<i32>} : memref<32x128xf32, #tpu.memory_space<vmem>>, vector<32x128xf32>,
    %c0_i32_8 = arith.constant 0 : i32
    %9 = arith.cmpi eq, %arg2, %c0_i32_8 : i32
    %10 = arith.extui %9 : i1 to i32
    %c0_i32_9 = arith.constant 0 : i32
    %11 = arith.cmpi ne, %10, %c0_i32_9 : i32
    scf.if %11 {
      %c0_10 = arith.constant 0 : index
      %c0_11 = arith.constant 0 : index
      %12 = vector.load %arg7[%c0_10, %c0_11] : memref<32x128xf32, #tpu.memory_space<vmem>>, vector<32x128xf32>
      %c0_12 = arith.constant 0 : index
      %c0_13 = arith.constant 0 : index
      %13 = vector.load %arg5[%c0_12, %c0_13] : memref<1x128xf32, #tpu.memory_space<vmem>>, vector<1x128xf32>
      %14 = vector.broadcast %13 : vector<1x128xf32> to vector<32x128xf32>
      %15 = arith.addf %12, %14 : vector<32x128xf32>
      %cst_14 = arith.constant 0.000000e+00 : f32
      %16 = vector.broadcast %cst_14 : f32 to vector<32x128xf32>
      %17 = arith.maximumf %15, %16 : vector<32x128xf32>
      %18 = arith.truncf %17 : vector<32x128xf32> to vector<32x128xbf16>
      %c0_15 = arith.constant 0 : index
      %c0_16 = arith.constant 0 : index
      %19 = vector.load %arg6[%c0_15, %c0_16] : memref<32x128xbf16, #tpu.memory_space<vmem>>, vector<32x128xbf16>
      tpu.vector_store %arg6[%c0_15, %c0_16], %18 {strides = array<i32>} : memref<32x128xbf16, #tpu.memory_space<vmem>>, vector<32x128xbf16>,
    } else {
    }
    return
  }
  func.func @transform_0(%arg0: i32, %arg1: i32, %arg2: i32) -> (i32, i32) {
    %c0_i32 = arith.constant 0 : i32
    return %arg0, %arg2 : i32, i32
  }
  func.func @transform_1(%arg0: i32, %arg1: i32, %arg2: i32) -> (i32, i32) {
    %c0_i32 = arith.constant 0 : i32
    return %arg2, %arg1 : i32, i32
  }
  func.func @transform_2(%arg0: i32, %arg1: i32, %arg2: i32) -> (i32, i32) {
    %c0_i32 = arith.constant 0 : i32
    %c0_i32_0 = arith.constant 0 : i32
    return %c0_i32, %arg1 : i32, i32
  }
  func.func @transform_3(%arg0: i32, %arg1: i32, %arg2: i32) -> (i32, i32) {
    %c0_i32 = arith.constant 0 : i32
    return %arg0, %arg1 : i32, i32
  }
}

module attributes {stable_mosaic.version = 11 : i64} {
  func.func @kernel(%arg0: i32, %arg1: i32, %arg2: i32, %arg3: memref<32x128xbf16, #tpu.memory_space<vmem>>, %arg4: memref<128x128xbf16, #tpu.memory_space<vmem>>, %arg5: memref<32x128xbf16, #tpu.memory_space<vmem>>, %arg6: memref<32x128xf32, #tpu.memory_space<vmem>>) attributes {dimension_semantics = [#tpu.dimension_semantics<parallel>, #tpu.dimension_semantics<parallel>, #tpu.dimension_semantics<arbitrary>], iteration_bounds = array<i64: 1, 1, 1>, scalar_prefetch = 0 : i64, scratch_operands = 1 : i64, tpu.core_type = #tpu.core_type<tc>, window_params = [{transform_indices = @transform_0, window_bounds = array<i64: 32, 128>}, {transform_indices = @transform_1, window_bounds = array<i64: 128, 128>}, {transform_indices = @transform_2, window_bounds = array<i64: 32, 128>}]} {
    %c0_i32 = arith.constant 0 : i32
    %0 = arith.cmpi eq, %arg2, %c0_i32 : i32
    %1 = arith.extui %0 : i1 to i32
    %c0_i32_0 = arith.constant 0 : i32
    %2 = arith.cmpi ne, %1, %c0_i32_0 : i32
    scf.if %2 {
      %cst_10 = arith.constant 0.000000e+00 : f32
      %12 = vector.broadcast %cst_10 : f32 to vector<32x128xf32>
      %c0_11 = arith.constant 0 : index
      %c0_12 = arith.constant 0 : index
      %13 = vector.load %arg6[%c0_11, %c0_12] : memref<32x128xf32, #tpu.memory_space<vmem>>, vector<32x128xf32>
      tpu.vector_store %arg6[%c0_11, %c0_12], %12 {strides = array<i32>} : memref<32x128xf32, #tpu.memory_space<vmem>>, vector<32x128xf32>,
    } else {
    }
    %c0 = arith.constant 0 : index
    %c0_1 = arith.constant 0 : index
    %3 = vector.load %arg6[%c0, %c0_1] : memref<32x128xf32, #tpu.memory_space<vmem>>, vector<32x128xf32>
    %c0_2 = arith.constant 0 : index
    %c0_3 = arith.constant 0 : index
    %4 = vector.load %arg3[%c0_2, %c0_3] : memref<32x128xbf16, #tpu.memory_space<vmem>>, vector<32x128xbf16>
    %c0_4 = arith.constant 0 : index
    %c0_5 = arith.constant 0 : index
    %5 = vector.load %arg4[%c0_4, %c0_5] : memref<128x128xbf16, #tpu.memory_space<vmem>>, vector<128x128xbf16>
    %cst = arith.constant dense<0.000000e+00> : vector<32x128xf32>
    %6 = tpu.matmul %4, %5, %cst {dimension_numbers = #tpu.dot_dimension_numbers<[1], [0], [0], [1], [0, 0, 1, 1], [], []>} : vector<32x128xbf16>, vector<128x128xbf16>, vector<32x128xf32> -> vector<32x128xf32>
    %7 = arith.addf %3, %6 : vector<32x128xf32>
    %c0_6 = arith.constant 0 : index
    %c0_7 = arith.constant 0 : index
    %8 = vector.load %arg6[%c0_6, %c0_7] : memref<32x128xf32, #tpu.memory_space<vmem>>, vector<32x128xf32>
    tpu.vector_store %arg6[%c0_6, %c0_7], %7 {strides = array<i32>} : memref<32x128xf32, #tpu.memory_space<vmem>>, vector<32x128xf32>,
    %c0_i32_8 = arith.constant 0 : i32
    %9 = arith.cmpi eq, %arg2, %c0_i32_8 : i32
    %10 = arith.extui %9 : i1 to i32
    %c0_i32_9 = arith.constant 0 : i32
    %11 = arith.cmpi ne, %10, %c0_i32_9 : i32
    scf.if %11 {
      %c0_10 = arith.constant 0 : index
      %c0_11 = arith.constant 0 : index
      %12 = vector.load %arg6[%c0_10, %c0_11] : memref<32x128xf32, #tpu.memory_space<vmem>>, vector<32x128xf32>
      %13 = arith.truncf %12 : vector<32x128xf32> to vector<32x128xbf16>
      %c0_12 = arith.constant 0 : index
      %c0_13 = arith.constant 0 : index
      %14 = vector.load %arg5[%c0_12, %c0_13] : memref<32x128xbf16, #tpu.memory_space<vmem>>, vector<32x128xbf16>
      tpu.vector_store %arg5[%c0_12, %c0_13], %13 {strides = array<i32>} : memref<32x128xbf16, #tpu.memory_space<vmem>>, vector<32x128xbf16>,
    } else {
    }
    return
  }
  func.func @transform_0(%arg0: i32, %arg1: i32, %arg2: i32) -> (i32, i32) {
    %c0_i32 = arith.constant 0 : i32
    return %arg0, %arg2 : i32, i32
  }
  func.func @transform_1(%arg0: i32, %arg1: i32, %arg2: i32) -> (i32, i32) {
    %c0_i32 = arith.constant 0 : i32
    return %arg2, %arg1 : i32, i32
  }
  func.func @transform_2(%arg0: i32, %arg1: i32, %arg2: i32) -> (i32, i32) {
    %c0_i32 = arith.constant 0 : i32
    return %arg0, %arg1 : i32, i32
  }
}

module attributes {stable_mosaic.version = 11 : i64} {
  func.func @kern(%arg0: i32, %arg1: i32, %arg2: memref<1x16x32xbf16, #tpu.memory_space<vmem>>, %arg3: memref<1x16x32xbf16, #tpu.memory_space<vmem>>, %arg4: memref<1x16x32xbf16, #tpu.memory_space<vmem>>, %arg5: memref<1x2x16x16xbf16, #tpu.memory_space<vmem>>, %arg6: memref<1x32xf32, #tpu.memory_space<vmem>>, %arg7: memref<1x32xf32, #tpu.memory_space<vmem>>, %arg8: memref<1x1x16xf32, #tpu.memory_space<vmem>>, %arg9: memref<1x16x32xbf16, #tpu.memory_space<vmem>>) attributes {dimension_semantics = [#tpu.dimension_semantics<parallel>, #tpu.dimension_semantics<parallel>], iteration_bounds = array<i64: 2, 1>, scalar_prefetch = 0 : i64, scratch_operands = 0 : i64, tpu.core_type = #tpu.core_type<tc>, window_params = [{transform_indices = @transform_0, window_bounds = array<i64: 1, 16, 32>}, {transform_indices = @transform_1, window_bounds = array<i64: 1, 16, 32>}, {transform_indices = @transform_2, window_bounds = array<i64: 1, 16, 32>}, {transform_indices = @transform_3, window_bounds = array<i64: 1, 2, 16, 16>}, {pipeline_mode = #tpu.pipeline_mode<synchronous>, transform_indices = @transform_4, window_bounds = array<i64: 1, 32>}, {pipeline_mode = #tpu.pipeline_mode<synchronous>, transform_indices = @transform_5, window_bounds = array<i64: 1, 32>}, {transform_indices = @transform_6, window_bounds = array<i64: 1, 1, 16>}, {transform_indices = @transform_7, window_bounds = array<i64: 1, 16, 32>}]} {
    %c0 = arith.constant 0 : index
    %c0_0 = arith.constant 0 : index
    %c0_1 = arith.constant 0 : index
    %0 = vector.load %arg2[%c0, %c0_0, %c0_1] : memref<1x16x32xbf16, #tpu.memory_space<vmem>>, vector<1x16x32xbf16>
    %1 = vector.shape_cast %0 : vector<1x16x32xbf16> to vector<16x32xbf16>
    %2 = arith.extf %1 : vector<16x32xbf16> to vector<16x32xf32>
    %c0_2 = arith.constant 0 : index
    %c0_3 = arith.constant 0 : index
    %3 = vector.load %arg6[%c0_2, %c0_3] : memref<1x32xf32, #tpu.memory_space<vmem>>, vector<1x32xf32>
    %4 = vector.broadcast %3 : vector<1x32xf32> to vector<16x32xf32>
    %5 = arith.addf %2, %4 : vector<16x32xf32>
    %6 = arith.truncf %5 : vector<16x32xf32> to vector<16x32xbf16>
    %c0_4 = arith.constant 0 : index
    %c0_5 = arith.constant 0 : index
    %c0_6 = arith.constant 0 : index
    %7 = vector.load %arg3[%c0_4, %c0_5, %c0_6] : memref<1x16x32xbf16, #tpu.memory_space<vmem>>, vector<1x16x32xbf16>
    %8 = vector.shape_cast %7 : vector<1x16x32xbf16> to vector<16x32xbf16>
    %c0_7 = arith.constant 0 : index
    %c0_8 = arith.constant 0 : index
    %c0_9 = arith.constant 0 : index
    %9 = vector.load %arg4[%c0_7, %c0_8, %c0_9] : memref<1x16x32xbf16, #tpu.memory_space<vmem>>, vector<1x16x32xbf16>
    %10 = vector.shape_cast %9 : vector<1x16x32xbf16> to vector<16x32xbf16>
    %c0_10 = arith.constant 0 : index
    %c0_11 = arith.constant 0 : index
    %c0_12 = arith.constant 0 : index
    %11 = vector.load %arg8[%c0_10, %c0_11, %c0_12] : memref<1x1x16xf32, #tpu.memory_space<vmem>>, vector<1x1x16xf32>
    %12 = vector.shape_cast %11 : vector<1x1x16xf32> to vector<1x16xf32>
    %cst = arith.constant 1.000000e+00 : f32
    %13 = vector.broadcast %cst : f32 to vector<1x16xf32>
    %14 = arith.subf %12, %13 : vector<1x16xf32>
    %cst_13 = arith.constant 1.000000e+30 : f32
    %15 = vector.broadcast %cst_13 : f32 to vector<1x16xf32>
    %16 = arith.mulf %14, %15 : vector<1x16xf32>
    %17 = vector.extract_strided_slice %6 {offsets = [0, 0], sizes = [16, 16], strides = [1, 1]} : vector<16x32xbf16> to vector<16x16xbf16>
    %18 = vector.extract_strided_slice %8 {offsets = [0, 0], sizes = [16, 16], strides = [1, 1]} : vector<16x32xbf16> to vector<16x16xbf16>
    %cst_14 = arith.constant dense<0.000000e+00> : vector<16x16xf32>
    %19 = tpu.matmul %17, %18, %cst_14 {dimension_numbers = #tpu.dot_dimension_numbers<[1], [1], [0], [0], [0, 0, 1, 0], [], []>} : vector<16x16xbf16>, vector<16x16xbf16>, vector<16x16xf32> -> vector<16x16xf32>
    %c0_15 = arith.constant 0 : index
    %c0_16 = arith.constant 0 : index
    %c0_17 = arith.constant 0 : index
    %c0_18 = arith.constant 0 : index
    %20 = vector.load %arg5[%c0_15, %c0_16, %c0_17, %c0_18] : memref<1x2x16x16xbf16, #tpu.memory_space<vmem>>, vector<1x1x16x16xbf16>
    %21 = vector.shape_cast %20 : vector<1x1x16x16xbf16> to vector<16x16xbf16>
    %22 = arith.extf %21 : vector<16x16xbf16> to vector<16x16xf32>
    %23 = arith.addf %19, %22 : vector<16x16xf32>
    %cst_19 = arith.constant 2.500000e-01 : f32
    %24 = vector.broadcast %cst_19 : f32 to vector<16x16xf32>
    %25 = arith.mulf %23, %24 : vector<16x16xf32>
    %26 = vector.broadcast %16 : vector<1x16xf32> to vector<16x16xf32>
    %27 = arith.addf %25, %26 : vector<16x16xf32>
    %cst_20 = arith.constant dense<0xFF800000> : vector<16xf32>
    %28 = vector.multi_reduction <maximumf>, %27, %cst_20 [1] : vector<16x16xf32> to vector<16xf32>
    %29 = vector.shape_cast %28 : vector<16xf32> to vector<16x1xf32>
    %30 = vector.broadcast %29 : vector<16x1xf32> to vector<16x16xf32>
    %31 = arith.subf %27, %30 : vector<16x16xf32>
    %32 = math.exp %31 : vector<16x16xf32>
    %33 = vector.broadcast %12 : vector<1x16xf32> to vector<16x16xf32>
    %34 = arith.mulf %32, %33 : vector<16x16xf32>
    %cst_21 = arith.constant dense<0.000000e+00> : vector<16xf32>
    %35 = vector.multi_reduction <add>, %34, %cst_21 [1] : vector<16x16xf32> to vector<16xf32>
    %36 = vector.shape_cast %35 : vector<16xf32> to vector<16x1xf32>
    %cst_22 = arith.constant 1.000000e-30 : f32
    %37 = vector.broadcast %cst_22 : f32 to vector<16x1xf32>
    %38 = arith.maximumf %36, %37 : vector<16x1xf32>
    %39 = tpu.reciprocal %38 {approx = true} : vector<16x1xf32> -> vector<16x1xf32>
    %40 = vector.broadcast %39 : vector<16x1xf32> to vector<16x16xf32>
    %41 = arith.mulf %34, %40 : vector<16x16xf32>
    %42 = arith.truncf %41 : vector<16x16xf32> to vector<16x16xbf16>
    %43 = vector.extract_strided_slice %10 {offsets = [0, 0], sizes = [16, 16], strides = [1, 1]} : vector<16x32xbf16> to vector<16x16xbf16>
    %cst_23 = arith.constant dense<0.000000e+00> : vector<16x16xf32>
    %44 = tpu.matmul %42, %43, %cst_23 {dimension_numbers = #tpu.dot_dimension_numbers<[1], [0], [0], [1], [0, 0, 1, 1], [], []>} : vector<16x16xbf16>, vector<16x16xbf16>, vector<16x16xf32> -> vector<16x16xf32>
    %45 = vector.extract_strided_slice %6 {offsets = [0, 16], sizes = [16, 16], strides = [1, 1]} : vector<16x32xbf16> to vector<16x16xbf16>
    %46 = vector.extract_strided_slice %8 {offsets = [0, 16], sizes = [16, 16], strides = [1, 1]} : vector<16x32xbf16> to vector<16x16xbf16>
    %cst_24 = arith.constant dense<0.000000e+00> : vector<16x16xf32>
    %47 = tpu.matmul %45, %46, %cst_24 {dimension_numbers = #tpu.dot_dimension_numbers<[1], [1], [0], [0], [0, 0, 1, 0], [], []>} : vector<16x16xbf16>, vector<16x16xbf16>, vector<16x16xf32> -> vector<16x16xf32>
    %c0_25 = arith.constant 0 : index
    %c1 = arith.constant 1 : index
    %c0_26 = arith.constant 0 : index
    %c0_27 = arith.constant 0 : index
    %48 = vector.load %arg5[%c0_25, %c1, %c0_26, %c0_27] : memref<1x2x16x16xbf16, #tpu.memory_space<vmem>>, vector<1x1x16x16xbf16>
    %49 = vector.shape_cast %48 : vector<1x1x16x16xbf16> to vector<16x16xbf16>
    %50 = arith.extf %49 : vector<16x16xbf16> to vector<16x16xf32>
    %51 = arith.addf %47, %50 : vector<16x16xf32>
    %cst_28 = arith.constant 2.500000e-01 : f32
    %52 = vector.broadcast %cst_28 : f32 to vector<16x16xf32>
    %53 = arith.mulf %51, %52 : vector<16x16xf32>
    %54 = vector.broadcast %16 : vector<1x16xf32> to vector<16x16xf32>
    %55 = arith.addf %53, %54 : vector<16x16xf32>
    %cst_29 = arith.constant dense<0xFF800000> : vector<16xf32>
    %56 = vector.multi_reduction <maximumf>, %55, %cst_29 [1] : vector<16x16xf32> to vector<16xf32>
    %57 = vector.shape_cast %56 : vector<16xf32> to vector<16x1xf32>
    %58 = vector.broadcast %57 : vector<16x1xf32> to vector<16x16xf32>
    %59 = arith.subf %55, %58 : vector<16x16xf32>
    %60 = math.exp %59 : vector<16x16xf32>
    %61 = vector.broadcast %12 : vector<1x16xf32> to vector<16x16xf32>
    %62 = arith.mulf %60, %61 : vector<16x16xf32>
    %cst_30 = arith.constant dense<0.000000e+00> : vector<16xf32>
    %63 = vector.multi_reduction <add>, %62, %cst_30 [1] : vector<16x16xf32> to vector<16xf32>
    %64 = vector.shape_cast %63 : vector<16xf32> to vector<16x1xf32>
    %cst_31 = arith.constant 1.000000e-30 : f32
    %65 = vector.broadcast %cst_31 : f32 to vector<16x1xf32>
    %66 = arith.maximumf %64, %65 : vector<16x1xf32>
    %67 = tpu.reciprocal %66 {approx = true} : vector<16x1xf32> -> vector<16x1xf32>
    %68 = vector.broadcast %67 : vector<16x1xf32> to vector<16x16xf32>
    %69 = arith.mulf %62, %68 : vector<16x16xf32>
    %70 = arith.truncf %69 : vector<16x16xf32> to vector<16x16xbf16>
    %71 = vector.extract_strided_slice %10 {offsets = [0, 16], sizes = [16, 16], strides = [1, 1]} : vector<16x32xbf16> to vector<16x16xbf16>
    %cst_32 = arith.constant dense<0.000000e+00> : vector<16x16xf32>
    %72 = tpu.matmul %70, %71, %cst_32 {dimension_numbers = #tpu.dot_dimension_numbers<[1], [0], [0], [1], [0, 0, 1, 1], [], []>} : vector<16x16xbf16>, vector<16x16xbf16>, vector<16x16xf32> -> vector<16x16xf32>
    %73 = tpu.concatenate %44, %72 in 1 : vector<16x16xf32>, vector<16x16xf32> -> vector<16x32xf32>
    %74 = arith.truncf %73 : vector<16x32xf32> to vector<16x32xbf16>
    %c0_33 = arith.constant 0 : index
    %c0_34 = arith.constant 0 : index
    %c0_35 = arith.constant 0 : index
    %75 = vector.load %arg9[%c0_33, %c0_34, %c0_35] : memref<1x16x32xbf16, #tpu.memory_space<vmem>>, vector<1x16x32xbf16>
    %76 = vector.shape_cast %75 : vector<1x16x32xbf16> to vector<16x32xbf16>
    %77 = vector.shape_cast %74 : vector<16x32xbf16> to vector<1x16x32xbf16>
    tpu.vector_store %arg9[%c0_33, %c0_34, %c0_35], %77 {strides = array<i32>} : memref<1x16x32xbf16, #tpu.memory_space<vmem>>, vector<1x16x32xbf16>,
    return
  }
  func.func @transform_0(%arg0: i32, %arg1: i32) -> (i32, i32, i32) {
    %c0_i32 = arith.constant 0 : i32
    %c0_i32_0 = arith.constant 0 : i32
    return %arg0, %arg1, %c0_i32 : i32, i32, i32
  }
  func.func @transform_1(%arg0: i32, %arg1: i32) -> (i32, i32, i32) {
    %c0_i32 = arith.constant 0 : i32
    %c0_i32_0 = arith.constant 0 : i32
    %c0_i32_1 = arith.constant 0 : i32
    return %arg0, %c0_i32, %c0_i32_0 : i32, i32, i32
  }
  func.func @transform_2(%arg0: i32, %arg1: i32) -> (i32, i32, i32) {
    %c0_i32 = arith.constant 0 : i32
    %c0_i32_0 = arith.constant 0 : i32
    %c0_i32_1 = arith.constant 0 : i32
    return %arg0, %c0_i32, %c0_i32_0 : i32, i32, i32
  }
  func.func @transform_3(%arg0: i32, %arg1: i32) -> (i32, i32, i32, i32) {
    %c0_i32 = arith.constant 0 : i32
    %c0_i32_0 = arith.constant 0 : i32
    %c0_i32_1 = arith.constant 0 : i32
    return %arg0, %c0_i32, %arg1, %c0_i32_0 : i32, i32, i32, i32
  }
  func.func @transform_4(%arg0: i32, %arg1: i32) -> (i32, i32) {
    %c0_i32 = arith.constant 0 : i32
    %c0_i32_0 = arith.constant 0 : i32
    %c0_i32_1 = arith.constant 0 : i32
    return %c0_i32, %c0_i32_0 : i32, i32
  }
  func.func @transform_5(%arg0: i32, %arg1: i32) -> (i32, i32) {
    %c0_i32 = arith.constant 0 : i32
    %c0_i32_0 = arith.constant 0 : i32
    %c0_i32_1 = arith.constant 0 : i32
    return %c0_i32, %c0_i32_0 : i32, i32
  }
  func.func @transform_6(%arg0: i32, %arg1: i32) -> (i32, i32, i32) {
    %c0_i32 = arith.constant 0 : i32
    %c0_i32_0 = arith.constant 0 : i32
    %c0_i32_1 = arith.constant 0 : i32
    return %arg0, %c0_i32, %c0_i32_0 : i32, i32, i32
  }
  func.func @transform_7(%arg0: i32, %arg1: i32) -> (i32, i32, i32) {
    %c0_i32 = arith.constant 0 : i32
    %c0_i32_0 = arith.constant 0 : i32
    return %arg0, %arg1, %c0_i32 : i32, i32, i32
  }
}

module attributes {stable_mosaic.version = 11 : i64} {
  func.func @kern(%arg0: i32, %arg1: memref<1x22x32xbf16, #tpu.memory_space<vmem>>, %arg2: memref<7x32xf32, #tpu.memory_space<vmem>>, %arg3: memref<1x32xf32, #tpu.memory_space<vmem>>, %arg4: memref<1x16x32xf32, #tpu.memory_space<vmem>>) attributes {dimension_semantics = [#tpu.dimension_semantics<parallel>], iteration_bounds = array<i64: 2>, scalar_prefetch = 0 : i64, scratch_operands = 0 : i64, tpu.core_type = #tpu.core_type<tc>, window_params = [{transform_indices = @transform_0, window_bounds = array<i64: 1, 22, 32>}, {pipeline_mode = #tpu.pipeline_mode<synchronous>, transform_indices = @transform_1, window_bounds = array<i64: 7, 32>}, {pipeline_mode = #tpu.pipeline_mode<synchronous>, transform_indices = @transform_2, window_bounds = array<i64: 1, 32>}, {transform_indices = @transform_3, window_bounds = array<i64: 1, 16, 32>}]} {
    %cst = arith.constant 0.000000e+00 : f32
    %0 = vector.broadcast %cst : f32 to vector<1x16x32xf32>
    %c0 = arith.constant 0 : index
    %c0_0 = arith.constant 0 : index
    %1 = vector.load %arg3[%c0, %c0_0] : memref<1x32xf32, #tpu.memory_space<vmem>>, vector<1x32xf32>
    %2 = vector.shape_cast %1 : vector<1x32xf32> to vector<1x1x32xf32>
    %3 = vector.broadcast %2 : vector<1x1x32xf32> to vector<1x16x32xf32>
    %4 = arith.addf %0, %3 : vector<1x16x32xf32>
    %c0_1 = arith.constant 0 : index
    %c0_2 = arith.constant 0 : index
    %c0_3 = arith.constant 0 : index
    %5 = vector.load %arg1[%c0_1, %c0_2, %c0_3] : memref<1x22x32xbf16, #tpu.memory_space<vmem>>, vector<1x16x32xbf16>
    %6 = vector.shape_cast %5 : vector<1x16x32xbf16> to vector<16x32xbf16>
    %7 = arith.extf %6 : vector<16x32xbf16> to vector<16x32xf32>
    %8 = vector.shape_cast %7 : vector<16x32xf32> to vector<1x16x32xf32>
    %c0_4 = arith.constant 0 : index
    %c0_5 = arith.constant 0 : index
    %9 = vector.load %arg2[%c0_4, %c0_5] : memref<7x32xf32, #tpu.memory_space<vmem>>, vector<1x32xf32>
    %10 = vector.shape_cast %9 : vector<1x32xf32> to vector<1x1x32xf32>
    %11 = vector.broadcast %10 : vector<1x1x32xf32> to vector<1x16x32xf32>
    %12 = arith.mulf %8, %11 : vector<1x16x32xf32>
    %13 = arith.addf %4, %12 : vector<1x16x32xf32>
    %c0_6 = arith.constant 0 : index
    %c1 = arith.constant 1 : index
    %c0_7 = arith.constant 0 : index
    %14 = vector.load %arg1[%c0_6, %c1, %c0_7] : memref<1x22x32xbf16, #tpu.memory_space<vmem>>, vector<1x16x32xbf16>
    %15 = vector.shape_cast %14 : vector<1x16x32xbf16> to vector<16x32xbf16>
    %16 = arith.extf %15 : vector<16x32xbf16> to vector<16x32xf32>
    %17 = vector.shape_cast %16 : vector<16x32xf32> to vector<1x16x32xf32>
    %c1_8 = arith.constant 1 : index
    %c0_9 = arith.constant 0 : index
    %18 = vector.load %arg2[%c1_8, %c0_9] : memref<7x32xf32, #tpu.memory_space<vmem>>, vector<1x32xf32>
    %19 = vector.shape_cast %18 : vector<1x32xf32> to vector<1x1x32xf32>
    %20 = vector.broadcast %19 : vector<1x1x32xf32> to vector<1x16x32xf32>
    %21 = arith.mulf %17, %20 : vector<1x16x32xf32>
    %22 = arith.addf %13, %21 : vector<1x16x32xf32>
    %c0_10 = arith.constant 0 : index
    %c2 = arith.constant 2 : index
    %c0_11 = arith.constant 0 : index
    %23 = vector.load %arg1[%c0_10, %c2, %c0_11] : memref<1x22x32xbf16, #tpu.memory_space<vmem>>, vector<1x16x32xbf16>
    %24 = vector.shape_cast %23 : vector<1x16x32xbf16> to vector<16x32xbf16>
    %25 = arith.extf %24 : vector<16x32xbf16> to vector<16x32xf32>
    %26 = vector.shape_cast %25 : vector<16x32xf32> to vector<1x16x32xf32>
    %c2_12 = arith.constant 2 : index
    %c0_13 = arith.constant 0 : index
    %27 = vector.load %arg2[%c2_12, %c0_13] : memref<7x32xf32, #tpu.memory_space<vmem>>, vector<1x32xf32>
    %28 = vector.shape_cast %27 : vector<1x32xf32> to vector<1x1x32xf32>
    %29 = vector.broadcast %28 : vector<1x1x32xf32> to vector<1x16x32xf32>
    %30 = arith.mulf %26, %29 : vector<1x16x32xf32>
    %31 = arith.addf %22, %30 : vector<1x16x32xf32>
    %c0_14 = arith.constant 0 : index
    %c3 = arith.constant 3 : index
    %c0_15 = arith.constant 0 : index
    %32 = vector.load %arg1[%c0_14, %c3, %c0_15] : memref<1x22x32xbf16, #tpu.memory_space<vmem>>, vector<1x16x32xbf16>
    %33 = vector.shape_cast %32 : vector<1x16x32xbf16> to vector<16x32xbf16>
    %34 = arith.extf %33 : vector<16x32xbf16> to vector<16x32xf32>
    %35 = vector.shape_cast %34 : vector<16x32xf32> to vector<1x16x32xf32>
    %c3_16 = arith.constant 3 : index
    %c0_17 = arith.constant 0 : index
    %36 = vector.load %arg2[%c3_16, %c0_17] : memref<7x32xf32, #tpu.memory_space<vmem>>, vector<1x32xf32>
    %37 = vector.shape_cast %36 : vector<1x32xf32> to vector<1x1x32xf32>
    %38 = vector.broadcast %37 : vector<1x1x32xf32> to vector<1x16x32xf32>
    %39 = arith.mulf %35, %38 : vector<1x16x32xf32>
    %40 = arith.addf %31, %39 : vector<1x16x32xf32>
    %c0_18 = arith.constant 0 : index
    %c4 = arith.constant 4 : index
    %c0_19 = arith.constant 0 : index
    %41 = vector.load %arg1[%c0_18, %c4, %c0_19] : memref<1x22x32xbf16, #tpu.memory_space<vmem>>, vector<1x16x32xbf16>
    %42 = vector.shape_cast %41 : vector<1x16x32xbf16> to vector<16x32xbf16>
    %43 = arith.extf %42 : vector<16x32xbf16> to vector<16x32xf32>
    %44 = vector.shape_cast %43 : vector<16x32xf32> to vector<1x16x32xf32>
    %c4_20 = arith.constant 4 : index
    %c0_21 = arith.constant 0 : index
    %45 = vector.load %arg2[%c4_20, %c0_21] : memref<7x32xf32, #tpu.memory_space<vmem>>, vector<1x32xf32>
    %46 = vector.shape_cast %45 : vector<1x32xf32> to vector<1x1x32xf32>
    %47 = vector.broadcast %46 : vector<1x1x32xf32> to vector<1x16x32xf32>
    %48 = arith.mulf %44, %47 : vector<1x16x32xf32>
    %49 = arith.addf %40, %48 : vector<1x16x32xf32>
    %c0_22 = arith.constant 0 : index
    %c5 = arith.constant 5 : index
    %c0_23 = arith.constant 0 : index
    %50 = vector.load %arg1[%c0_22, %c5, %c0_23] : memref<1x22x32xbf16, #tpu.memory_space<vmem>>, vector<1x16x32xbf16>
    %51 = vector.shape_cast %50 : vector<1x16x32xbf16> to vector<16x32xbf16>
    %52 = arith.extf %51 : vector<16x32xbf16> to vector<16x32xf32>
    %53 = vector.shape_cast %52 : vector<16x32xf32> to vector<1x16x32xf32>
    %c5_24 = arith.constant 5 : index
    %c0_25 = arith.constant 0 : index
    %54 = vector.load %arg2[%c5_24, %c0_25] : memref<7x32xf32, #tpu.memory_space<vmem>>, vector<1x32xf32>
    %55 = vector.shape_cast %54 : vector<1x32xf32> to vector<1x1x32xf32>
    %56 = vector.broadcast %55 : vector<1x1x32xf32> to vector<1x16x32xf32>
    %57 = arith.mulf %53, %56 : vector<1x16x32xf32>
    %58 = arith.addf %49, %57 : vector<1x16x32xf32>
    %c0_26 = arith.constant 0 : index
    %c6 = arith.constant 6 : index
    %c0_27 = arith.constant 0 : index
    %59 = vector.load %arg1[%c0_26, %c6, %c0_27] : memref<1x22x32xbf16, #tpu.memory_space<vmem>>, vector<1x16x32xbf16>
    %60 = vector.shape_cast %59 : vector<1x16x32xbf16> to vector<16x32xbf16>
    %61 = arith.extf %60 : vector<16x32xbf16> to vector<16x32xf32>
    %62 = vector.shape_cast %61 : vector<16x32xf32> to vector<1x16x32xf32>
    %c6_28 = arith.constant 6 : index
    %c0_29 = arith.constant 0 : index
    %63 = vector.load %arg2[%c6_28, %c0_29] : memref<7x32xf32, #tpu.memory_space<vmem>>, vector<1x32xf32>
    %64 = vector.shape_cast %63 : vector<1x32xf32> to vector<1x1x32xf32>
    %65 = vector.broadcast %64 : vector<1x1x32xf32> to vector<1x16x32xf32>
    %66 = arith.mulf %62, %65 : vector<1x16x32xf32>
    %67 = arith.addf %58, %66 : vector<1x16x32xf32>
    %c0_30 = arith.constant 0 : index
    %c0_31 = arith.constant 0 : index
    %c0_32 = arith.constant 0 : index
    %68 = vector.load %arg4[%c0_30, %c0_31, %c0_32] : memref<1x16x32xf32, #tpu.memory_space<vmem>>, vector<1x16x32xf32>
    tpu.vector_store %arg4[%c0_30, %c0_31, %c0_32], %67 {strides = array<i32>} : memref<1x16x32xf32, #tpu.memory_space<vmem>>, vector<1x16x32xf32>,
    return
  }
  func.func @transform_0(%arg0: i32) -> (i32, i32, i32) {
    %c0_i32 = arith.constant 0 : i32
    %c0_i32_0 = arith.constant 0 : i32
    %c0_i32_1 = arith.constant 0 : i32
    return %arg0, %c0_i32, %c0_i32_0 : i32, i32, i32
  }
  func.func @transform_1(%arg0: i32) -> (i32, i32) {
    %c0_i32 = arith.constant 0 : i32
    %c0_i32_0 = arith.constant 0 : i32
    %c0_i32_1 = arith.constant 0 : i32
    return %c0_i32, %c0_i32_0 : i32, i32
  }
  func.func @transform_2(%arg0: i32) -> (i32, i32) {
    %c0_i32 = arith.constant 0 : i32
    %c0_i32_0 = arith.constant 0 : i32
    %c0_i32_1 = arith.constant 0 : i32
    return %c0_i32, %c0_i32_0 : i32, i32
  }
  func.func @transform_3(%arg0: i32) -> (i32, i32, i32) {
    %c0_i32 = arith.constant 0 : i32
    %c0_i32_0 = arith.constant 0 : i32
    %c0_i32_1 = arith.constant 0 : i32
    return %arg0, %c0_i32, %c0_i32_0 : i32, i32, i32
  }
}

module attributes {stable_mosaic.version = 11 : i64} {
  func.func @kern(%arg0: i32, %arg1: memref<32x32xf32, #tpu.memory_space<vmem>>, %arg2: memref<1x32xf32, #tpu.memory_space<vmem>>, %arg3: memref<1x32xf32, #tpu.memory_space<vmem>>, %arg4: memref<32x32xf32, #tpu.memory_space<vmem>>) attributes {dimension_semantics = [#tpu.dimension_semantics<parallel>], iteration_bounds = array<i64: 1>, scalar_prefetch = 0 : i64, scratch_operands = 0 : i64, tpu.core_type = #tpu.core_type<tc>, window_params = [{transform_indices = @transform_0, window_bounds = array<i64: 32, 32>}, {pipeline_mode = #tpu.pipeline_mode<synchronous>, transform_indices = @transform_1, window_bounds = array<i64: 1, 32>}, {pipeline_mode = #tpu.pipeline_mode<synchronous>, transform_indices = @transform_2, window_bounds = array<i64: 1, 32>}, {transform_indices = @transform_3, window_bounds = array<i64: 32, 32>}]} {
    %c0 = arith.constant 0 : index
    %c0_0 = arith.constant 0 : index
    %0 = vector.load %arg1[%c0, %c0_0] : memref<32x32xf32, #tpu.memory_space<vmem>>, vector<32x32xf32>
    %cst = arith.constant dense<0.000000e+00> : vector<32xf32>
    %1 = vector.multi_reduction <add>, %0, %cst [1] : vector<32x32xf32> to vector<32xf32>
    %2 = vector.shape_cast %1 : vector<32xf32> to vector<32x1xf32>
    %cst_1 = arith.constant 3.200000e+01 : f32
    %3 = vector.broadcast %cst_1 : f32 to vector<32x1xf32>
    %4 = arith.divf %2, %3 : vector<32x1xf32>
    %5 = vector.broadcast %4 : vector<32x1xf32> to vector<32x32xf32>
    %6 = arith.subf %0, %5 : vector<32x32xf32>
    %7 = arith.mulf %6, %6 : vector<32x32xf32>
    %cst_2 = arith.constant dense<0.000000e+00> : vector<32xf32>
    %8 = vector.multi_reduction <add>, %7, %cst_2 [1] : vector<32x32xf32> to vector<32xf32>
    %9 = vector.shape_cast %8 : vector<32xf32> to vector<32x1xf32>
    %cst_3 = arith.constant 3.200000e+01 : f32
    %10 = vector.broadcast %cst_3 : f32 to vector<32x1xf32>
    %11 = arith.divf %9, %10 : vector<32x1xf32>
    %cst_4 = arith.constant 9.99999974E-6 : f32
    %12 = vector.broadcast %cst_4 : f32 to vector<32x1xf32>
    %13 = arith.addf %11, %12 : vector<32x1xf32>
    %14 = math.rsqrt %13 : vector<32x1xf32>
    %15 = vector.broadcast %14 : vector<32x1xf32> to vector<32x32xf32>
    %16 = arith.mulf %6, %15 : vector<32x32xf32>
    %c0_5 = arith.constant 0 : index
    %c0_6 = arith.constant 0 : index
    %17 = vector.load %arg2[%c0_5, %c0_6] : memref<1x32xf32, #tpu.memory_space<vmem>>, vector<1x32xf32>
    %18 = vector.broadcast %17 : vector<1x32xf32> to vector<32x32xf32>
    %19 = arith.mulf %16, %18 : vector<32x32xf32>
    %c0_7 = arith.constant 0 : index
    %c0_8 = arith.constant 0 : index
    %20 = vector.load %arg3[%c0_7, %c0_8] : memref<1x32xf32, #tpu.memory_space<vmem>>, vector<1x32xf32>
    %21 = vector.broadcast %20 : vector<1x32xf32> to vector<32x32xf32>
    %22 = arith.addf %19, %21 : vector<32x32xf32>
    %c0_9 = arith.constant 0 : index
    %c0_10 = arith.constant 0 : index
    %23 = vector.load %arg4[%c0_9, %c0_10] : memref<32x32xf32, #tpu.memory_space<vmem>>, vector<32x32xf32>
    tpu.vector_store %arg4[%c0_9, %c0_10], %22 {strides = array<i32>} : memref<32x32xf32, #tpu.memory_space<vmem>>, vector<32x32xf32>,
    return
  }
  func.func @transform_0(%arg0: i32) -> (i32, i32) {
    %c0_i32 = arith.constant 0 : i32
    %c0_i32_0 = arith.constant 0 : i32
    return %arg0, %c0_i32 : i32, i32
  }
  func.func @transform_1(%arg0: i32) -> (i32, i32) {
    %c0_i32 = arith.constant 0 : i32
    %c0_i32_0 = arith.constant 0 : i32
    %c0_i32_1 = arith.constant 0 : i32
    return %c0_i32, %c0_i32_0 : i32, i32
  }
  func.func @transform_2(%arg0: i32) -> (i32, i32) {
    %c0_i32 = arith.constant 0 : i32
    %c0_i32_0 = arith.constant 0 : i32
    %c0_i32_1 = arith.constant 0 : i32
    return %c0_i32, %c0_i32_0 : i32, i32
  }
  func.func @transform_3(%arg0: i32) -> (i32, i32) {
    %c0_i32 = arith.constant 0 : i32
    %c0_i32_0 = arith.constant 0 : i32
    return %arg0, %c0_i32 : i32, i32
  }
}

module attributes {stable_mosaic.version = 11 : i64} {
  func.func @kernel(%arg0: i32, %arg1: i32, %arg2: i32, %arg3: memref<32x128xbf16, #tpu.memory_space<vmem>>, %arg4: memref<128x128xbf16, #tpu.memory_space<vmem>>, %arg5: memref<1x128xf32, #tpu.memory_space<vmem>>, %arg6: memref<32x128xf32, #tpu.memory_space<vmem>>, %arg7: memref<32x128xf32, #tpu.memory_space<vmem>>) attributes {dimension_semantics = [#tpu.dimension_semantics<parallel>, #tpu.dimension_semantics<parallel>, #tpu.dimension_semantics<arbitrary>], iteration_bounds = array<i64: 1, 1, 1>, scalar_prefetch = 0 : i64, scratch_operands = 1 : i64, tpu.core_type = #tpu.core_type<tc>, window_params = [{transform_indices = @transform_0, window_bounds = array<i64: 32, 128>}, {transform_indices = @transform_1, window_bounds = array<i64: 128, 128>}, {transform_indices = @transform_2, window_bounds = array<i64: 1, 128>}, {transform_indices = @transform_3, window_bounds = array<i64: 32, 128>}]} {
    %c0_i32 = arith.constant 0 : i32
    %0 = arith.cmpi eq, %arg2, %c0_i32 : i32
    %1 = arith.extui %0 : i1 to i32
    %c0_i32_0 = arith.constant 0 : i32
    %2 = arith.cmpi ne, %1, %c0_i32_0 : i32
    scf.if %2 {
      %cst_10 = arith.constant 0.000000e+00 : f32
      %12 = vector.broadcast %cst_10 : f32 to vector<32x128xf32>
      %c0_11 = arith.constant 0 : index
      %c0_12 = arith.constant 0 : index
      %13 = vector.load %arg7[%c0_11, %c0_12] : memref<32x128xf32, #tpu.memory_space<vmem>>, vector<32x128xf32>
      tpu.vector_store %arg7[%c0_11, %c0_12], %12 {strides = array<i32>} : memref<32x128xf32, #tpu.memory_space<vmem>>, vector<32x128xf32>,
    } else {
    }
    %c0 = arith.constant 0 : index
    %c0_1 = arith.constant 0 : index
    %3 = vector.load %arg7[%c0, %c0_1] : memref<32x128xf32, #tpu.memory_space<vmem>>, vector<32x128xf32>
    %c0_2 = arith.constant 0 : index
    %c0_3 = arith.constant 0 : index
    %4 = vector.load %arg3[%c0_2, %c0_3] : memref<32x128xbf16, #tpu.memory_space<vmem>>, vector<32x128xbf16>
    %c0_4 = arith.constant 0 : index
    %c0_5 = arith.constant 0 : index
    %5 = vector.load %arg4[%c0_4, %c0_5] : memref<128x128xbf16, #tpu.memory_space<vmem>>, vector<128x128xbf16>
    %cst = arith.constant dense<0.000000e+00> : vector<32x128xf32>
    %6 = tpu.matmul %4, %5, %cst {dimension_numbers = #tpu.dot_dimension_numbers<[1], [0], [0], [1], [0, 0, 1, 1], [], []>} : vector<32x128xbf16>, vector<128x128xbf16>, vector<32x128xf32> -> vector<32x128xf32>
    %7 = arith.addf %3, %6 : vector<32x128xf32>
    %c0_6 = arith.constant 0 : index
    %c0_7 = arith.constant 0 : index
    %8 = vector.load %arg7[%c0_6, %c0_7] : memref<32x128xf32, #tpu.memory_space<vmem>>, vector<32x128xf32>
    tpu.vector_store %arg7[%c0_6, %c0_7], %7 {strides = array<i32>} : memref<32x128xf32, #tpu.memory_space<vmem>>, vector<32x128xf32>,
    %c0_i32_8 = arith.constant 0 : i32
    %9 = arith.cmpi eq, %arg2, %c0_i32_8 : i32
    %10 = arith.extui %9 : i1 to i32
    %c0_i32_9 = arith.constant 0 : i32
    %11 = arith.cmpi ne, %10, %c0_i32_9 : i32
    scf.if %11 {
      %c0_10 = arith.constant 0 : index
      %c0_11 = arith.constant 0 : index
      %12 = vector.load %arg7[%c0_10, %c0_11] : memref<32x128xf32, #tpu.memory_space<vmem>>, vector<32x128xf32>
      %c0_12 = arith.constant 0 : index
      %c0_13 = arith.constant 0 : index
      %13 = vector.load %arg5[%c0_12, %c0_13] : memref<1x128xf32, #tpu.memory_space<vmem>>, vector<1x128xf32>
      %14 = vector.broadcast %13 : vector<1x128xf32> to vector<32x128xf32>
      %15 = arith.addf %12, %14 : vector<32x128xf32>
      %c0_14 = arith.constant 0 : index
      %c0_15 = arith.constant 0 : index
      %16 = vector.load %arg6[%c0_14, %c0_15] : memref<32x128xf32, #tpu.memory_space<vmem>>, vector<32x128xf32>
      tpu.vector_store %arg6[%c0_14, %c0_15], %15 {strides = array<i32>} : memref<32x128xf32, #tpu.memory_space<vmem>>, vector<32x128xf32>,
    } else {
    }
    return
  }
  func.func @transform_0(%arg0: i32, %arg1: i32, %arg2: i32) -> (i32, i32) {
    %c0_i32 = arith.constant 0 : i32
    return %arg0, %arg2 : i32, i32
  }
  func.func @transform_1(%arg0: i32, %arg1: i32, %arg2: i32) -> (i32, i32) {
    %c0_i32 = arith.constant 0 : i32
    return %arg2, %arg1 : i32, i32
  }
  func.func @transform_2(%arg0: i32, %arg1: i32, %arg2: i32) -> (i32, i32) {
    %c0_i32 = arith.constant 0 : i32
    %c0_i32_0 = arith.constant 0 : i32
    return %c0_i32, %arg1 : i32, i32
  }
  func.func @transform_3(%arg0: i32, %arg1: i32, %arg2: i32) -> (i32, i32) {
    %c0_i32 = arith.constant 0 : i32
    return %arg0, %arg1 : i32, i32
  }
}

module attributes {stable_mosaic.version = 11 : i64} {
  func.func @kernel(%arg0: i32, %arg1: i32, %arg2: i32, %arg3: memref<32x128xbf16, #tpu.memory_space<vmem>>, %arg4: memref<128x128xbf16, #tpu.memory_space<vmem>>, %arg5: memref<32x128xf32, #tpu.memory_space<vmem>>, %arg6: memref<32x128xf32, #tpu.memory_space<vmem>>) attributes {dimension_semantics = [#tpu.dimension_semantics<parallel>, #tpu.dimension_semantics<parallel>, #tpu.dimension_semantics<arbitrary>], iteration_bounds = array<i64: 1, 1, 1>, scalar_prefetch = 0 : i64, scratch_operands = 1 : i64, tpu.core_type = #tpu.core_type<tc>, window_params = [{transform_indices = @transform_0, window_bounds = array<i64: 32, 128>}, {transform_indices = @transform_1, window_bounds = array<i64: 128, 128>}, {transform_indices = @transform_2, window_bounds = array<i64: 32, 128>}]} {
    %c0_i32 = arith.constant 0 : i32
    %0 = arith.cmpi eq, %arg2, %c0_i32 : i32
    %1 = arith.extui %0 : i1 to i32
    %c0_i32_0 = arith.constant 0 : i32
    %2 = arith.cmpi ne, %1, %c0_i32_0 : i32
    scf.if %2 {
      %cst_10 = arith.constant 0.000000e+00 : f32
      %12 = vector.broadcast %cst_10 : f32 to vector<32x128xf32>
      %c0_11 = arith.constant 0 : index
      %c0_12 = arith.constant 0 : index
      %13 = vector.load %arg6[%c0_11, %c0_12] : memref<32x128xf32, #tpu.memory_space<vmem>>, vector<32x128xf32>
      tpu.vector_store %arg6[%c0_11, %c0_12], %12 {strides = array<i32>} : memref<32x128xf32, #tpu.memory_space<vmem>>, vector<32x128xf32>,
    } else {
    }
    %c0 = arith.constant 0 : index
    %c0_1 = arith.constant 0 : index
    %3 = vector.load %arg6[%c0, %c0_1] : memref<32x128xf32, #tpu.memory_space<vmem>>, vector<32x128xf32>
    %c0_2 = arith.constant 0 : index
    %c0_3 = arith.constant 0 : index
    %4 = vector.load %arg3[%c0_2, %c0_3] : memref<32x128xbf16, #tpu.memory_space<vmem>>, vector<32x128xbf16>
    %c0_4 = arith.constant 0 : index
    %c0_5 = arith.constant 0 : index
    %5 = vector.load %arg4[%c0_4, %c0_5] : memref<128x128xbf16, #tpu.memory_space<vmem>>, vector<128x128xbf16>
    %cst = arith.constant dense<0.000000e+00> : vector<32x128xf32>
    %6 = tpu.matmul %4, %5, %cst {dimension_numbers = #tpu.dot_dimension_numbers<[1], [0], [0], [1], [0, 0, 1, 1], [], []>} : vector<32x128xbf16>, vector<128x128xbf16>, vector<32x128xf32> -> vector<32x128xf32>
    %7 = arith.addf %3, %6 : vector<32x128xf32>
    %c0_6 = arith.constant 0 : index
    %c0_7 = arith.constant 0 : index
    %8 = vector.load %arg6[%c0_6, %c0_7] : memref<32x128xf32, #tpu.memory_space<vmem>>, vector<32x128xf32>
    tpu.vector_store %arg6[%c0_6, %c0_7], %7 {strides = array<i32>} : memref<32x128xf32, #tpu.memory_space<vmem>>, vector<32x128xf32>,
    %c0_i32_8 = arith.constant 0 : i32
    %9 = arith.cmpi eq, %arg2, %c0_i32_8 : i32
    %10 = arith.extui %9 : i1 to i32
    %c0_i32_9 = arith.constant 0 : i32
    %11 = arith.cmpi ne, %10, %c0_i32_9 : i32
    scf.if %11 {
      %c0_10 = arith.constant 0 : index
      %c0_11 = arith.constant 0 : index
      %12 = vector.load %arg6[%c0_10, %c0_11] : memref<32x128xf32, #tpu.memory_space<vmem>>, vector<32x128xf32>
      %c0_12 = arith.constant 0 : index
      %c0_13 = arith.constant 0 : index
      %13 = vector.load %arg5[%c0_12, %c0_13] : memref<32x128xf32, #tpu.memory_space<vmem>>, vector<32x128xf32>
      tpu.vector_store %arg5[%c0_12, %c0_13], %12 {strides = array<i32>} : memref<32x128xf32, #tpu.memory_space<vmem>>, vector<32x128xf32>,
    } else {
    }
    return
  }
  func.func @transform_0(%arg0: i32, %arg1: i32, %arg2: i32) -> (i32, i32) {
    %c0_i32 = arith.constant 0 : i32
    return %arg0, %arg2 : i32, i32
  }
  func.func @transform_1(%arg0: i32, %arg1: i32, %arg2: i32) -> (i32, i32) {
    %c0_i32 = arith.constant 0 : i32
    return %arg2, %arg1 : i32, i32
  }
  func.func @transform_2(%arg0: i32, %arg1: i32, %arg2: i32) -> (i32, i32) {
    %c0_i32 = arith.constant 0 : i32
    return %arg0, %arg1 : i32, i32
  }
}

module attributes {stable_mosaic.version = 11 : i64} {
  func.func @kernel(%arg0: i32, %arg1: i32, %arg2: i32, %arg3: memref<32x256xbf16, #tpu.memory_space<vmem>>, %arg4: memref<256x128xbf16, #tpu.memory_space<vmem>>, %arg5: memref<32x128xf32, #tpu.memory_space<vmem>>, %arg6: memref<32x128xf32, #tpu.memory_space<vmem>>) attributes {dimension_semantics = [#tpu.dimension_semantics<parallel>, #tpu.dimension_semantics<parallel>, #tpu.dimension_semantics<arbitrary>], iteration_bounds = array<i64: 1, 1, 1>, scalar_prefetch = 0 : i64, scratch_operands = 1 : i64, tpu.core_type = #tpu.core_type<tc>, window_params = [{transform_indices = @transform_0, window_bounds = array<i64: 32, 256>}, {transform_indices = @transform_1, window_bounds = array<i64: 256, 128>}, {transform_indices = @transform_2, window_bounds = array<i64: 32, 128>}]} {
    %c0_i32 = arith.constant 0 : i32
    %0 = arith.cmpi eq, %arg2, %c0_i32 : i32
    %1 = arith.extui %0 : i1 to i32
    %c0_i32_0 = arith.constant 0 : i32
    %2 = arith.cmpi ne, %1, %c0_i32_0 : i32
    scf.if %2 {
      %cst_10 = arith.constant 0.000000e+00 : f32
      %12 = vector.broadcast %cst_10 : f32 to vector<32x128xf32>
      %c0_11 = arith.constant 0 : index
      %c0_12 = arith.constant 0 : index
      %13 = vector.load %arg6[%c0_11, %c0_12] : memref<32x128xf32, #tpu.memory_space<vmem>>, vector<32x128xf32>
      tpu.vector_store %arg6[%c0_11, %c0_12], %12 {strides = array<i32>} : memref<32x128xf32, #tpu.memory_space<vmem>>, vector<32x128xf32>,
    } else {
    }
    %c0 = arith.constant 0 : index
    %c0_1 = arith.constant 0 : index
    %3 = vector.load %arg6[%c0, %c0_1] : memref<32x128xf32, #tpu.memory_space<vmem>>, vector<32x128xf32>
    %c0_2 = arith.constant 0 : index
    %c0_3 = arith.constant 0 : index
    %4 = vector.load %arg3[%c0_2, %c0_3] : memref<32x256xbf16, #tpu.memory_space<vmem>>, vector<32x256xbf16>
    %c0_4 = arith.constant 0 : index
    %c0_5 = arith.constant 0 : index
    %5 = vector.load %arg4[%c0_4, %c0_5] : memref<256x128xbf16, #tpu.memory_space<vmem>>, vector<256x128xbf16>
    %cst = arith.constant dense<0.000000e+00> : vector<32x128xf32>
    %6 = tpu.matmul %4, %5, %cst {dimension_numbers = #tpu.dot_dimension_numbers<[1], [0], [0], [1], [0, 0, 1, 1], [], []>} : vector<32x256xbf16>, vector<256x128xbf16>, vector<32x128xf32> -> vector<32x128xf32>
    %7 = arith.addf %3, %6 : vector<32x128xf32>
    %c0_6 = arith.constant 0 : index
    %c0_7 = arith.constant 0 : index
    %8 = vector.load %arg6[%c0_6, %c0_7] : memref<32x128xf32, #tpu.memory_space<vmem>>, vector<32x128xf32>
    tpu.vector_store %arg6[%c0_6, %c0_7], %7 {strides = array<i32>} : memref<32x128xf32, #tpu.memory_space<vmem>>, vector<32x128xf32>,
    %c0_i32_8 = arith.constant 0 : i32
    %9 = arith.cmpi eq, %arg2, %c0_i32_8 : i32
    %10 = arith.extui %9 : i1 to i32
    %c0_i32_9 = arith.constant 0 : i32
    %11 = arith.cmpi ne, %10, %c0_i32_9 : i32
    scf.if %11 {
      %c0_10 = arith.constant 0 : index
      %c0_11 = arith.constant 0 : index
      %12 = vector.load %arg6[%c0_10, %c0_11] : memref<32x128xf32, #tpu.memory_space<vmem>>, vector<32x128xf32>
      %c0_12 = arith.constant 0 : index
      %c0_13 = arith.constant 0 : index
      %13 = vector.load %arg5[%c0_12, %c0_13] : memref<32x128xf32, #tpu.memory_space<vmem>>, vector<32x128xf32>
      tpu.vector_store %arg5[%c0_12, %c0_13], %12 {strides = array<i32>} : memref<32x128xf32, #tpu.memory_space<vmem>>, vector<32x128xf32>,
    } else {
    }
    return
  }
  func.func @transform_0(%arg0: i32, %arg1: i32, %arg2: i32) -> (i32, i32) {
    %c0_i32 = arith.constant 0 : i32
    return %arg0, %arg2 : i32, i32
  }
  func.func @transform_1(%arg0: i32, %arg1: i32, %arg2: i32) -> (i32, i32) {
    %c0_i32 = arith.constant 0 : i32
    return %arg2, %arg1 : i32, i32
  }
  func.func @transform_2(%arg0: i32, %arg1: i32, %arg2: i32) -> (i32, i32) {
    %c0_i32 = arith.constant 0 : i32
    return %arg0, %arg1 : i32, i32
  }
}

</mosaic_0001>

<llo_original>
// kernel: tpu_custom_call.1
$region0: #{tpu_custom_call.1}
  #allocation0 [shape = 'u32[]', space=smem, size = 0x4, offset = 0x4, fixed_abs, tag = 'smem constant byte address 0x4 - core index']
  #allocation1 [shape = 'u32[144,128]{1,0:T(1,128)}', space=vmem, size = 0x12000, scoped, tag = 'internal scratch']
  %s0 = inlined_call_operand.hbm [shape: f32[8,128], index: 0, kind: input, shape index: {}]
  %s1 = inlined_call_operand.hbm [shape: f32[8,128], index: 1, kind: output, shape index: {}]
  %s2 = sld [smem:[#allocation0]]
  $region18: #{tpu_custom_call.1} parent=0
    _
  %s4 = ssub.s32 1, %s2
  %s5 = scalar_select 0, %s4, %s2
  $region1: #{tpu_custom_call.1} parent=0
    #allocation2 [shape = 'u8[4096]{0}', space=vmem, size = 0x1000, scoped, tag = 'input window, operand 0, single buffered']
    #allocation3 [shape = 's32[1]{0}', space=sflag, size = 0x4, scoped, tag = 'scoped memory for tpu_custom_call.1']
    #allocation4 [shape = 's32[1]{0}', space=sflag, size = 0x4, scoped, tag = 'scoped memory for tpu_custom_call.1']
    #allocation5 [shape = 'u8[4096]{0}', space=vmem, size = 0x1000, scoped, tag = 'output window, operand 0, single buffered']
    %6 = vsyncpa [#allocation3], 0
    %7 = vsyncpa [#allocation4], 0
    // Predicated region
    $region2: #{tpu_custom_call.1} parent=1 // pred_check
      _
    $region3: #{tpu_custom_call.1} parent=1 // pred_check_branch
      %9 = sbr.rel (0) target = $region5
    $region4: #{tpu_custom_call.1} parent=1 // pred_region
      %s11 = ssub.s32 128, 128
      %12 = vsyncadd [#allocation3], %s11
      %s14 = sshll.u32 [#allocation2], 4
      %s15 = int_to_ptr.vmem [resolvable:$true] %s14
      %17 = dma.hbm_to_vmem [thread:$0]  %s0, 128, %s15, [#allocation3]
    $region5: #{tpu_custom_call.1} parent=1 // pred_fallthru
      _
    // Predicated region
    $region6: #{tpu_custom_call.1} parent=1 // pred_check
      _
    $region7: #{tpu_custom_call.1} parent=1 // pred_check_branch
      %19 = sbr.rel (0) target = $region9
    $region8: #{tpu_custom_call.1} parent=1 // pred_region
      %20 = dma.done [#allocation3], 128
    $region9: #{tpu_custom_call.1} parent=1 // pred_fallthru
      _
    %s21 = sadd.s32 0, 127
    %v22 = vld [vmem:[#allocation2] sm:$0xff]
    %s23 = sand.u32 %s21, 127
    %s24 = sand.u32 %s23, 127
    %s25 = sand.u32 %s24, 127
    %s26 = sand.u32 %s25, 255
    %s28 = sor.u32 256, %s26
    %29 = vrot.lane.b32.xlu0 %v22, %s28
    %v30 = vpop.permute.xlu0 %29
    %31 = vst [vmem:[#allocation5] sm:$0xff] %v30
    // Predicated region
    $region10: #{tpu_custom_call.1} parent=1 // pred_check
      _
    $region11: #{tpu_custom_call.1} parent=1 // pred_check_branch
      %33 = sbr.rel (0) target = $region13
    $region12: #{tpu_custom_call.1} parent=1 // pred_region
      %s35 = ssub.s32 128, 128
      %36 = vsyncadd [#allocation4], %s35
      %s38 = sshll.u32 [#allocation5], 4
      %s39 = int_to_ptr.vmem [resolvable:$true] %s38
      %41 = dma.vmem_to_hbm [thread:$0]  %s39, 128, %s1, [#allocation4]
    $region13: #{tpu_custom_call.1} parent=1 // pred_fallthru
      _
    // Predicated region
    $region14: #{tpu_custom_call.1} parent=1 // pred_check
      _
    $region15: #{tpu_custom_call.1} parent=1 // pred_check_branch
      %43 = sbr.rel (0) target = $region17
    $region16: #{tpu_custom_call.1} parent=1 // pred_region
      %44 = dma.done [#allocation4], 128
    $region17: #{tpu_custom_call.1} parent=1 // pred_fallthru
      _
    %45 = vsyncpa [#allocation3], 1
    %46 = vsyncpa [#allocation4], 1

// kernel: fastspeech2_forward.105
$region0: #{fastspeech2_forward.105}
  #allocation0 [shape = 'u32[]', space=smem, size = 0x4, offset = 0x4, fixed_abs, tag = 'smem constant byte address 0x4 - core index']
  #allocation1 [shape = 'u32[144,128]{1,0:T(1,128)}', space=vmem, size = 0x12000, scoped, tag = 'internal scratch']
  #allocation2 [shape = 'f32[16,128]{1,0:T(8,128)}', space=vmem, size = 0x2000, scoped, tag = 'scratch operand']
  %s0 = inlined_call_operand.vmem [shape: bf16[16,128], index: 0, kind: input, shape index: {}]
  %s1 = inlined_call_operand.vmem [shape: bf16[128,128], index: 1, kind: input, shape index: {}]
  %s2 = inlined_call_operand.vmem [shape: bf16[16,128], index: 2, kind: output, shape index: {}]
  %s3 = sld [smem:[#allocation0]]
  $region26: #{fastspeech2_forward.105} parent=0
    _
  %s5 = ssub.s32 1, %s3
  %s6 = scalar_select 0, %s5, %s3
  // Predicated region
  $region2: #{fastspeech2_forward.105} parent=0 // pred_check
    _
  $region3: #{fastspeech2_forward.105} parent=0 // pred_check_branch
    %8 = sbr.rel (0) target = $region5
  $region4: #{fastspeech2_forward.105} parent=0 // pred_region
    _
  $region5: #{fastspeech2_forward.105} parent=0 // pred_fallthru
    _
  // Predicated region
  $region6: #{fastspeech2_forward.105} parent=0 // pred_check
    _
  $region7: #{fastspeech2_forward.105} parent=0 // pred_check_branch
    %10 = sbr.rel (0) target = $region9
  $region8: #{fastspeech2_forward.105} parent=0 // pred_region
    _
  $region9: #{fastspeech2_forward.105} parent=0 // pred_fallthru
    _
  %p12 = scmp.eq.s32.totalorder 0, 0
  // Predicated region
  $region10: #{fastspeech2_forward.105} parent=0 // pred_check
    %p13 = pneg %p12
  $region11: #{fastspeech2_forward.105} parent=0 // pred_check_branch
    %15 = sbr.rel (%p13) target = $region13
  $region12: #{fastspeech2_forward.105} parent=0 // pred_region
    %16 = vst [vmem:[#allocation2] sm:$0xff] 0.0
    %17 = vst [vmem:[#allocation2 + $0x8] sm:$0xff] 0.0
  $region13: #{fastspeech2_forward.105} parent=0 // pred_fallthru
    _
  %v18 = vld [vmem:[#allocation2] sm:$0xff]
  %v19 = vld [vmem:[#allocation2 + $0x8] sm:$0xff]
  %v20 = vld [vmem:[%s0] sm:$0xf]
  %v21 = vld [vmem:[%s0 + $0x4] sm:$0xf]
  %v22 = vld [vmem:[%s1] sm:$0xf]
  %v23 = vld [vmem:[%s1 + $0x4] sm:$0xf]
  %v24 = vld [vmem:[%s1 + $0x8] sm:$0xf]
  %v25 = vld [vmem:[%s1 + $0xc] sm:$0xf]
  %v26 = vld [vmem:[%s1 + $0x10] sm:$0xf]
  %v27 = vld [vmem:[%s1 + $0x14] sm:$0xf]
  %v28 = vld [vmem:[%s1 + $0x18] sm:$0xf]
  %v29 = vld [vmem:[%s1 + $0x1c] sm:$0xf]
  %v30 = vld [vmem:[%s1 + $0x20] sm:$0xf]
  %v31 = vld [vmem:[%s1 + $0x24] sm:$0xf]
  %v32 = vld [vmem:[%s1 + $0x28] sm:$0xf]
  %v33 = vld [vmem:[%s1 + $0x2c] sm:$0xf]
  %v34 = vld [vmem:[%s1 + $0x30] sm:$0xf]
  %v35 = vld [vmem:[%s1 + $0x34] sm:$0xf]
  %v36 = vld [vmem:[%s1 + $0x38] sm:$0xf]
  %v37 = vld [vmem:[%s1 + $0x3c] sm:$0xf]
  %v40 = vunpack.c.l.b16 %v20
  %v41 = vunpack.c.l.b16 %v21
  %v42 = vpack.c.b16 %v41, %v40
  %v60 = vunpack.c.l.b16 %v22
  %v61 = vunpack.c.l.b16 %v23
  %v62 = vunpack.c.l.b16 %v24
  %v63 = vunpack.c.l.b16 %v25
  %v64 = vunpack.c.l.b16 %v26
  %v65 = vunpack.c.l.b16 %v27
  %v66 = vunpack.c.l.b16 %v28
  %v67 = vunpack.c.l.b16 %v29
  %v68 = vunpack.c.l.b16 %v30
  %v69 = vunpack.c.l.b16 %v31
  %v70 = vunpack.c.l.b16 %v32
  %v71 = vunpack.c.l.b16 %v33
  %v72 = vunpack.c.l.b16 %v34
  %v73 = vunpack.c.l.b16 %v35
  %v74 = vunpack.c.l.b16 %v36
  %v75 = vunpack.c.l.b16 %v37
  %v76 = vpack.c.b16 %v61, %v60
  %v77 = vpack.c.b16 %v63, %v62
  %v78 = vpack.c.b16 %v65, %v64
  %v79 = vpack.c.b16 %v67, %v66
  %v80 = vpack.c.b16 %v69, %v68
  %v81 = vpack.c.b16 %v71, %v70
  %v82 = vpack.c.b16 %v73, %v72
  %v83 = vpack.c.b16 %v75, %v74
  %92 = vmatprep.subr.bf16.mxu0 0
  %93 = vmatpush1.bf16.msra.mxu0 %v76
  %94 = vmatprep.subr.bf16.mxu0 0
  %95 = vmatpush1.bf16.msra.mxu0 %v77
  %96 = vmatprep.subr.bf16.mxu0 0
  %97 = vmatpush1.bf16.msra.mxu0 %v78
  %98 = vmatprep.subr.bf16.mxu0 0
  %99 = vmatpush1.bf16.msra.mxu0 %v79
  %100 = vmatprep.subr.bf16.mxu0 0
  %101 = vmatpush1.bf16.msra.mxu0 %v80
  %102 = vmatprep.subr.bf16.mxu0 0
  %103 = vmatpush1.bf16.msra.mxu0 %v81
  %104 = vmatprep.subr.bf16.mxu0 0
  %105 = vmatpush1.bf16.msra.mxu0 %v82
  %106 = vmatprep.subr.bf16.mxu0 0
  %107 = vmatpush1.bf16.msra.mxu0 %v83
  %108 = vmatprep.subr.bf16.mxu0 0
  %109 = vmatpush1.bf16.msra.mxu0 0
  %110 = vmatprep.subr.bf16.mxu0 0
  %111 = vmatpush1.bf16.msra.mxu0 0
  %112 = vmatprep.subr.bf16.mxu0 0
  %113 = vmatpush1.bf16.msra.mxu0 0
  %114 = vmatprep.subr.bf16.mxu0 0
  %115 = vmatpush1.bf16.msra.mxu0 0
  %116 = vmatprep.subr.bf16.mxu0 0
  %117 = vmatpush1.bf16.msra.mxu0 0
  %118 = vmatprep.subr.bf16.mxu0 0
  %119 = vmatpush1.bf16.msra.mxu0 0
  %120 = vmatprep.subr.bf16.mxu0 0
  %121 = vmatpush1.bf16.msra.mxu0 0
  %122 = vmatprep.subr.bf16.mxu0 0
  %123 = vmatpush1.bf16.msra.mxu0 0
  %124 = vmatprep.mubr.bf16.mxu0 0
  %125 = vmatmul.mubr.bf16.gmra.mrb[0].mxu0 %v42
  %v126 = vpop.f32.mrb[0].mxu0
  %v127 = vadd.f32 0.0, %v126
  %v128 = vpop.f32.mrb[0].mxu0
  %v129 = vpop.f32.mrb[0].mxu0
  %v130 = vadd.f32 0.0, %v129
  %v131 = vpop.f32.mrb[0].mxu0
  %132 = vdwg.mxu0
  %v133 = vadd.f32 %v18, %v127
  %v134 = vadd.f32 %v19, %v130
  %135 = vst [vmem:[#allocation2] sm:$0xff] %v133
  %136 = vst [vmem:[#allocation2 + $0x8] sm:$0xff] %v134
  // Predicated region
  $region14: #{fastspeech2_forward.105} parent=0 // pred_check
    %p137 = pneg %p12
  $region15: #{fastspeech2_forward.105} parent=0 // pred_check_branch
    %139 = sbr.rel (%p137) target = $region17
  $region16: #{fastspeech2_forward.105} parent=0 // pred_region
    %v140 = vld [vmem:[#allocation2] sm:$0xff]
    %v141 = vld [vmem:[#allocation2 + $0x8] sm:$0xff]
    %v142 = vpack.c.bf16 %v141, %v140
    %v144 = vunpack.c.l.b16 %v142
    %v145 = vunpack.c.h.b16 %v142
    %v146 = vpack.c.b16 %v144, %v144
    %v147 = vpack.c.b16 %v145, %v145
    %150 = vst [vmem:[%s2] sm:$0xf] %v146
    %151 = vst [vmem:[%s2 + $0x4] sm:$0xf] %v147
  $region17: #{fastspeech2_forward.105} parent=0 // pred_fallthru
    _
  // Predicated region
  $region18: #{fastspeech2_forward.105} parent=0 // pred_check
    _
  $region19: #{fastspeech2_forward.105} parent=0 // pred_check_branch
    %153 = sbr.rel (0) target = $region21
  $region20: #{fastspeech2_forward.105} parent=0 // pred_region
    _
  $region21: #{fastspeech2_forward.105} parent=0 // pred_fallthru
    _
  // Predicated region
  $region22: #{fastspeech2_forward.105} parent=0 // pred_check
    _
  $region23: #{fastspeech2_forward.105} parent=0 // pred_check_branch
    %155 = sbr.rel (0) target = $region25
  $region24: #{fastspeech2_forward.105} parent=0 // pred_region
    _
  $region25: #{fastspeech2_forward.105} parent=0 // pred_fallthru
    _

// kernel: fastspeech2_forward.96
$region0: #{fastspeech2_forward.96}
  #allocation0 [shape = 'u32[]', space=smem, size = 0x4, offset = 0x4, fixed_abs, tag = 'smem constant byte address 0x4 - core index']
  #allocation1 [shape = 'u32[144,128]{1,0:T(1,128)}', space=vmem, size = 0x12000, scoped, tag = 'internal scratch']
  #allocation2 [shape = 'f32[16,128]{1,0:T(8,128)}', space=vmem, size = 0x2000, scoped, tag = 'scratch operand']
  %s0 = inlined_call_operand.vmem [shape: bf16[16,128], index: 0, kind: input, shape index: {}]
  %s1 = inlined_call_operand.vmem [shape: bf16[128,128], index: 1, kind: input, shape index: {}]
  %s2 = inlined_call_operand.vmem [shape: f32[1,128], index: 2, kind: input, shape index: {}]
  %s3 = inlined_call_operand.vmem [shape: bf16[16,128], index: 3, kind: output, shape index: {}]
  %s4 = sld [smem:[#allocation0]]
  $region30: #{fastspeech2_forward.96} parent=0
    _
  %s6 = ssub.s32 1, %s4
  %s7 = scalar_select 0, %s6, %s4
  // Predicated region
  $region2: #{fastspeech2_forward.96} parent=0 // pred_check
    _
  $region3: #{fastspeech2_forward.96} parent=0 // pred_check_branch
    %9 = sbr.rel (0) target = $region5
  $region4: #{fastspeech2_forward.96} parent=0 // pred_region
    _
  $region5: #{fastspeech2_forward.96} parent=0 // pred_fallthru
    _
  // Predicated region
  $region6: #{fastspeech2_forward.96} parent=0 // pred_check
    _
  $region7: #{fastspeech2_forward.96} parent=0 // pred_check_branch
    %11 = sbr.rel (0) target = $region9
  $region8: #{fastspeech2_forward.96} parent=0 // pred_region
    _
  $region9: #{fastspeech2_forward.96} parent=0 // pred_fallthru
    _
  // Predicated region
  $region10: #{fastspeech2_forward.96} parent=0 // pred_check
    _
  $region11: #{fastspeech2_forward.96} parent=0 // pred_check_branch
    %13 = sbr.rel (0) target = $region13
  $region12: #{fastspeech2_forward.96} parent=0 // pred_region
    _
  $region13: #{fastspeech2_forward.96} parent=0 // pred_fallthru
    _
  %p15 = scmp.eq.s32.totalorder 0, 0
  // Predicated region
  $region14: #{fastspeech2_forward.96} parent=0 // pred_check
    %p16 = pneg %p15
  $region15: #{fastspeech2_forward.96} parent=0 // pred_check_branch
    %18 = sbr.rel (%p16) target = $region17
  $region16: #{fastspeech2_forward.96} parent=0 // pred_region
    %19 = vst [vmem:[#allocation2] sm:$0xff] 0.0
    %20 = vst [vmem:[#allocation2 + $0x8] sm:$0xff] 0.0
  $region17: #{fastspeech2_forward.96} parent=0 // pred_fallthru
    _
  %v21 = vld [vmem:[#allocation2] sm:$0xff]
  %v22 = vld [vmem:[#allocation2 + $0x8] sm:$0xff]
  %v23 = vld [vmem:[%s0] sm:$0xf]
  %v24 = vld [vmem:[%s0 + $0x4] sm:$0xf]
  %v25 = vld [vmem:[%s1] sm:$0xf]
  %v26 = vld [vmem:[%s1 + $0x4] sm:$0xf]
  %v27 = vld [vmem:[%s1 + $0x8] sm:$0xf]
  %v28 = vld [vmem:[%s1 + $0xc] sm:$0xf]
  %v29 = vld [vmem:[%s1 + $0x10] sm:$0xf]
  %v30 = vld [vmem:[%s1 + $0x14] sm:$0xf]
  %v31 = vld [vmem:[%s1 + $0x18] sm:$0xf]
  %v32 = vld [vmem:[%s1 + $0x1c] sm:$0xf]
  %v33 = vld [vmem:[%s1 + $0x20] sm:$0xf]
  %v34 = vld [vmem:[%s1 + $0x24] sm:$0xf]
  %v35 = vld [vmem:[%s1 + $0x28] sm:$0xf]
  %v36 = vld [vmem:[%s1 + $0x2c] sm:$0xf]
  %v37 = vld [vmem:[%s1 + $0x30] sm:$0xf]
  %v38 = vld [vmem:[%s1 + $0x34] sm:$0xf]
  %v39 = vld [vmem:[%s1 + $0x38] sm:$0xf]
  %v40 = vld [vmem:[%s1 + $0x3c] sm:$0xf]
  %v43 = vunpack.c.l.b16 %v23
  %v44 = vunpack.c.l.b16 %v24
  %v45 = vpack.c.b16 %v44, %v43
  %v63 = vunpack.c.l.b16 %v25
  %v64 = vunpack.c.l.b16 %v26
  %v65 = vunpack.c.l.b16 %v27
  %v66 = vunpack.c.l.b16 %v28
  %v67 = vunpack.c.l.b16 %v29
  %v68 = vunpack.c.l.b16 %v30
  %v69 = vunpack.c.l.b16 %v31
  %v70 = vunpack.c.l.b16 %v32
  %v71 = vunpack.c.l.b16 %v33
  %v72 = vunpack.c.l.b16 %v34
  %v73 = vunpack.c.l.b16 %v35
  %v74 = vunpack.c.l.b16 %v36
  %v75 = vunpack.c.l.b16 %v37
  %v76 = vunpack.c.l.b16 %v38
  %v77 = vunpack.c.l.b16 %v39
  %v78 = vunpack.c.l.b16 %v40
  %v79 = vpack.c.b16 %v64, %v63
  %v80 = vpack.c.b16 %v66, %v65
  %v81 = vpack.c.b16 %v68, %v67
  %v82 = vpack.c.b16 %v70, %v69
  %v83 = vpack.c.b16 %v72, %v71
  %v84 = vpack.c.b16 %v74, %v73
  %v85 = vpack.c.b16 %v76, %v75
  %v86 = vpack.c.b16 %v78, %v77
  %95 = vmatprep.subr.bf16.mxu0 0
  %96 = vmatpush1.bf16.msra.mxu0 %v79
  %97 = vmatprep.subr.bf16.mxu0 0
  %98 = vmatpush1.bf16.msra.mxu0 %v80
  %99 = vmatprep.subr.bf16.mxu0 0
  %100 = vmatpush1.bf16.msra.mxu0 %v81
  %101 = vmatprep.subr.bf16.mxu0 0
  %102 = vmatpush1.bf16.msra.mxu0 %v82
  %103 = vmatprep.subr.bf16.mxu0 0
  %104 = vmatpush1.bf16.msra.mxu0 %v83
  %105 = vmatprep.subr.bf16.mxu0 0
  %106 = vmatpush1.bf16.msra.mxu0 %v84
  %107 = vmatprep.subr.bf16.mxu0 0
  %108 = vmatpush1.bf16.msra.mxu0 %v85
  %109 = vmatprep.subr.bf16.mxu0 0
  %110 = vmatpush1.bf16.msra.mxu0 %v86
  %111 = vmatprep.subr.bf16.mxu0 0
  %112 = vmatpush1.bf16.msra.mxu0 0
  %113 = vmatprep.subr.bf16.mxu0 0
  %114 = vmatpush1.bf16.msra.mxu0 0
  %115 = vmatprep.subr.bf16.mxu0 0
  %116 = vmatpush1.bf16.msra.mxu0 0
  %117 = vmatprep.subr.bf16.mxu0 0
  %118 = vmatpush1.bf16.msra.mxu0 0
  %119 = vmatprep.subr.bf16.mxu0 0
  %120 = vmatpush1.bf16.msra.mxu0 0
  %121 = vmatprep.subr.bf16.mxu0 0
  %122 = vmatpush1.bf16.msra.mxu0 0
  %123 = vmatprep.subr.bf16.mxu0 0
  %124 = vmatpush1.bf16.msra.mxu0 0
  %125 = vmatprep.subr.bf16.mxu0 0
  %126 = vmatpush1.bf16.msra.mxu0 0
  %127 = vmatprep.mubr.bf16.mxu0 0
  %128 = vmatmul.mubr.bf16.gmra.mrb[0].mxu0 %v45
  %v129 = vpop.f32.mrb[0].mxu0
  %v130 = vadd.f32 0.0, %v129
  %v131 = vpop.f32.mrb[0].mxu0
  %v132 = vpop.f32.mrb[0].mxu0
  %v133 = vadd.f32 0.0, %v132
  %v134 = vpop.f32.mrb[0].mxu0
  %135 = vdwg.mxu0
  %v136 = vadd.f32 %v21, %v130
  %v137 = vadd.f32 %v22, %v133
  %138 = vst [vmem:[#allocation2] sm:$0xff] %v136
  %139 = vst [vmem:[#allocation2 + $0x8] sm:$0xff] %v137
  // Predicated region
  $region18: #{fastspeech2_forward.96} parent=0 // pred_check
    %p140 = pneg %p15
  $region19: #{fastspeech2_forward.96} parent=0 // pred_check_branch
    %142 = sbr.rel (%p140) target = $region21
  $region20: #{fastspeech2_forward.96} parent=0 // pred_region
    %v143 = vld [vmem:[#allocation2] sm:$0xff]
    %v144 = vld [vmem:[#allocation2 + $0x8] sm:$0xff]
    %v145 = vld [vmem:[%s2] sm:$0x1]
    %v147 = vlaneseq
    %v148 = vshrl.u32 %v147, 7
    %v149 = vsub.s32 0, %v148
    %v150 = vrot.slane %v145, %v149
    %v152 = vadd.f32 %v143, %v150
    %v153 = vadd.f32 %v144, %v150
    %v154 = vtanh.pop %v152
    %v155 = vtanh.pop %v153
    %v156 = vpack.c.bf16 %v155, %v154
    %v158 = vunpack.c.l.b16 %v156
    %v159 = vunpack.c.h.b16 %v156
    %v160 = vpack.c.b16 %v158, %v158
    %v161 = vpack.c.b16 %v159, %v159
    %164 = vst [vmem:[%s3] sm:$0xf] %v160
    %165 = vst [vmem:[%s3 + $0x4] sm:$0xf] %v161
  $region21: #{fastspeech2_forward.96} parent=0 // pred_fallthru
    _
  // Predicated region
  $region22: #{fastspeech2_forward.96} parent=0 // pred_check
    _
  $region23: #{fastspeech2_forward.96} parent=0 // pred_check_branch
    %167 = sbr.rel (0) target = $region25
  $region24: #{fastspeech2_forward.96} parent=0 // pred_region
    _
  $region25: #{fastspeech2_forward.96} parent=0 // pred_fallthru
    _
  // Predicated region
  $region26: #{fastspeech2_forward.96} parent=0 // pred_check
    _
  $region27: #{fastspeech2_forward.96} parent=0 // pred_check_branch
    %169 = sbr.rel (0) target = $region29
  $region28: #{fastspeech2_forward.96} parent=0 // pred_region
    _
  $region29: #{fastspeech2_forward.96} parent=0 // pred_fallthru
    _

// kernel: fastspeech2_forward.97
$region0: #{fastspeech2_forward.97}
  #allocation0 [shape = 'u32[]', space=smem, size = 0x4, offset = 0x4, fixed_abs, tag = 'smem constant byte address 0x4 - core index']
  #allocation1 [shape = 'u32[144,128]{1,0:T(1,128)}', space=vmem, size = 0x12000, scoped, tag = 'internal scratch']
  #allocation2 [shape = 'f32[16,128]{1,0:T(8,128)}', space=vmem, size = 0x2000, scoped, tag = 'scratch operand']
  %s0 = inlined_call_operand.vmem [shape: bf16[16,128], index: 0, kind: input, shape index: {}]
  %s1 = inlined_call_operand.vmem [shape: bf16[128,128], index: 1, kind: input, shape index: {}]
  %s2 = inlined_call_operand.vmem [shape: f32[1,128], index: 2, kind: input, shape index: {}]
  %s3 = inlined_call_operand.vmem [shape: f32[16,128], index: 3, kind: output, shape index: {}]
  %s4 = sld [smem:[#allocation0]]
  $region30: #{fastspeech2_forward.97} parent=0
    _
  %s6 = ssub.s32 1, %s4
  %s7 = scalar_select 0, %s6, %s4
  // Predicated region
  $region2: #{fastspeech2_forward.97} parent=0 // pred_check
    _
  $region3: #{fastspeech2_forward.97} parent=0 // pred_check_branch
    %9 = sbr.rel (0) target = $region5
  $region4: #{fastspeech2_forward.97} parent=0 // pred_region
    _
  $region5: #{fastspeech2_forward.97} parent=0 // pred_fallthru
    _
  // Predicated region
  $region6: #{fastspeech2_forward.97} parent=0 // pred_check
    _
  $region7: #{fastspeech2_forward.97} parent=0 // pred_check_branch
    %11 = sbr.rel (0) target = $region9
  $region8: #{fastspeech2_forward.97} parent=0 // pred_region
    _
  $region9: #{fastspeech2_forward.97} parent=0 // pred_fallthru
    _
  // Predicated region
  $region10: #{fastspeech2_forward.97} parent=0 // pred_check
    _
  $region11: #{fastspeech2_forward.97} parent=0 // pred_check_branch
    %13 = sbr.rel (0) target = $region13
  $region12: #{fastspeech2_forward.97} parent=0 // pred_region
    _
  $region13: #{fastspeech2_forward.97} parent=0 // pred_fallthru
    _
  %p15 = scmp.eq.s32.totalorder 0, 0
  // Predicated region
  $region14: #{fastspeech2_forward.97} parent=0 // pred_check
    %p16 = pneg %p15
  $region15: #{fastspeech2_forward.97} parent=0 // pred_check_branch
    %18 = sbr.rel (%p16) target = $region17
  $region16: #{fastspeech2_forward.97} parent=0 // pred_region
    %19 = vst [vmem:[#allocation2] sm:$0xff] 0.0
    %20 = vst [vmem:[#allocation2 + $0x8] sm:$0xff] 0.0
  $region17: #{fastspeech2_forward.97} parent=0 // pred_fallthru
    _
  %v21 = vld [vmem:[#allocation2] sm:$0xff]
  %v22 = vld [vmem:[#allocation2 + $0x8] sm:$0xff]
  %v23 = vld [vmem:[%s0] sm:$0xf]
  %v24 = vld [vmem:[%s0 + $0x4] sm:$0xf]
  %v25 = vld [vmem:[%s1] sm:$0xf]
  %v26 = vld [vmem:[%s1 + $0x4] sm:$0xf]
  %v27 = vld [vmem:[%s1 + $0x8] sm:$0xf]
  %v28 = vld [vmem:[%s1 + $0xc] sm:$0xf]
  %v29 = vld [vmem:[%s1 + $0x10] sm:$0xf]
  %v30 = vld [vmem:[%s1 + $0x14] sm:$0xf]
  %v31 = vld [vmem:[%s1 + $0x18] sm:$0xf]
  %v32 = vld [vmem:[%s1 + $0x1c] sm:$0xf]
  %v33 = vld [vmem:[%s1 + $0x20] sm:$0xf]
  %v34 = vld [vmem:[%s1 + $0x24] sm:$0xf]
  %v35 = vld [vmem:[%s1 + $0x28] sm:$0xf]
  %v36 = vld [vmem:[%s1 + $0x2c] sm:$0xf]
  %v37 = vld [vmem:[%s1 + $0x30] sm:$0xf]
  %v38 = vld [vmem:[%s1 + $0x34] sm:$0xf]
  %v39 = vld [vmem:[%s1 + $0x38] sm:$0xf]
  %v40 = vld [vmem:[%s1 + $0x3c] sm:$0xf]
  %v43 = vunpack.c.l.b16 %v23
  %v44 = vunpack.c.l.b16 %v24
  %v45 = vpack.c.b16 %v44, %v43
  %v63 = vunpack.c.l.b16 %v25
  %v64 = vunpack.c.l.b16 %v26
  %v65 = vunpack.c.l.b16 %v27
  %v66 = vunpack.c.l.b16 %v28
  %v67 = vunpack.c.l.b16 %v29
  %v68 = vunpack.c.l.b16 %v30
  %v69 = vunpack.c.l.b16 %v31
  %v70 = vunpack.c.l.b16 %v32
  %v71 = vunpack.c.l.b16 %v33
  %v72 = vunpack.c.l.b16 %v34
  %v73 = vunpack.c.l.b16 %v35
  %v74 = vunpack.c.l.b16 %v36
  %v75 = vunpack.c.l.b16 %v37
  %v76 = vunpack.c.l.b16 %v38
  %v77 = vunpack.c.l.b16 %v39
  %v78 = vunpack.c.l.b16 %v40
  %v79 = vpack.c.b16 %v64, %v63
  %v80 = vpack.c.b16 %v66, %v65
  %v81 = vpack.c.b16 %v68, %v67
  %v82 = vpack.c.b16 %v70, %v69
  %v83 = vpack.c.b16 %v72, %v71
  %v84 = vpack.c.b16 %v74, %v73
  %v85 = vpack.c.b16 %v76, %v75
  %v86 = vpack.c.b16 %v78, %v77
  %95 = vmatprep.subr.bf16.mxu0 0
  %96 = vmatpush1.bf16.msra.mxu0 %v79
  %97 = vmatprep.subr.bf16.mxu0 0
  %98 = vmatpush1.bf16.msra.mxu0 %v80
  %99 = vmatprep.subr.bf16.mxu0 0
  %100 = vmatpush1.bf16.msra.mxu0 %v81
  %101 = vmatprep.subr.bf16.mxu0 0
  %102 = vmatpush1.bf16.msra.mxu0 %v82
  %103 = vmatprep.subr.bf16.mxu0 0
  %104 = vmatpush1.bf16.msra.mxu0 %v83
  %105 = vmatprep.subr.bf16.mxu0 0
  %106 = vmatpush1.bf16.msra.mxu0 %v84
  %107 = vmatprep.subr.bf16.mxu0 0
  %108 = vmatpush1.bf16.msra.mxu0 %v85
  %109 = vmatprep.subr.bf16.mxu0 0
  %110 = vmatpush1.bf16.msra.mxu0 %v86
  %111 = vmatprep.subr.bf16.mxu0 0
  %112 = vmatpush1.bf16.msra.mxu0 0
  %113 = vmatprep.subr.bf16.mxu0 0
  %114 = vmatpush1.bf16.msra.mxu0 0
  %115 = vmatprep.subr.bf16.mxu0 0
  %116 = vmatpush1.bf16.msra.mxu0 0
  %117 = vmatprep.subr.bf16.mxu0 0
  %118 = vmatpush1.bf16.msra.mxu0 0
  %119 = vmatprep.subr.bf16.mxu0 0
  %120 = vmatpush1.bf16.msra.mxu0 0
  %121 = vmatprep.subr.bf16.mxu0 0
  %122 = vmatpush1.bf16.msra.mxu0 0
  %123 = vmatprep.subr.bf16.mxu0 0
  %124 = vmatpush1.bf16.msra.mxu0 0
  %125 = vmatprep.subr.bf16.mxu0 0
  %126 = vmatpush1.bf16.msra.mxu0 0
  %127 = vmatprep.mubr.bf16.mxu0 0
  %128 = vmatmul.mubr.bf16.gmra.mrb[0].mxu0 %v45
  %v129 = vpop.f32.mrb[0].mxu0
  %v130 = vadd.f32 0.0, %v129
  %v131 = vpop.f32.mrb[0].mxu0
  %v132 = vpop.f32.mrb[0].mxu0
  %v133 = vadd.f32 0.0, %v132
  %v134 = vpop.f32.mrb[0].mxu0
  %135 = vdwg.mxu0
  %v136 = vadd.f32 %v21, %v130
  %v137 = vadd.f32 %v22, %v133
  %138 = vst [vmem:[#allocation2] sm:$0xff] %v136
  %139 = vst [vmem:[#allocation2 + $0x8] sm:$0xff] %v137
  // Predicated region
  $region18: #{fastspeech2_forward.97} parent=0 // pred_check
    %p140 = pneg %p15
  $region19: #{fastspeech2_forward.97} parent=0 // pred_check_branch
    %142 = sbr.rel (%p140) target = $region21
  $region20: #{fastspeech2_forward.97} parent=0 // pred_region
    %v143 = vld [vmem:[#allocation2] sm:$0xff]
    %v144 = vld [vmem:[#allocation2 + $0x8] sm:$0xff]
    %v145 = vld [vmem:[%s2] sm:$0x1]
    %v147 = vlaneseq
    %v148 = vshrl.u32 %v147, 7
    %v149 = vsub.s32 0, %v148
    %v150 = vrot.slane %v145, %v149
    %v152 = vadd.f32 %v143, %v150
    %v153 = vadd.f32 %v144, %v150
    %154 = vst [vmem:[%s3] sm:$0xff] %v152
    %155 = vst [vmem:[%s3 + $0x8] sm:$0xff] %v153
  $region21: #{fastspeech2_forward.97} parent=0 // pred_fallthru
    _
  // Predicated region
  $region22: #{fastspeech2_forward.97} parent=0 // pred_check
    _
  $region23: #{fastspeech2_forward.97} parent=0 // pred_check_branch
    %157 = sbr.rel (0) target = $region25
  $region24: #{fastspeech2_forward.97} parent=0 // pred_region
    _
  $region25: #{fastspeech2_forward.97} parent=0 // pred_fallthru
    _
  // Predicated region
  $region26: #{fastspeech2_forward.97} parent=0 // pred_check
    _
  $region27: #{fastspeech2_forward.97} parent=0 // pred_check_branch
    %159 = sbr.rel (0) target = $region29
  $region28: #{fastspeech2_forward.97} parent=0 // pred_region
    _
  $region29: #{fastspeech2_forward.97} parent=0 // pred_fallthru
    _

// kernel: fastspeech2_forward.98
$region0: #{fastspeech2_forward.98}
  #allocation0 [shape = 'u32[]', space=smem, size = 0x4, offset = 0x4, fixed_abs, tag = 'smem constant byte address 0x4 - core index']
  #allocation1 [shape = 'u32[144,128]{1,0:T(1,128)}', space=vmem, size = 0x12000, scoped, tag = 'internal scratch']
  %s0 = inlined_call_operand.vmem [shape: f32[16,32], index: 0, kind: input, shape index: {}]
  %s1 = inlined_call_operand.vmem [shape: f32[1,32], index: 1, kind: input, shape index: {}]
  %s2 = inlined_call_operand.vmem [shape: f32[1,32], index: 2, kind: input, shape index: {}]
  %s3 = inlined_call_operand.vmem [shape: bf16[16,32], index: 3, kind: output, shape index: {}]
  %s4 = sld [smem:[#allocation0]]
  $region22: #{fastspeech2_forward.98} parent=0
    _
  %s6 = ssub.s32 1, %s4
  %s7 = scalar_select 0, %s6, %s4
  // Predicated region
  $region2: #{fastspeech2_forward.98} parent=0 // pred_check
    _
  $region3: #{fastspeech2_forward.98} parent=0 // pred_check_branch
    %9 = sbr.rel (0) target = $region5
  $region4: #{fastspeech2_forward.98} parent=0 // pred_region
    _
  $region5: #{fastspeech2_forward.98} parent=0 // pred_fallthru
    _
  // Predicated region
  $region6: #{fastspeech2_forward.98} parent=0 // pred_check
    _
  $region7: #{fastspeech2_forward.98} parent=0 // pred_check_branch
    %11 = sbr.rel (0) target = $region9
  $region8: #{fastspeech2_forward.98} parent=0 // pred_region
    _
  $region9: #{fastspeech2_forward.98} parent=0 // pred_fallthru
    _
  // Predicated region
  $region10: #{fastspeech2_forward.98} parent=0 // pred_check
    _
  $region11: #{fastspeech2_forward.98} parent=0 // pred_check_branch
    %13 = sbr.rel (0) target = $region13
  $region12: #{fastspeech2_forward.98} parent=0 // pred_region
    _
  $region13: #{fastspeech2_forward.98} parent=0 // pred_fallthru
    _
  %v14 = vld [vmem:[%s0] sm:$0xff]
  %v15 = vld [vmem:[%s0 + $0x8] sm:$0xff]
  %vm16 = vcmask 261120
  %v17 = vsel %vm16, %v14, 0.0
  %18 = vadd.xlane.f32.xlu0 %v17
  %v19 = vpop.xlane.xlu0 %18
  %v20 = vsel %vm16, %v15, 0.0
  %21 = vadd.xlane.f32.xlu0 %v20
  %v22 = vpop.xlane.xlu0 %21
  %v23 = vrcp.pop 32.0
  %v24 = vmul.f32 %v19, %v23
  %v25 = vmul.f32 %v22, %v23
  %v26 = vsub.f32 %v14, %v24
  %v27 = vsub.f32 %v15, %v25
  %v28 = vmul.f32 %v26, %v26
  %v29 = vmul.f32 %v27, %v27
  %v30 = vsel %vm16, %v28, 0.0
  %31 = vadd.xlane.f32.xlu0 %v30
  %v32 = vpop.xlane.xlu0 %31
  %v33 = vsel %vm16, %v29, 0.0
  %34 = vadd.xlane.f32.xlu0 %v33
  %v35 = vpop.xlane.xlu0 %34
  %v36 = vmul.f32 %v32, %v23
  %v37 = vmul.f32 %v35, %v23
  %v38 = vadd.f32 %v36, 1e-05
  %v39 = vadd.f32 %v37, 1e-05
  %v40 = vrsqrt.pop %v38
  %v41 = vrsqrt.pop %v39
  %v42 = vmul.f32 %v26, %v40
  %v43 = vmul.f32 %v27, %v41
  %v44 = vld [vmem:[%s1] sm:$0x1]
  %v46 = vlaneseq
  %v47 = vshrl.u32 %v46, 7
  %v48 = vsub.s32 0, %v47
  %v49 = vrot.slane %v44, %v48
  %v51 = vmul.f32 %v42, %v49
  %v52 = vmul.f32 %v43, %v49
  %v53 = vld [vmem:[%s2] sm:$0x1]
  %v55 = vlaneseq
  %v56 = vshrl.u32 %v55, 7
  %v57 = vsub.s32 0, %v56
  %v58 = vrot.slane %v53, %v57
  %v60 = vadd.f32 %v51, %v58
  %v61 = vadd.f32 %v52, %v58
  %v62 = vpack.c.bf16 %v61, %v60
  %v64 = vunpack.c.l.b16 %v62
  %v65 = vunpack.c.h.b16 %v62
  %v66 = vpack.c.b16 %v64, %v64
  %v67 = vpack.c.b16 %v65, %v65
  %vm70 = vcmask 257024
  %71 = vst.msk [vmem:[%s3] sm:$0xf] %vm70, %v66
  %72 = vst.msk [vmem:[%s3 + $0x4] sm:$0xf] %vm70, %v67
  // Predicated region
  $region14: #{fastspeech2_forward.98} parent=0 // pred_check
    _
  $region15: #{fastspeech2_forward.98} parent=0 // pred_check_branch
    %74 = sbr.rel (0) target = $region17
  $region16: #{fastspeech2_forward.98} parent=0 // pred_region
    _
  $region17: #{fastspeech2_forward.98} parent=0 // pred_fallthru
    _
  // Predicated region
  $region18: #{fastspeech2_forward.98} parent=0 // pred_check
    _
  $region19: #{fastspeech2_forward.98} parent=0 // pred_check_branch
    %76 = sbr.rel (0) target = $region21
  $region20: #{fastspeech2_forward.98} parent=0 // pred_region
    _
  $region21: #{fastspeech2_forward.98} parent=0 // pred_fallthru
    _

// kernel: fastspeech2_forward.99
$region0: #{fastspeech2_forward.99}
  #allocation0 [shape = 'u32[]', space=smem, size = 0x4, offset = 0x4, fixed_abs, tag = 'smem constant byte address 0x4 - core index']
  #allocation1 [shape = 'u32[144,128]{1,0:T(1,128)}', space=vmem, size = 0x12000, scoped, tag = 'internal scratch']
  #allocation2 [shape = 'f32[16,128]{1,0:T(8,128)}', space=vmem, size = 0x2000, scoped, tag = 'scratch operand']
  %s0 = inlined_call_operand.vmem [shape: bf16[16,128], index: 0, kind: input, shape index: {}]
  %s1 = inlined_call_operand.vmem [shape: bf16[128,128], index: 1, kind: input, shape index: {}]
  %s2 = inlined_call_operand.vmem [shape: f32[1,128], index: 2, kind: input, shape index: {}]
  %s3 = inlined_call_operand.vmem [shape: bf16[16,128], index: 3, kind: output, shape index: {}]
  %s4 = sld [smem:[#allocation0]]
  $region30: #{fastspeech2_forward.99} parent=0
    _
  %s6 = ssub.s32 1, %s4
  %s7 = scalar_select 0, %s6, %s4
  // Predicated region
  $region2: #{fastspeech2_forward.99} parent=0 // pred_check
    _
  $region3: #{fastspeech2_forward.99} parent=0 // pred_check_branch
    %9 = sbr.rel (0) target = $region5
  $region4: #{fastspeech2_forward.99} parent=0 // pred_region
    _
  $region5: #{fastspeech2_forward.99} parent=0 // pred_fallthru
    _
  // Predicated region
  $region6: #{fastspeech2_forward.99} parent=0 // pred_check
    _
  $region7: #{fastspeech2_forward.99} parent=0 // pred_check_branch
    %11 = sbr.rel (0) target = $region9
  $region8: #{fastspeech2_forward.99} parent=0 // pred_region
    _
  $region9: #{fastspeech2_forward.99} parent=0 // pred_fallthru
    _
  // Predicated region
  $region10: #{fastspeech2_forward.99} parent=0 // pred_check
    _
  $region11: #{fastspeech2_forward.99} parent=0 // pred_check_branch
    %13 = sbr.rel (0) target = $region13
  $region12: #{fastspeech2_forward.99} parent=0 // pred_region
    _
  $region13: #{fastspeech2_forward.99} parent=0 // pred_fallthru
    _
  %p15 = scmp.eq.s32.totalorder 0, 0
  // Predicated region
  $region14: #{fastspeech2_forward.99} parent=0 // pred_check
    %p16 = pneg %p15
  $region15: #{fastspeech2_forward.99} parent=0 // pred_check_branch
    %18 = sbr.rel (%p16) target = $region17
  $region16: #{fastspeech2_forward.99} parent=0 // pred_region
    %19 = vst [vmem:[#allocation2] sm:$0xff] 0.0
    %20 = vst [vmem:[#allocation2 + $0x8] sm:$0xff] 0.0
  $region17: #{fastspeech2_forward.99} parent=0 // pred_fallthru
    _
  %v21 = vld [vmem:[#allocation2] sm:$0xff]
  %v22 = vld [vmem:[#allocation2 + $0x8] sm:$0xff]
  %v23 = vld [vmem:[%s0] sm:$0xf]
  %v24 = vld [vmem:[%s0 + $0x4] sm:$0xf]
  %v25 = vld [vmem:[%s1] sm:$0xf]
  %v26 = vld [vmem:[%s1 + $0x4] sm:$0xf]
  %v27 = vld [vmem:[%s1 + $0x8] sm:$0xf]
  %v28 = vld [vmem:[%s1 + $0xc] sm:$0xf]
  %v29 = vld [vmem:[%s1 + $0x10] sm:$0xf]
  %v30 = vld [vmem:[%s1 + $0x14] sm:$0xf]
  %v31 = vld [vmem:[%s1 + $0x18] sm:$0xf]
  %v32 = vld [vmem:[%s1 + $0x1c] sm:$0xf]
  %v33 = vld [vmem:[%s1 + $0x20] sm:$0xf]
  %v34 = vld [vmem:[%s1 + $0x24] sm:$0xf]
  %v35 = vld [vmem:[%s1 + $0x28] sm:$0xf]
  %v36 = vld [vmem:[%s1 + $0x2c] sm:$0xf]
  %v37 = vld [vmem:[%s1 + $0x30] sm:$0xf]
  %v38 = vld [vmem:[%s1 + $0x34] sm:$0xf]
  %v39 = vld [vmem:[%s1 + $0x38] sm:$0xf]
  %v40 = vld [vmem:[%s1 + $0x3c] sm:$0xf]
  %v43 = vunpack.c.l.b16 %v23
  %v44 = vunpack.c.l.b16 %v24
  %v45 = vpack.c.b16 %v44, %v43
  %v63 = vunpack.c.l.b16 %v25
  %v64 = vunpack.c.l.b16 %v26
  %v65 = vunpack.c.l.b16 %v27
  %v66 = vunpack.c.l.b16 %v28
  %v67 = vunpack.c.l.b16 %v29
  %v68 = vunpack.c.l.b16 %v30
  %v69 = vunpack.c.l.b16 %v31
  %v70 = vunpack.c.l.b16 %v32
  %v71 = vunpack.c.l.b16 %v33
  %v72 = vunpack.c.l.b16 %v34
  %v73 = vunpack.c.l.b16 %v35
  %v74 = vunpack.c.l.b16 %v36
  %v75 = vunpack.c.l.b16 %v37
  %v76 = vunpack.c.l.b16 %v38
  %v77 = vunpack.c.l.b16 %v39
  %v78 = vunpack.c.l.b16 %v40
  %v79 = vpack.c.b16 %v64, %v63
  %v80 = vpack.c.b16 %v66, %v65
  %v81 = vpack.c.b16 %v68, %v67
  %v82 = vpack.c.b16 %v70, %v69
  %v83 = vpack.c.b16 %v72, %v71
  %v84 = vpack.c.b16 %v74, %v73
  %v85 = vpack.c.b16 %v76, %v75
  %v86 = vpack.c.b16 %v78, %v77
  %95 = vmatprep.subr.bf16.mxu0 0
  %96 = vmatpush1.bf16.msra.mxu0 %v79
  %97 = vmatprep.subr.bf16.mxu0 0
  %98 = vmatpush1.bf16.msra.mxu0 %v80
  %99 = vmatprep.subr.bf16.mxu0 0
  %100 = vmatpush1.bf16.msra.mxu0 %v81
  %101 = vmatprep.subr.bf16.mxu0 0
  %102 = vmatpush1.bf16.msra.mxu0 %v82
  %103 = vmatprep.subr.bf16.mxu0 0
  %104 = vmatpush1.bf16.msra.mxu0 %v83
  %105 = vmatprep.subr.bf16.mxu0 0
  %106 = vmatpush1.bf16.msra.mxu0 %v84
  %107 = vmatprep.subr.bf16.mxu0 0
  %108 = vmatpush1.bf16.msra.mxu0 %v85
  %109 = vmatprep.subr.bf16.mxu0 0
  %110 = vmatpush1.bf16.msra.mxu0 %v86
  %111 = vmatprep.subr.bf16.mxu0 0
  %112 = vmatpush1.bf16.msra.mxu0 0
  %113 = vmatprep.subr.bf16.mxu0 0
  %114 = vmatpush1.bf16.msra.mxu0 0
  %115 = vmatprep.subr.bf16.mxu0 0
  %116 = vmatpush1.bf16.msra.mxu0 0
  %117 = vmatprep.subr.bf16.mxu0 0
  %118 = vmatpush1.bf16.msra.mxu0 0
  %119 = vmatprep.subr.bf16.mxu0 0
  %120 = vmatpush1.bf16.msra.mxu0 0
  %121 = vmatprep.subr.bf16.mxu0 0
  %122 = vmatpush1.bf16.msra.mxu0 0
  %123 = vmatprep.subr.bf16.mxu0 0
  %124 = vmatpush1.bf16.msra.mxu0 0
  %125 = vmatprep.subr.bf16.mxu0 0
  %126 = vmatpush1.bf16.msra.mxu0 0
  %127 = vmatprep.mubr.bf16.mxu0 0
  %128 = vmatmul.mubr.bf16.gmra.mrb[0].mxu0 %v45
  %v129 = vpop.f32.mrb[0].mxu0
  %v130 = vadd.f32 0.0, %v129
  %v131 = vpop.f32.mrb[0].mxu0
  %v132 = vpop.f32.mrb[0].mxu0
  %v133 = vadd.f32 0.0, %v132
  %v134 = vpop.f32.mrb[0].mxu0
  %135 = vdwg.mxu0
  %v136 = vadd.f32 %v21, %v130
  %v137 = vadd.f32 %v22, %v133
  %138 = vst [vmem:[#allocation2] sm:$0xff] %v136
  %139 = vst [vmem:[#allocation2 + $0x8] sm:$0xff] %v137
  // Predicated region
  $region18: #{fastspeech2_forward.99} parent=0 // pred_check
    %p140 = pneg %p15
  $region19: #{fastspeech2_forward.99} parent=0 // pred_check_branch
    %142 = sbr.rel (%p140) target = $region21
  $region20: #{fastspeech2_forward.99} parent=0 // pred_region
    %v143 = vld [vmem:[#allocation2] sm:$0xff]
    %v144 = vld [vmem:[#allocation2 + $0x8] sm:$0xff]
    %v145 = vld [vmem:[%s2] sm:$0x1]
    %v147 = vlaneseq
    %v148 = vshrl.u32 %v147, 7
    %v149 = vsub.s32 0, %v148
    %v150 = vrot.slane %v145, %v149
    %v152 = vadd.f32 %v143, %v150
    %v153 = vadd.f32 %v144, %v150
    %v154 = vmax.f32 %v152, 0.0
    %v155 = vmax.f32 %v153, 0.0
    %v156 = vpack.c.bf16 %v155, %v154
    %v158 = vunpack.c.l.b16 %v156
    %v159 = vunpack.c.h.b16 %v156
    %v160 = vpack.c.b16 %v158, %v158
    %v161 = vpack.c.b16 %v159, %v159
    %164 = vst [vmem:[%s3] sm:$0xf] %v160
    %165 = vst [vmem:[%s3 + $0x4] sm:$0xf] %v161
  $region21: #{fastspeech2_forward.99} parent=0 // pred_fallthru
    _
  // Predicated region
  $region22: #{fastspeech2_forward.99} parent=0 // pred_check
    _
  $region23: #{fastspeech2_forward.99} parent=0 // pred_check_branch
    %167 = sbr.rel (0) target = $region25
  $region24: #{fastspeech2_forward.99} parent=0 // pred_region
    _
  $region25: #{fastspeech2_forward.99} parent=0 // pred_fallthru
    _
  // Predicated region
  $region26: #{fastspeech2_forward.99} parent=0 // pred_check
    _
  $region27: #{fastspeech2_forward.99} parent=0 // pred_check_branch
    %169 = sbr.rel (0) target = $region29
  $region28: #{fastspeech2_forward.99} parent=0 // pred_region
    _
  $region29: #{fastspeech2_forward.99} parent=0 // pred_fallthru
    _

// kernel: fastspeech2_forward.100
$region0: #{fastspeech2_forward.100}
  #allocation0 [shape = 'u32[]', space=smem, size = 0x4, offset = 0x4, fixed_abs, tag = 'smem constant byte address 0x4 - core index']
  #allocation1 [shape = 'u32[144,128]{1,0:T(1,128)}', space=vmem, size = 0x12000, scoped, tag = 'internal scratch']
  #allocation2 [shape = 'f32[16,128]{1,0:T(8,128)}', space=vmem, size = 0x2000, scoped, tag = 'scratch operand']
  %s0 = inlined_call_operand.vmem [shape: bf16[16,128], index: 0, kind: input, shape index: {}]
  %s1 = inlined_call_operand.vmem [shape: bf16[128,128], index: 1, kind: input, shape index: {}]
  %s2 = inlined_call_operand.vmem [shape: f32[1,128], index: 2, kind: input, shape index: {}]
  %s3 = inlined_call_operand.vmem [shape: bf16[16,128], index: 3, kind: output, shape index: {}]
  %s4 = sld [smem:[#allocation0]]
  $region30: #{fastspeech2_forward.100} parent=0
    _
  %s6 = ssub.s32 1, %s4
  %s7 = scalar_select 0, %s6, %s4
  // Predicated region
  $region2: #{fastspeech2_forward.100} parent=0 // pred_check
    _
  $region3: #{fastspeech2_forward.100} parent=0 // pred_check_branch
    %9 = sbr.rel (0) target = $region5
  $region4: #{fastspeech2_forward.100} parent=0 // pred_region
    _
  $region5: #{fastspeech2_forward.100} parent=0 // pred_fallthru
    _
  // Predicated region
  $region6: #{fastspeech2_forward.100} parent=0 // pred_check
    _
  $region7: #{fastspeech2_forward.100} parent=0 // pred_check_branch
    %11 = sbr.rel (0) target = $region9
  $region8: #{fastspeech2_forward.100} parent=0 // pred_region
    _
  $region9: #{fastspeech2_forward.100} parent=0 // pred_fallthru
    _
  // Predicated region
  $region10: #{fastspeech2_forward.100} parent=0 // pred_check
    _
  $region11: #{fastspeech2_forward.100} parent=0 // pred_check_branch
    %13 = sbr.rel (0) target = $region13
  $region12: #{fastspeech2_forward.100} parent=0 // pred_region
    _
  $region13: #{fastspeech2_forward.100} parent=0 // pred_fallthru
    _
  %p15 = scmp.eq.s32.totalorder 0, 0
  // Predicated region
  $region14: #{fastspeech2_forward.100} parent=0 // pred_check
    %p16 = pneg %p15
  $region15: #{fastspeech2_forward.100} parent=0 // pred_check_branch
    %18 = sbr.rel (%p16) target = $region17
  $region16: #{fastspeech2_forward.100} parent=0 // pred_region
    %19 = vst [vmem:[#allocation2] sm:$0xff] 0.0
    %20 = vst [vmem:[#allocation2 + $0x8] sm:$0xff] 0.0
  $region17: #{fastspeech2_forward.100} parent=0 // pred_fallthru
    _
  %v21 = vld [vmem:[#allocation2] sm:$0xff]
  %v22 = vld [vmem:[#allocation2 + $0x8] sm:$0xff]
  %v23 = vld [vmem:[%s0] sm:$0xf]
  %v24 = vld [vmem:[%s0 + $0x4] sm:$0xf]
  %v25 = vld [vmem:[%s1] sm:$0xf]
  %v26 = vld [vmem:[%s1 + $0x4] sm:$0xf]
  %v27 = vld [vmem:[%s1 + $0x8] sm:$0xf]
  %v28 = vld [vmem:[%s1 + $0xc] sm:$0xf]
  %v29 = vld [vmem:[%s1 + $0x10] sm:$0xf]
  %v30 = vld [vmem:[%s1 + $0x14] sm:$0xf]
  %v31 = vld [vmem:[%s1 + $0x18] sm:$0xf]
  %v32 = vld [vmem:[%s1 + $0x1c] sm:$0xf]
  %v33 = vld [vmem:[%s1 + $0x20] sm:$0xf]
  %v34 = vld [vmem:[%s1 + $0x24] sm:$0xf]
  %v35 = vld [vmem:[%s1 + $0x28] sm:$0xf]
  %v36 = vld [vmem:[%s1 + $0x2c] sm:$0xf]
  %v37 = vld [vmem:[%s1 + $0x30] sm:$0xf]
  %v38 = vld [vmem:[%s1 + $0x34] sm:$0xf]
  %v39 = vld [vmem:[%s1 + $0x38] sm:$0xf]
  %v40 = vld [vmem:[%s1 + $0x3c] sm:$0xf]
  %v43 = vunpack.c.l.b16 %v23
  %v44 = vunpack.c.l.b16 %v24
  %v45 = vpack.c.b16 %v44, %v43
  %v63 = vunpack.c.l.b16 %v25
  %v64 = vunpack.c.l.b16 %v26
  %v65 = vunpack.c.l.b16 %v27
  %v66 = vunpack.c.l.b16 %v28
  %v67 = vunpack.c.l.b16 %v29
  %v68 = vunpack.c.l.b16 %v30
  %v69 = vunpack.c.l.b16 %v31
  %v70 = vunpack.c.l.b16 %v32
  %v71 = vunpack.c.l.b16 %v33
  %v72 = vunpack.c.l.b16 %v34
  %v73 = vunpack.c.l.b16 %v35
  %v74 = vunpack.c.l.b16 %v36
  %v75 = vunpack.c.l.b16 %v37
  %v76 = vunpack.c.l.b16 %v38
  %v77 = vunpack.c.l.b16 %v39
  %v78 = vunpack.c.l.b16 %v40
  %v79 = vpack.c.b16 %v64, %v63
  %v80 = vpack.c.b16 %v66, %v65
  %v81 = vpack.c.b16 %v68, %v67
  %v82 = vpack.c.b16 %v70, %v69
  %v83 = vpack.c.b16 %v72, %v71
  %v84 = vpack.c.b16 %v74, %v73
  %v85 = vpack.c.b16 %v76, %v75
  %v86 = vpack.c.b16 %v78, %v77
  %95 = vmatprep.subr.bf16.mxu0 0
  %96 = vmatpush1.bf16.msra.mxu0 %v79
  %97 = vmatprep.subr.bf16.mxu0 0
  %98 = vmatpush1.bf16.msra.mxu0 %v80
  %99 = vmatprep.subr.bf16.mxu0 0
  %100 = vmatpush1.bf16.msra.mxu0 %v81
  %101 = vmatprep.subr.bf16.mxu0 0
  %102 = vmatpush1.bf16.msra.mxu0 %v82
  %103 = vmatprep.subr.bf16.mxu0 0
  %104 = vmatpush1.bf16.msra.mxu0 %v83
  %105 = vmatprep.subr.bf16.mxu0 0
  %106 = vmatpush1.bf16.msra.mxu0 %v84
  %107 = vmatprep.subr.bf16.mxu0 0
  %108 = vmatpush1.bf16.msra.mxu0 %v85
  %109 = vmatprep.subr.bf16.mxu0 0
  %110 = vmatpush1.bf16.msra.mxu0 %v86
  %111 = vmatprep.subr.bf16.mxu0 0
  %112 = vmatpush1.bf16.msra.mxu0 0
  %113 = vmatprep.subr.bf16.mxu0 0
  %114 = vmatpush1.bf16.msra.mxu0 0
  %115 = vmatprep.subr.bf16.mxu0 0
  %116 = vmatpush1.bf16.msra.mxu0 0
  %117 = vmatprep.subr.bf16.mxu0 0
  %118 = vmatpush1.bf16.msra.mxu0 0
  %119 = vmatprep.subr.bf16.mxu0 0
  %120 = vmatpush1.bf16.msra.mxu0 0
  %121 = vmatprep.subr.bf16.mxu0 0
  %122 = vmatpush1.bf16.msra.mxu0 0
  %123 = vmatprep.subr.bf16.mxu0 0
  %124 = vmatpush1.bf16.msra.mxu0 0
  %125 = vmatprep.subr.bf16.mxu0 0
  %126 = vmatpush1.bf16.msra.mxu0 0
  %127 = vmatprep.mubr.bf16.mxu0 0
  %128 = vmatmul.mubr.bf16.gmra.mrb[0].mxu0 %v45
  %v129 = vpop.f32.mrb[0].mxu0
  %v130 = vadd.f32 0.0, %v129
  %v131 = vpop.f32.mrb[0].mxu0
  %v132 = vpop.f32.mrb[0].mxu0
  %v133 = vadd.f32 0.0, %v132
  %v134 = vpop.f32.mrb[0].mxu0
  %135 = vdwg.mxu0
  %v136 = vadd.f32 %v21, %v130
  %v137 = vadd.f32 %v22, %v133
  %138 = vst [vmem:[#allocation2] sm:$0xff] %v136
  %139 = vst [vmem:[#allocation2 + $0x8] sm:$0xff] %v137
  // Predicated region
  $region18: #{fastspeech2_forward.100} parent=0 // pred_check
    %p140 = pneg %p15
  $region19: #{fastspeech2_forward.100} parent=0 // pred_check_branch
    %142 = sbr.rel (%p140) target = $region21
  $region20: #{fastspeech2_forward.100} parent=0 // pred_region
    %v143 = vld [vmem:[#allocation2] sm:$0xff]
    %v144 = vld [vmem:[#allocation2 + $0x8] sm:$0xff]
    %v145 = vld [vmem:[%s2] sm:$0x1]
    %v147 = vlaneseq
    %v148 = vshrl.u32 %v147, 7
    %v149 = vsub.s32 0, %v148
    %v150 = vrot.slane %v145, %v149
    %v152 = vadd.f32 %v143, %v150
    %v153 = vadd.f32 %v144, %v150
    %v154 = vpack.c.bf16 %v153, %v152
    %v156 = vunpack.c.l.b16 %v154
    %v157 = vunpack.c.h.b16 %v154
    %v158 = vpack.c.b16 %v156, %v156
    %v159 = vpack.c.b16 %v157, %v157
    %162 = vst [vmem:[%s3] sm:$0xf] %v158
    %163 = vst [vmem:[%s3 + $0x4] sm:$0xf] %v159
  $region21: #{fastspeech2_forward.100} parent=0 // pred_fallthru
    _
  // Predicated region
  $region22: #{fastspeech2_forward.100} parent=0 // pred_check
    _
  $region23: #{fastspeech2_forward.100} parent=0 // pred_check_branch
    %165 = sbr.rel (0) target = $region25
  $region24: #{fastspeech2_forward.100} parent=0 // pred_region
    _
  $region25: #{fastspeech2_forward.100} parent=0 // pred_fallthru
    _
  // Predicated region
  $region26: #{fastspeech2_forward.100} parent=0 // pred_check
    _
  $region27: #{fastspeech2_forward.100} parent=0 // pred_check_branch
    %167 = sbr.rel (0) target = $region29
  $region28: #{fastspeech2_forward.100} parent=0 // pred_region
    _
  $region29: #{fastspeech2_forward.100} parent=0 // pred_fallthru
    _

// kernel: fastspeech2_forward.115
$region0: #{fastspeech2_forward.115}
  #allocation0 [shape = 'u32[]', space=smem, size = 0x4, offset = 0x4, fixed_abs, tag = 'smem constant byte address 0x4 - core index']
  #allocation1 [shape = 'u32[144,128]{1,0:T(1,128)}', space=vmem, size = 0x12000, scoped, tag = 'internal scratch']
  %s0 = inlined_call_operand.vmem [shape: f32[16,32], index: 0, kind: input, shape index: {}]
  %s1 = inlined_call_operand.vmem [shape: f32[1,32], index: 1, kind: input, shape index: {}]
  %s2 = inlined_call_operand.vmem [shape: f32[1,32], index: 2, kind: input, shape index: {}]
  %s3 = inlined_call_operand.vmem [shape: f32[16,32], index: 3, kind: output, shape index: {}]
  %s4 = sld [smem:[#allocation0]]
  $region22: #{fastspeech2_forward.115} parent=0
    _
  %s6 = ssub.s32 1, %s4
  %s7 = scalar_select 0, %s6, %s4
  // Predicated region
  $region2: #{fastspeech2_forward.115} parent=0 // pred_check
    _
  $region3: #{fastspeech2_forward.115} parent=0 // pred_check_branch
    %9 = sbr.rel (0) target = $region5
  $region4: #{fastspeech2_forward.115} parent=0 // pred_region
    _
  $region5: #{fastspeech2_forward.115} parent=0 // pred_fallthru
    _
  // Predicated region
  $region6: #{fastspeech2_forward.115} parent=0 // pred_check
    _
  $region7: #{fastspeech2_forward.115} parent=0 // pred_check_branch
    %11 = sbr.rel (0) target = $region9
  $region8: #{fastspeech2_forward.115} parent=0 // pred_region
    _
  $region9: #{fastspeech2_forward.115} parent=0 // pred_fallthru
    _
  // Predicated region
  $region10: #{fastspeech2_forward.115} parent=0 // pred_check
    _
  $region11: #{fastspeech2_forward.115} parent=0 // pred_check_branch
    %13 = sbr.rel (0) target = $region13
  $region12: #{fastspeech2_forward.115} parent=0 // pred_region
    _
  $region13: #{fastspeech2_forward.115} parent=0 // pred_fallthru
    _
  %v14 = vld [vmem:[%s0] sm:$0xff]
  %v15 = vld [vmem:[%s0 + $0x8] sm:$0xff]
  %vm16 = vcmask 261120
  %v17 = vsel %vm16, %v14, 0.0
  %18 = vadd.xlane.f32.xlu0 %v17
  %v19 = vpop.xlane.xlu0 %18
  %v20 = vsel %vm16, %v15, 0.0
  %21 = vadd.xlane.f32.xlu0 %v20
  %v22 = vpop.xlane.xlu0 %21
  %v23 = vrcp.pop 32.0
  %v24 = vmul.f32 %v19, %v23
  %v25 = vmul.f32 %v22, %v23
  %v26 = vsub.f32 %v14, %v24
  %v27 = vsub.f32 %v15, %v25
  %v28 = vmul.f32 %v26, %v26
  %v29 = vmul.f32 %v27, %v27
  %v30 = vsel %vm16, %v28, 0.0
  %31 = vadd.xlane.f32.xlu0 %v30
  %v32 = vpop.xlane.xlu0 %31
  %v33 = vsel %vm16, %v29, 0.0
  %34 = vadd.xlane.f32.xlu0 %v33
  %v35 = vpop.xlane.xlu0 %34
  %v36 = vmul.f32 %v32, %v23
  %v37 = vmul.f32 %v35, %v23
  %v38 = vadd.f32 %v36, 1e-05
  %v39 = vadd.f32 %v37, 1e-05
  %v40 = vrsqrt.pop %v38
  %v41 = vrsqrt.pop %v39
  %v42 = vmul.f32 %v26, %v40
  %v43 = vmul.f32 %v27, %v41
  %v44 = vld [vmem:[%s1] sm:$0x1]
  %v46 = vlaneseq
  %v47 = vshrl.u32 %v46, 7
  %v48 = vsub.s32 0, %v47
  %v49 = vrot.slane %v44, %v48
  %v51 = vmul.f32 %v42, %v49
  %v52 = vmul.f32 %v43, %v49
  %v53 = vld [vmem:[%s2] sm:$0x1]
  %v55 = vlaneseq
  %v56 = vshrl.u32 %v55, 7
  %v57 = vsub.s32 0, %v56
  %v58 = vrot.slane %v53, %v57
  %v60 = vadd.f32 %v51, %v58
  %v61 = vadd.f32 %v52, %v58
  %62 = vst.msk [vmem:[%s3] sm:$0xff] %vm16, %v60
  %63 = vst.msk [vmem:[%s3 + $0x8] sm:$0xff] %vm16, %v61
  // Predicated region
  $region14: #{fastspeech2_forward.115} parent=0 // pred_check
    _
  $region15: #{fastspeech2_forward.115} parent=0 // pred_check_branch
    %65 = sbr.rel (0) target = $region17
  $region16: #{fastspeech2_forward.115} parent=0 // pred_region
    _
  $region17: #{fastspeech2_forward.115} parent=0 // pred_fallthru
    _
  // Predicated region
  $region18: #{fastspeech2_forward.115} parent=0 // pred_check
    _
  $region19: #{fastspeech2_forward.115} parent=0 // pred_check_branch
    %67 = sbr.rel (0) target = $region21
  $region20: #{fastspeech2_forward.115} parent=0 // pred_region
    _
  $region21: #{fastspeech2_forward.115} parent=0 // pred_fallthru
    _

// kernel: fastspeech2_forward.106
$region0: #{fastspeech2_forward.106}
  #allocation0 [shape = 'u32[]', space=smem, size = 0x4, offset = 0x4, fixed_abs, tag = 'smem constant byte address 0x4 - core index']
  #allocation1 [shape = 'u32[144,128]{1,0:T(1,128)}', space=vmem, size = 0x12000, scoped, tag = 'internal scratch']
  %s0 = inlined_call_operand.vmem [shape: bf16[2,8,32], index: 0, kind: input, shape index: {}]
  %s1 = inlined_call_operand.vmem [shape: bf16[2,8,32], index: 1, kind: input, shape index: {}]
  %s2 = inlined_call_operand.vmem [shape: bf16[2,8,32], index: 2, kind: input, shape index: {}]
  %s3 = inlined_call_operand.vmem [shape: bf16[2,2,8,8], index: 3, kind: input, shape index: {}]
  %s4 = inlined_call_operand.vmem [shape: f32[1,32], index: 4, kind: input, shape index: {}]
  %s5 = inlined_call_operand.vmem [shape: f32[1,32], index: 5, kind: input, shape index: {}]
  %s6 = inlined_call_operand.vmem [shape: f32[2,1,8], index: 6, kind: input, shape index: {}]
  %s7 = inlined_call_operand.vmem [shape: bf16[2,8,32], index: 7, kind: output, shape index: {}]
  %s8 = sld [smem:[#allocation0]]
  $region61: #{fastspeech2_forward.106} parent=0
    _
  %s10 = ssub.s32 1, %s8
  %s11 = scalar_select 0, %s10, %s8
  loop: start=0, step=1, limit=4
  $region2: #{fastspeech2_forward.106} parent=0 // loop_pre_header
    _
  $region3: #{fastspeech2_forward.106} parent=0 // loop_header
    %s13 = sphi 0, %s17
    %p14 = scmp.ge.s32.totalorder %s13, 4
    %s20 = sphi 0, %s32
    %s21 = sphi 0, %s28
    %s22 = sphi 0, %s20
    %s23 = sphi 0, %s21
    %s24 = sphi 0, %s22
    %s25 = sphi 0, %s23
    %s37 = sphi 0, %s39
    %s40 = sphi 0, %s37
    %s41 = sphi 0, %s40
    %s57 = sphi 0, %s41
    %s63 = sphi 0, %s65
    %s66 = sphi 0, %s63
    %s67 = sphi 0, %s66
    %s83 = sphi 0, %s67
    %s89 = sphi 0, %s91
    %s92 = sphi 0, %s89
    %s93 = sphi 0, %s92
    %s109 = sphi 0, %s93
    %s117 = sphi 0, %s119
    %s120 = sphi 0, %s117
    %s121 = sphi 0, %s120
    %s137 = sphi 0, %s121
    %s141 = sphi 0, %s141
    %s143 = sphi 0, %s141
    %s144 = sphi 0, %s143
    %s158 = sphi 0, %s144
    %s162 = sphi 0, %s162
    %s164 = sphi 0, %s162
    %s165 = sphi 0, %s164
    %s179 = sphi 0, %s165
    %s185 = sphi 0, %s187
    %s188 = sphi 0, %s185
    %s189 = sphi 0, %s188
    %s205 = sphi 0, %s189
    %s213 = sphi 0, %s215
    %s216 = sphi 0, %s213
    %s217 = sphi 0, %s216
    %s233 = sphi 0, %s217
  $region4: #{fastspeech2_forward.106} parent=0 // loop_header_branch
    %16 = sbr.rel (%p14) target = $region8
  $region5: #{fastspeech2_forward.106} parent=0 // loop_body
    %s18 = ssub.s32 %s13, 1
    %s19 = ssub.s32 %s13, 2
    %s26 = sadd.s32 1, %s21
    %p27 = scmp.ge.s32.totalorder %s26, 1
    %s28 = scalar_select %p27, 0, %s26
    %s29 = sadd.s32 1, %s20
    %s30 = scalar_select %p27, %s29, %s20
    %p31 = scmp.ge.s32.totalorder %s30, 2
    %s32 = scalar_select %p31, 0, %s30
    %s33 = ssub.s32 %s20, %s32
    %s34 = ssub.s32 %s21, %s28
    %s35 = sor.u32 %s33, %s34
    %p36 = scmp.eq.s32.totalorder %s35, 0
    %s38 = sadd.s32 %s37, 1
    %s39 = scalar_select %p36, %s37, %s38
    %p42 = pneg %p36
    %p43 = scmp.eq.s32.totalorder %s13, 1
    %p44 = por %p42, %p43
    %p45 = scmp.ne.s32.totalorder %s37, %s40
    %p46 = scmp.eq.s32.totalorder %s13, 0
    %p47 = por %p45, %p46
    %p48 = scmp.ne.s32.totalorder %s37, %s40
    %p49 = scmp.eq.s32.totalorder %s18, 1
    %p50 = por %p48, %p49
    %p51 = scmp.ne.s32.totalorder %s40, %s41
    %p52 = scmp.eq.s32.totalorder %s18, 0
    %p53 = por %p51, %p52
    %p54 = scmp.ne.s32.totalorder %s40, %s41
    %p55 = scmp.eq.s32.totalorder %s19, 1
    %p56 = por %p54, %p55
    %p58 = scmp.ne.s32.totalorder %s41, %s57
    %p59 = scmp.eq.s32.totalorder %s19, 0
    %p60 = por %p58, %p59
    %s61 = ssub.s32 %s20, %s32
    %p62 = scmp.eq.s32.totalorder %s61, 0
    %s64 = sadd.s32 %s63, 1
    %s65 = scalar_select %p62, %s63, %s64
    %p68 = pneg %p62
    %p69 = scmp.eq.s32.totalorder %s13, 1
    %p70 = por %p68, %p69
    %p71 = scmp.ne.s32.totalorder %s63, %s66
    %p72 = scmp.eq.s32.totalorder %s13, 0
    %p73 = por %p71, %p72
    %p74 = scmp.ne.s32.totalorder %s63, %s66
    %p75 = scmp.eq.s32.totalorder %s18, 1
    %p76 = por %p74, %p75
    %p77 = scmp.ne.s32.totalorder %s66, %s67
    %p78 = scmp.eq.s32.totalorder %s18, 0
    %p79 = por %p77, %p78
    %p80 = scmp.ne.s32.totalorder %s66, %s67
    %p81 = scmp.eq.s32.totalorder %s19, 1
    %p82 = por %p80, %p81
    %p84 = scmp.ne.s32.totalorder %s67, %s83
    %p85 = scmp.eq.s32.totalorder %s19, 0
    %p86 = por %p84, %p85
    %s87 = ssub.s32 %s20, %s32
    %p88 = scmp.eq.s32.totalorder %s87, 0
    %s90 = sadd.s32 %s89, 1
    %s91 = scalar_select %p88, %s89, %s90
    %p94 = pneg %p88
    %p95 = scmp.eq.s32.totalorder %s13, 1
    %p96 = por %p94, %p95
    %p97 = scmp.ne.s32.totalorder %s89, %s92
    %p98 = scmp.eq.s32.totalorder %s13, 0
    %p99 = por %p97, %p98
    %p100 = scmp.ne.s32.totalorder %s89, %s92
    %p101 = scmp.eq.s32.totalorder %s18, 1
    %p102 = por %p100, %p101
    %p103 = scmp.ne.s32.totalorder %s92, %s93
    %p104 = scmp.eq.s32.totalorder %s18, 0
    %p105 = por %p103, %p104
    %p106 = scmp.ne.s32.totalorder %s92, %s93
    %p107 = scmp.eq.s32.totalorder %s19, 1
    %p108 = por %p106, %p107
    %p110 = scmp.ne.s32.totalorder %s93, %s109
    %p111 = scmp.eq.s32.totalorder %s19, 0
    %p112 = por %p110, %p111
    %s113 = ssub.s32 %s20, %s32
    %s114 = ssub.s32 %s21, %s28
    %s115 = sor.u32 %s113, %s114
    %p116 = scmp.eq.s32.totalorder %s115, 0
    %s118 = sadd.s32 %s117, 1
    %s119 = scalar_select %p116, %s117, %s118
    %p122 = pneg %p116
    %p123 = scmp.eq.s32.totalorder %s13, 1
    %p124 = por %p122, %p123
    %p125 = scmp.ne.s32.totalorder %s117, %s120
    %p126 = scmp.eq.s32.totalorder %s13, 0
    %p127 = por %p125, %p126
    %p128 = scmp.ne.s32.totalorder %s117, %s120
    %p129 = scmp.eq.s32.totalorder %s18, 1
    %p130 = por %p128, %p129
    %p131 = scmp.ne.s32.totalorder %s120, %s121
    %p132 = scmp.eq.s32.totalorder %s18, 0
    %p133 = por %p131, %p132
    %p134 = scmp.ne.s32.totalorder %s120, %s121
    %p135 = scmp.eq.s32.totalorder %s19, 1
    %p136 = por %p134, %p135
    %p138 = scmp.ne.s32.totalorder %s121, %s137
    %p139 = scmp.eq.s32.totalorder %s19, 0
    %p140 = por %p138, %p139
    %s142 = sadd.s32 %s141, 1
    %p145 = scmp.eq.s32.totalorder %s13, 1
    %p146 = scmp.ne.s32.totalorder %s141, %s143
    %p147 = scmp.eq.s32.totalorder %s13, 0
    %p148 = por %p146, %p147
    %p149 = scmp.ne.s32.totalorder %s141, %s143
    %p150 = scmp.eq.s32.totalorder %s18, 1
    %p151 = por %p149, %p150
    %p152 = scmp.ne.s32.totalorder %s143, %s144
    %p153 = scmp.eq.s32.totalorder %s18, 0
    %p154 = por %p152, %p153
    %p155 = scmp.ne.s32.totalorder %s143, %s144
    %p156 = scmp.eq.s32.totalorder %s19, 1
    %p157 = por %p155, %p156
    %p159 = scmp.ne.s32.totalorder %s144, %s158
    %p160 = scmp.eq.s32.totalorder %s19, 0
    %p161 = por %p159, %p160
    %s163 = sadd.s32 %s162, 1
    %p166 = scmp.eq.s32.totalorder %s13, 1
    %p167 = scmp.ne.s32.totalorder %s162, %s164
    %p168 = scmp.eq.s32.totalorder %s13, 0
    %p169 = por %p167, %p168
    %p170 = scmp.ne.s32.totalorder %s162, %s164
    %p171 = scmp.eq.s32.totalorder %s18, 1
    %p172 = por %p170, %p171
    %p173 = scmp.ne.s32.totalorder %s164, %s165
    %p174 = scmp.eq.s32.totalorder %s18, 0
    %p175 = por %p173, %p174
    %p176 = scmp.ne.s32.totalorder %s164, %s165
    %p177 = scmp.eq.s32.totalorder %s19, 1
    %p178 = por %p176, %p177
    %p180 = scmp.ne.s32.totalorder %s165, %s179
    %p181 = scmp.eq.s32.totalorder %s19, 0
    %p182 = por %p180, %p181
    %s183 = ssub.s32 %s20, %s32
    %p184 = scmp.eq.s32.totalorder %s183, 0
    %s186 = sadd.s32 %s185, 1
    %s187 = scalar_select %p184, %s185, %s186
    %p190 = pneg %p184
    %p191 = scmp.eq.s32.totalorder %s13, 1
    %p192 = por %p190, %p191
    %p193 = scmp.ne.s32.totalorder %s185, %s188
    %p194 = scmp.eq.s32.totalorder %s13, 0
    %p195 = por %p193, %p194
    %p196 = scmp.ne.s32.totalorder %s185, %s188
    %p197 = scmp.eq.s32.totalorder %s18, 1
    %p198 = por %p196, %p197
    %p199 = scmp.ne.s32.totalorder %s188, %s189
    %p200 = scmp.eq.s32.totalorder %s18, 0
    %p201 = por %p199, %p200
    %p202 = scmp.ne.s32.totalorder %s188, %s189
    %p203 = scmp.eq.s32.totalorder %s19, 1
    %p204 = por %p202, %p203
    %p206 = scmp.ne.s32.totalorder %s189, %s205
    %p207 = scmp.eq.s32.totalorder %s19, 0
    %p208 = por %p206, %p207
    %s209 = ssub.s32 %s20, %s32
    %s210 = ssub.s32 %s21, %s28
    %s211 = sor.u32 %s209, %s210
    %p212 = scmp.eq.s32.totalorder %s211, 0
    %s214 = sadd.s32 %s213, 1
    %s215 = scalar_select %p212, %s213, %s214
    %p218 = pneg %p212
    %p219 = scmp.eq.s32.totalorder %s13, 1
    %p220 = por %p218, %p219
    %p221 = scmp.ne.s32.totalorder %s213, %s216
    %p222 = scmp.eq.s32.totalorder %s13, 0
    %p223 = por %p221, %p222
    %p224 = scmp.ne.s32.totalorder %s213, %s216
    %p225 = scmp.eq.s32.totalorder %s18, 1
    %p226 = por %p224, %p225
    %p227 = scmp.ne.s32.totalorder %s216, %s217
    %p228 = scmp.eq.s32.totalorder %s18, 0
    %p229 = por %p227, %p228
    %p230 = scmp.ne.s32.totalorder %s216, %s217
    %p231 = scmp.eq.s32.totalorder %s19, 1
    %p232 = por %p230, %p231
    %p234 = scmp.ne.s32.totalorder %s217, %s233
    %p235 = scmp.eq.s32.totalorder %s19, 0
    %p236 = por %p234, %p235
    %p237 = scmp.le.s32.totalorder 1, %s13
    %p238 = scmp.lt.s32.totalorder %s13, 3
    %p239 = pnand %p237, %p238
    %p240 = pneg %p239
    // Predicated region
    $region9: #{fastspeech2_forward.106} parent=5 // pred_check
      _
    $region10: #{fastspeech2_forward.106} parent=5 // pred_check_branch
      %242 = sbr.rel (%p239) target = $region12
    $region11: #{fastspeech2_forward.106} parent=5 // pred_region
      %s243 = ssub.s32 %s13, 1
      // Predicated region
      $region13: #{fastspeech2_forward.106} parent=11 // pred_check
        %p244 = pneg %p154
      $region14: #{fastspeech2_forward.106} parent=11 // pred_check_branch
        %246 = sbr.rel (%p244) target = $region16
      $region15: #{fastspeech2_forward.106} parent=11 // pred_region
        _
      $region16: #{fastspeech2_forward.106} parent=11 // pred_fallthru
        _
      // Predicated region
      $region17: #{fastspeech2_forward.106} parent=11 // pred_check
        %p247 = pneg %p175
      $region18: #{fastspeech2_forward.106} parent=11 // pred_check_branch
        %249 = sbr.rel (%p247) target = $region20
      $region19: #{fastspeech2_forward.106} parent=11 // pred_region
        _
      $region20: #{fastspeech2_forward.106} parent=11 // pred_fallthru
        _
    $region12: #{fastspeech2_forward.106} parent=5 // pred_fallthru
      _
    %p250 = scmp.lt.s32.totalorder %s13, 2
    // Predicated region
    $region21: #{fastspeech2_forward.106} parent=5 // pred_check
      %p251 = pneg %p250
    $region22: #{fastspeech2_forward.106} parent=5 // pred_check_branch
      %253 = sbr.rel (%p251) target = $region24
    $region23: #{fastspeech2_forward.106} parent=5 // pred_region
      // Predicated region
      $region25: #{fastspeech2_forward.106} parent=23 // pred_check
        %p254 = pneg %p47
      $region26: #{fastspeech2_forward.106} parent=23 // pred_check_branch
        %256 = sbr.rel (%p254) target = $region28
      $region27: #{fastspeech2_forward.106} parent=23 // pred_region
        %p257 = scmp.lt.s32.totalorder %s20, 1
        %s258 = scalar_select %p257, %s20, 1
        %p259 = scmp.lt.s32.totalorder %s21, 0
        %s260 = scalar_select %p259, %s21, 0
        %s261 = sadd.s32 %s260, %s258
        %s262 = smul.addr %s261, 4
        %s263 = scalar_lea.vmem %s0, %s262
      $region28: #{fastspeech2_forward.106} parent=23 // pred_fallthru
        _
      // Predicated region
      $region29: #{fastspeech2_forward.106} parent=23 // pred_check
        %p264 = pneg %p73
      $region30: #{fastspeech2_forward.106} parent=23 // pred_check_branch
        %266 = sbr.rel (%p264) target = $region32
      $region31: #{fastspeech2_forward.106} parent=23 // pred_region
        %p267 = scmp.lt.s32.totalorder %s20, 1
        %s268 = scalar_select %p267, %s20, 1
        %s269 = smul.addr %s268, 4
        %s270 = scalar_lea.vmem %s1, %s269
      $region32: #{fastspeech2_forward.106} parent=23 // pred_fallthru
        _
      // Predicated region
      $region33: #{fastspeech2_forward.106} parent=23 // pred_check
        %p271 = pneg %p99
      $region34: #{fastspeech2_forward.106} parent=23 // pred_check_branch
        %273 = sbr.rel (%p271) target = $region36
      $region35: #{fastspeech2_forward.106} parent=23 // pred_region
        %p274 = scmp.lt.s32.totalorder %s20, 1
        %s275 = scalar_select %p274, %s20, 1
        %s276 = smul.addr %s275, 4
        %s277 = scalar_lea.vmem %s2, %s276
      $region36: #{fastspeech2_forward.106} parent=23 // pred_fallthru
        _
      // Predicated region
      $region37: #{fastspeech2_forward.106} parent=23 // pred_check
        %p278 = pneg %p127
      $region38: #{fastspeech2_forward.106} parent=23 // pred_check_branch
        %280 = sbr.rel (%p278) target = $region40
      $region39: #{fastspeech2_forward.106} parent=23 // pred_region
        %p281 = scmp.lt.s32.totalorder %s20, 1
        %s282 = scalar_select %p281, %s20, 1
        %p283 = scmp.lt.s32.totalorder %s21, 0
        %s284 = scalar_select %p283, %s21, 0
        %s285 = smul.addr %s282, 2
        %s286 = sadd.s32 %s284, %s285
        %s287 = smul.addr %s286, 4
        %s288 = scalar_lea.vmem %s3, %s287
      $region40: #{fastspeech2_forward.106} parent=23 // pred_fallthru
        _
      // Predicated region
      $region41: #{fastspeech2_forward.106} parent=23 // pred_check
        %p289 = pneg %p195
      $region42: #{fastspeech2_forward.106} parent=23 // pred_check_branch
        %291 = sbr.rel (%p289) target = $region44
      $region43: #{fastspeech2_forward.106} parent=23 // pred_region
        %p292 = scmp.lt.s32.totalorder %s20, 1
        %s293 = scalar_select %p292, %s20, 1
        %s294 = scalar_lea.vmem %s6, %s293
      $region44: #{fastspeech2_forward.106} parent=23 // pred_fallthru
        _
    $region24: #{fastspeech2_forward.106} parent=5 // pred_fallthru
      _
    %p295 = scmp.le.s32.totalorder 1, %s13
    %p296 = scmp.lt.s32.totalorder %s13, 3
    %p297 = pnand %p295, %p296
    %p298 = pneg %p297
    // Predicated region
    $region45: #{fastspeech2_forward.106} parent=5 // pred_check
      _
    $region46: #{fastspeech2_forward.106} parent=5 // pred_check_branch
      %300 = sbr.rel (%p297) target = $region48
    $region47: #{fastspeech2_forward.106} parent=5 // pred_region
      %s301 = ssub.s32 %s13, 1
      %p302 = scmp.lt.s32.totalorder %s22, 1
      %s303 = scalar_select %p302, %s22, 1
      %p304 = scmp.lt.s32.totalorder %s23, 0
      %s305 = scalar_select %p304, %s23, 0
      %s306 = sadd.s32 %s305, %s303
      %s307 = smul.addr %s306, 4
      %s308 = scalar_lea.vmem %s0, %s307
      %p309 = pneg %p53
      %p310 = pneg %p50
      %p311 = scmp.lt.s32.totalorder %s22, 1
      %s312 = scalar_select %p311, %s22, 1
      %s313 = smul.addr %s312, 4
      %s314 = scalar_lea.vmem %s1, %s313
      %p315 = pneg %p79
      %p316 = pneg %p76
      %p317 = scmp.lt.s32.totalorder %s22, 1
      %s318 = scalar_select %p317, %s22, 1
      %s319 = smul.addr %s318, 4
      %s320 = scalar_lea.vmem %s2, %s319
      %p321 = pneg %p105
      %p322 = pneg %p102
      %p323 = scmp.lt.s32.totalorder %s22, 1
      %s324 = scalar_select %p323, %s22, 1
      %p325 = scmp.lt.s32.totalorder %s23, 0
      %s326 = scalar_select %p325, %s23, 0
      %s327 = smul.addr %s324, 2
      %s328 = sadd.s32 %s326, %s327
      %s329 = smul.addr %s328, 4
      %s330 = scalar_lea.vmem %s3, %s329
      %p331 = pneg %p133
      %p332 = pneg %p130
      %p333 = pneg %p154
      %p334 = pneg %p151
      %p335 = pneg %p175
      %p336 = pneg %p172
      %p337 = scmp.lt.s32.totalorder %s22, 1
      %s338 = scalar_select %p337, %s22, 1
      %s339 = scalar_lea.vmem %s6, %s338
      %p340 = pneg %p201
      %p341 = pneg %p198
      %p342 = pneg %p229
      %p343 = pneg %p226
      %p344 = scmp.lt.s32.totalorder %s22, 1
      %s345 = scalar_select %p344, %s22, 1
      %p346 = scmp.lt.s32.totalorder %s23, 0
      %s347 = scalar_select %p346, %s23, 0
      %s348 = sadd.s32 %s347, %s345
      %s349 = smul.addr %s348, 4
      %s350 = scalar_lea.vmem %s7, %s349
      %p351 = scmp.lt.s32.totalorder %s22, 1
      %s352 = scalar_select %p351, %s22, 1
      %p353 = scmp.lt.s32.totalorder %s23, 0
      %s354 = scalar_select %p353, %s23, 0
      %s355 = sadd.s32 %s354, %s352
      %s356 = smul.addr %s355, 4
      %s357 = scalar_lea.vmem %s0, %s356
      %p358 = scmp.lt.s32.totalorder %s22, 1
      %s359 = scalar_select %p358, %s22, 1
      %s360 = smul.addr %s359, 4
      %s361 = scalar_lea.vmem %s1, %s360
      %p362 = scmp.lt.s32.totalorder %s22, 1
      %s363 = scalar_select %p362, %s22, 1
      %s364 = smul.addr %s363, 4
      %s365 = scalar_lea.vmem %s2, %s364
      %p366 = scmp.lt.s32.totalorder %s22, 1
      %s367 = scalar_select %p366, %s22, 1
      %p368 = scmp.lt.s32.totalorder %s23, 0
      %s369 = scalar_select %p368, %s23, 0
      %s370 = smul.addr %s367, 2
      %s371 = sadd.s32 %s369, %s370
      %s372 = smul.addr %s371, 4
      %s373 = scalar_lea.vmem %s3, %s372
      %p374 = scmp.lt.s32.totalorder %s22, 1
      %s375 = scalar_select %p374, %s22, 1
      %s376 = scalar_lea.vmem %s6, %s375
      %p377 = scmp.lt.s32.totalorder %s22, 1
      %s378 = scalar_select %p377, %s22, 1
      %p379 = scmp.lt.s32.totalorder %s23, 0
      %s380 = scalar_select %p379, %s23, 0
      %s381 = sadd.s32 %s380, %s378
      %s382 = smul.addr %s381, 4
      %s383 = scalar_lea.vmem %s7, %s382
      %v385 = vld [vmem:[%s357] sm:$0xf]
      %v386 = vunpack.c.l.bf16 %v385
      %v387 = vld [vmem:[%s4] sm:$0x1]
      %v389 = vlaneseq
      %v390 = vshrl.u32 %v389, 7
      %v391 = vsub.s32 0, %v390
      %v392 = vrot.slane %v387, %v391
      %v394 = vadd.f32 %v386, %v392
      %v395 = vpack.c.bf16 %v394, %v394
      %v396 = vld [vmem:[%s361] sm:$0xf]
      %v397 = vld [vmem:[%s365] sm:$0xf]
      %v398 = vld [vmem:[%s376] sm:$0x1]
      %v399 = vsub.f32 %v398, 1.0
      %v400 = vmul.f32 %v399, 1e+30
      %v401 = vld [vmem:[%s373] sm:$0xf]
      %v402 = vunpack.c.l.bf16 %v401
      %vm403 = vcmask 130048
      %v405 = vsel %vm403, %v395, 0
      %v408 = vsel %vm403, %v396, 0
      %410 = vmatprep.subr.bf16.mxu0 0
      %411 = vmatpush1.bf16.xpose.msra.mxu0 %v408
      %412 = vmatprep.subr.bf16.mxu0 0
      %413 = vmatpush1.bf16.xpose.msra.mxu0 0
      %414 = vmatprep.subr.bf16.mxu0 0
      %415 = vmatpush1.bf16.xpose.msra.mxu0 0
      %416 = vmatprep.subr.bf16.mxu0 0
      %417 = vmatpush1.bf16.xpose.msra.mxu0 0
      %418 = vmatprep.subr.bf16.mxu0 0
      %419 = vmatpush1.bf16.xpose.msra.mxu0 0
      %420 = vmatprep.subr.bf16.mxu0 0
      %421 = vmatpush1.bf16.xpose.msra.mxu0 0
      %422 = vmatprep.subr.bf16.mxu0 0
      %423 = vmatpush1.bf16.xpose.msra.mxu0 0
      %424 = vmatprep.subr.bf16.mxu0 0
      %425 = vmatpush1.bf16.xpose.msra.mxu0 0
      %426 = vmatprep.subr.bf16.mxu0 0
      %427 = vmatpush1.bf16.xpose.msra.mxu0 0
      %428 = vmatprep.subr.bf16.mxu0 0
      %429 = vmatpush1.bf16.xpose.msra.mxu0 0
      %430 = vmatprep.subr.bf16.mxu0 0
      %431 = vmatpush1.bf16.xpose.msra.mxu0 0
      %432 = vmatprep.subr.bf16.mxu0 0
      %433 = vmatpush1.bf16.xpose.msra.mxu0 0
      %434 = vmatprep.subr.bf16.mxu0 0
      %435 = vmatpush1.bf16.xpose.msra.mxu0 0
      %436 = vmatprep.subr.bf16.mxu0 0
      %437 = vmatpush1.bf16.xpose.msra.mxu0 0
      %438 = vmatprep.subr.bf16.mxu0 0
      %439 = vmatpush1.bf16.xpose.msra.mxu0 0
      %440 = vmatprep.subr.bf16.mxu0 0
      %441 = vmatpush1.bf16.xpose.msra.mxu0 0
      %442 = vmatprep.mubr.bf16.mxu0 0
      %443 = vmatmul.mubr.bf16.gmra.mrb[0].mxu0 %v405
      %v444 = vpop.f32.mrb[0].mxu0
      %v445 = vadd.f32 %v402, %v444
      %v446 = vpop.f32.mrb[0].mxu0
      %v447 = vpop.f32.mrb[0].mxu0
      %v448 = vpop.f32.mrb[0].mxu0
      %449 = vdwg.mxu0
      %v450 = vmul.f32 %v445, 0.25
      %v452 = vlaneseq
      %v453 = vshrl.u32 %v452, 7
      %v454 = vsub.s32 0, %v453
      %v455 = vrot.slane %v400, %v454
      %v457 = vadd.f32 %v450, %v455
      %vm458 = vcmask 64512
      %v459 = vsel %vm458, %v457, -inf
      %460 = vmax.xlane.f32.xlu0 %v459
      %v461 = vpop.xlane.xlu0 %460
      %v462 = vsub.f32 %v457, %v461
      %v463 = vmul.f32 %v462, 1.442695
      %v464 = vpow.pop %v463
      %v466 = vlaneseq
      %v467 = vshrl.u32 %v466, 7
      %v468 = vsub.s32 0, %v467
      %v469 = vrot.slane %v398, %v468
      %v471 = vmul.f32 %v464, %v469
      %v472 = vsel %vm458, %v471, 0.0
      %473 = vadd.xlane.f32.xlu0 %v472
      %v474 = vpop.xlane.xlu0 %473
      %v475 = vmax.f32 %v474, 1e-30
      %v476 = vrcp.pop %v475
      %v477 = vmul.f32 %v471, %v476
      %v478 = vpack.c.bf16 %v477, %v477
      %v480 = vsel %vm458, %v478, 0
      %vm482 = vcmask 1043456
      %v484 = vsel %vm482, %v397, 0
      %486 = vmatprep.subr.bf16.mxu0 0
      %487 = vmatpush1.bf16.msra.mxu0 %v484
      %488 = vmatprep.subr.bf16.mxu0 0
      %489 = vmatpush1.bf16.msra.mxu0 0
      %490 = vmatprep.subr.bf16.mxu0 0
      %491 = vmatpush1.bf16.msra.mxu0 0
      %492 = vmatprep.subr.bf16.mxu0 0
      %493 = vmatpush1.bf16.msra.mxu0 0
      %494 = vmatprep.subr.bf16.mxu0 0
      %495 = vmatpush1.bf16.msra.mxu0 0
      %496 = vmatprep.subr.bf16.mxu0 0
      %497 = vmatpush1.bf16.msra.mxu0 0
      %498 = vmatprep.subr.bf16.mxu0 0
      %499 = vmatpush1.bf16.msra.mxu0 0
      %500 = vmatprep.subr.bf16.mxu0 0
      %501 = vmatpush1.bf16.msra.mxu0 0
      %502 = vmatprep.subr.bf16.mxu0 0
      %503 = vmatpush1.bf16.msra.mxu0 0
      %504 = vmatprep.subr.bf16.mxu0 0
      %505 = vmatpush1.bf16.msra.mxu0 0
      %506 = vmatprep.subr.bf16.mxu0 0
      %507 = vmatpush1.bf16.msra.mxu0 0
      %508 = vmatprep.subr.bf16.mxu0 0
      %509 = vmatpush1.bf16.msra.mxu0 0
      %510 = vmatprep.subr.bf16.mxu0 0
      %511 = vmatpush1.bf16.msra.mxu0 0
      %512 = vmatprep.subr.bf16.mxu0 0
      %513 = vmatpush1.bf16.msra.mxu0 0
      %514 = vmatprep.subr.bf16.mxu0 0
      %515 = vmatpush1.bf16.msra.mxu0 0
      %516 = vmatprep.subr.bf16.mxu0 0
      %517 = vmatpush1.bf16.msra.mxu0 0
      %518 = vmatprep.mubr.bf16.mxu0 0
      %519 = vmatmul.mubr.bf16.gmra.mrb[0].mxu0 %v480
      %v520 = vpop.f32.mrb[0].mxu0
      %v521 = vadd.f32 0.0, %v520
      %v522 = vpop.f32.mrb[0].mxu0
      %v523 = vpop.f32.mrb[0].mxu0
      %v524 = vpop.f32.mrb[0].mxu0
      %525 = vdwg.mxu0
      %s526 = scalar_lea.vmem %s373, 4
      %v527 = vld [vmem:[%s526] sm:$0xf]
      %v528 = vunpack.c.l.bf16 %v527
      %530 = vrot.lane.b32.xlu0 %v395, 112
      %v531 = vpop.permute.xlu0 %530
      %v533 = vunpack.c.l.b16 %v396
      %v534 = vpack.c.b16 %v533, %v533
      %535 = vrot.lane.b32.xlu0 %v534, 112
      %v536 = vpop.permute.xlu0 %535
      %v538 = vsel %vm403, %v531, 0
      %v541 = vsel %vm403, %v536, 0
      %543 = vmatprep.subr.bf16.mxu0 0
      %544 = vmatpush1.bf16.xpose.msra.mxu0 %v541
      %545 = vmatprep.subr.bf16.mxu0 0
      %546 = vmatpush1.bf16.xpose.msra.mxu0 0
      %547 = vmatprep.subr.bf16.mxu0 0
      %548 = vmatpush1.bf16.xpose.msra.mxu0 0
      %549 = vmatprep.subr.bf16.mxu0 0
      %550 = vmatpush1.bf16.xpose.msra.mxu0 0
      %551 = vmatprep.subr.bf16.mxu0 0
      %552 = vmatpush1.bf16.xpose.msra.mxu0 0
      %553 = vmatprep.subr.bf16.mxu0 0
      %554 = vmatpush1.bf16.xpose.msra.mxu0 0
      %555 = vmatprep.subr.bf16.mxu0 0
      %556 = vmatpush1.bf16.xpose.msra.mxu0 0
      %557 = vmatprep.subr.bf16.mxu0 0
      %558 = vmatpush1.bf16.xpose.msra.mxu0 0
      %559 = vmatprep.subr.bf16.mxu0 0
      %560 = vmatpush1.bf16.xpose.msra.mxu0 0
      %561 = vmatprep.subr.bf16.mxu0 0
      %562 = vmatpush1.bf16.xpose.msra.mxu0 0
      %563 = vmatprep.subr.bf16.mxu0 0
      %564 = vmatpush1.bf16.xpose.msra.mxu0 0
      %565 = vmatprep.subr.bf16.mxu0 0
      %566 = vmatpush1.bf16.xpose.msra.mxu0 0
      %567 = vmatprep.subr.bf16.mxu0 0
      %568 = vmatpush1.bf16.xpose.msra.mxu0 0
      %569 = vmatprep.subr.bf16.mxu0 0
      %570 = vmatpush1.bf16.xpose.msra.mxu0 0
      %571 = vmatprep.subr.bf16.mxu0 0
      %572 = vmatpush1.bf16.xpose.msra.mxu0 0
      %573 = vmatprep.subr.bf16.mxu0 0
      %574 = vmatpush1.bf16.xpose.msra.mxu0 0
      %575 = vmatprep.mubr.bf16.mxu0 0
      %576 = vmatmul.mubr.bf16.gmra.mrb[0].mxu0 %v538
      %v577 = vpop.f32.mrb[0].mxu0
      %v578 = vadd.f32 %v528, %v577
      %v579 = vpop.f32.mrb[0].mxu0
      %v580 = vpop.f32.mrb[0].mxu0
      %v581 = vpop.f32.mrb[0].mxu0
      %582 = vdwg.mxu0
      %v583 = vmul.f32 %v578, 0.25
      %v584 = vadd.f32 %v583, %v455
      %v585 = vsel %vm458, %v584, -inf
      %586 = vmax.xlane.f32.xlu0 %v585
      %v587 = vpop.xlane.xlu0 %586
      %v588 = vsub.f32 %v584, %v587
      %v589 = vmul.f32 %v588, 1.442695
      %v590 = vpow.pop %v589
      %v591 = vmul.f32 %v590, %v469
      %v592 = vsel %vm458, %v591, 0.0
      %593 = vadd.xlane.f32.xlu0 %v592
      %v594 = vpop.xlane.xlu0 %593
      %v595 = vmax.f32 %v594, 1e-30
      %v596 = vrcp.pop %v595
      %v597 = vmul.f32 %v591, %v596
      %v598 = vpack.c.bf16 %v597, %v597
      %v600 = vunpack.c.l.b16 %v397
      %v601 = vpack.c.b16 %v600, %v600
      %602 = vrot.lane.b32.xlu0 %v601, 112
      %v603 = vpop.permute.xlu0 %602
      %v605 = vsel %vm458, %v598, 0
      %v608 = vsel %vm482, %v603, 0
      %610 = vmatprep.subr.bf16.mxu0 0
      %611 = vmatpush1.bf16.msra.mxu0 %v608
      %612 = vmatprep.subr.bf16.mxu0 0
      %613 = vmatpush1.bf16.msra.mxu0 0
      %614 = vmatprep.subr.bf16.mxu0 0
      %615 = vmatpush1.bf16.msra.mxu0 0
      %616 = vmatprep.subr.bf16.mxu0 0
      %617 = vmatpush1.bf16.msra.mxu0 0
      %618 = vmatprep.subr.bf16.mxu0 0
      %619 = vmatpush1.bf16.msra.mxu0 0
      %620 = vmatprep.subr.bf16.mxu0 0
      %621 = vmatpush1.bf16.msra.mxu0 0
      %622 = vmatprep.subr.bf16.mxu0 0
      %623 = vmatpush1.bf16.msra.mxu0 0
      %624 = vmatprep.subr.bf16.mxu0 0
      %625 = vmatpush1.bf16.msra.mxu0 0
      %626 = vmatprep.subr.bf16.mxu0 0
      %627 = vmatpush1.bf16.msra.mxu0 0
      %628 = vmatprep.subr.bf16.mxu0 0
      %629 = vmatpush1.bf16.msra.mxu0 0
      %630 = vmatprep.subr.bf16.mxu0 0
      %631 = vmatpush1.bf16.msra.mxu0 0
      %632 = vmatprep.subr.bf16.mxu0 0
      %633 = vmatpush1.bf16.msra.mxu0 0
      %634 = vmatprep.subr.bf16.mxu0 0
      %635 = vmatpush1.bf16.msra.mxu0 0
      %636 = vmatprep.subr.bf16.mxu0 0
      %637 = vmatpush1.bf16.msra.mxu0 0
      %638 = vmatprep.subr.bf16.mxu0 0
      %639 = vmatpush1.bf16.msra.mxu0 0
      %640 = vmatprep.subr.bf16.mxu0 0
      %641 = vmatpush1.bf16.msra.mxu0 0
      %642 = vmatprep.mubr.bf16.mxu0 0
      %643 = vmatmul.mubr.bf16.gmra.mrb[0].mxu0 %v605
      %v644 = vpop.f32.mrb[0].mxu0
      %v645 = vadd.f32 0.0, %v644
      %v646 = vpop.f32.mrb[0].mxu0
      %v647 = vpop.f32.mrb[0].mxu0
      %v648 = vpop.f32.mrb[0].mxu0
      %649 = vdwg.mxu0
      %651 = vrot.lane.b32.xlu0 %v645, 16
      %v652 = vpop.permute.xlu0 %651
      %v654 = vsel %vm403, %v521, %v652
      %v655 = vpack.c.bf16 %v654, %v654
      %vm656 = vcmask 257024
      %657 = vst.msk [vmem:[%s383] sm:$0xf] %vm656, %v655
      %p658 = scmp.lt.s32.totalorder %s22, 1
      %s659 = scalar_select %p658, %s22, 1
      %p660 = scmp.lt.s32.totalorder %s23, 0
      %s661 = scalar_select %p660, %s23, 0
      %s662 = sadd.s32 %s661, %s659
      %s663 = smul.addr %s662, 4
      %s664 = scalar_lea.vmem %s7, %s663
      // Predicated region
      $region49: #{fastspeech2_forward.106} parent=47 // pred_check
        %p665 = pneg %p226
      $region50: #{fastspeech2_forward.106} parent=47 // pred_check_branch
        %667 = sbr.rel (%p665) target = $region52
      $region51: #{fastspeech2_forward.106} parent=47 // pred_region
        _
      $region52: #{fastspeech2_forward.106} parent=47 // pred_fallthru
        _
    $region48: #{fastspeech2_forward.106} parent=5 // pred_fallthru
      _
    %p668 = scmp.le.s32.totalorder 2, %s13
    // Predicated region
    $region53: #{fastspeech2_forward.106} parent=5 // pred_check
      %p669 = pneg %p668
    $region54: #{fastspeech2_forward.106} parent=5 // pred_check_branch
      %671 = sbr.rel (%p669) target = $region56
    $region55: #{fastspeech2_forward.106} parent=5 // pred_region
      %s672 = ssub.s32 %s13, 2
      // Predicated region
      $region57: #{fastspeech2_forward.106} parent=55 // pred_check
        %p673 = pneg %p232
      $region58: #{fastspeech2_forward.106} parent=55 // pred_check_branch
        %675 = sbr.rel (%p673) target = $region60
      $region59: #{fastspeech2_forward.106} parent=55 // pred_region
        %p676 = scmp.lt.s32.totalorder %s24, 1
        %s677 = scalar_select %p676, %s24, 1
        %p678 = scmp.lt.s32.totalorder %s25, 0
        %s679 = scalar_select %p678, %s25, 0
        %s680 = sadd.s32 %s679, %s677
        %s681 = smul.addr %s680, 4
        %s682 = scalar_lea.vmem %s7, %s681
      $region60: #{fastspeech2_forward.106} parent=55 // pred_fallthru
        _
    $region56: #{fastspeech2_forward.106} parent=5 // pred_fallthru
      _
  $region6: #{fastspeech2_forward.106} parent=0 // loop_footer
    %s17 = sadd.s32 1, %s13
  $region7: #{fastspeech2_forward.106} parent=0 // loop_footer_branch
    %12 = sbr.rel target = $region3
  $region8: #{fastspeech2_forward.106} parent=0 // loop_exit
    _

// kernel: fastspeech2_forward.110
$region0: #{fastspeech2_forward.110}
  #allocation0 [shape = 'u32[]', space=smem, size = 0x4, offset = 0x4, fixed_abs, tag = 'smem constant byte address 0x4 - core index']
  #allocation1 [shape = 'u32[144,128]{1,0:T(1,128)}', space=vmem, size = 0x12000, scoped, tag = 'internal scratch']
  %s0 = inlined_call_operand.vmem [shape: bf16[2,14,32], index: 0, kind: input, shape index: {}]
  %s1 = inlined_call_operand.vmem [shape: f32[7,32], index: 1, kind: input, shape index: {}]
  %s2 = inlined_call_operand.vmem [shape: f32[1,32], index: 2, kind: input, shape index: {}]
  %s3 = inlined_call_operand.vmem [shape: f32[2,8,32], index: 3, kind: output, shape index: {}]
  %s4 = sld [smem:[#allocation0]]
  $region45: #{fastspeech2_forward.110} parent=0
    _
  %s6 = ssub.s32 1, %s4
  %s7 = scalar_select 0, %s6, %s4
  loop: start=0, step=1, limit=4
  $region2: #{fastspeech2_forward.110} parent=0 // loop_pre_header
    _
  $region3: #{fastspeech2_forward.110} parent=0 // loop_header
    %s9 = sphi 0, %s13
    %p10 = scmp.ge.s32.totalorder %s9, 4
    %s19 = sphi 0, %s21
    %s22 = sphi 0, %s19
    %s23 = sphi 0, %s22
    %s39 = sphi 0, %s23
    %s43 = sphi 0, %s43
    %s45 = sphi 0, %s43
    %s46 = sphi 0, %s45
    %s60 = sphi 0, %s46
    %s64 = sphi 0, %s64
    %s66 = sphi 0, %s64
    %s67 = sphi 0, %s66
    %s81 = sphi 0, %s67
    %s87 = sphi 0, %s89
    %s90 = sphi 0, %s87
    %s91 = sphi 0, %s90
    %s107 = sphi 0, %s91
  $region4: #{fastspeech2_forward.110} parent=0 // loop_header_branch
    %12 = sbr.rel (%p10) target = $region8
  $region5: #{fastspeech2_forward.110} parent=0 // loop_body
    %s14 = ssub.s32 %s9, 1
    %s15 = ssub.s32 %s9, 2
    %s16 = sadd.s32 %s9, 1
    %s17 = ssub.s32 %s9, %s16
    %p18 = scmp.eq.s32.totalorder %s17, 0
    %s20 = sadd.s32 %s19, 1
    %s21 = scalar_select %p18, %s19, %s20
    %p24 = pneg %p18
    %p25 = scmp.eq.s32.totalorder %s9, 1
    %p26 = por %p24, %p25
    %p27 = scmp.ne.s32.totalorder %s19, %s22
    %p28 = scmp.eq.s32.totalorder %s9, 0
    %p29 = por %p27, %p28
    %p30 = scmp.ne.s32.totalorder %s19, %s22
    %p31 = scmp.eq.s32.totalorder %s14, 1
    %p32 = por %p30, %p31
    %p33 = scmp.ne.s32.totalorder %s22, %s23
    %p34 = scmp.eq.s32.totalorder %s14, 0
    %p35 = por %p33, %p34
    %p36 = scmp.ne.s32.totalorder %s22, %s23
    %p37 = scmp.eq.s32.totalorder %s15, 1
    %p38 = por %p36, %p37
    %p40 = scmp.ne.s32.totalorder %s23, %s39
    %p41 = scmp.eq.s32.totalorder %s15, 0
    %p42 = por %p40, %p41
    %s44 = sadd.s32 %s43, 1
    %p47 = scmp.eq.s32.totalorder %s9, 1
    %p48 = scmp.ne.s32.totalorder %s43, %s45
    %p49 = scmp.eq.s32.totalorder %s9, 0
    %p50 = por %p48, %p49
    %p51 = scmp.ne.s32.totalorder %s43, %s45
    %p52 = scmp.eq.s32.totalorder %s14, 1
    %p53 = por %p51, %p52
    %p54 = scmp.ne.s32.totalorder %s45, %s46
    %p55 = scmp.eq.s32.totalorder %s14, 0
    %p56 = por %p54, %p55
    %p57 = scmp.ne.s32.totalorder %s45, %s46
    %p58 = scmp.eq.s32.totalorder %s15, 1
    %p59 = por %p57, %p58
    %p61 = scmp.ne.s32.totalorder %s46, %s60
    %p62 = scmp.eq.s32.totalorder %s15, 0
    %p63 = por %p61, %p62
    %s65 = sadd.s32 %s64, 1
    %p68 = scmp.eq.s32.totalorder %s9, 1
    %p69 = scmp.ne.s32.totalorder %s64, %s66
    %p70 = scmp.eq.s32.totalorder %s9, 0
    %p71 = por %p69, %p70
    %p72 = scmp.ne.s32.totalorder %s64, %s66
    %p73 = scmp.eq.s32.totalorder %s14, 1
    %p74 = por %p72, %p73
    %p75 = scmp.ne.s32.totalorder %s66, %s67
    %p76 = scmp.eq.s32.totalorder %s14, 0
    %p77 = por %p75, %p76
    %p78 = scmp.ne.s32.totalorder %s66, %s67
    %p79 = scmp.eq.s32.totalorder %s15, 1
    %p80 = por %p78, %p79
    %p82 = scmp.ne.s32.totalorder %s67, %s81
    %p83 = scmp.eq.s32.totalorder %s15, 0
    %p84 = por %p82, %p83
    %s85 = ssub.s32 %s9, %s16
    %p86 = scmp.eq.s32.totalorder %s85, 0
    %s88 = sadd.s32 %s87, 1
    %s89 = scalar_select %p86, %s87, %s88
    %p92 = pneg %p86
    %p93 = scmp.eq.s32.totalorder %s9, 1
    %p94 = por %p92, %p93
    %p95 = scmp.ne.s32.totalorder %s87, %s90
    %p96 = scmp.eq.s32.totalorder %s9, 0
    %p97 = por %p95, %p96
    %p98 = scmp.ne.s32.totalorder %s87, %s90
    %p99 = scmp.eq.s32.totalorder %s14, 1
    %p100 = por %p98, %p99
    %p101 = scmp.ne.s32.totalorder %s90, %s91
    %p102 = scmp.eq.s32.totalorder %s14, 0
    %p103 = por %p101, %p102
    %p104 = scmp.ne.s32.totalorder %s90, %s91
    %p105 = scmp.eq.s32.totalorder %s15, 1
    %p106 = por %p104, %p105
    %p108 = scmp.ne.s32.totalorder %s91, %s107
    %p109 = scmp.eq.s32.totalorder %s15, 0
    %p110 = por %p108, %p109
    %p111 = scmp.le.s32.totalorder 1, %s9
    %p112 = scmp.lt.s32.totalorder %s9, 3
    %p113 = pnand %p111, %p112
    %p114 = pneg %p113
    // Predicated region
    $region9: #{fastspeech2_forward.110} parent=5 // pred_check
      _
    $region10: #{fastspeech2_forward.110} parent=5 // pred_check_branch
      %116 = sbr.rel (%p113) target = $region12
    $region11: #{fastspeech2_forward.110} parent=5 // pred_region
      %s117 = ssub.s32 %s9, 1
      // Predicated region
      $region13: #{fastspeech2_forward.110} parent=11 // pred_check
        %p118 = pneg %p56
      $region14: #{fastspeech2_forward.110} parent=11 // pred_check_branch
        %120 = sbr.rel (%p118) target = $region16
      $region15: #{fastspeech2_forward.110} parent=11 // pred_region
        _
      $region16: #{fastspeech2_forward.110} parent=11 // pred_fallthru
        _
      // Predicated region
      $region17: #{fastspeech2_forward.110} parent=11 // pred_check
        %p121 = pneg %p77
      $region18: #{fastspeech2_forward.110} parent=11 // pred_check_branch
        %123 = sbr.rel (%p121) target = $region20
      $region19: #{fastspeech2_forward.110} parent=11 // pred_region
        _
      $region20: #{fastspeech2_forward.110} parent=11 // pred_fallthru
        _
    $region12: #{fastspeech2_forward.110} parent=5 // pred_fallthru
      _
    %p124 = scmp.lt.s32.totalorder %s9, 2
    // Predicated region
    $region21: #{fastspeech2_forward.110} parent=5 // pred_check
      %p125 = pneg %p124
    $region22: #{fastspeech2_forward.110} parent=5 // pred_check_branch
      %127 = sbr.rel (%p125) target = $region24
    $region23: #{fastspeech2_forward.110} parent=5 // pred_region
      // Predicated region
      $region25: #{fastspeech2_forward.110} parent=23 // pred_check
        %p128 = pneg %p29
      $region26: #{fastspeech2_forward.110} parent=23 // pred_check_branch
        %130 = sbr.rel (%p128) target = $region28
      $region27: #{fastspeech2_forward.110} parent=23 // pred_region
        %p131 = scmp.lt.s32.totalorder %s9, 1
        %s132 = scalar_select %p131, %s9, 1
        %s133 = smul.addr %s132, 2
        %s134 = smul.addr %s133, 4
        %s135 = scalar_lea.vmem %s0, %s134
      $region28: #{fastspeech2_forward.110} parent=23 // pred_fallthru
        _
    $region24: #{fastspeech2_forward.110} parent=5 // pred_fallthru
      _
    %p136 = scmp.le.s32.totalorder 1, %s9
    %p137 = scmp.lt.s32.totalorder %s9, 3
    %p138 = pnand %p136, %p137
    %p139 = pneg %p138
    // Predicated region
    $region29: #{fastspeech2_forward.110} parent=5 // pred_check
      _
    $region30: #{fastspeech2_forward.110} parent=5 // pred_check_branch
      %141 = sbr.rel (%p138) target = $region32
    $region31: #{fastspeech2_forward.110} parent=5 // pred_region
      %s142 = ssub.s32 %s9, 1
      %p143 = scmp.lt.s32.totalorder %s14, 1
      %s144 = scalar_select %p143, %s14, 1
      %s145 = smul.addr %s144, 2
      %s146 = smul.addr %s145, 4
      %s147 = scalar_lea.vmem %s0, %s146
      %p148 = pneg %p35
      %p149 = pneg %p32
      %p150 = pneg %p56
      %p151 = pneg %p53
      %p152 = pneg %p77
      %p153 = pneg %p74
      %p154 = pneg %p103
      %p155 = pneg %p100
      %p156 = scmp.lt.s32.totalorder %s14, 1
      %s157 = scalar_select %p156, %s14, 1
      %s158 = smul.addr %s157, 8
      %s159 = scalar_lea.vmem %s3, %s158
      %p160 = scmp.lt.s32.totalorder %s14, 1
      %s161 = scalar_select %p160, %s14, 1
      %s162 = smul.addr %s161, 2
      %s163 = smul.addr %s162, 4
      %s164 = scalar_lea.vmem %s0, %s163
      %p165 = scmp.lt.s32.totalorder %s14, 1
      %s166 = scalar_select %p165, %s14, 1
      %s167 = smul.addr %s166, 8
      %s168 = scalar_lea.vmem %s3, %s167
      %v169 = vld [vmem:[%s2] sm:$0x1]
      %v171 = vlaneseq
      %v172 = vshrl.u32 %v171, 7
      %v173 = vsub.s32 0, %v172
      %v174 = vrot.slane %v169, %v173
      %v176 = vadd.f32 %v174, 0.0
      %v177 = vld [vmem:[%s164] sm:$0xf]
      %v178 = vunpack.c.l.bf16 %v177
      %v179 = vld [vmem:[%s1] sm:$0x1]
      %v180 = vlaneseq
      %v181 = vshrl.u32 %v180, 7
      %v182 = vsub.s32 0, %v181
      %v183 = vrot.slane %v179, %v182
      %v184 = vmul.f32 %v178, %v183
      %v185 = vadd.f32 %v176, %v184
      %v186 = vld [vmem:[%s164 + $0x4] sm:$0x1]
      %v187 = vunpack.c.l.bf16 %v186
      %v188 = vld [vmem:[%s1 + $0x1] sm:$0x1]
      %v189 = vlaneseq
      %v190 = vshrl.u32 %v189, 7
      %v191 = vsub.s32 0, %v190
      %v192 = vrot.slane %v188, %v191
      %v193 = vmul.f32 %v178, %v192
      %v194 = vmul.f32 %v187, %v192
      %vm197 = vcmask 1046528
      %v198 = vrot.slane %v193, 1
      %v199 = vrot.slane %v194, 1
      %v200 = vsel %vm197, %v198, %v199
      %v202 = vadd.f32 %v185, %v200
      %v203 = vld [vmem:[%s164] sm:$0xe]
      %v204 = vunpack.c.l.bf16 %v203
      %v205 = vld [vmem:[%s1 + $0x2] sm:$0x1]
      %v206 = vlaneseq
      %v207 = vshrl.u32 %v206, 7
      %v208 = vsub.s32 0, %v207
      %v209 = vrot.slane %v205, %v208
      %v210 = vmul.f32 %v204, %v209
      %v211 = vmul.f32 %v187, %v209
      %vm214 = vcmask 1045504
      %v215 = vrot.slane %v210, 2
      %v216 = vrot.slane %v211, 2
      %v217 = vsel %vm214, %v215, %v216
      %v219 = vadd.f32 %v202, %v217
      %v220 = vld [vmem:[%s164 + $0x4] sm:$0x3]
      %v221 = vunpack.c.l.bf16 %v220
      %v222 = vld [vmem:[%s1 + $0x3] sm:$0x1]
      %v223 = vlaneseq
      %v224 = vshrl.u32 %v223, 7
      %v225 = vsub.s32 0, %v224
      %v226 = vrot.slane %v222, %v225
      %v227 = vmul.f32 %v204, %v226
      %v228 = vmul.f32 %v221, %v226
      %vm231 = vcmask 1044480
      %v232 = vrot.slane %v227, 3
      %v233 = vrot.slane %v228, 3
      %v234 = vsel %vm231, %v232, %v233
      %v236 = vadd.f32 %v219, %v234
      %v237 = vld [vmem:[%s164] sm:$0xc]
      %v238 = vunpack.c.l.bf16 %v237
      %v239 = vld [vmem:[%s1 + $0x4] sm:$0x1]
      %v240 = vlaneseq
      %v241 = vshrl.u32 %v240, 7
      %v242 = vsub.s32 0, %v241
      %v243 = vrot.slane %v239, %v242
      %v244 = vmul.f32 %v238, %v243
      %v245 = vmul.f32 %v221, %v243
      %vm248 = vcmask 1043456
      %v249 = vrot.slane %v244, 4
      %v250 = vrot.slane %v245, 4
      %v251 = vsel %vm248, %v249, %v250
      %v253 = vadd.f32 %v236, %v251
      %v254 = vld [vmem:[%s164 + $0x4] sm:$0x7]
      %v255 = vunpack.c.l.bf16 %v254
      %v256 = vld [vmem:[%s1 + $0x5] sm:$0x1]
      %v257 = vlaneseq
      %v258 = vshrl.u32 %v257, 7
      %v259 = vsub.s32 0, %v258
      %v260 = vrot.slane %v256, %v259
      %v261 = vmul.f32 %v238, %v260
      %v262 = vmul.f32 %v255, %v260
      %vm265 = vcmask 1042432
      %v266 = vrot.slane %v261, 5
      %v267 = vrot.slane %v262, 5
      %v268 = vsel %vm265, %v266, %v267
      %v270 = vadd.f32 %v253, %v268
      %v271 = vld [vmem:[%s164] sm:$0x8]
      %v272 = vunpack.c.l.bf16 %v271
      %v273 = vld [vmem:[%s1 + $0x6] sm:$0x1]
      %v274 = vlaneseq
      %v275 = vshrl.u32 %v274, 7
      %v276 = vsub.s32 0, %v275
      %v277 = vrot.slane %v273, %v276
      %v278 = vmul.f32 %v272, %v277
      %v279 = vmul.f32 %v255, %v277
      %vm282 = vcmask 1041408
      %v283 = vrot.slane %v278, 6
      %v284 = vrot.slane %v279, 6
      %v285 = vsel %vm282, %v283, %v284
      %v287 = vadd.f32 %v270, %v285
      %vm288 = vcmask 261120
      %289 = vst.msk [vmem:[%s168] sm:$0xff] %vm288, %v287
      %p290 = scmp.lt.s32.totalorder %s14, 1
      %s291 = scalar_select %p290, %s14, 1
      %s292 = smul.addr %s291, 8
      %s293 = scalar_lea.vmem %s3, %s292
      // Predicated region
      $region33: #{fastspeech2_forward.110} parent=31 // pred_check
        %p294 = pneg %p100
      $region34: #{fastspeech2_forward.110} parent=31 // pred_check_branch
        %296 = sbr.rel (%p294) target = $region36
      $region35: #{fastspeech2_forward.110} parent=31 // pred_region
        _
      $region36: #{fastspeech2_forward.110} parent=31 // pred_fallthru
        _
    $region32: #{fastspeech2_forward.110} parent=5 // pred_fallthru
      _
    %p297 = scmp.le.s32.totalorder 2, %s9
    // Predicated region
    $region37: #{fastspeech2_forward.110} parent=5 // pred_check
      %p298 = pneg %p297
    $region38: #{fastspeech2_forward.110} parent=5 // pred_check_branch
      %300 = sbr.rel (%p298) target = $region40
    $region39: #{fastspeech2_forward.110} parent=5 // pred_region
      %s301 = ssub.s32 %s9, 2
      // Predicated region
      $region41: #{fastspeech2_forward.110} parent=39 // pred_check
        %p302 = pneg %p106
      $region42: #{fastspeech2_forward.110} parent=39 // pred_check_branch
        %304 = sbr.rel (%p302) target = $region44
      $region43: #{fastspeech2_forward.110} parent=39 // pred_region
        %p305 = scmp.lt.s32.totalorder %s15, 1
        %s306 = scalar_select %p305, %s15, 1
        %s307 = smul.addr %s306, 8
        %s308 = scalar_lea.vmem %s3, %s307
      $region44: #{fastspeech2_forward.110} parent=39 // pred_fallthru
        _
    $region40: #{fastspeech2_forward.110} parent=5 // pred_fallthru
      _
  $region6: #{fastspeech2_forward.110} parent=0 // loop_footer
    %s13 = sadd.s32 1, %s9
  $region7: #{fastspeech2_forward.110} parent=0 // loop_footer_branch
    %8 = sbr.rel target = $region3
  $region8: #{fastspeech2_forward.110} parent=0 // loop_exit
    _

// kernel: fastspeech2_forward.136
$region0: #{fastspeech2_forward.136}
  #allocation0 [shape = 'u32[]', space=smem, size = 0x4, offset = 0x4, fixed_abs, tag = 'smem constant byte address 0x4 - core index']
  #allocation1 [shape = 'u32[144,128]{1,0:T(1,128)}', space=vmem, size = 0x12000, scoped, tag = 'internal scratch']
  #allocation2 [shape = 'f32[16,128]{1,0:T(8,128)}', space=vmem, size = 0x2000, scoped, tag = 'scratch operand']
  %s0 = inlined_call_operand.vmem [shape: bf16[16,256], index: 0, kind: input, shape index: {}]
  %s1 = inlined_call_operand.vmem [shape: bf16[256,128], index: 1, kind: input, shape index: {}]
  %s2 = inlined_call_operand.vmem [shape: f32[1,128], index: 2, kind: input, shape index: {}]
  %s3 = inlined_call_operand.vmem [shape: bf16[16,128], index: 3, kind: output, shape index: {}]
  %s4 = sld [smem:[#allocation0]]
  $region30: #{fastspeech2_forward.136} parent=0
    _
  %s6 = ssub.s32 1, %s4
  %s7 = scalar_select 0, %s6, %s4
  // Predicated region
  $region2: #{fastspeech2_forward.136} parent=0 // pred_check
    _
  $region3: #{fastspeech2_forward.136} parent=0 // pred_check_branch
    %9 = sbr.rel (0) target = $region5
  $region4: #{fastspeech2_forward.136} parent=0 // pred_region
    _
  $region5: #{fastspeech2_forward.136} parent=0 // pred_fallthru
    _
  // Predicated region
  $region6: #{fastspeech2_forward.136} parent=0 // pred_check
    _
  $region7: #{fastspeech2_forward.136} parent=0 // pred_check_branch
    %11 = sbr.rel (0) target = $region9
  $region8: #{fastspeech2_forward.136} parent=0 // pred_region
    _
  $region9: #{fastspeech2_forward.136} parent=0 // pred_fallthru
    _
  // Predicated region
  $region10: #{fastspeech2_forward.136} parent=0 // pred_check
    _
  $region11: #{fastspeech2_forward.136} parent=0 // pred_check_branch
    %13 = sbr.rel (0) target = $region13
  $region12: #{fastspeech2_forward.136} parent=0 // pred_region
    _
  $region13: #{fastspeech2_forward.136} parent=0 // pred_fallthru
    _
  %p15 = scmp.eq.s32.totalorder 0, 0
  // Predicated region
  $region14: #{fastspeech2_forward.136} parent=0 // pred_check
    %p16 = pneg %p15
  $region15: #{fastspeech2_forward.136} parent=0 // pred_check_branch
    %18 = sbr.rel (%p16) target = $region17
  $region16: #{fastspeech2_forward.136} parent=0 // pred_region
    %19 = vst [vmem:[#allocation2] sm:$0xff] 0.0
    %20 = vst [vmem:[#allocation2 + $0x8] sm:$0xff] 0.0
  $region17: #{fastspeech2_forward.136} parent=0 // pred_fallthru
    _
  %v21 = vld [vmem:[#allocation2] sm:$0xff]
  %v22 = vld [vmem:[#allocation2 + $0x8] sm:$0xff]
  %v23 = vld [vmem:[%s0] sm:$0xff]
  %v24 = vld [vmem:[%s0 + $0x8] sm:$0xff]
  %v25 = vld [vmem:[%s1] sm:$0xf]
  %v26 = vld [vmem:[%s1 + $0x4] sm:$0xf]
  %v27 = vld [vmem:[%s1 + $0x8] sm:$0xf]
  %v28 = vld [vmem:[%s1 + $0xc] sm:$0xf]
  %v29 = vld [vmem:[%s1 + $0x10] sm:$0xf]
  %v30 = vld [vmem:[%s1 + $0x14] sm:$0xf]
  %v31 = vld [vmem:[%s1 + $0x18] sm:$0xf]
  %v32 = vld [vmem:[%s1 + $0x1c] sm:$0xf]
  %v33 = vld [vmem:[%s1 + $0x20] sm:$0xf]
  %v34 = vld [vmem:[%s1 + $0x24] sm:$0xf]
  %v35 = vld [vmem:[%s1 + $0x28] sm:$0xf]
  %v36 = vld [vmem:[%s1 + $0x2c] sm:$0xf]
  %v37 = vld [vmem:[%s1 + $0x30] sm:$0xf]
  %v38 = vld [vmem:[%s1 + $0x34] sm:$0xf]
  %v39 = vld [vmem:[%s1 + $0x38] sm:$0xf]
  %v40 = vld [vmem:[%s1 + $0x3c] sm:$0xf]
  %v41 = vld [vmem:[%s1 + $0x40] sm:$0xf]
  %v42 = vld [vmem:[%s1 + $0x44] sm:$0xf]
  %v43 = vld [vmem:[%s1 + $0x48] sm:$0xf]
  %v44 = vld [vmem:[%s1 + $0x4c] sm:$0xf]
  %v45 = vld [vmem:[%s1 + $0x50] sm:$0xf]
  %v46 = vld [vmem:[%s1 + $0x54] sm:$0xf]
  %v47 = vld [vmem:[%s1 + $0x58] sm:$0xf]
  %v48 = vld [vmem:[%s1 + $0x5c] sm:$0xf]
  %v49 = vld [vmem:[%s1 + $0x60] sm:$0xf]
  %v50 = vld [vmem:[%s1 + $0x64] sm:$0xf]
  %v51 = vld [vmem:[%s1 + $0x68] sm:$0xf]
  %v52 = vld [vmem:[%s1 + $0x6c] sm:$0xf]
  %v53 = vld [vmem:[%s1 + $0x70] sm:$0xf]
  %v54 = vld [vmem:[%s1 + $0x74] sm:$0xf]
  %v55 = vld [vmem:[%s1 + $0x78] sm:$0xf]
  %v56 = vld [vmem:[%s1 + $0x7c] sm:$0xf]
  %v59 = vunpack.c.l.b16 %v23
  %v60 = vunpack.c.h.b16 %v23
  %v61 = vunpack.c.l.b16 %v24
  %v62 = vunpack.c.h.b16 %v24
  %v63 = vpack.c.b16 %v61, %v59
  %v64 = vpack.c.b16 %v62, %v60
  %v99 = vunpack.c.l.b16 %v25
  %v100 = vunpack.c.l.b16 %v26
  %v101 = vunpack.c.l.b16 %v27
  %v102 = vunpack.c.l.b16 %v28
  %v103 = vunpack.c.l.b16 %v29
  %v104 = vunpack.c.l.b16 %v30
  %v105 = vunpack.c.l.b16 %v31
  %v106 = vunpack.c.l.b16 %v32
  %v107 = vunpack.c.l.b16 %v33
  %v108 = vunpack.c.l.b16 %v34
  %v109 = vunpack.c.l.b16 %v35
  %v110 = vunpack.c.l.b16 %v36
  %v111 = vunpack.c.l.b16 %v37
  %v112 = vunpack.c.l.b16 %v38
  %v113 = vunpack.c.l.b16 %v39
  %v114 = vunpack.c.l.b16 %v40
  %v115 = vunpack.c.l.b16 %v41
  %v116 = vunpack.c.l.b16 %v42
  %v117 = vunpack.c.l.b16 %v43
  %v118 = vunpack.c.l.b16 %v44
  %v119 = vunpack.c.l.b16 %v45
  %v120 = vunpack.c.l.b16 %v46
  %v121 = vunpack.c.l.b16 %v47
  %v122 = vunpack.c.l.b16 %v48
  %v123 = vunpack.c.l.b16 %v49
  %v124 = vunpack.c.l.b16 %v50
  %v125 = vunpack.c.l.b16 %v51
  %v126 = vunpack.c.l.b16 %v52
  %v127 = vunpack.c.l.b16 %v53
  %v128 = vunpack.c.l.b16 %v54
  %v129 = vunpack.c.l.b16 %v55
  %v130 = vunpack.c.l.b16 %v56
  %v131 = vpack.c.b16 %v100, %v99
  %v132 = vpack.c.b16 %v102, %v101
  %v133 = vpack.c.b16 %v104, %v103
  %v134 = vpack.c.b16 %v106, %v105
  %v135 = vpack.c.b16 %v108, %v107
  %v136 = vpack.c.b16 %v110, %v109
  %v137 = vpack.c.b16 %v112, %v111
  %v138 = vpack.c.b16 %v114, %v113
  %v139 = vpack.c.b16 %v116, %v115
  %v140 = vpack.c.b16 %v118, %v117
  %v141 = vpack.c.b16 %v120, %v119
  %v142 = vpack.c.b16 %v122, %v121
  %v143 = vpack.c.b16 %v124, %v123
  %v144 = vpack.c.b16 %v126, %v125
  %v145 = vpack.c.b16 %v128, %v127
  %v146 = vpack.c.b16 %v130, %v129
  %163 = vmatprep.subr.bf16.mxu0 0
  %164 = vmatpush1.bf16.msra.mxu0 %v131
  %165 = vmatprep.subr.bf16.mxu0 0
  %166 = vmatpush1.bf16.msra.mxu0 %v132
  %167 = vmatprep.subr.bf16.mxu0 0
  %168 = vmatpush1.bf16.msra.mxu0 %v133
  %169 = vmatprep.subr.bf16.mxu0 0
  %170 = vmatpush1.bf16.msra.mxu0 %v134
  %171 = vmatprep.subr.bf16.mxu0 0
  %172 = vmatpush1.bf16.msra.mxu0 %v135
  %173 = vmatprep.subr.bf16.mxu0 0
  %174 = vmatpush1.bf16.msra.mxu0 %v136
  %175 = vmatprep.subr.bf16.mxu0 0
  %176 = vmatpush1.bf16.msra.mxu0 %v137
  %177 = vmatprep.subr.bf16.mxu0 0
  %178 = vmatpush1.bf16.msra.mxu0 %v138
  %179 = vmatprep.subr.bf16.mxu0 0
  %180 = vmatpush1.bf16.msra.mxu0 %v139
  %181 = vmatprep.subr.bf16.mxu0 0
  %182 = vmatpush1.bf16.msra.mxu0 %v140
  %183 = vmatprep.subr.bf16.mxu0 0
  %184 = vmatpush1.bf16.msra.mxu0 %v141
  %185 = vmatprep.subr.bf16.mxu0 0
  %186 = vmatpush1.bf16.msra.mxu0 %v142
  %187 = vmatprep.subr.bf16.mxu0 0
  %188 = vmatpush1.bf16.msra.mxu0 %v143
  %189 = vmatprep.subr.bf16.mxu0 0
  %190 = vmatpush1.bf16.msra.mxu0 %v144
  %191 = vmatprep.subr.bf16.mxu0 0
  %192 = vmatpush1.bf16.msra.mxu0 %v145
  %193 = vmatprep.subr.bf16.mxu0 0
  %194 = vmatpush1.bf16.msra.mxu0 %v146
  %195 = vmatprep.mubr.bf16.mxu0 %v64
  %196 = vmatmul.mubr.bf16.gmra.mrb[0].mxu0 %v63
  %v197 = vpop.f32.mrb[0].mxu0
  %v198 = vadd.f32 0.0, %v197
  %v199 = vpop.f32.mrb[0].mxu0
  %v200 = vpop.f32.mrb[0].mxu0
  %v201 = vadd.f32 0.0, %v200
  %v202 = vpop.f32.mrb[0].mxu0
  %203 = vdwg.mxu0
  %v204 = vadd.f32 %v21, %v198
  %v205 = vadd.f32 %v22, %v201
  %206 = vst [vmem:[#allocation2] sm:$0xff] %v204
  %207 = vst [vmem:[#allocation2 + $0x8] sm:$0xff] %v205
  // Predicated region
  $region18: #{fastspeech2_forward.136} parent=0 // pred_check
    %p208 = pneg %p15
  $region19: #{fastspeech2_forward.136} parent=0 // pred_check_branch
    %210 = sbr.rel (%p208) target = $region21
  $region20: #{fastspeech2_forward.136} parent=0 // pred_region
    %v211 = vld [vmem:[#allocation2] sm:$0xff]
    %v212 = vld [vmem:[#allocation2 + $0x8] sm:$0xff]
    %v213 = vld [vmem:[%s2] sm:$0x1]
    %v215 = vlaneseq
    %v216 = vshrl.u32 %v215, 7
    %v217 = vsub.s32 0, %v216
    %v218 = vrot.slane %v213, %v217
    %v220 = vadd.f32 %v211, %v218
    %v221 = vadd.f32 %v212, %v218
    %v222 = vmax.f32 %v220, 0.0
    %v223 = vmax.f32 %v221, 0.0
    %v224 = vpack.c.bf16 %v223, %v222
    %v226 = vunpack.c.l.b16 %v224
    %v227 = vunpack.c.h.b16 %v224
    %v228 = vpack.c.b16 %v226, %v226
    %v229 = vpack.c.b16 %v227, %v227
    %232 = vst [vmem:[%s3] sm:$0xf] %v228
    %233 = vst [vmem:[%s3 + $0x4] sm:$0xf] %v229
  $region21: #{fastspeech2_forward.136} parent=0 // pred_fallthru
    _
  // Predicated region
  $region22: #{fastspeech2_forward.136} parent=0 // pred_check
    _
  $region23: #{fastspeech2_forward.136} parent=0 // pred_check_branch
    %235 = sbr.rel (0) target = $region25
  $region24: #{fastspeech2_forward.136} parent=0 // pred_region
    _
  $region25: #{fastspeech2_forward.136} parent=0 // pred_fallthru
    _
  // Predicated region
  $region26: #{fastspeech2_forward.136} parent=0 // pred_check
    _
  $region27: #{fastspeech2_forward.136} parent=0 // pred_check_branch
    %237 = sbr.rel (0) target = $region29
  $region28: #{fastspeech2_forward.136} parent=0 // pred_region
    _
  $region29: #{fastspeech2_forward.136} parent=0 // pred_fallthru
    _

// kernel: fastspeech2_forward.137
$region0: #{fastspeech2_forward.137}
  #allocation0 [shape = 'u32[]', space=smem, size = 0x4, offset = 0x4, fixed_abs, tag = 'smem constant byte address 0x4 - core index']
  #allocation1 [shape = 'u32[144,128]{1,0:T(1,128)}', space=vmem, size = 0x12000, scoped, tag = 'internal scratch']
  %s0 = inlined_call_operand.vmem [shape: bf16[16,32], index: 0, kind: input, shape index: {}]
  %s1 = inlined_call_operand.vmem [shape: f32[1,32], index: 1, kind: input, shape index: {}]
  %s2 = inlined_call_operand.vmem [shape: f32[1,32], index: 2, kind: input, shape index: {}]
  %s3 = inlined_call_operand.vmem [shape: bf16[16,32], index: 3, kind: output, shape index: {}]
  %s4 = sld [smem:[#allocation0]]
  $region22: #{fastspeech2_forward.137} parent=0
    _
  %s6 = ssub.s32 1, %s4
  %s7 = scalar_select 0, %s6, %s4
  // Predicated region
  $region2: #{fastspeech2_forward.137} parent=0 // pred_check
    _
  $region3: #{fastspeech2_forward.137} parent=0 // pred_check_branch
    %9 = sbr.rel (0) target = $region5
  $region4: #{fastspeech2_forward.137} parent=0 // pred_region
    _
  $region5: #{fastspeech2_forward.137} parent=0 // pred_fallthru
    _
  // Predicated region
  $region6: #{fastspeech2_forward.137} parent=0 // pred_check
    _
  $region7: #{fastspeech2_forward.137} parent=0 // pred_check_branch
    %11 = sbr.rel (0) target = $region9
  $region8: #{fastspeech2_forward.137} parent=0 // pred_region
    _
  $region9: #{fastspeech2_forward.137} parent=0 // pred_fallthru
    _
  // Predicated region
  $region10: #{fastspeech2_forward.137} parent=0 // pred_check
    _
  $region11: #{fastspeech2_forward.137} parent=0 // pred_check_branch
    %13 = sbr.rel (0) target = $region13
  $region12: #{fastspeech2_forward.137} parent=0 // pred_region
    _
  $region13: #{fastspeech2_forward.137} parent=0 // pred_fallthru
    _
  %v14 = vld [vmem:[%s0] sm:$0xf]
  %v15 = vld [vmem:[%s0 + $0x4] sm:$0xf]
  %v16 = vunpack.c.l.bf16 %v14
  %v17 = vunpack.c.l.bf16 %v15
  %vm18 = vcmask 261120
  %v19 = vsel %vm18, %v16, 0.0
  %20 = vadd.xlane.f32.xlu0 %v19
  %v21 = vpop.xlane.xlu0 %20
  %v22 = vsel %vm18, %v17, 0.0
  %23 = vadd.xlane.f32.xlu0 %v22
  %v24 = vpop.xlane.xlu0 %23
  %v25 = vrcp.pop 32.0
  %v26 = vmul.f32 %v21, %v25
  %v27 = vmul.f32 %v24, %v25
  %v28 = vsub.f32 %v16, %v26
  %v29 = vsub.f32 %v17, %v27
  %v30 = vmul.f32 %v28, %v28
  %v31 = vmul.f32 %v29, %v29
  %v32 = vsel %vm18, %v30, 0.0
  %33 = vadd.xlane.f32.xlu0 %v32
  %v34 = vpop.xlane.xlu0 %33
  %v35 = vsel %vm18, %v31, 0.0
  %36 = vadd.xlane.f32.xlu0 %v35
  %v37 = vpop.xlane.xlu0 %36
  %v38 = vmul.f32 %v34, %v25
  %v39 = vmul.f32 %v37, %v25
  %v40 = vadd.f32 %v38, 1e-05
  %v41 = vadd.f32 %v39, 1e-05
  %v42 = vrsqrt.pop %v40
  %v43 = vrsqrt.pop %v41
  %v44 = vmul.f32 %v28, %v42
  %v45 = vmul.f32 %v29, %v43
  %v46 = vld [vmem:[%s1] sm:$0x1]
  %v48 = vlaneseq
  %v49 = vshrl.u32 %v48, 7
  %v50 = vsub.s32 0, %v49
  %v51 = vrot.slane %v46, %v50
  %v53 = vmul.f32 %v44, %v51
  %v54 = vmul.f32 %v45, %v51
  %v55 = vld [vmem:[%s2] sm:$0x1]
  %v57 = vlaneseq
  %v58 = vshrl.u32 %v57, 7
  %v59 = vsub.s32 0, %v58
  %v60 = vrot.slane %v55, %v59
  %v62 = vadd.f32 %v53, %v60
  %v63 = vadd.f32 %v54, %v60
  %v64 = vpack.c.bf16 %v63, %v62
  %v66 = vunpack.c.l.b16 %v64
  %v67 = vunpack.c.h.b16 %v64
  %v68 = vpack.c.b16 %v66, %v66
  %v69 = vpack.c.b16 %v67, %v67
  %vm72 = vcmask 257024
  %73 = vst.msk [vmem:[%s3] sm:$0xf] %vm72, %v68
  %74 = vst.msk [vmem:[%s3 + $0x4] sm:$0xf] %vm72, %v69
  // Predicated region
  $region14: #{fastspeech2_forward.137} parent=0 // pred_check
    _
  $region15: #{fastspeech2_forward.137} parent=0 // pred_check_branch
    %76 = sbr.rel (0) target = $region17
  $region16: #{fastspeech2_forward.137} parent=0 // pred_region
    _
  $region17: #{fastspeech2_forward.137} parent=0 // pred_fallthru
    _
  // Predicated region
  $region18: #{fastspeech2_forward.137} parent=0 // pred_check
    _
  $region19: #{fastspeech2_forward.137} parent=0 // pred_check_branch
    %78 = sbr.rel (0) target = $region21
  $region20: #{fastspeech2_forward.137} parent=0 // pred_region
    _
  $region21: #{fastspeech2_forward.137} parent=0 // pred_fallthru
    _

// kernel: custom-call.4
$region0: #{custom-call.4}
  %s0 = inlined_call_operand.vmem [shape: u32[2,16], index: 0, kind: output, shape index: {}]

// kernel: squeeze.7
$region0: #{squeeze.7}
  %s0 = inlined_call_operand.vmem [shape: s32[32], index: 0, kind: input, shape index: {}]
  %s1 = inlined_call_operand.vmem [shape: s32[2,16], index: 1, kind: output, shape index: {}]
  $region1: #{squeeze.7} parent=0
    #allocation0 [shape = 'u8[4096]{0}', space=vmem, size = 0x1000, scoped, tag = 'scoped mem for output reshape']
    #allocation1 [shape = 'u8[4096]{0}', space=vmem, size = 0x1000, scoped, tag = 'scoped mem for input reshape']
    %s3 = sshllo.u32 0, 1
    %v4 = vld [vmem:[%s0] sm:%s3]
    %5 = vst [vmem:[#allocation1] sm:%s3] %v4
    %v6 = vld [vmem:[#allocation1] sm:$0x1]
    %vm7 = vcmask 130048
    %8 = vst.msk [vmem:[#allocation0] sm:$0x1] %vm7, %v6
    %v9 = vld [vmem:[#allocation1] sm:$0x1]
    %10 = vrot.lane.b32.xlu0 %v9, 112
    %v11 = vpop.permute.xlu0 %10
    %vm12 = vcmask 130048
    %s13 = scalar_lea.vmem [#allocation0], 1
    %14 = vst.msk [vmem:[%s13] sm:$0x1] %vm12, %v11
    %s16 = sshllo.u32 0, 2
    %v18 = vld [vmem:[#allocation0] sm:%s16]
    %s19 = sshllo.u32 0, 2
    %20 = vst [vmem:[%s1] sm:%s19] %v18

// kernel: fastspeech2_forward.151
$region0: #{fastspeech2_forward.151}
  #allocation0 [shape = 'u32[]', space=smem, size = 0x4, offset = 0x4, fixed_abs, tag = 'smem constant byte address 0x4 - core index']
  #allocation1 [shape = 'u32[144,128]{1,0:T(1,128)}', space=vmem, size = 0x12000, scoped, tag = 'internal scratch']
  %s0 = inlined_call_operand.vmem [shape: f32[32,32], index: 0, kind: input, shape index: {}]
  %s1 = inlined_call_operand.vmem [shape: f32[1,32], index: 1, kind: input, shape index: {}]
  %s2 = inlined_call_operand.vmem [shape: f32[1,32], index: 2, kind: input, shape index: {}]
  %s3 = inlined_call_operand.vmem [shape: bf16[32,32], index: 3, kind: output, shape index: {}]
  %s4 = sld [smem:[#allocation0]]
  $region22: #{fastspeech2_forward.151} parent=0
    _
  %s6 = ssub.s32 1, %s4
  %s7 = scalar_select 0, %s6, %s4
  // Predicated region
  $region2: #{fastspeech2_forward.151} parent=0 // pred_check
    _
  $region3: #{fastspeech2_forward.151} parent=0 // pred_check_branch
    %9 = sbr.rel (0) target = $region5
  $region4: #{fastspeech2_forward.151} parent=0 // pred_region
    _
  $region5: #{fastspeech2_forward.151} parent=0 // pred_fallthru
    _
  // Predicated region
  $region6: #{fastspeech2_forward.151} parent=0 // pred_check
    _
  $region7: #{fastspeech2_forward.151} parent=0 // pred_check_branch
    %11 = sbr.rel (0) target = $region9
  $region8: #{fastspeech2_forward.151} parent=0 // pred_region
    _
  $region9: #{fastspeech2_forward.151} parent=0 // pred_fallthru
    _
  // Predicated region
  $region10: #{fastspeech2_forward.151} parent=0 // pred_check
    _
  $region11: #{fastspeech2_forward.151} parent=0 // pred_check_branch
    %13 = sbr.rel (0) target = $region13
  $region12: #{fastspeech2_forward.151} parent=0 // pred_region
    _
  $region13: #{fastspeech2_forward.151} parent=0 // pred_fallthru
    _
  %v14 = vld [vmem:[%s0] sm:$0xff]
  %v15 = vld [vmem:[%s0 + $0x8] sm:$0xff]
  %v16 = vld [vmem:[%s0 + $0x10] sm:$0xff]
  %v17 = vld [vmem:[%s0 + $0x18] sm:$0xff]
  %vm18 = vcmask 261120
  %v19 = vsel %vm18, %v14, 0.0
  %20 = vadd.xlane.f32.xlu0 %v19
  %v21 = vpop.xlane.xlu0 %20
  %v22 = vsel %vm18, %v15, 0.0
  %23 = vadd.xlane.f32.xlu0 %v22
  %v24 = vpop.xlane.xlu0 %23
  %v25 = vsel %vm18, %v16, 0.0
  %26 = vadd.xlane.f32.xlu0 %v25
  %v27 = vpop.xlane.xlu0 %26
  %v28 = vsel %vm18, %v17, 0.0
  %29 = vadd.xlane.f32.xlu0 %v28
  %v30 = vpop.xlane.xlu0 %29
  %v31 = vrcp.pop 32.0
  %v32 = vmul.f32 %v21, %v31
  %v33 = vmul.f32 %v24, %v31
  %v34 = vmul.f32 %v27, %v31
  %v35 = vmul.f32 %v30, %v31
  %v36 = vsub.f32 %v14, %v32
  %v37 = vsub.f32 %v15, %v33
  %v38 = vsub.f32 %v16, %v34
  %v39 = vsub.f32 %v17, %v35
  %v40 = vmul.f32 %v36, %v36
  %v41 = vmul.f32 %v37, %v37
  %v42 = vmul.f32 %v38, %v38
  %v43 = vmul.f32 %v39, %v39
  %v44 = vsel %vm18, %v40, 0.0
  %45 = vadd.xlane.f32.xlu0 %v44
  %v46 = vpop.xlane.xlu0 %45
  %v47 = vsel %vm18, %v41, 0.0
  %48 = vadd.xlane.f32.xlu0 %v47
  %v49 = vpop.xlane.xlu0 %48
  %v50 = vsel %vm18, %v42, 0.0
  %51 = vadd.xlane.f32.xlu0 %v50
  %v52 = vpop.xlane.xlu0 %51
  %v53 = vsel %vm18, %v43, 0.0
  %54 = vadd.xlane.f32.xlu0 %v53
  %v55 = vpop.xlane.xlu0 %54
  %v56 = vmul.f32 %v46, %v31
  %v57 = vmul.f32 %v49, %v31
  %v58 = vmul.f32 %v52, %v31
  %v59 = vmul.f32 %v55, %v31
  %v60 = vadd.f32 %v56, 1e-05
  %v61 = vadd.f32 %v57, 1e-05
  %v62 = vadd.f32 %v58, 1e-05
  %v63 = vadd.f32 %v59, 1e-05
  %v64 = vrsqrt.pop %v60
  %v65 = vrsqrt.pop %v61
  %v66 = vrsqrt.pop %v62
  %v67 = vrsqrt.pop %v63
  %v68 = vmul.f32 %v36, %v64
  %v69 = vmul.f32 %v37, %v65
  %v70 = vmul.f32 %v38, %v66
  %v71 = vmul.f32 %v39, %v67
  %v72 = vld [vmem:[%s1] sm:$0x1]
  %v74 = vlaneseq
  %v75 = vshrl.u32 %v74, 7
  %v76 = vsub.s32 0, %v75
  %v77 = vrot.slane %v72, %v76
  %v79 = vmul.f32 %v68, %v77
  %v80 = vmul.f32 %v69, %v77
  %v81 = vmul.f32 %v70, %v77
  %v82 = vmul.f32 %v71, %v77
  %v83 = vld [vmem:[%s2] sm:$0x1]
  %v85 = vlaneseq
  %v86 = vshrl.u32 %v85, 7
  %v87 = vsub.s32 0, %v86
  %v88 = vrot.slane %v83, %v87
  %v90 = vadd.f32 %v79, %v88
  %v91 = vadd.f32 %v80, %v88
  %v92 = vadd.f32 %v81, %v88
  %v93 = vadd.f32 %v82, %v88
  %v94 = vpack.c.bf16 %v91, %v90
  %v95 = vpack.c.bf16 %v93, %v92
  %v98 = vunpack.c.l.b16 %v94
  %v99 = vunpack.c.h.b16 %v94
  %v100 = vunpack.c.l.b16 %v95
  %v101 = vunpack.c.h.b16 %v95
  %v102 = vpack.c.b16 %v98, %v98
  %v103 = vpack.c.b16 %v99, %v99
  %v104 = vpack.c.b16 %v100, %v100
  %v105 = vpack.c.b16 %v101, %v101
  %vm110 = vcmask 257024
  %111 = vst.msk [vmem:[%s3] sm:$0xf] %vm110, %v102
  %112 = vst.msk [vmem:[%s3 + $0x4] sm:$0xf] %vm110, %v103
  %113 = vst.msk [vmem:[%s3 + $0x8] sm:$0xf] %vm110, %v104
  %114 = vst.msk [vmem:[%s3 + $0xc] sm:$0xf] %vm110, %v105
  // Predicated region
  $region14: #{fastspeech2_forward.151} parent=0 // pred_check
    _
  $region15: #{fastspeech2_forward.151} parent=0 // pred_check_branch
    %116 = sbr.rel (0) target = $region17
  $region16: #{fastspeech2_forward.151} parent=0 // pred_region
    _
  $region17: #{fastspeech2_forward.151} parent=0 // pred_fallthru
    _
  // Predicated region
  $region18: #{fastspeech2_forward.151} parent=0 // pred_check
    _
  $region19: #{fastspeech2_forward.151} parent=0 // pred_check_branch
    %118 = sbr.rel (0) target = $region21
  $region20: #{fastspeech2_forward.151} parent=0 // pred_region
    _
  $region21: #{fastspeech2_forward.151} parent=0 // pred_fallthru
    _

// kernel: fastspeech2_forward.153
$region0: #{fastspeech2_forward.153}
  #allocation0 [shape = 'u32[]', space=smem, size = 0x4, offset = 0x4, fixed_abs, tag = 'smem constant byte address 0x4 - core index']
  #allocation1 [shape = 'u32[144,128]{1,0:T(1,128)}', space=vmem, size = 0x12000, scoped, tag = 'internal scratch']
  #allocation2 [shape = 'f32[32,128]{1,0:T(8,128)}', space=vmem, size = 0x4000, scoped, tag = 'scratch operand']
  %s0 = inlined_call_operand.vmem [shape: bf16[32,128], index: 0, kind: input, shape index: {}]
  %s1 = inlined_call_operand.vmem [shape: bf16[128,128], index: 1, kind: input, shape index: {}]
  %s2 = inlined_call_operand.vmem [shape: f32[1,128], index: 2, kind: input, shape index: {}]
  %s3 = inlined_call_operand.vmem [shape: bf16[32,128], index: 3, kind: output, shape index: {}]
  %s4 = sld [smem:[#allocation0]]
  $region30: #{fastspeech2_forward.153} parent=0
    _
  %s6 = ssub.s32 1, %s4
  %s7 = scalar_select 0, %s6, %s4
  // Predicated region
  $region2: #{fastspeech2_forward.153} parent=0 // pred_check
    _
  $region3: #{fastspeech2_forward.153} parent=0 // pred_check_branch
    %9 = sbr.rel (0) target = $region5
  $region4: #{fastspeech2_forward.153} parent=0 // pred_region
    _
  $region5: #{fastspeech2_forward.153} parent=0 // pred_fallthru
    _
  // Predicated region
  $region6: #{fastspeech2_forward.153} parent=0 // pred_check
    _
  $region7: #{fastspeech2_forward.153} parent=0 // pred_check_branch
    %11 = sbr.rel (0) target = $region9
  $region8: #{fastspeech2_forward.153} parent=0 // pred_region
    _
  $region9: #{fastspeech2_forward.153} parent=0 // pred_fallthru
    _
  // Predicated region
  $region10: #{fastspeech2_forward.153} parent=0 // pred_check
    _
  $region11: #{fastspeech2_forward.153} parent=0 // pred_check_branch
    %13 = sbr.rel (0) target = $region13
  $region12: #{fastspeech2_forward.153} parent=0 // pred_region
    _
  $region13: #{fastspeech2_forward.153} parent=0 // pred_fallthru
    _
  %p15 = scmp.eq.s32.totalorder 0, 0
  // Predicated region
  $region14: #{fastspeech2_forward.153} parent=0 // pred_check
    %p16 = pneg %p15
  $region15: #{fastspeech2_forward.153} parent=0 // pred_check_branch
    %18 = sbr.rel (%p16) target = $region17
  $region16: #{fastspeech2_forward.153} parent=0 // pred_region
    %19 = vst [vmem:[#allocation2] sm:$0xff] 0.0
    %20 = vst [vmem:[#allocation2 + $0x8] sm:$0xff] 0.0
    %21 = vst [vmem:[#allocation2 + $0x10] sm:$0xff] 0.0
    %22 = vst [vmem:[#allocation2 + $0x18] sm:$0xff] 0.0
  $region17: #{fastspeech2_forward.153} parent=0 // pred_fallthru
    _
  %v23 = vld [vmem:[#allocation2] sm:$0xff]
  %v24 = vld [vmem:[#allocation2 + $0x8] sm:$0xff]
  %v25 = vld [vmem:[#allocation2 + $0x10] sm:$0xff]
  %v26 = vld [vmem:[#allocation2 + $0x18] sm:$0xff]
  %v27 = vld [vmem:[%s0] sm:$0xf]
  %v28 = vld [vmem:[%s0 + $0x4] sm:$0xf]
  %v29 = vld [vmem:[%s0 + $0x8] sm:$0xf]
  %v30 = vld [vmem:[%s0 + $0xc] sm:$0xf]
  %v31 = vld [vmem:[%s1] sm:$0xf]
  %v32 = vld [vmem:[%s1 + $0x4] sm:$0xf]
  %v33 = vld [vmem:[%s1 + $0x8] sm:$0xf]
  %v34 = vld [vmem:[%s1 + $0xc] sm:$0xf]
  %v35 = vld [vmem:[%s1 + $0x10] sm:$0xf]
  %v36 = vld [vmem:[%s1 + $0x14] sm:$0xf]
  %v37 = vld [vmem:[%s1 + $0x18] sm:$0xf]
  %v38 = vld [vmem:[%s1 + $0x1c] sm:$0xf]
  %v39 = vld [vmem:[%s1 + $0x20] sm:$0xf]
  %v40 = vld [vmem:[%s1 + $0x24] sm:$0xf]
  %v41 = vld [vmem:[%s1 + $0x28] sm:$0xf]
  %v42 = vld [vmem:[%s1 + $0x2c] sm:$0xf]
  %v43 = vld [vmem:[%s1 + $0x30] sm:$0xf]
  %v44 = vld [vmem:[%s1 + $0x34] sm:$0xf]
  %v45 = vld [vmem:[%s1 + $0x38] sm:$0xf]
  %v46 = vld [vmem:[%s1 + $0x3c] sm:$0xf]
  %v51 = vunpack.c.l.b16 %v27
  %v52 = vunpack.c.l.b16 %v28
  %v53 = vunpack.c.l.b16 %v29
  %v54 = vunpack.c.l.b16 %v30
  %v55 = vpack.c.b16 %v52, %v51
  %v56 = vpack.c.b16 %v54, %v53
  %v75 = vunpack.c.l.b16 %v31
  %v76 = vunpack.c.l.b16 %v32
  %v77 = vunpack.c.l.b16 %v33
  %v78 = vunpack.c.l.b16 %v34
  %v79 = vunpack.c.l.b16 %v35
  %v80 = vunpack.c.l.b16 %v36
  %v81 = vunpack.c.l.b16 %v37
  %v82 = vunpack.c.l.b16 %v38
  %v83 = vunpack.c.l.b16 %v39
  %v84 = vunpack.c.l.b16 %v40
  %v85 = vunpack.c.l.b16 %v41
  %v86 = vunpack.c.l.b16 %v42
  %v87 = vunpack.c.l.b16 %v43
  %v88 = vunpack.c.l.b16 %v44
  %v89 = vunpack.c.l.b16 %v45
  %v90 = vunpack.c.l.b16 %v46
  %v91 = vpack.c.b16 %v76, %v75
  %v92 = vpack.c.b16 %v78, %v77
  %v93 = vpack.c.b16 %v80, %v79
  %v94 = vpack.c.b16 %v82, %v81
  %v95 = vpack.c.b16 %v84, %v83
  %v96 = vpack.c.b16 %v86, %v85
  %v97 = vpack.c.b16 %v88, %v87
  %v98 = vpack.c.b16 %v90, %v89
  %107 = vmatprep.subr.bf16.mxu0 0
  %108 = vmatpush1.bf16.msra.mxu0 %v91
  %109 = vmatprep.subr.bf16.mxu0 0
  %110 = vmatpush1.bf16.msra.mxu0 %v92
  %111 = vmatprep.subr.bf16.mxu0 0
  %112 = vmatpush1.bf16.msra.mxu0 %v93
  %113 = vmatprep.subr.bf16.mxu0 0
  %114 = vmatpush1.bf16.msra.mxu0 %v94
  %115 = vmatprep.subr.bf16.mxu0 0
  %116 = vmatpush1.bf16.msra.mxu0 %v95
  %117 = vmatprep.subr.bf16.mxu0 0
  %118 = vmatpush1.bf16.msra.mxu0 %v96
  %119 = vmatprep.subr.bf16.mxu0 0
  %120 = vmatpush1.bf16.msra.mxu0 %v97
  %121 = vmatprep.subr.bf16.mxu0 0
  %122 = vmatpush1.bf16.msra.mxu0 %v98
  %123 = vmatprep.subr.bf16.mxu0 0
  %124 = vmatpush1.bf16.msra.mxu0 0
  %125 = vmatprep.subr.bf16.mxu0 0
  %126 = vmatpush1.bf16.msra.mxu0 0
  %127 = vmatprep.subr.bf16.mxu0 0
  %128 = vmatpush1.bf16.msra.mxu0 0
  %129 = vmatprep.subr.bf16.mxu0 0
  %130 = vmatpush1.bf16.msra.mxu0 0
  %131 = vmatprep.subr.bf16.mxu0 0
  %132 = vmatpush1.bf16.msra.mxu0 0
  %133 = vmatprep.subr.bf16.mxu0 0
  %134 = vmatpush1.bf16.msra.mxu0 0
  %135 = vmatprep.subr.bf16.mxu0 0
  %136 = vmatpush1.bf16.msra.mxu0 0
  %137 = vmatprep.subr.bf16.mxu0 0
  %138 = vmatpush1.bf16.msra.mxu0 0
  %139 = vmatprep.mubr.bf16.mxu0 0
  %140 = vmatmul.mubr.bf16.gmra.mrb[0].mxu0 %v55
  %v141 = vpop.f32.mrb[0].mxu0
  %v142 = vadd.f32 0.0, %v141
  %v143 = vpop.f32.mrb[0].mxu0
  %v144 = vpop.f32.mrb[0].mxu0
  %v145 = vadd.f32 0.0, %v144
  %v146 = vpop.f32.mrb[0].mxu0
  %147 = vmatprep.mubr.bf16.mxu0 0
  %148 = vmatmul.mubr.bf16.gmra.mrb[0].mxu0 %v56
  %v149 = vpop.f32.mrb[0].mxu0
  %v150 = vadd.f32 0.0, %v149
  %v151 = vpop.f32.mrb[0].mxu0
  %v152 = vpop.f32.mrb[0].mxu0
  %v153 = vadd.f32 0.0, %v152
  %v154 = vpop.f32.mrb[0].mxu0
  %155 = vdwg.mxu0
  %v156 = vadd.f32 %v23, %v142
  %v157 = vadd.f32 %v24, %v145
  %v158 = vadd.f32 %v25, %v150
  %v159 = vadd.f32 %v26, %v153
  %160 = vst [vmem:[#allocation2] sm:$0xff] %v156
  %161 = vst [vmem:[#allocation2 + $0x8] sm:$0xff] %v157
  %162 = vst [vmem:[#allocation2 + $0x10] sm:$0xff] %v158
  %163 = vst [vmem:[#allocation2 + $0x18] sm:$0xff] %v159
  // Predicated region
  $region18: #{fastspeech2_forward.153} parent=0 // pred_check
    %p164 = pneg %p15
  $region19: #{fastspeech2_forward.153} parent=0 // pred_check_branch
    %166 = sbr.rel (%p164) target = $region21
  $region20: #{fastspeech2_forward.153} parent=0 // pred_region
    %v167 = vld [vmem:[#allocation2] sm:$0xff]
    %v168 = vld [vmem:[#allocation2 + $0x8] sm:$0xff]
    %v169 = vld [vmem:[#allocation2 + $0x10] sm:$0xff]
    %v170 = vld [vmem:[#allocation2 + $0x18] sm:$0xff]
    %v171 = vld [vmem:[%s2] sm:$0x1]
    %v173 = vlaneseq
    %v174 = vshrl.u32 %v173, 7
    %v175 = vsub.s32 0, %v174
    %v176 = vrot.slane %v171, %v175
    %v178 = vadd.f32 %v167, %v176
    %v179 = vadd.f32 %v168, %v176
    %v180 = vadd.f32 %v169, %v176
    %v181 = vadd.f32 %v170, %v176
    %v182 = vpack.c.bf16 %v179, %v178
    %v183 = vpack.c.bf16 %v181, %v180
    %v186 = vunpack.c.l.b16 %v182
    %v187 = vunpack.c.h.b16 %v182
    %v188 = vunpack.c.l.b16 %v183
    %v189 = vunpack.c.h.b16 %v183
    %v190 = vpack.c.b16 %v186, %v186
    %v191 = vpack.c.b16 %v187, %v187
    %v192 = vpack.c.b16 %v188, %v188
    %v193 = vpack.c.b16 %v189, %v189
    %198 = vst [vmem:[%s3] sm:$0xf] %v190
    %199 = vst [vmem:[%s3 + $0x4] sm:$0xf] %v191
    %200 = vst [vmem:[%s3 + $0x8] sm:$0xf] %v192
    %201 = vst [vmem:[%s3 + $0xc] sm:$0xf] %v193
  $region21: #{fastspeech2_forward.153} parent=0 // pred_fallthru
    _
  // Predicated region
  $region22: #{fastspeech2_forward.153} parent=0 // pred_check
    _
  $region23: #{fastspeech2_forward.153} parent=0 // pred_check_branch
    %203 = sbr.rel (0) target = $region25
  $region24: #{fastspeech2_forward.153} parent=0 // pred_region
    _
  $region25: #{fastspeech2_forward.153} parent=0 // pred_fallthru
    _
  // Predicated region
  $region26: #{fastspeech2_forward.153} parent=0 // pred_check
    _
  $region27: #{fastspeech2_forward.153} parent=0 // pred_check_branch
    %205 = sbr.rel (0) target = $region29
  $region28: #{fastspeech2_forward.153} parent=0 // pred_region
    _
  $region29: #{fastspeech2_forward.153} parent=0 // pred_fallthru
    _

// kernel: fastspeech2_forward.152
$region0: #{fastspeech2_forward.152}
  #allocation0 [shape = 'u32[]', space=smem, size = 0x4, offset = 0x4, fixed_abs, tag = 'smem constant byte address 0x4 - core index']
  #allocation1 [shape = 'u32[144,128]{1,0:T(1,128)}', space=vmem, size = 0x12000, scoped, tag = 'internal scratch']
  #allocation2 [shape = 'f32[32,128]{1,0:T(8,128)}', space=vmem, size = 0x4000, scoped, tag = 'scratch operand']
  %s0 = inlined_call_operand.vmem [shape: bf16[32,128], index: 0, kind: input, shape index: {}]
  %s1 = inlined_call_operand.vmem [shape: bf16[128,128], index: 1, kind: input, shape index: {}]
  %s2 = inlined_call_operand.vmem [shape: f32[1,128], index: 2, kind: input, shape index: {}]
  %s3 = inlined_call_operand.vmem [shape: bf16[32,128], index: 3, kind: output, shape index: {}]
  %s4 = sld [smem:[#allocation0]]
  $region30: #{fastspeech2_forward.152} parent=0
    _
  %s6 = ssub.s32 1, %s4
  %s7 = scalar_select 0, %s6, %s4
  // Predicated region
  $region2: #{fastspeech2_forward.152} parent=0 // pred_check
    _
  $region3: #{fastspeech2_forward.152} parent=0 // pred_check_branch
    %9 = sbr.rel (0) target = $region5
  $region4: #{fastspeech2_forward.152} parent=0 // pred_region
    _
  $region5: #{fastspeech2_forward.152} parent=0 // pred_fallthru
    _
  // Predicated region
  $region6: #{fastspeech2_forward.152} parent=0 // pred_check
    _
  $region7: #{fastspeech2_forward.152} parent=0 // pred_check_branch
    %11 = sbr.rel (0) target = $region9
  $region8: #{fastspeech2_forward.152} parent=0 // pred_region
    _
  $region9: #{fastspeech2_forward.152} parent=0 // pred_fallthru
    _
  // Predicated region
  $region10: #{fastspeech2_forward.152} parent=0 // pred_check
    _
  $region11: #{fastspeech2_forward.152} parent=0 // pred_check_branch
    %13 = sbr.rel (0) target = $region13
  $region12: #{fastspeech2_forward.152} parent=0 // pred_region
    _
  $region13: #{fastspeech2_forward.152} parent=0 // pred_fallthru
    _
  %p15 = scmp.eq.s32.totalorder 0, 0
  // Predicated region
  $region14: #{fastspeech2_forward.152} parent=0 // pred_check
    %p16 = pneg %p15
  $region15: #{fastspeech2_forward.152} parent=0 // pred_check_branch
    %18 = sbr.rel (%p16) target = $region17
  $region16: #{fastspeech2_forward.152} parent=0 // pred_region
    %19 = vst [vmem:[#allocation2] sm:$0xff] 0.0
    %20 = vst [vmem:[#allocation2 + $0x8] sm:$0xff] 0.0
    %21 = vst [vmem:[#allocation2 + $0x10] sm:$0xff] 0.0
    %22 = vst [vmem:[#allocation2 + $0x18] sm:$0xff] 0.0
  $region17: #{fastspeech2_forward.152} parent=0 // pred_fallthru
    _
  %v23 = vld [vmem:[#allocation2] sm:$0xff]
  %v24 = vld [vmem:[#allocation2 + $0x8] sm:$0xff]
  %v25 = vld [vmem:[#allocation2 + $0x10] sm:$0xff]
  %v26 = vld [vmem:[#allocation2 + $0x18] sm:$0xff]
  %v27 = vld [vmem:[%s0] sm:$0xf]
  %v28 = vld [vmem:[%s0 + $0x4] sm:$0xf]
  %v29 = vld [vmem:[%s0 + $0x8] sm:$0xf]
  %v30 = vld [vmem:[%s0 + $0xc] sm:$0xf]
  %v31 = vld [vmem:[%s1] sm:$0xf]
  %v32 = vld [vmem:[%s1 + $0x4] sm:$0xf]
  %v33 = vld [vmem:[%s1 + $0x8] sm:$0xf]
  %v34 = vld [vmem:[%s1 + $0xc] sm:$0xf]
  %v35 = vld [vmem:[%s1 + $0x10] sm:$0xf]
  %v36 = vld [vmem:[%s1 + $0x14] sm:$0xf]
  %v37 = vld [vmem:[%s1 + $0x18] sm:$0xf]
  %v38 = vld [vmem:[%s1 + $0x1c] sm:$0xf]
  %v39 = vld [vmem:[%s1 + $0x20] sm:$0xf]
  %v40 = vld [vmem:[%s1 + $0x24] sm:$0xf]
  %v41 = vld [vmem:[%s1 + $0x28] sm:$0xf]
  %v42 = vld [vmem:[%s1 + $0x2c] sm:$0xf]
  %v43 = vld [vmem:[%s1 + $0x30] sm:$0xf]
  %v44 = vld [vmem:[%s1 + $0x34] sm:$0xf]
  %v45 = vld [vmem:[%s1 + $0x38] sm:$0xf]
  %v46 = vld [vmem:[%s1 + $0x3c] sm:$0xf]
  %v51 = vunpack.c.l.b16 %v27
  %v52 = vunpack.c.l.b16 %v28
  %v53 = vunpack.c.l.b16 %v29
  %v54 = vunpack.c.l.b16 %v30
  %v55 = vpack.c.b16 %v52, %v51
  %v56 = vpack.c.b16 %v54, %v53
  %v75 = vunpack.c.l.b16 %v31
  %v76 = vunpack.c.l.b16 %v32
  %v77 = vunpack.c.l.b16 %v33
  %v78 = vunpack.c.l.b16 %v34
  %v79 = vunpack.c.l.b16 %v35
  %v80 = vunpack.c.l.b16 %v36
  %v81 = vunpack.c.l.b16 %v37
  %v82 = vunpack.c.l.b16 %v38
  %v83 = vunpack.c.l.b16 %v39
  %v84 = vunpack.c.l.b16 %v40
  %v85 = vunpack.c.l.b16 %v41
  %v86 = vunpack.c.l.b16 %v42
  %v87 = vunpack.c.l.b16 %v43
  %v88 = vunpack.c.l.b16 %v44
  %v89 = vunpack.c.l.b16 %v45
  %v90 = vunpack.c.l.b16 %v46
  %v91 = vpack.c.b16 %v76, %v75
  %v92 = vpack.c.b16 %v78, %v77
  %v93 = vpack.c.b16 %v80, %v79
  %v94 = vpack.c.b16 %v82, %v81
  %v95 = vpack.c.b16 %v84, %v83
  %v96 = vpack.c.b16 %v86, %v85
  %v97 = vpack.c.b16 %v88, %v87
  %v98 = vpack.c.b16 %v90, %v89
  %107 = vmatprep.subr.bf16.mxu0 0
  %108 = vmatpush1.bf16.msra.mxu0 %v91
  %109 = vmatprep.subr.bf16.mxu0 0
  %110 = vmatpush1.bf16.msra.mxu0 %v92
  %111 = vmatprep.subr.bf16.mxu0 0
  %112 = vmatpush1.bf16.msra.mxu0 %v93
  %113 = vmatprep.subr.bf16.mxu0 0
  %114 = vmatpush1.bf16.msra.mxu0 %v94
  %115 = vmatprep.subr.bf16.mxu0 0
  %116 = vmatpush1.bf16.msra.mxu0 %v95
  %117 = vmatprep.subr.bf16.mxu0 0
  %118 = vmatpush1.bf16.msra.mxu0 %v96
  %119 = vmatprep.subr.bf16.mxu0 0
  %120 = vmatpush1.bf16.msra.mxu0 %v97
  %121 = vmatprep.subr.bf16.mxu0 0
  %122 = vmatpush1.bf16.msra.mxu0 %v98
  %123 = vmatprep.subr.bf16.mxu0 0
  %124 = vmatpush1.bf16.msra.mxu0 0
  %125 = vmatprep.subr.bf16.mxu0 0
  %126 = vmatpush1.bf16.msra.mxu0 0
  %127 = vmatprep.subr.bf16.mxu0 0
  %128 = vmatpush1.bf16.msra.mxu0 0
  %129 = vmatprep.subr.bf16.mxu0 0
  %130 = vmatpush1.bf16.msra.mxu0 0
  %131 = vmatprep.subr.bf16.mxu0 0
  %132 = vmatpush1.bf16.msra.mxu0 0
  %133 = vmatprep.subr.bf16.mxu0 0
  %134 = vmatpush1.bf16.msra.mxu0 0
  %135 = vmatprep.subr.bf16.mxu0 0
  %136 = vmatpush1.bf16.msra.mxu0 0
  %137 = vmatprep.subr.bf16.mxu0 0
  %138 = vmatpush1.bf16.msra.mxu0 0
  %139 = vmatprep.mubr.bf16.mxu0 0
  %140 = vmatmul.mubr.bf16.gmra.mrb[0].mxu0 %v55
  %v141 = vpop.f32.mrb[0].mxu0
  %v142 = vadd.f32 0.0, %v141
  %v143 = vpop.f32.mrb[0].mxu0
  %v144 = vpop.f32.mrb[0].mxu0
  %v145 = vadd.f32 0.0, %v144
  %v146 = vpop.f32.mrb[0].mxu0
  %147 = vmatprep.mubr.bf16.mxu0 0
  %148 = vmatmul.mubr.bf16.gmra.mrb[0].mxu0 %v56
  %v149 = vpop.f32.mrb[0].mxu0
  %v150 = vadd.f32 0.0, %v149
  %v151 = vpop.f32.mrb[0].mxu0
  %v152 = vpop.f32.mrb[0].mxu0
  %v153 = vadd.f32 0.0, %v152
  %v154 = vpop.f32.mrb[0].mxu0
  %155 = vdwg.mxu0
  %v156 = vadd.f32 %v23, %v142
  %v157 = vadd.f32 %v24, %v145
  %v158 = vadd.f32 %v25, %v150
  %v159 = vadd.f32 %v26, %v153
  %160 = vst [vmem:[#allocation2] sm:$0xff] %v156
  %161 = vst [vmem:[#allocation2 + $0x8] sm:$0xff] %v157
  %162 = vst [vmem:[#allocation2 + $0x10] sm:$0xff] %v158
  %163 = vst [vmem:[#allocation2 + $0x18] sm:$0xff] %v159
  // Predicated region
  $region18: #{fastspeech2_forward.152} parent=0 // pred_check
    %p164 = pneg %p15
  $region19: #{fastspeech2_forward.152} parent=0 // pred_check_branch
    %166 = sbr.rel (%p164) target = $region21
  $region20: #{fastspeech2_forward.152} parent=0 // pred_region
    %v167 = vld [vmem:[#allocation2] sm:$0xff]
    %v168 = vld [vmem:[#allocation2 + $0x8] sm:$0xff]
    %v169 = vld [vmem:[#allocation2 + $0x10] sm:$0xff]
    %v170 = vld [vmem:[#allocation2 + $0x18] sm:$0xff]
    %v171 = vld [vmem:[%s2] sm:$0x1]
    %v173 = vlaneseq
    %v174 = vshrl.u32 %v173, 7
    %v175 = vsub.s32 0, %v174
    %v176 = vrot.slane %v171, %v175
    %v178 = vadd.f32 %v167, %v176
    %v179 = vadd.f32 %v168, %v176
    %v180 = vadd.f32 %v169, %v176
    %v181 = vadd.f32 %v170, %v176
    %v182 = vmax.f32 %v178, 0.0
    %v183 = vmax.f32 %v179, 0.0
    %v184 = vmax.f32 %v180, 0.0
    %v185 = vmax.f32 %v181, 0.0
    %v186 = vpack.c.bf16 %v183, %v182
    %v187 = vpack.c.bf16 %v185, %v184
    %v190 = vunpack.c.l.b16 %v186
    %v191 = vunpack.c.h.b16 %v186
    %v192 = vunpack.c.l.b16 %v187
    %v193 = vunpack.c.h.b16 %v187
    %v194 = vpack.c.b16 %v190, %v190
    %v195 = vpack.c.b16 %v191, %v191
    %v196 = vpack.c.b16 %v192, %v192
    %v197 = vpack.c.b16 %v193, %v193
    %202 = vst [vmem:[%s3] sm:$0xf] %v194
    %203 = vst [vmem:[%s3 + $0x4] sm:$0xf] %v195
    %204 = vst [vmem:[%s3 + $0x8] sm:$0xf] %v196
    %205 = vst [vmem:[%s3 + $0xc] sm:$0xf] %v197
  $region21: #{fastspeech2_forward.152} parent=0 // pred_fallthru
    _
  // Predicated region
  $region22: #{fastspeech2_forward.152} parent=0 // pred_check
    _
  $region23: #{fastspeech2_forward.152} parent=0 // pred_check_branch
    %207 = sbr.rel (0) target = $region25
  $region24: #{fastspeech2_forward.152} parent=0 // pred_region
    _
  $region25: #{fastspeech2_forward.152} parent=0 // pred_fallthru
    _
  // Predicated region
  $region26: #{fastspeech2_forward.152} parent=0 // pred_check
    _
  $region27: #{fastspeech2_forward.152} parent=0 // pred_check_branch
    %209 = sbr.rel (0) target = $region29
  $region28: #{fastspeech2_forward.152} parent=0 // pred_region
    _
  $region29: #{fastspeech2_forward.152} parent=0 // pred_fallthru
    _

// kernel: fastspeech2_forward.158
$region0: #{fastspeech2_forward.158}
  #allocation0 [shape = 'u32[]', space=smem, size = 0x4, offset = 0x4, fixed_abs, tag = 'smem constant byte address 0x4 - core index']
  #allocation1 [shape = 'u32[144,128]{1,0:T(1,128)}', space=vmem, size = 0x12000, scoped, tag = 'internal scratch']
  #allocation2 [shape = 'f32[32,128]{1,0:T(8,128)}', space=vmem, size = 0x4000, scoped, tag = 'scratch operand']
  %s0 = inlined_call_operand.vmem [shape: bf16[32,128], index: 0, kind: input, shape index: {}]
  %s1 = inlined_call_operand.vmem [shape: bf16[128,128], index: 1, kind: input, shape index: {}]
  %s2 = inlined_call_operand.vmem [shape: bf16[32,128], index: 2, kind: output, shape index: {}]
  %s3 = sld [smem:[#allocation0]]
  $region26: #{fastspeech2_forward.158} parent=0
    _
  %s5 = ssub.s32 1, %s3
  %s6 = scalar_select 0, %s5, %s3
  // Predicated region
  $region2: #{fastspeech2_forward.158} parent=0 // pred_check
    _
  $region3: #{fastspeech2_forward.158} parent=0 // pred_check_branch
    %8 = sbr.rel (0) target = $region5
  $region4: #{fastspeech2_forward.158} parent=0 // pred_region
    _
  $region5: #{fastspeech2_forward.158} parent=0 // pred_fallthru
    _
  // Predicated region
  $region6: #{fastspeech2_forward.158} parent=0 // pred_check
    _
  $region7: #{fastspeech2_forward.158} parent=0 // pred_check_branch
    %10 = sbr.rel (0) target = $region9
  $region8: #{fastspeech2_forward.158} parent=0 // pred_region
    _
  $region9: #{fastspeech2_forward.158} parent=0 // pred_fallthru
    _
  %p12 = scmp.eq.s32.totalorder 0, 0
  // Predicated region
  $region10: #{fastspeech2_forward.158} parent=0 // pred_check
    %p13 = pneg %p12
  $region11: #{fastspeech2_forward.158} parent=0 // pred_check_branch
    %15 = sbr.rel (%p13) target = $region13
  $region12: #{fastspeech2_forward.158} parent=0 // pred_region
    %16 = vst [vmem:[#allocation2] sm:$0xff] 0.0
    %17 = vst [vmem:[#allocation2 + $0x8] sm:$0xff] 0.0
    %18 = vst [vmem:[#allocation2 + $0x10] sm:$0xff] 0.0
    %19 = vst [vmem:[#allocation2 + $0x18] sm:$0xff] 0.0
  $region13: #{fastspeech2_forward.158} parent=0 // pred_fallthru
    _
  %v20 = vld [vmem:[#allocation2] sm:$0xff]
  %v21 = vld [vmem:[#allocation2 + $0x8] sm:$0xff]
  %v22 = vld [vmem:[#allocation2 + $0x10] sm:$0xff]
  %v23 = vld [vmem:[#allocation2 + $0x18] sm:$0xff]
  %v24 = vld [vmem:[%s0] sm:$0xf]
  %v25 = vld [vmem:[%s0 + $0x4] sm:$0xf]
  %v26 = vld [vmem:[%s0 + $0x8] sm:$0xf]
  %v27 = vld [vmem:[%s0 + $0xc] sm:$0xf]
  %v28 = vld [vmem:[%s1] sm:$0xf]
  %v29 = vld [vmem:[%s1 + $0x4] sm:$0xf]
  %v30 = vld [vmem:[%s1 + $0x8] sm:$0xf]
  %v31 = vld [vmem:[%s1 + $0xc] sm:$0xf]
  %v32 = vld [vmem:[%s1 + $0x10] sm:$0xf]
  %v33 = vld [vmem:[%s1 + $0x14] sm:$0xf]
  %v34 = vld [vmem:[%s1 + $0x18] sm:$0xf]
  %v35 = vld [vmem:[%s1 + $0x1c] sm:$0xf]
  %v36 = vld [vmem:[%s1 + $0x20] sm:$0xf]
  %v37 = vld [vmem:[%s1 + $0x24] sm:$0xf]
  %v38 = vld [vmem:[%s1 + $0x28] sm:$0xf]
  %v39 = vld [vmem:[%s1 + $0x2c] sm:$0xf]
  %v40 = vld [vmem:[%s1 + $0x30] sm:$0xf]
  %v41 = vld [vmem:[%s1 + $0x34] sm:$0xf]
  %v42 = vld [vmem:[%s1 + $0x38] sm:$0xf]
  %v43 = vld [vmem:[%s1 + $0x3c] sm:$0xf]
  %v48 = vunpack.c.l.b16 %v24
  %v49 = vunpack.c.l.b16 %v25
  %v50 = vunpack.c.l.b16 %v26
  %v51 = vunpack.c.l.b16 %v27
  %v52 = vpack.c.b16 %v49, %v48
  %v53 = vpack.c.b16 %v51, %v50
  %v72 = vunpack.c.l.b16 %v28
  %v73 = vunpack.c.l.b16 %v29
  %v74 = vunpack.c.l.b16 %v30
  %v75 = vunpack.c.l.b16 %v31
  %v76 = vunpack.c.l.b16 %v32
  %v77 = vunpack.c.l.b16 %v33
  %v78 = vunpack.c.l.b16 %v34
  %v79 = vunpack.c.l.b16 %v35
  %v80 = vunpack.c.l.b16 %v36
  %v81 = vunpack.c.l.b16 %v37
  %v82 = vunpack.c.l.b16 %v38
  %v83 = vunpack.c.l.b16 %v39
  %v84 = vunpack.c.l.b16 %v40
  %v85 = vunpack.c.l.b16 %v41
  %v86 = vunpack.c.l.b16 %v42
  %v87 = vunpack.c.l.b16 %v43
  %v88 = vpack.c.b16 %v73, %v72
  %v89 = vpack.c.b16 %v75, %v74
  %v90 = vpack.c.b16 %v77, %v76
  %v91 = vpack.c.b16 %v79, %v78
  %v92 = vpack.c.b16 %v81, %v80
  %v93 = vpack.c.b16 %v83, %v82
  %v94 = vpack.c.b16 %v85, %v84
  %v95 = vpack.c.b16 %v87, %v86
  %104 = vmatprep.subr.bf16.mxu0 0
  %105 = vmatpush1.bf16.msra.mxu0 %v88
  %106 = vmatprep.subr.bf16.mxu0 0
  %107 = vmatpush1.bf16.msra.mxu0 %v89
  %108 = vmatprep.subr.bf16.mxu0 0
  %109 = vmatpush1.bf16.msra.mxu0 %v90
  %110 = vmatprep.subr.bf16.mxu0 0
  %111 = vmatpush1.bf16.msra.mxu0 %v91
  %112 = vmatprep.subr.bf16.mxu0 0
  %113 = vmatpush1.bf16.msra.mxu0 %v92
  %114 = vmatprep.subr.bf16.mxu0 0
  %115 = vmatpush1.bf16.msra.mxu0 %v93
  %116 = vmatprep.subr.bf16.mxu0 0
  %117 = vmatpush1.bf16.msra.mxu0 %v94
  %118 = vmatprep.subr.bf16.mxu0 0
  %119 = vmatpush1.bf16.msra.mxu0 %v95
  %120 = vmatprep.subr.bf16.mxu0 0
  %121 = vmatpush1.bf16.msra.mxu0 0
  %122 = vmatprep.subr.bf16.mxu0 0
  %123 = vmatpush1.bf16.msra.mxu0 0
  %124 = vmatprep.subr.bf16.mxu0 0
  %125 = vmatpush1.bf16.msra.mxu0 0
  %126 = vmatprep.subr.bf16.mxu0 0
  %127 = vmatpush1.bf16.msra.mxu0 0
  %128 = vmatprep.subr.bf16.mxu0 0
  %129 = vmatpush1.bf16.msra.mxu0 0
  %130 = vmatprep.subr.bf16.mxu0 0
  %131 = vmatpush1.bf16.msra.mxu0 0
  %132 = vmatprep.subr.bf16.mxu0 0
  %133 = vmatpush1.bf16.msra.mxu0 0
  %134 = vmatprep.subr.bf16.mxu0 0
  %135 = vmatpush1.bf16.msra.mxu0 0
  %136 = vmatprep.mubr.bf16.mxu0 0
  %137 = vmatmul.mubr.bf16.gmra.mrb[0].mxu0 %v52
  %v138 = vpop.f32.mrb[0].mxu0
  %v139 = vadd.f32 0.0, %v138
  %v140 = vpop.f32.mrb[0].mxu0
  %v141 = vpop.f32.mrb[0].mxu0
  %v142 = vadd.f32 0.0, %v141
  %v143 = vpop.f32.mrb[0].mxu0
  %144 = vmatprep.mubr.bf16.mxu0 0
  %145 = vmatmul.mubr.bf16.gmra.mrb[0].mxu0 %v53
  %v146 = vpop.f32.mrb[0].mxu0
  %v147 = vadd.f32 0.0, %v146
  %v148 = vpop.f32.mrb[0].mxu0
  %v149 = vpop.f32.mrb[0].mxu0
  %v150 = vadd.f32 0.0, %v149
  %v151 = vpop.f32.mrb[0].mxu0
  %152 = vdwg.mxu0
  %v153 = vadd.f32 %v20, %v139
  %v154 = vadd.f32 %v21, %v142
  %v155 = vadd.f32 %v22, %v147
  %v156 = vadd.f32 %v23, %v150
  %157 = vst [vmem:[#allocation2] sm:$0xff] %v153
  %158 = vst [vmem:[#allocation2 + $0x8] sm:$0xff] %v154
  %159 = vst [vmem:[#allocation2 + $0x10] sm:$0xff] %v155
  %160 = vst [vmem:[#allocation2 + $0x18] sm:$0xff] %v156
  // Predicated region
  $region14: #{fastspeech2_forward.158} parent=0 // pred_check
    %p161 = pneg %p12
  $region15: #{fastspeech2_forward.158} parent=0 // pred_check_branch
    %163 = sbr.rel (%p161) target = $region17
  $region16: #{fastspeech2_forward.158} parent=0 // pred_region
    %v164 = vld [vmem:[#allocation2] sm:$0xff]
    %v165 = vld [vmem:[#allocation2 + $0x8] sm:$0xff]
    %v166 = vld [vmem:[#allocation2 + $0x10] sm:$0xff]
    %v167 = vld [vmem:[#allocation2 + $0x18] sm:$0xff]
    %v168 = vpack.c.bf16 %v165, %v164
    %v169 = vpack.c.bf16 %v167, %v166
    %v172 = vunpack.c.l.b16 %v168
    %v173 = vunpack.c.h.b16 %v168
    %v174 = vunpack.c.l.b16 %v169
    %v175 = vunpack.c.h.b16 %v169
    %v176 = vpack.c.b16 %v172, %v172
    %v177 = vpack.c.b16 %v173, %v173
    %v178 = vpack.c.b16 %v174, %v174
    %v179 = vpack.c.b16 %v175, %v175
    %184 = vst [vmem:[%s2] sm:$0xf] %v176
    %185 = vst [vmem:[%s2 + $0x4] sm:$0xf] %v177
    %186 = vst [vmem:[%s2 + $0x8] sm:$0xf] %v178
    %187 = vst [vmem:[%s2 + $0xc] sm:$0xf] %v179
  $region17: #{fastspeech2_forward.158} parent=0 // pred_fallthru
    _
  // Predicated region
  $region18: #{fastspeech2_forward.158} parent=0 // pred_check
    _
  $region19: #{fastspeech2_forward.158} parent=0 // pred_check_branch
    %189 = sbr.rel (0) target = $region21
  $region20: #{fastspeech2_forward.158} parent=0 // pred_region
    _
  $region21: #{fastspeech2_forward.158} parent=0 // pred_fallthru
    _
  // Predicated region
  $region22: #{fastspeech2_forward.158} parent=0 // pred_check
    _
  $region23: #{fastspeech2_forward.158} parent=0 // pred_check_branch
    %191 = sbr.rel (0) target = $region25
  $region24: #{fastspeech2_forward.158} parent=0 // pred_region
    _
  $region25: #{fastspeech2_forward.158} parent=0 // pred_fallthru
    _

// kernel: fastspeech2_forward.163
$region0: #{fastspeech2_forward.163}
  #allocation0 [shape = 'u32[]', space=smem, size = 0x4, offset = 0x4, fixed_abs, tag = 'smem constant byte address 0x4 - core index']
  #allocation1 [shape = 'u32[144,128]{1,0:T(1,128)}', space=vmem, size = 0x12000, scoped, tag = 'internal scratch']
  %s0 = inlined_call_operand.vmem [shape: bf16[2,22,32], index: 0, kind: input, shape index: {}]
  %s1 = inlined_call_operand.vmem [shape: f32[7,32], index: 1, kind: input, shape index: {}]
  %s2 = inlined_call_operand.vmem [shape: f32[1,32], index: 2, kind: input, shape index: {}]
  %s3 = inlined_call_operand.vmem [shape: f32[2,16,32], index: 3, kind: output, shape index: {}]
  %s4 = sld [smem:[#allocation0]]
  $region45: #{fastspeech2_forward.163} parent=0
    _
  %s6 = ssub.s32 1, %s4
  %s7 = scalar_select 0, %s6, %s4
  loop: start=0, step=1, limit=4
  $region2: #{fastspeech2_forward.163} parent=0 // loop_pre_header
    _
  $region3: #{fastspeech2_forward.163} parent=0 // loop_header
    %s9 = sphi 0, %s13
    %p10 = scmp.ge.s32.totalorder %s9, 4
    %s19 = sphi 0, %s21
    %s22 = sphi 0, %s19
    %s23 = sphi 0, %s22
    %s39 = sphi 0, %s23
    %s43 = sphi 0, %s43
    %s45 = sphi 0, %s43
    %s46 = sphi 0, %s45
    %s60 = sphi 0, %s46
    %s64 = sphi 0, %s64
    %s66 = sphi 0, %s64
    %s67 = sphi 0, %s66
    %s81 = sphi 0, %s67
    %s87 = sphi 0, %s89
    %s90 = sphi 0, %s87
    %s91 = sphi 0, %s90
    %s107 = sphi 0, %s91
  $region4: #{fastspeech2_forward.163} parent=0 // loop_header_branch
    %12 = sbr.rel (%p10) target = $region8
  $region5: #{fastspeech2_forward.163} parent=0 // loop_body
    %s14 = ssub.s32 %s9, 1
    %s15 = ssub.s32 %s9, 2
    %s16 = sadd.s32 %s9, 1
    %s17 = ssub.s32 %s9, %s16
    %p18 = scmp.eq.s32.totalorder %s17, 0
    %s20 = sadd.s32 %s19, 1
    %s21 = scalar_select %p18, %s19, %s20
    %p24 = pneg %p18
    %p25 = scmp.eq.s32.totalorder %s9, 1
    %p26 = por %p24, %p25
    %p27 = scmp.ne.s32.totalorder %s19, %s22
    %p28 = scmp.eq.s32.totalorder %s9, 0
    %p29 = por %p27, %p28
    %p30 = scmp.ne.s32.totalorder %s19, %s22
    %p31 = scmp.eq.s32.totalorder %s14, 1
    %p32 = por %p30, %p31
    %p33 = scmp.ne.s32.totalorder %s22, %s23
    %p34 = scmp.eq.s32.totalorder %s14, 0
    %p35 = por %p33, %p34
    %p36 = scmp.ne.s32.totalorder %s22, %s23
    %p37 = scmp.eq.s32.totalorder %s15, 1
    %p38 = por %p36, %p37
    %p40 = scmp.ne.s32.totalorder %s23, %s39
    %p41 = scmp.eq.s32.totalorder %s15, 0
    %p42 = por %p40, %p41
    %s44 = sadd.s32 %s43, 1
    %p47 = scmp.eq.s32.totalorder %s9, 1
    %p48 = scmp.ne.s32.totalorder %s43, %s45
    %p49 = scmp.eq.s32.totalorder %s9, 0
    %p50 = por %p48, %p49
    %p51 = scmp.ne.s32.totalorder %s43, %s45
    %p52 = scmp.eq.s32.totalorder %s14, 1
    %p53 = por %p51, %p52
    %p54 = scmp.ne.s32.totalorder %s45, %s46
    %p55 = scmp.eq.s32.totalorder %s14, 0
    %p56 = por %p54, %p55
    %p57 = scmp.ne.s32.totalorder %s45, %s46
    %p58 = scmp.eq.s32.totalorder %s15, 1
    %p59 = por %p57, %p58
    %p61 = scmp.ne.s32.totalorder %s46, %s60
    %p62 = scmp.eq.s32.totalorder %s15, 0
    %p63 = por %p61, %p62
    %s65 = sadd.s32 %s64, 1
    %p68 = scmp.eq.s32.totalorder %s9, 1
    %p69 = scmp.ne.s32.totalorder %s64, %s66
    %p70 = scmp.eq.s32.totalorder %s9, 0
    %p71 = por %p69, %p70
    %p72 = scmp.ne.s32.totalorder %s64, %s66
    %p73 = scmp.eq.s32.totalorder %s14, 1
    %p74 = por %p72, %p73
    %p75 = scmp.ne.s32.totalorder %s66, %s67
    %p76 = scmp.eq.s32.totalorder %s14, 0
    %p77 = por %p75, %p76
    %p78 = scmp.ne.s32.totalorder %s66, %s67
    %p79 = scmp.eq.s32.totalorder %s15, 1
    %p80 = por %p78, %p79
    %p82 = scmp.ne.s32.totalorder %s67, %s81
    %p83 = scmp.eq.s32.totalorder %s15, 0
    %p84 = por %p82, %p83
    %s85 = ssub.s32 %s9, %s16
    %p86 = scmp.eq.s32.totalorder %s85, 0
    %s88 = sadd.s32 %s87, 1
    %s89 = scalar_select %p86, %s87, %s88
    %p92 = pneg %p86
    %p93 = scmp.eq.s32.totalorder %s9, 1
    %p94 = por %p92, %p93
    %p95 = scmp.ne.s32.totalorder %s87, %s90
    %p96 = scmp.eq.s32.totalorder %s9, 0
    %p97 = por %p95, %p96
    %p98 = scmp.ne.s32.totalorder %s87, %s90
    %p99 = scmp.eq.s32.totalorder %s14, 1
    %p100 = por %p98, %p99
    %p101 = scmp.ne.s32.totalorder %s90, %s91
    %p102 = scmp.eq.s32.totalorder %s14, 0
    %p103 = por %p101, %p102
    %p104 = scmp.ne.s32.totalorder %s90, %s91
    %p105 = scmp.eq.s32.totalorder %s15, 1
    %p106 = por %p104, %p105
    %p108 = scmp.ne.s32.totalorder %s91, %s107
    %p109 = scmp.eq.s32.totalorder %s15, 0
    %p110 = por %p108, %p109
    %p111 = scmp.le.s32.totalorder 1, %s9
    %p112 = scmp.lt.s32.totalorder %s9, 3
    %p113 = pnand %p111, %p112
    %p114 = pneg %p113
    // Predicated region
    $region9: #{fastspeech2_forward.163} parent=5 // pred_check
      _
    $region10: #{fastspeech2_forward.163} parent=5 // pred_check_branch
      %116 = sbr.rel (%p113) target = $region12
    $region11: #{fastspeech2_forward.163} parent=5 // pred_region
      %s117 = ssub.s32 %s9, 1
      // Predicated region
      $region13: #{fastspeech2_forward.163} parent=11 // pred_check
        %p118 = pneg %p56
      $region14: #{fastspeech2_forward.163} parent=11 // pred_check_branch
        %120 = sbr.rel (%p118) target = $region16
      $region15: #{fastspeech2_forward.163} parent=11 // pred_region
        _
      $region16: #{fastspeech2_forward.163} parent=11 // pred_fallthru
        _
      // Predicated region
      $region17: #{fastspeech2_forward.163} parent=11 // pred_check
        %p121 = pneg %p77
      $region18: #{fastspeech2_forward.163} parent=11 // pred_check_branch
        %123 = sbr.rel (%p121) target = $region20
      $region19: #{fastspeech2_forward.163} parent=11 // pred_region
        _
      $region20: #{fastspeech2_forward.163} parent=11 // pred_fallthru
        _
    $region12: #{fastspeech2_forward.163} parent=5 // pred_fallthru
      _
    %p124 = scmp.lt.s32.totalorder %s9, 2
    // Predicated region
    $region21: #{fastspeech2_forward.163} parent=5 // pred_check
      %p125 = pneg %p124
    $region22: #{fastspeech2_forward.163} parent=5 // pred_check_branch
      %127 = sbr.rel (%p125) target = $region24
    $region23: #{fastspeech2_forward.163} parent=5 // pred_region
      // Predicated region
      $region25: #{fastspeech2_forward.163} parent=23 // pred_check
        %p128 = pneg %p29
      $region26: #{fastspeech2_forward.163} parent=23 // pred_check_branch
        %130 = sbr.rel (%p128) target = $region28
      $region27: #{fastspeech2_forward.163} parent=23 // pred_region
        %p131 = scmp.lt.s32.totalorder %s9, 1
        %s132 = scalar_select %p131, %s9, 1
        %s133 = smul.addr %s132, 3
        %s134 = smul.addr %s133, 4
        %s135 = scalar_lea.vmem %s0, %s134
      $region28: #{fastspeech2_forward.163} parent=23 // pred_fallthru
        _
    $region24: #{fastspeech2_forward.163} parent=5 // pred_fallthru
      _
    %p136 = scmp.le.s32.totalorder 1, %s9
    %p137 = scmp.lt.s32.totalorder %s9, 3
    %p138 = pnand %p136, %p137
    %p139 = pneg %p138
    // Predicated region
    $region29: #{fastspeech2_forward.163} parent=5 // pred_check
      _
    $region30: #{fastspeech2_forward.163} parent=5 // pred_check_branch
      %141 = sbr.rel (%p138) target = $region32
    $region31: #{fastspeech2_forward.163} parent=5 // pred_region
      %s142 = ssub.s32 %s9, 1
      %p143 = scmp.lt.s32.totalorder %s14, 1
      %s144 = scalar_select %p143, %s14, 1
      %s145 = smul.addr %s144, 3
      %s146 = smul.addr %s145, 4
      %s147 = scalar_lea.vmem %s0, %s146
      %p148 = pneg %p35
      %p149 = pneg %p32
      %p150 = pneg %p56
      %p151 = pneg %p53
      %p152 = pneg %p77
      %p153 = pneg %p74
      %p154 = pneg %p103
      %p155 = pneg %p100
      %p156 = scmp.lt.s32.totalorder %s14, 1
      %s157 = scalar_select %p156, %s14, 1
      %s158 = smul.addr %s157, 2
      %s159 = smul.addr %s158, 8
      %s160 = scalar_lea.vmem %s3, %s159
      %p161 = scmp.lt.s32.totalorder %s14, 1
      %s162 = scalar_select %p161, %s14, 1
      %s163 = smul.addr %s162, 3
      %s164 = smul.addr %s163, 4
      %s165 = scalar_lea.vmem %s0, %s164
      %p166 = scmp.lt.s32.totalorder %s14, 1
      %s167 = scalar_select %p166, %s14, 1
      %s168 = smul.addr %s167, 2
      %s169 = smul.addr %s168, 8
      %s170 = scalar_lea.vmem %s3, %s169
      %v171 = vld [vmem:[%s2] sm:$0x1]
      %v173 = vlaneseq
      %v174 = vshrl.u32 %v173, 7
      %v175 = vsub.s32 0, %v174
      %v176 = vrot.slane %v171, %v175
      %v178 = vadd.f32 %v176, 0.0
      %v179 = vld [vmem:[%s165] sm:$0xf]
      %v180 = vld [vmem:[%s165 + $0x4] sm:$0xf]
      %v181 = vunpack.c.l.bf16 %v179
      %v182 = vunpack.c.l.bf16 %v180
      %v183 = vld [vmem:[%s1] sm:$0x1]
      %v184 = vlaneseq
      %v185 = vshrl.u32 %v184, 7
      %v186 = vsub.s32 0, %v185
      %v187 = vrot.slane %v183, %v186
      %v188 = vmul.f32 %v181, %v187
      %v189 = vmul.f32 %v182, %v187
      %v190 = vadd.f32 %v178, %v188
      %v191 = vadd.f32 %v178, %v189
      %v192 = vld [vmem:[%s165 + $0x8] sm:$0x1]
      %v193 = vunpack.c.l.bf16 %v192
      %v194 = vld [vmem:[%s1 + $0x1] sm:$0x1]
      %v195 = vlaneseq
      %v196 = vshrl.u32 %v195, 7
      %v197 = vsub.s32 0, %v196
      %v198 = vrot.slane %v194, %v197
      %v199 = vmul.f32 %v181, %v198
      %v200 = vmul.f32 %v182, %v198
      %v201 = vmul.f32 %v193, %v198
      %vm205 = vcmask 1046528
      %v206 = vrot.slane %v199, 1
      %v207 = vrot.slane %v200, 1
      %v208 = vsel %vm205, %v206, %v207
      %v209 = vrot.slane %v201, 1
      %v210 = vsel %vm205, %v207, %v209
      %v213 = vadd.f32 %v190, %v208
      %v214 = vadd.f32 %v191, %v210
      %v215 = vld [vmem:[%s165] sm:$0xe]
      %v216 = vunpack.c.l.bf16 %v215
      %v217 = vld [vmem:[%s1 + $0x2] sm:$0x1]
      %v218 = vlaneseq
      %v219 = vshrl.u32 %v218, 7
      %v220 = vsub.s32 0, %v219
      %v221 = vrot.slane %v217, %v220
      %v222 = vmul.f32 %v216, %v221
      %v223 = vmul.f32 %v182, %v221
      %v224 = vmul.f32 %v193, %v221
      %vm228 = vcmask 1045504
      %v229 = vrot.slane %v222, 2
      %v230 = vrot.slane %v223, 2
      %v231 = vsel %vm228, %v229, %v230
      %v232 = vrot.slane %v224, 2
      %v233 = vsel %vm228, %v230, %v232
      %v236 = vadd.f32 %v213, %v231
      %v237 = vadd.f32 %v214, %v233
      %v238 = vld [vmem:[%s165 + $0x8] sm:$0x3]
      %v239 = vunpack.c.l.bf16 %v238
      %v240 = vld [vmem:[%s1 + $0x3] sm:$0x1]
      %v241 = vlaneseq
      %v242 = vshrl.u32 %v241, 7
      %v243 = vsub.s32 0, %v242
      %v244 = vrot.slane %v240, %v243
      %v245 = vmul.f32 %v216, %v244
      %v246 = vmul.f32 %v182, %v244
      %v247 = vmul.f32 %v239, %v244
      %vm251 = vcmask 1044480
      %v252 = vrot.slane %v245, 3
      %v253 = vrot.slane %v246, 3
      %v254 = vsel %vm251, %v252, %v253
      %v255 = vrot.slane %v247, 3
      %v256 = vsel %vm251, %v253, %v255
      %v259 = vadd.f32 %v236, %v254
      %v260 = vadd.f32 %v237, %v256
      %v261 = vld [vmem:[%s165] sm:$0xc]
      %v262 = vunpack.c.l.bf16 %v261
      %v263 = vld [vmem:[%s1 + $0x4] sm:$0x1]
      %v264 = vlaneseq
      %v265 = vshrl.u32 %v264, 7
      %v266 = vsub.s32 0, %v265
      %v267 = vrot.slane %v263, %v266
      %v268 = vmul.f32 %v262, %v267
      %v269 = vmul.f32 %v182, %v267
      %v270 = vmul.f32 %v239, %v267
      %vm274 = vcmask 1043456
      %v275 = vrot.slane %v268, 4
      %v276 = vrot.slane %v269, 4
      %v277 = vsel %vm274, %v275, %v276
      %v278 = vrot.slane %v270, 4
      %v279 = vsel %vm274, %v276, %v278
      %v282 = vadd.f32 %v259, %v277
      %v283 = vadd.f32 %v260, %v279
      %v284 = vld [vmem:[%s165 + $0x8] sm:$0x7]
      %v285 = vunpack.c.l.bf16 %v284
      %v286 = vld [vmem:[%s1 + $0x5] sm:$0x1]
      %v287 = vlaneseq
      %v288 = vshrl.u32 %v287, 7
      %v289 = vsub.s32 0, %v288
      %v290 = vrot.slane %v286, %v289
      %v291 = vmul.f32 %v262, %v290
      %v292 = vmul.f32 %v182, %v290
      %v293 = vmul.f32 %v285, %v290
      %vm297 = vcmask 1042432
      %v298 = vrot.slane %v291, 5
      %v299 = vrot.slane %v292, 5
      %v300 = vsel %vm297, %v298, %v299
      %v301 = vrot.slane %v293, 5
      %v302 = vsel %vm297, %v299, %v301
      %v305 = vadd.f32 %v282, %v300
      %v306 = vadd.f32 %v283, %v302
      %v307 = vld [vmem:[%s165] sm:$0x8]
      %v308 = vunpack.c.l.bf16 %v307
      %v309 = vld [vmem:[%s1 + $0x6] sm:$0x1]
      %v310 = vlaneseq
      %v311 = vshrl.u32 %v310, 7
      %v312 = vsub.s32 0, %v311
      %v313 = vrot.slane %v309, %v312
      %v314 = vmul.f32 %v308, %v313
      %v315 = vmul.f32 %v182, %v313
      %v316 = vmul.f32 %v285, %v313
      %vm320 = vcmask 1041408
      %v321 = vrot.slane %v314, 6
      %v322 = vrot.slane %v315, 6
      %v323 = vsel %vm320, %v321, %v322
      %v324 = vrot.slane %v316, 6
      %v325 = vsel %vm320, %v322, %v324
      %v328 = vadd.f32 %v305, %v323
      %v329 = vadd.f32 %v306, %v325
      %vm330 = vcmask 261120
      %331 = vst.msk [vmem:[%s170] sm:$0xff] %vm330, %v328
      %332 = vst.msk [vmem:[%s170 + $0x8] sm:$0xff] %vm330, %v329
      %p333 = scmp.lt.s32.totalorder %s14, 1
      %s334 = scalar_select %p333, %s14, 1
      %s335 = smul.addr %s334, 2
      %s336 = smul.addr %s335, 8
      %s337 = scalar_lea.vmem %s3, %s336
      // Predicated region
      $region33: #{fastspeech2_forward.163} parent=31 // pred_check
        %p338 = pneg %p100
      $region34: #{fastspeech2_forward.163} parent=31 // pred_check_branch
        %340 = sbr.rel (%p338) target = $region36
      $region35: #{fastspeech2_forward.163} parent=31 // pred_region
        _
      $region36: #{fastspeech2_forward.163} parent=31 // pred_fallthru
        _
    $region32: #{fastspeech2_forward.163} parent=5 // pred_fallthru
      _
    %p341 = scmp.le.s32.totalorder 2, %s9
    // Predicated region
    $region37: #{fastspeech2_forward.163} parent=5 // pred_check
      %p342 = pneg %p341
    $region38: #{fastspeech2_forward.163} parent=5 // pred_check_branch
      %344 = sbr.rel (%p342) target = $region40
    $region39: #{fastspeech2_forward.163} parent=5 // pred_region
      %s345 = ssub.s32 %s9, 2
      // Predicated region
      $region41: #{fastspeech2_forward.163} parent=39 // pred_check
        %p346 = pneg %p106
      $region42: #{fastspeech2_forward.163} parent=39 // pred_check_branch
        %348 = sbr.rel (%p346) target = $region44
      $region43: #{fastspeech2_forward.163} parent=39 // pred_region
        %p349 = scmp.lt.s32.totalorder %s15, 1
        %s350 = scalar_select %p349, %s15, 1
        %s351 = smul.addr %s350, 2
        %s352 = smul.addr %s351, 8
        %s353 = scalar_lea.vmem %s3, %s352
      $region44: #{fastspeech2_forward.163} parent=39 // pred_fallthru
        _
    $region40: #{fastspeech2_forward.163} parent=5 // pred_fallthru
      _
  $region6: #{fastspeech2_forward.163} parent=0 // loop_footer
    %s13 = sadd.s32 1, %s9
  $region7: #{fastspeech2_forward.163} parent=0 // loop_footer_branch
    %8 = sbr.rel target = $region3
  $region8: #{fastspeech2_forward.163} parent=0 // loop_exit
    _

// kernel: fastspeech2_forward.159
$region0: #{fastspeech2_forward.159}
  #allocation0 [shape = 'u32[]', space=smem, size = 0x4, offset = 0x4, fixed_abs, tag = 'smem constant byte address 0x4 - core index']
  #allocation1 [shape = 'u32[144,128]{1,0:T(1,128)}', space=vmem, size = 0x12000, scoped, tag = 'internal scratch']
  %s0 = inlined_call_operand.vmem [shape: bf16[2,16,32], index: 0, kind: input, shape index: {}]
  %s1 = inlined_call_operand.vmem [shape: bf16[2,16,32], index: 1, kind: input, shape index: {}]
  %s2 = inlined_call_operand.vmem [shape: bf16[2,16,32], index: 2, kind: input, shape index: {}]
  %s3 = inlined_call_operand.vmem [shape: bf16[2,2,16,16], index: 3, kind: input, shape index: {}]
  %s4 = inlined_call_operand.vmem [shape: f32[1,32], index: 4, kind: input, shape index: {}]
  %s5 = inlined_call_operand.vmem [shape: f32[1,32], index: 5, kind: input, shape index: {}]
  %s6 = inlined_call_operand.vmem [shape: f32[2,1,16], index: 6, kind: input, shape index: {}]
  %s7 = inlined_call_operand.vmem [shape: bf16[2,16,32], index: 7, kind: output, shape index: {}]
  %s8 = sld [smem:[#allocation0]]
  $region61: #{fastspeech2_forward.159} parent=0
    _
  %s10 = ssub.s32 1, %s8
  %s11 = scalar_select 0, %s10, %s8
  loop: start=0, step=1, limit=4
  $region2: #{fastspeech2_forward.159} parent=0 // loop_pre_header
    _
  $region3: #{fastspeech2_forward.159} parent=0 // loop_header
    %s13 = sphi 0, %s17
    %p14 = scmp.ge.s32.totalorder %s13, 4
    %s20 = sphi 0, %s32
    %s21 = sphi 0, %s28
    %s22 = sphi 0, %s20
    %s23 = sphi 0, %s21
    %s24 = sphi 0, %s22
    %s25 = sphi 0, %s23
    %s37 = sphi 0, %s39
    %s40 = sphi 0, %s37
    %s41 = sphi 0, %s40
    %s57 = sphi 0, %s41
    %s63 = sphi 0, %s65
    %s66 = sphi 0, %s63
    %s67 = sphi 0, %s66
    %s83 = sphi 0, %s67
    %s89 = sphi 0, %s91
    %s92 = sphi 0, %s89
    %s93 = sphi 0, %s92
    %s109 = sphi 0, %s93
    %s117 = sphi 0, %s119
    %s120 = sphi 0, %s117
    %s121 = sphi 0, %s120
    %s137 = sphi 0, %s121
    %s141 = sphi 0, %s141
    %s143 = sphi 0, %s141
    %s144 = sphi 0, %s143
    %s158 = sphi 0, %s144
    %s162 = sphi 0, %s162
    %s164 = sphi 0, %s162
    %s165 = sphi 0, %s164
    %s179 = sphi 0, %s165
    %s185 = sphi 0, %s187
    %s188 = sphi 0, %s185
    %s189 = sphi 0, %s188
    %s205 = sphi 0, %s189
    %s213 = sphi 0, %s215
    %s216 = sphi 0, %s213
    %s217 = sphi 0, %s216
    %s233 = sphi 0, %s217
  $region4: #{fastspeech2_forward.159} parent=0 // loop_header_branch
    %16 = sbr.rel (%p14) target = $region8
  $region5: #{fastspeech2_forward.159} parent=0 // loop_body
    %s18 = ssub.s32 %s13, 1
    %s19 = ssub.s32 %s13, 2
    %s26 = sadd.s32 1, %s21
    %p27 = scmp.ge.s32.totalorder %s26, 1
    %s28 = scalar_select %p27, 0, %s26
    %s29 = sadd.s32 1, %s20
    %s30 = scalar_select %p27, %s29, %s20
    %p31 = scmp.ge.s32.totalorder %s30, 2
    %s32 = scalar_select %p31, 0, %s30
    %s33 = ssub.s32 %s20, %s32
    %s34 = ssub.s32 %s21, %s28
    %s35 = sor.u32 %s33, %s34
    %p36 = scmp.eq.s32.totalorder %s35, 0
    %s38 = sadd.s32 %s37, 1
    %s39 = scalar_select %p36, %s37, %s38
    %p42 = pneg %p36
    %p43 = scmp.eq.s32.totalorder %s13, 1
    %p44 = por %p42, %p43
    %p45 = scmp.ne.s32.totalorder %s37, %s40
    %p46 = scmp.eq.s32.totalorder %s13, 0
    %p47 = por %p45, %p46
    %p48 = scmp.ne.s32.totalorder %s37, %s40
    %p49 = scmp.eq.s32.totalorder %s18, 1
    %p50 = por %p48, %p49
    %p51 = scmp.ne.s32.totalorder %s40, %s41
    %p52 = scmp.eq.s32.totalorder %s18, 0
    %p53 = por %p51, %p52
    %p54 = scmp.ne.s32.totalorder %s40, %s41
    %p55 = scmp.eq.s32.totalorder %s19, 1
    %p56 = por %p54, %p55
    %p58 = scmp.ne.s32.totalorder %s41, %s57
    %p59 = scmp.eq.s32.totalorder %s19, 0
    %p60 = por %p58, %p59
    %s61 = ssub.s32 %s20, %s32
    %p62 = scmp.eq.s32.totalorder %s61, 0
    %s64 = sadd.s32 %s63, 1
    %s65 = scalar_select %p62, %s63, %s64
    %p68 = pneg %p62
    %p69 = scmp.eq.s32.totalorder %s13, 1
    %p70 = por %p68, %p69
    %p71 = scmp.ne.s32.totalorder %s63, %s66
    %p72 = scmp.eq.s32.totalorder %s13, 0
    %p73 = por %p71, %p72
    %p74 = scmp.ne.s32.totalorder %s63, %s66
    %p75 = scmp.eq.s32.totalorder %s18, 1
    %p76 = por %p74, %p75
    %p77 = scmp.ne.s32.totalorder %s66, %s67
    %p78 = scmp.eq.s32.totalorder %s18, 0
    %p79 = por %p77, %p78
    %p80 = scmp.ne.s32.totalorder %s66, %s67
    %p81 = scmp.eq.s32.totalorder %s19, 1
    %p82 = por %p80, %p81
    %p84 = scmp.ne.s32.totalorder %s67, %s83
    %p85 = scmp.eq.s32.totalorder %s19, 0
    %p86 = por %p84, %p85
    %s87 = ssub.s32 %s20, %s32
    %p88 = scmp.eq.s32.totalorder %s87, 0
    %s90 = sadd.s32 %s89, 1
    %s91 = scalar_select %p88, %s89, %s90
    %p94 = pneg %p88
    %p95 = scmp.eq.s32.totalorder %s13, 1
    %p96 = por %p94, %p95
    %p97 = scmp.ne.s32.totalorder %s89, %s92
    %p98 = scmp.eq.s32.totalorder %s13, 0
    %p99 = por %p97, %p98
    %p100 = scmp.ne.s32.totalorder %s89, %s92
    %p101 = scmp.eq.s32.totalorder %s18, 1
    %p102 = por %p100, %p101
    %p103 = scmp.ne.s32.totalorder %s92, %s93
    %p104 = scmp.eq.s32.totalorder %s18, 0
    %p105 = por %p103, %p104
    %p106 = scmp.ne.s32.totalorder %s92, %s93
    %p107 = scmp.eq.s32.totalorder %s19, 1
    %p108 = por %p106, %p107
    %p110 = scmp.ne.s32.totalorder %s93, %s109
    %p111 = scmp.eq.s32.totalorder %s19, 0
    %p112 = por %p110, %p111
    %s113 = ssub.s32 %s20, %s32
    %s114 = ssub.s32 %s21, %s28
    %s115 = sor.u32 %s113, %s114
    %p116 = scmp.eq.s32.totalorder %s115, 0
    %s118 = sadd.s32 %s117, 1
    %s119 = scalar_select %p116, %s117, %s118
    %p122 = pneg %p116
    %p123 = scmp.eq.s32.totalorder %s13, 1
    %p124 = por %p122, %p123
    %p125 = scmp.ne.s32.totalorder %s117, %s120
    %p126 = scmp.eq.s32.totalorder %s13, 0
    %p127 = por %p125, %p126
    %p128 = scmp.ne.s32.totalorder %s117, %s120
    %p129 = scmp.eq.s32.totalorder %s18, 1
    %p130 = por %p128, %p129
    %p131 = scmp.ne.s32.totalorder %s120, %s121
    %p132 = scmp.eq.s32.totalorder %s18, 0
    %p133 = por %p131, %p132
    %p134 = scmp.ne.s32.totalorder %s120, %s121
    %p135 = scmp.eq.s32.totalorder %s19, 1
    %p136 = por %p134, %p135
    %p138 = scmp.ne.s32.totalorder %s121, %s137
    %p139 = scmp.eq.s32.totalorder %s19, 0
    %p140 = por %p138, %p139
    %s142 = sadd.s32 %s141, 1
    %p145 = scmp.eq.s32.totalorder %s13, 1
    %p146 = scmp.ne.s32.totalorder %s141, %s143
    %p147 = scmp.eq.s32.totalorder %s13, 0
    %p148 = por %p146, %p147
    %p149 = scmp.ne.s32.totalorder %s141, %s143
    %p150 = scmp.eq.s32.totalorder %s18, 1
    %p151 = por %p149, %p150
    %p152 = scmp.ne.s32.totalorder %s143, %s144
    %p153 = scmp.eq.s32.totalorder %s18, 0
    %p154 = por %p152, %p153
    %p155 = scmp.ne.s32.totalorder %s143, %s144
    %p156 = scmp.eq.s32.totalorder %s19, 1
    %p157 = por %p155, %p156
    %p159 = scmp.ne.s32.totalorder %s144, %s158
    %p160 = scmp.eq.s32.totalorder %s19, 0
    %p161 = por %p159, %p160
    %s163 = sadd.s32 %s162, 1
    %p166 = scmp.eq.s32.totalorder %s13, 1
    %p167 = scmp.ne.s32.totalorder %s162, %s164
    %p168 = scmp.eq.s32.totalorder %s13, 0
    %p169 = por %p167, %p168
    %p170 = scmp.ne.s32.totalorder %s162, %s164
    %p171 = scmp.eq.s32.totalorder %s18, 1
    %p172 = por %p170, %p171
    %p173 = scmp.ne.s32.totalorder %s164, %s165
    %p174 = scmp.eq.s32.totalorder %s18, 0
    %p175 = por %p173, %p174
    %p176 = scmp.ne.s32.totalorder %s164, %s165
    %p177 = scmp.eq.s32.totalorder %s19, 1
    %p178 = por %p176, %p177
    %p180 = scmp.ne.s32.totalorder %s165, %s179
    %p181 = scmp.eq.s32.totalorder %s19, 0
    %p182 = por %p180, %p181
    %s183 = ssub.s32 %s20, %s32
    %p184 = scmp.eq.s32.totalorder %s183, 0
    %s186 = sadd.s32 %s185, 1
    %s187 = scalar_select %p184, %s185, %s186
    %p190 = pneg %p184
    %p191 = scmp.eq.s32.totalorder %s13, 1
    %p192 = por %p190, %p191
    %p193 = scmp.ne.s32.totalorder %s185, %s188
    %p194 = scmp.eq.s32.totalorder %s13, 0
    %p195 = por %p193, %p194
    %p196 = scmp.ne.s32.totalorder %s185, %s188
    %p197 = scmp.eq.s32.totalorder %s18, 1
    %p198 = por %p196, %p197
    %p199 = scmp.ne.s32.totalorder %s188, %s189
    %p200 = scmp.eq.s32.totalorder %s18, 0
    %p201 = por %p199, %p200
    %p202 = scmp.ne.s32.totalorder %s188, %s189
    %p203 = scmp.eq.s32.totalorder %s19, 1
    %p204 = por %p202, %p203
    %p206 = scmp.ne.s32.totalorder %s189, %s205
    %p207 = scmp.eq.s32.totalorder %s19, 0
    %p208 = por %p206, %p207
    %s209 = ssub.s32 %s20, %s32
    %s210 = ssub.s32 %s21, %s28
    %s211 = sor.u32 %s209, %s210
    %p212 = scmp.eq.s32.totalorder %s211, 0
    %s214 = sadd.s32 %s213, 1
    %s215 = scalar_select %p212, %s213, %s214
    %p218 = pneg %p212
    %p219 = scmp.eq.s32.totalorder %s13, 1
    %p220 = por %p218, %p219
    %p221 = scmp.ne.s32.totalorder %s213, %s216
    %p222 = scmp.eq.s32.totalorder %s13, 0
    %p223 = por %p221, %p222
    %p224 = scmp.ne.s32.totalorder %s213, %s216
    %p225 = scmp.eq.s32.totalorder %s18, 1
    %p226 = por %p224, %p225
    %p227 = scmp.ne.s32.totalorder %s216, %s217
    %p228 = scmp.eq.s32.totalorder %s18, 0
    %p229 = por %p227, %p228
    %p230 = scmp.ne.s32.totalorder %s216, %s217
    %p231 = scmp.eq.s32.totalorder %s19, 1
    %p232 = por %p230, %p231
    %p234 = scmp.ne.s32.totalorder %s217, %s233
    %p235 = scmp.eq.s32.totalorder %s19, 0
    %p236 = por %p234, %p235
    %p237 = scmp.le.s32.totalorder 1, %s13
    %p238 = scmp.lt.s32.totalorder %s13, 3
    %p239 = pnand %p237, %p238
    %p240 = pneg %p239
    // Predicated region
    $region9: #{fastspeech2_forward.159} parent=5 // pred_check
      _
    $region10: #{fastspeech2_forward.159} parent=5 // pred_check_branch
      %242 = sbr.rel (%p239) target = $region12
    $region11: #{fastspeech2_forward.159} parent=5 // pred_region
      %s243 = ssub.s32 %s13, 1
      // Predicated region
      $region13: #{fastspeech2_forward.159} parent=11 // pred_check
        %p244 = pneg %p154
      $region14: #{fastspeech2_forward.159} parent=11 // pred_check_branch
        %246 = sbr.rel (%p244) target = $region16
      $region15: #{fastspeech2_forward.159} parent=11 // pred_region
        _
      $region16: #{fastspeech2_forward.159} parent=11 // pred_fallthru
        _
      // Predicated region
      $region17: #{fastspeech2_forward.159} parent=11 // pred_check
        %p247 = pneg %p175
      $region18: #{fastspeech2_forward.159} parent=11 // pred_check_branch
        %249 = sbr.rel (%p247) target = $region20
      $region19: #{fastspeech2_forward.159} parent=11 // pred_region
        _
      $region20: #{fastspeech2_forward.159} parent=11 // pred_fallthru
        _
    $region12: #{fastspeech2_forward.159} parent=5 // pred_fallthru
      _
    %p250 = scmp.lt.s32.totalorder %s13, 2
    // Predicated region
    $region21: #{fastspeech2_forward.159} parent=5 // pred_check
      %p251 = pneg %p250
    $region22: #{fastspeech2_forward.159} parent=5 // pred_check_branch
      %253 = sbr.rel (%p251) target = $region24
    $region23: #{fastspeech2_forward.159} parent=5 // pred_region
      // Predicated region
      $region25: #{fastspeech2_forward.159} parent=23 // pred_check
        %p254 = pneg %p47
      $region26: #{fastspeech2_forward.159} parent=23 // pred_check_branch
        %256 = sbr.rel (%p254) target = $region28
      $region27: #{fastspeech2_forward.159} parent=23 // pred_region
        %s257 = smul.u32 2, %s21
        %p258 = scmp.lt.s32.totalorder %s20, 1
        %s259 = scalar_select %p258, %s20, 1
        %p260 = scmp.lt.s32.totalorder %s257, 1
        %s261 = scalar_select %p260, %s257, 1
        %s262 = smul.addr %s259, 2
        %s263 = sadd.s32 %s261, %s262
        %s264 = smul.addr %s263, 4
        %s265 = scalar_lea.vmem %s0, %s264
        %s266 = smul.u32 2, %s21
      $region28: #{fastspeech2_forward.159} parent=23 // pred_fallthru
        _
      // Predicated region
      $region29: #{fastspeech2_forward.159} parent=23 // pred_check
        %p267 = pneg %p73
      $region30: #{fastspeech2_forward.159} parent=23 // pred_check_branch
        %269 = sbr.rel (%p267) target = $region32
      $region31: #{fastspeech2_forward.159} parent=23 // pred_region
        %p270 = scmp.lt.s32.totalorder %s20, 1
        %s271 = scalar_select %p270, %s20, 1
        %s272 = smul.addr %s271, 2
        %s273 = smul.addr %s272, 4
        %s274 = scalar_lea.vmem %s1, %s273
      $region32: #{fastspeech2_forward.159} parent=23 // pred_fallthru
        _
      // Predicated region
      $region33: #{fastspeech2_forward.159} parent=23 // pred_check
        %p275 = pneg %p99
      $region34: #{fastspeech2_forward.159} parent=23 // pred_check_branch
        %277 = sbr.rel (%p275) target = $region36
      $region35: #{fastspeech2_forward.159} parent=23 // pred_region
        %p278 = scmp.lt.s32.totalorder %s20, 1
        %s279 = scalar_select %p278, %s20, 1
        %s280 = smul.addr %s279, 2
        %s281 = smul.addr %s280, 4
        %s282 = scalar_lea.vmem %s2, %s281
      $region36: #{fastspeech2_forward.159} parent=23 // pred_fallthru
        _
      // Predicated region
      $region37: #{fastspeech2_forward.159} parent=23 // pred_check
        %p283 = pneg %p127
      $region38: #{fastspeech2_forward.159} parent=23 // pred_check_branch
        %285 = sbr.rel (%p283) target = $region40
      $region39: #{fastspeech2_forward.159} parent=23 // pred_region
        %s286 = smul.u32 2, %s21
        %p287 = scmp.lt.s32.totalorder %s20, 1
        %s288 = scalar_select %p287, %s20, 1
        %p289 = scmp.lt.s32.totalorder %s286, 1
        %s290 = scalar_select %p289, %s286, 1
        %s291 = smul.addr %s288, 4
        %s292 = sadd.s32 %s290, %s291
        %s293 = smul.addr %s292, 4
        %s294 = scalar_lea.vmem %s3, %s293
        %s295 = smul.u32 2, %s21
      $region40: #{fastspeech2_forward.159} parent=23 // pred_fallthru
        _
      // Predicated region
      $region41: #{fastspeech2_forward.159} parent=23 // pred_check
        %p296 = pneg %p195
      $region42: #{fastspeech2_forward.159} parent=23 // pred_check_branch
        %298 = sbr.rel (%p296) target = $region44
      $region43: #{fastspeech2_forward.159} parent=23 // pred_region
        %p299 = scmp.lt.s32.totalorder %s20, 1
        %s300 = scalar_select %p299, %s20, 1
        %s301 = scalar_lea.vmem %s6, %s300
      $region44: #{fastspeech2_forward.159} parent=23 // pred_fallthru
        _
    $region24: #{fastspeech2_forward.159} parent=5 // pred_fallthru
      _
    %p302 = scmp.le.s32.totalorder 1, %s13
    %p303 = scmp.lt.s32.totalorder %s13, 3
    %p304 = pnand %p302, %p303
    %p305 = pneg %p304
    // Predicated region
    $region45: #{fastspeech2_forward.159} parent=5 // pred_check
      _
    $region46: #{fastspeech2_forward.159} parent=5 // pred_check_branch
      %307 = sbr.rel (%p304) target = $region48
    $region47: #{fastspeech2_forward.159} parent=5 // pred_region
      %s308 = ssub.s32 %s13, 1
      %s309 = smul.u32 2, %s23
      %p310 = scmp.lt.s32.totalorder %s22, 1
      %s311 = scalar_select %p310, %s22, 1
      %p312 = scmp.lt.s32.totalorder %s309, 1
      %s313 = scalar_select %p312, %s309, 1
      %s314 = smul.addr %s311, 2
      %s315 = sadd.s32 %s313, %s314
      %s316 = smul.addr %s315, 4
      %s317 = scalar_lea.vmem %s0, %s316
      %p318 = pneg %p53
      %p319 = pneg %p50
      %p320 = scmp.lt.s32.totalorder %s22, 1
      %s321 = scalar_select %p320, %s22, 1
      %s322 = smul.addr %s321, 2
      %s323 = smul.addr %s322, 4
      %s324 = scalar_lea.vmem %s1, %s323
      %p325 = pneg %p79
      %p326 = pneg %p76
      %p327 = scmp.lt.s32.totalorder %s22, 1
      %s328 = scalar_select %p327, %s22, 1
      %s329 = smul.addr %s328, 2
      %s330 = smul.addr %s329, 4
      %s331 = scalar_lea.vmem %s2, %s330
      %p332 = pneg %p105
      %p333 = pneg %p102
      %s334 = smul.u32 2, %s23
      %p335 = scmp.lt.s32.totalorder %s22, 1
      %s336 = scalar_select %p335, %s22, 1
      %p337 = scmp.lt.s32.totalorder %s334, 1
      %s338 = scalar_select %p337, %s334, 1
      %s339 = smul.addr %s336, 4
      %s340 = sadd.s32 %s338, %s339
      %s341 = smul.addr %s340, 4
      %s342 = scalar_lea.vmem %s3, %s341
      %p343 = pneg %p133
      %p344 = pneg %p130
      %p345 = pneg %p154
      %p346 = pneg %p151
      %p347 = pneg %p175
      %p348 = pneg %p172
      %p349 = scmp.lt.s32.totalorder %s22, 1
      %s350 = scalar_select %p349, %s22, 1
      %s351 = scalar_lea.vmem %s6, %s350
      %p352 = pneg %p201
      %p353 = pneg %p198
      %p354 = pneg %p229
      %p355 = pneg %p226
      %s356 = smul.u32 2, %s23
      %p357 = scmp.lt.s32.totalorder %s22, 1
      %s358 = scalar_select %p357, %s22, 1
      %p359 = scmp.lt.s32.totalorder %s356, 1
      %s360 = scalar_select %p359, %s356, 1
      %s361 = smul.addr %s358, 2
      %s362 = sadd.s32 %s360, %s361
      %s363 = smul.addr %s362, 4
      %s364 = scalar_lea.vmem %s7, %s363
      %s365 = smul.u32 2, %s23
      %p366 = scmp.lt.s32.totalorder %s22, 1
      %s367 = scalar_select %p366, %s22, 1
      %p368 = scmp.lt.s32.totalorder %s365, 1
      %s369 = scalar_select %p368, %s365, 1
      %s370 = smul.addr %s367, 2
      %s371 = sadd.s32 %s369, %s370
      %s372 = smul.addr %s371, 4
      %s373 = scalar_lea.vmem %s0, %s372
      %s374 = smul.u32 2, %s23
      %p375 = scmp.lt.s32.totalorder %s22, 1
      %s376 = scalar_select %p375, %s22, 1
      %s377 = smul.addr %s376, 2
      %s378 = smul.addr %s377, 4
      %s379 = scalar_lea.vmem %s1, %s378
      %p380 = scmp.lt.s32.totalorder %s22, 1
      %s381 = scalar_select %p380, %s22, 1
      %s382 = smul.addr %s381, 2
      %s383 = smul.addr %s382, 4
      %s384 = scalar_lea.vmem %s2, %s383
      %s385 = smul.u32 2, %s23
      %p386 = scmp.lt.s32.totalorder %s22, 1
      %s387 = scalar_select %p386, %s22, 1
      %p388 = scmp.lt.s32.totalorder %s385, 1
      %s389 = scalar_select %p388, %s385, 1
      %s390 = smul.addr %s387, 4
      %s391 = sadd.s32 %s389, %s390
      %s392 = smul.addr %s391, 4
      %s393 = scalar_lea.vmem %s3, %s392
      %s394 = smul.u32 2, %s23
      %p395 = scmp.lt.s32.totalorder %s22, 1
      %s396 = scalar_select %p395, %s22, 1
      %s397 = scalar_lea.vmem %s6, %s396
      %s398 = smul.u32 2, %s23
      %p399 = scmp.lt.s32.totalorder %s22, 1
      %s400 = scalar_select %p399, %s22, 1
      %p401 = scmp.lt.s32.totalorder %s398, 1
      %s402 = scalar_select %p401, %s398, 1
      %s403 = smul.addr %s400, 2
      %s404 = sadd.s32 %s402, %s403
      %s405 = smul.addr %s404, 4
      %s406 = scalar_lea.vmem %s7, %s405
      %s407 = smul.u32 2, %s23
      %v409 = vld [vmem:[%s373] sm:$0xf]
      %v410 = vld [vmem:[%s373 + $0x4] sm:$0xf]
      %v411 = vunpack.c.l.bf16 %v409
      %v412 = vunpack.c.l.bf16 %v410
      %v413 = vld [vmem:[%s4] sm:$0x1]
      %v415 = vlaneseq
      %v416 = vshrl.u32 %v415, 7
      %v417 = vsub.s32 0, %v416
      %v418 = vrot.slane %v413, %v417
      %v420 = vadd.f32 %v411, %v418
      %v421 = vadd.f32 %v412, %v418
      %v422 = vpack.c.bf16 %v421, %v420
      %v423 = vld [vmem:[%s379] sm:$0xf]
      %v424 = vld [vmem:[%s379 + $0x4] sm:$0xf]
      %v425 = vld [vmem:[%s384] sm:$0xf]
      %v426 = vld [vmem:[%s384 + $0x4] sm:$0xf]
      %v427 = vld [vmem:[%s397] sm:$0x1]
      %v428 = vsub.f32 %v427, 1.0
      %v429 = vmul.f32 %v428, 1e+30
      %v430 = vld [vmem:[%s393] sm:$0xf]
      %v431 = vld [vmem:[%s393 + $0x4] sm:$0xf]
      %v432 = vunpack.c.l.bf16 %v430
      %v433 = vunpack.c.l.bf16 %v431
      %v436 = vunpack.c.l.b16 %v423
      %v437 = vunpack.c.l.b16 %v424
      %v438 = vpack.c.b16 %v437, %v436
      %vm439 = vcmask 130048
      %v441 = vsel %vm439, %v422, 0
      %v444 = vsel %vm439, %v438, 0
      %446 = vmatprep.subr.bf16.mxu0 0
      %447 = vmatpush1.bf16.xpose.msra.mxu0 %v444
      %448 = vmatprep.subr.bf16.mxu0 0
      %449 = vmatpush1.bf16.xpose.msra.mxu0 0
      %450 = vmatprep.subr.bf16.mxu0 0
      %451 = vmatpush1.bf16.xpose.msra.mxu0 0
      %452 = vmatprep.subr.bf16.mxu0 0
      %453 = vmatpush1.bf16.xpose.msra.mxu0 0
      %454 = vmatprep.subr.bf16.mxu0 0
      %455 = vmatpush1.bf16.xpose.msra.mxu0 0
      %456 = vmatprep.subr.bf16.mxu0 0
      %457 = vmatpush1.bf16.xpose.msra.mxu0 0
      %458 = vmatprep.subr.bf16.mxu0 0
      %459 = vmatpush1.bf16.xpose.msra.mxu0 0
      %460 = vmatprep.subr.bf16.mxu0 0
      %461 = vmatpush1.bf16.xpose.msra.mxu0 0
      %462 = vmatprep.subr.bf16.mxu0 0
      %463 = vmatpush1.bf16.xpose.msra.mxu0 0
      %464 = vmatprep.subr.bf16.mxu0 0
      %465 = vmatpush1.bf16.xpose.msra.mxu0 0
      %466 = vmatprep.subr.bf16.mxu0 0
      %467 = vmatpush1.bf16.xpose.msra.mxu0 0
      %468 = vmatprep.subr.bf16.mxu0 0
      %469 = vmatpush1.bf16.xpose.msra.mxu0 0
      %470 = vmatprep.subr.bf16.mxu0 0
      %471 = vmatpush1.bf16.xpose.msra.mxu0 0
      %472 = vmatprep.subr.bf16.mxu0 0
      %473 = vmatpush1.bf16.xpose.msra.mxu0 0
      %474 = vmatprep.subr.bf16.mxu0 0
      %475 = vmatpush1.bf16.xpose.msra.mxu0 0
      %476 = vmatprep.subr.bf16.mxu0 0
      %477 = vmatpush1.bf16.xpose.msra.mxu0 0
      %478 = vmatprep.mubr.bf16.mxu0 0
      %479 = vmatmul.mubr.bf16.gmra.mrb[0].mxu0 %v441
      %v480 = vpop.f32.mrb[0].mxu0
      %v481 = vadd.f32 %v432, %v480
      %v482 = vpop.f32.mrb[0].mxu0
      %v483 = vpop.f32.mrb[0].mxu0
      %v484 = vadd.f32 %v433, %v483
      %v485 = vpop.f32.mrb[0].mxu0
      %486 = vdwg.mxu0
      %v487 = vmul.f32 %v481, 0.25
      %v488 = vmul.f32 %v484, 0.25
      %v490 = vlaneseq
      %v491 = vshrl.u32 %v490, 7
      %v492 = vsub.s32 0, %v491
      %v493 = vrot.slane %v429, %v492
      %v495 = vadd.f32 %v487, %v493
      %v496 = vadd.f32 %v488, %v493
      %v497 = vsel %vm439, %v495, -inf
      %498 = vmax.xlane.f32.xlu0 %v497
      %v499 = vpop.xlane.xlu0 %498
      %v500 = vsel %vm439, %v496, -inf
      %501 = vmax.xlane.f32.xlu0 %v500
      %v502 = vpop.xlane.xlu0 %501
      %v503 = vsub.f32 %v495, %v499
      %v504 = vsub.f32 %v496, %v502
      %v505 = vmul.f32 %v503, 1.442695
      %v506 = vpow.pop %v505
      %v507 = vmul.f32 %v504, 1.442695
      %v508 = vpow.pop %v507
      %v510 = vlaneseq
      %v511 = vshrl.u32 %v510, 7
      %v512 = vsub.s32 0, %v511
      %v513 = vrot.slane %v427, %v512
      %v515 = vmul.f32 %v506, %v513
      %v516 = vmul.f32 %v508, %v513
      %v517 = vsel %vm439, %v515, 0.0
      %518 = vadd.xlane.f32.xlu0 %v517
      %v519 = vpop.xlane.xlu0 %518
      %v520 = vsel %vm439, %v516, 0.0
      %521 = vadd.xlane.f32.xlu0 %v520
      %v522 = vpop.xlane.xlu0 %521
      %v523 = vmax.f32 %v519, 1e-30
      %v524 = vmax.f32 %v522, 1e-30
      %v525 = vrcp.pop %v523
      %v526 = vrcp.pop %v524
      %v527 = vmul.f32 %v515, %v525
      %v528 = vmul.f32 %v516, %v526
      %v529 = vpack.c.bf16 %v528, %v527
      %v532 = vunpack.c.l.b16 %v425
      %v533 = vunpack.c.l.b16 %v426
      %v534 = vpack.c.b16 %v533, %v532
      %v537 = vsel %vm439, %v529, 0
      %539 = vmatprep.subr.bf16.mxu0 0
      %540 = vmatpush1.bf16.msra.mxu0 %v534
      %541 = vmatprep.subr.bf16.mxu0 0
      %542 = vmatpush1.bf16.msra.mxu0 0
      %543 = vmatprep.subr.bf16.mxu0 0
      %544 = vmatpush1.bf16.msra.mxu0 0
      %545 = vmatprep.subr.bf16.mxu0 0
      %546 = vmatpush1.bf16.msra.mxu0 0
      %547 = vmatprep.subr.bf16.mxu0 0
      %548 = vmatpush1.bf16.msra.mxu0 0
      %549 = vmatprep.subr.bf16.mxu0 0
      %550 = vmatpush1.bf16.msra.mxu0 0
      %551 = vmatprep.subr.bf16.mxu0 0
      %552 = vmatpush1.bf16.msra.mxu0 0
      %553 = vmatprep.subr.bf16.mxu0 0
      %554 = vmatpush1.bf16.msra.mxu0 0
      %555 = vmatprep.subr.bf16.mxu0 0
      %556 = vmatpush1.bf16.msra.mxu0 0
      %557 = vmatprep.subr.bf16.mxu0 0
      %558 = vmatpush1.bf16.msra.mxu0 0
      %559 = vmatprep.subr.bf16.mxu0 0
      %560 = vmatpush1.bf16.msra.mxu0 0
      %561 = vmatprep.subr.bf16.mxu0 0
      %562 = vmatpush1.bf16.msra.mxu0 0
      %563 = vmatprep.subr.bf16.mxu0 0
      %564 = vmatpush1.bf16.msra.mxu0 0
      %565 = vmatprep.subr.bf16.mxu0 0
      %566 = vmatpush1.bf16.msra.mxu0 0
      %567 = vmatprep.subr.bf16.mxu0 0
      %568 = vmatpush1.bf16.msra.mxu0 0
      %569 = vmatprep.subr.bf16.mxu0 0
      %570 = vmatpush1.bf16.msra.mxu0 0
      %571 = vmatprep.mubr.bf16.mxu0 0
      %572 = vmatmul.mubr.bf16.gmra.mrb[0].mxu0 %v537
      %v573 = vpop.f32.mrb[0].mxu0
      %v574 = vadd.f32 0.0, %v573
      %v575 = vpop.f32.mrb[0].mxu0
      %v576 = vpop.f32.mrb[0].mxu0
      %v577 = vadd.f32 0.0, %v576
      %v578 = vpop.f32.mrb[0].mxu0
      %579 = vdwg.mxu0
      %s580 = scalar_lea.vmem %s393, 8
      %v581 = vld [vmem:[%s580] sm:$0xf]
      %v582 = vld [vmem:[%s580 + $0x4] sm:$0xf]
      %v583 = vunpack.c.l.bf16 %v581
      %v584 = vunpack.c.l.bf16 %v582
      %586 = vrot.lane.b32.xlu0 %v422, 112
      %v587 = vpop.permute.xlu0 %586
      %588 = vrot.lane.b32.xlu0 %v438, 112
      %v589 = vpop.permute.xlu0 %588
      %v591 = vsel %vm439, %v587, 0
      %v594 = vsel %vm439, %v589, 0
      %596 = vmatprep.subr.bf16.mxu0 0
      %597 = vmatpush1.bf16.xpose.msra.mxu0 %v594
      %598 = vmatprep.subr.bf16.mxu0 0
      %599 = vmatpush1.bf16.xpose.msra.mxu0 0
      %600 = vmatprep.subr.bf16.mxu0 0
      %601 = vmatpush1.bf16.xpose.msra.mxu0 0
      %602 = vmatprep.subr.bf16.mxu0 0
      %603 = vmatpush1.bf16.xpose.msra.mxu0 0
      %604 = vmatprep.subr.bf16.mxu0 0
      %605 = vmatpush1.bf16.xpose.msra.mxu0 0
      %606 = vmatprep.subr.bf16.mxu0 0
      %607 = vmatpush1.bf16.xpose.msra.mxu0 0
      %608 = vmatprep.subr.bf16.mxu0 0
      %609 = vmatpush1.bf16.xpose.msra.mxu0 0
      %610 = vmatprep.subr.bf16.mxu0 0
      %611 = vmatpush1.bf16.xpose.msra.mxu0 0
      %612 = vmatprep.subr.bf16.mxu0 0
      %613 = vmatpush1.bf16.xpose.msra.mxu0 0
      %614 = vmatprep.subr.bf16.mxu0 0
      %615 = vmatpush1.bf16.xpose.msra.mxu0 0
      %616 = vmatprep.subr.bf16.mxu0 0
      %617 = vmatpush1.bf16.xpose.msra.mxu0 0
      %618 = vmatprep.subr.bf16.mxu0 0
      %619 = vmatpush1.bf16.xpose.msra.mxu0 0
      %620 = vmatprep.subr.bf16.mxu0 0
      %621 = vmatpush1.bf16.xpose.msra.mxu0 0
      %622 = vmatprep.subr.bf16.mxu0 0
      %623 = vmatpush1.bf16.xpose.msra.mxu0 0
      %624 = vmatprep.subr.bf16.mxu0 0
      %625 = vmatpush1.bf16.xpose.msra.mxu0 0
      %626 = vmatprep.subr.bf16.mxu0 0
      %627 = vmatpush1.bf16.xpose.msra.mxu0 0
      %628 = vmatprep.mubr.bf16.mxu0 0
      %629 = vmatmul.mubr.bf16.gmra.mrb[0].mxu0 %v591
      %v630 = vpop.f32.mrb[0].mxu0
      %v631 = vadd.f32 %v583, %v630
      %v632 = vpop.f32.mrb[0].mxu0
      %v633 = vpop.f32.mrb[0].mxu0
      %v634 = vadd.f32 %v584, %v633
      %v635 = vpop.f32.mrb[0].mxu0
      %636 = vdwg.mxu0
      %v637 = vmul.f32 %v631, 0.25
      %v638 = vmul.f32 %v634, 0.25
      %v639 = vadd.f32 %v637, %v493
      %v640 = vadd.f32 %v638, %v493
      %v641 = vsel %vm439, %v639, -inf
      %642 = vmax.xlane.f32.xlu0 %v641
      %v643 = vpop.xlane.xlu0 %642
      %v644 = vsel %vm439, %v640, -inf
      %645 = vmax.xlane.f32.xlu0 %v644
      %v646 = vpop.xlane.xlu0 %645
      %v647 = vsub.f32 %v639, %v643
      %v648 = vsub.f32 %v640, %v646
      %v649 = vmul.f32 %v647, 1.442695
      %v650 = vpow.pop %v649
      %v651 = vmul.f32 %v648, 1.442695
      %v652 = vpow.pop %v651
      %v653 = vmul.f32 %v650, %v513
      %v654 = vmul.f32 %v652, %v513
      %v655 = vsel %vm439, %v653, 0.0
      %656 = vadd.xlane.f32.xlu0 %v655
      %v657 = vpop.xlane.xlu0 %656
      %v658 = vsel %vm439, %v654, 0.0
      %659 = vadd.xlane.f32.xlu0 %v658
      %v660 = vpop.xlane.xlu0 %659
      %v661 = vmax.f32 %v657, 1e-30
      %v662 = vmax.f32 %v660, 1e-30
      %v663 = vrcp.pop %v661
      %v664 = vrcp.pop %v662
      %v665 = vmul.f32 %v653, %v663
      %v666 = vmul.f32 %v654, %v664
      %v667 = vpack.c.bf16 %v666, %v665
      %668 = vrot.lane.b32.xlu0 %v534, 112
      %v669 = vpop.permute.xlu0 %668
      %v672 = vsel %vm439, %v667, 0
      %674 = vmatprep.subr.bf16.mxu0 0
      %675 = vmatpush1.bf16.msra.mxu0 %v669
      %676 = vmatprep.subr.bf16.mxu0 0
      %677 = vmatpush1.bf16.msra.mxu0 0
      %678 = vmatprep.subr.bf16.mxu0 0
      %679 = vmatpush1.bf16.msra.mxu0 0
      %680 = vmatprep.subr.bf16.mxu0 0
      %681 = vmatpush1.bf16.msra.mxu0 0
      %682 = vmatprep.subr.bf16.mxu0 0
      %683 = vmatpush1.bf16.msra.mxu0 0
      %684 = vmatprep.subr.bf16.mxu0 0
      %685 = vmatpush1.bf16.msra.mxu0 0
      %686 = vmatprep.subr.bf16.mxu0 0
      %687 = vmatpush1.bf16.msra.mxu0 0
      %688 = vmatprep.subr.bf16.mxu0 0
      %689 = vmatpush1.bf16.msra.mxu0 0
      %690 = vmatprep.subr.bf16.mxu0 0
      %691 = vmatpush1.bf16.msra.mxu0 0
      %692 = vmatprep.subr.bf16.mxu0 0
      %693 = vmatpush1.bf16.msra.mxu0 0
      %694 = vmatprep.subr.bf16.mxu0 0
      %695 = vmatpush1.bf16.msra.mxu0 0
      %696 = vmatprep.subr.bf16.mxu0 0
      %697 = vmatpush1.bf16.msra.mxu0 0
      %698 = vmatprep.subr.bf16.mxu0 0
      %699 = vmatpush1.bf16.msra.mxu0 0
      %700 = vmatprep.subr.bf16.mxu0 0
      %701 = vmatpush1.bf16.msra.mxu0 0
      %702 = vmatprep.subr.bf16.mxu0 0
      %703 = vmatpush1.bf16.msra.mxu0 0
      %704 = vmatprep.subr.bf16.mxu0 0
      %705 = vmatpush1.bf16.msra.mxu0 0
      %706 = vmatprep.mubr.bf16.mxu0 0
      %707 = vmatmul.mubr.bf16.gmra.mrb[0].mxu0 %v672
      %v708 = vpop.f32.mrb[0].mxu0
      %v709 = vadd.f32 0.0, %v708
      %v710 = vpop.f32.mrb[0].mxu0
      %v711 = vpop.f32.mrb[0].mxu0
      %v712 = vadd.f32 0.0, %v711
      %v713 = vpop.f32.mrb[0].mxu0
      %714 = vdwg.mxu0
      %717 = vrot.lane.b32.xlu0 %v709, 16
      %v718 = vpop.permute.xlu0 %717
      %719 = vrot.lane.b32.xlu0 %v712, 16
      %v720 = vpop.permute.xlu0 %719
      %v723 = vsel %vm439, %v574, %v718
      %v724 = vsel %vm439, %v577, %v720
      %v725 = vpack.c.bf16 %v724, %v723
      %v727 = vunpack.c.l.b16 %v725
      %v728 = vunpack.c.h.b16 %v725
      %v729 = vpack.c.b16 %v727, %v727
      %v730 = vpack.c.b16 %v728, %v728
      %vm733 = vcmask 257024
      %734 = vst.msk [vmem:[%s406] sm:$0xf] %vm733, %v729
      %735 = vst.msk [vmem:[%s406 + $0x4] sm:$0xf] %vm733, %v730
      %s736 = smul.u32 2, %s23
      %p737 = scmp.lt.s32.totalorder %s22, 1
      %s738 = scalar_select %p737, %s22, 1
      %p739 = scmp.lt.s32.totalorder %s736, 1
      %s740 = scalar_select %p739, %s736, 1
      %s741 = smul.addr %s738, 2
      %s742 = sadd.s32 %s740, %s741
      %s743 = smul.addr %s742, 4
      %s744 = scalar_lea.vmem %s7, %s743
      // Predicated region
      $region49: #{fastspeech2_forward.159} parent=47 // pred_check
        %p745 = pneg %p226
      $region50: #{fastspeech2_forward.159} parent=47 // pred_check_branch
        %747 = sbr.rel (%p745) target = $region52
      $region51: #{fastspeech2_forward.159} parent=47 // pred_region
        %s748 = smul.u32 2, %s23
      $region52: #{fastspeech2_forward.159} parent=47 // pred_fallthru
        _
    $region48: #{fastspeech2_forward.159} parent=5 // pred_fallthru
      _
    %p749 = scmp.le.s32.totalorder 2, %s13
    // Predicated region
    $region53: #{fastspeech2_forward.159} parent=5 // pred_check
      %p750 = pneg %p749
    $region54: #{fastspeech2_forward.159} parent=5 // pred_check_branch
      %752 = sbr.rel (%p750) target = $region56
    $region55: #{fastspeech2_forward.159} parent=5 // pred_region
      %s753 = ssub.s32 %s13, 2
      // Predicated region
      $region57: #{fastspeech2_forward.159} parent=55 // pred_check
        %p754 = pneg %p232
      $region58: #{fastspeech2_forward.159} parent=55 // pred_check_branch
        %756 = sbr.rel (%p754) target = $region60
      $region59: #{fastspeech2_forward.159} parent=55 // pred_region
        %s757 = smul.u32 2, %s25
        %p758 = scmp.lt.s32.totalorder %s24, 1
        %s759 = scalar_select %p758, %s24, 1
        %p760 = scmp.lt.s32.totalorder %s757, 1
        %s761 = scalar_select %p760, %s757, 1
        %s762 = smul.addr %s759, 2
        %s763 = sadd.s32 %s761, %s762
        %s764 = smul.addr %s763, 4
        %s765 = scalar_lea.vmem %s7, %s764
      $region60: #{fastspeech2_forward.159} parent=55 // pred_fallthru
        _
    $region56: #{fastspeech2_forward.159} parent=5 // pred_fallthru
      _
  $region6: #{fastspeech2_forward.159} parent=0 // loop_footer
    %s17 = sadd.s32 1, %s13
  $region7: #{fastspeech2_forward.159} parent=0 // loop_footer_branch
    %12 = sbr.rel target = $region3
  $region8: #{fastspeech2_forward.159} parent=0 // loop_exit
    _

// kernel: fastspeech2_forward.168
$region0: #{fastspeech2_forward.168}
  #allocation0 [shape = 'u32[]', space=smem, size = 0x4, offset = 0x4, fixed_abs, tag = 'smem constant byte address 0x4 - core index']
  #allocation1 [shape = 'u32[144,128]{1,0:T(1,128)}', space=vmem, size = 0x12000, scoped, tag = 'internal scratch']
  %s0 = inlined_call_operand.vmem [shape: f32[32,32], index: 0, kind: input, shape index: {}]
  %s1 = inlined_call_operand.vmem [shape: f32[1,32], index: 1, kind: input, shape index: {}]
  %s2 = inlined_call_operand.vmem [shape: f32[1,32], index: 2, kind: input, shape index: {}]
  %s3 = inlined_call_operand.vmem [shape: f32[32,32], index: 3, kind: output, shape index: {}]
  %s4 = sld [smem:[#allocation0]]
  $region22: #{fastspeech2_forward.168} parent=0
    _
  %s6 = ssub.s32 1, %s4
  %s7 = scalar_select 0, %s6, %s4
  // Predicated region
  $region2: #{fastspeech2_forward.168} parent=0 // pred_check
    _
  $region3: #{fastspeech2_forward.168} parent=0 // pred_check_branch
    %9 = sbr.rel (0) target = $region5
  $region4: #{fastspeech2_forward.168} parent=0 // pred_region
    _
  $region5: #{fastspeech2_forward.168} parent=0 // pred_fallthru
    _
  // Predicated region
  $region6: #{fastspeech2_forward.168} parent=0 // pred_check
    _
  $region7: #{fastspeech2_forward.168} parent=0 // pred_check_branch
    %11 = sbr.rel (0) target = $region9
  $region8: #{fastspeech2_forward.168} parent=0 // pred_region
    _
  $region9: #{fastspeech2_forward.168} parent=0 // pred_fallthru
    _
  // Predicated region
  $region10: #{fastspeech2_forward.168} parent=0 // pred_check
    _
  $region11: #{fastspeech2_forward.168} parent=0 // pred_check_branch
    %13 = sbr.rel (0) target = $region13
  $region12: #{fastspeech2_forward.168} parent=0 // pred_region
    _
  $region13: #{fastspeech2_forward.168} parent=0 // pred_fallthru
    _
  %v14 = vld [vmem:[%s0] sm:$0xff]
  %v15 = vld [vmem:[%s0 + $0x8] sm:$0xff]
  %v16 = vld [vmem:[%s0 + $0x10] sm:$0xff]
  %v17 = vld [vmem:[%s0 + $0x18] sm:$0xff]
  %vm18 = vcmask 261120
  %v19 = vsel %vm18, %v14, 0.0
  %20 = vadd.xlane.f32.xlu0 %v19
  %v21 = vpop.xlane.xlu0 %20
  %v22 = vsel %vm18, %v15, 0.0
  %23 = vadd.xlane.f32.xlu0 %v22
  %v24 = vpop.xlane.xlu0 %23
  %v25 = vsel %vm18, %v16, 0.0
  %26 = vadd.xlane.f32.xlu0 %v25
  %v27 = vpop.xlane.xlu0 %26
  %v28 = vsel %vm18, %v17, 0.0
  %29 = vadd.xlane.f32.xlu0 %v28
  %v30 = vpop.xlane.xlu0 %29
  %v31 = vrcp.pop 32.0
  %v32 = vmul.f32 %v21, %v31
  %v33 = vmul.f32 %v24, %v31
  %v34 = vmul.f32 %v27, %v31
  %v35 = vmul.f32 %v30, %v31
  %v36 = vsub.f32 %v14, %v32
  %v37 = vsub.f32 %v15, %v33
  %v38 = vsub.f32 %v16, %v34
  %v39 = vsub.f32 %v17, %v35
  %v40 = vmul.f32 %v36, %v36
  %v41 = vmul.f32 %v37, %v37
  %v42 = vmul.f32 %v38, %v38
  %v43 = vmul.f32 %v39, %v39
  %v44 = vsel %vm18, %v40, 0.0
  %45 = vadd.xlane.f32.xlu0 %v44
  %v46 = vpop.xlane.xlu0 %45
  %v47 = vsel %vm18, %v41, 0.0
  %48 = vadd.xlane.f32.xlu0 %v47
  %v49 = vpop.xlane.xlu0 %48
  %v50 = vsel %vm18, %v42, 0.0
  %51 = vadd.xlane.f32.xlu0 %v50
  %v52 = vpop.xlane.xlu0 %51
  %v53 = vsel %vm18, %v43, 0.0
  %54 = vadd.xlane.f32.xlu0 %v53
  %v55 = vpop.xlane.xlu0 %54
  %v56 = vmul.f32 %v46, %v31
  %v57 = vmul.f32 %v49, %v31
  %v58 = vmul.f32 %v52, %v31
  %v59 = vmul.f32 %v55, %v31
  %v60 = vadd.f32 %v56, 1e-05
  %v61 = vadd.f32 %v57, 1e-05
  %v62 = vadd.f32 %v58, 1e-05
  %v63 = vadd.f32 %v59, 1e-05
  %v64 = vrsqrt.pop %v60
  %v65 = vrsqrt.pop %v61
  %v66 = vrsqrt.pop %v62
  %v67 = vrsqrt.pop %v63
  %v68 = vmul.f32 %v36, %v64
  %v69 = vmul.f32 %v37, %v65
  %v70 = vmul.f32 %v38, %v66
  %v71 = vmul.f32 %v39, %v67
  %v72 = vld [vmem:[%s1] sm:$0x1]
  %v74 = vlaneseq
  %v75 = vshrl.u32 %v74, 7
  %v76 = vsub.s32 0, %v75
  %v77 = vrot.slane %v72, %v76
  %v79 = vmul.f32 %v68, %v77
  %v80 = vmul.f32 %v69, %v77
  %v81 = vmul.f32 %v70, %v77
  %v82 = vmul.f32 %v71, %v77
  %v83 = vld [vmem:[%s2] sm:$0x1]
  %v85 = vlaneseq
  %v86 = vshrl.u32 %v85, 7
  %v87 = vsub.s32 0, %v86
  %v88 = vrot.slane %v83, %v87
  %v90 = vadd.f32 %v79, %v88
  %v91 = vadd.f32 %v80, %v88
  %v92 = vadd.f32 %v81, %v88
  %v93 = vadd.f32 %v82, %v88
  %94 = vst.msk [vmem:[%s3] sm:$0xff] %vm18, %v90
  %95 = vst.msk [vmem:[%s3 + $0x8] sm:$0xff] %vm18, %v91
  %96 = vst.msk [vmem:[%s3 + $0x10] sm:$0xff] %vm18, %v92
  %97 = vst.msk [vmem:[%s3 + $0x18] sm:$0xff] %vm18, %v93
  // Predicated region
  $region14: #{fastspeech2_forward.168} parent=0 // pred_check
    _
  $region15: #{fastspeech2_forward.168} parent=0 // pred_check_branch
    %99 = sbr.rel (0) target = $region17
  $region16: #{fastspeech2_forward.168} parent=0 // pred_region
    _
  $region17: #{fastspeech2_forward.168} parent=0 // pred_fallthru
    _
  // Predicated region
  $region18: #{fastspeech2_forward.168} parent=0 // pred_check
    _
  $region19: #{fastspeech2_forward.168} parent=0 // pred_check_branch
    %101 = sbr.rel (0) target = $region21
  $region20: #{fastspeech2_forward.168} parent=0 // pred_region
    _
  $region21: #{fastspeech2_forward.168} parent=0 // pred_fallthru
    _

// kernel: fastspeech2_forward.188
$region0: #{fastspeech2_forward.188}
  #allocation0 [shape = 'u32[]', space=smem, size = 0x4, offset = 0x4, fixed_abs, tag = 'smem constant byte address 0x4 - core index']
  #allocation1 [shape = 'u32[144,128]{1,0:T(1,128)}', space=vmem, size = 0x12000, scoped, tag = 'internal scratch']
  #allocation2 [shape = 'f32[32,128]{1,0:T(8,128)}', space=vmem, size = 0x4000, scoped, tag = 'scratch operand']
  %s0 = inlined_call_operand.vmem [shape: bf16[32,128], index: 0, kind: input, shape index: {}]
  %s1 = inlined_call_operand.vmem [shape: bf16[128,128], index: 1, kind: input, shape index: {}]
  %s2 = inlined_call_operand.vmem [shape: f32[1,128], index: 2, kind: input, shape index: {}]
  %s3 = inlined_call_operand.vmem [shape: f32[32,128], index: 3, kind: output, shape index: {}]
  %s4 = sld [smem:[#allocation0]]
  $region30: #{fastspeech2_forward.188} parent=0
    _
  %s6 = ssub.s32 1, %s4
  %s7 = scalar_select 0, %s6, %s4
  // Predicated region
  $region2: #{fastspeech2_forward.188} parent=0 // pred_check
    _
  $region3: #{fastspeech2_forward.188} parent=0 // pred_check_branch
    %9 = sbr.rel (0) target = $region5
  $region4: #{fastspeech2_forward.188} parent=0 // pred_region
    _
  $region5: #{fastspeech2_forward.188} parent=0 // pred_fallthru
    _
  // Predicated region
  $region6: #{fastspeech2_forward.188} parent=0 // pred_check
    _
  $region7: #{fastspeech2_forward.188} parent=0 // pred_check_branch
    %11 = sbr.rel (0) target = $region9
  $region8: #{fastspeech2_forward.188} parent=0 // pred_region
    _
  $region9: #{fastspeech2_forward.188} parent=0 // pred_fallthru
    _
  // Predicated region
  $region10: #{fastspeech2_forward.188} parent=0 // pred_check
    _
  $region11: #{fastspeech2_forward.188} parent=0 // pred_check_branch
    %13 = sbr.rel (0) target = $region13
  $region12: #{fastspeech2_forward.188} parent=0 // pred_region
    _
  $region13: #{fastspeech2_forward.188} parent=0 // pred_fallthru
    _
  %p15 = scmp.eq.s32.totalorder 0, 0
  // Predicated region
  $region14: #{fastspeech2_forward.188} parent=0 // pred_check
    %p16 = pneg %p15
  $region15: #{fastspeech2_forward.188} parent=0 // pred_check_branch
    %18 = sbr.rel (%p16) target = $region17
  $region16: #{fastspeech2_forward.188} parent=0 // pred_region
    %19 = vst [vmem:[#allocation2] sm:$0xff] 0.0
    %20 = vst [vmem:[#allocation2 + $0x8] sm:$0xff] 0.0
    %21 = vst [vmem:[#allocation2 + $0x10] sm:$0xff] 0.0
    %22 = vst [vmem:[#allocation2 + $0x18] sm:$0xff] 0.0
  $region17: #{fastspeech2_forward.188} parent=0 // pred_fallthru
    _
  %v23 = vld [vmem:[#allocation2] sm:$0xff]
  %v24 = vld [vmem:[#allocation2 + $0x8] sm:$0xff]
  %v25 = vld [vmem:[#allocation2 + $0x10] sm:$0xff]
  %v26 = vld [vmem:[#allocation2 + $0x18] sm:$0xff]
  %v27 = vld [vmem:[%s0] sm:$0xf]
  %v28 = vld [vmem:[%s0 + $0x4] sm:$0xf]
  %v29 = vld [vmem:[%s0 + $0x8] sm:$0xf]
  %v30 = vld [vmem:[%s0 + $0xc] sm:$0xf]
  %v31 = vld [vmem:[%s1] sm:$0xf]
  %v32 = vld [vmem:[%s1 + $0x4] sm:$0xf]
  %v33 = vld [vmem:[%s1 + $0x8] sm:$0xf]
  %v34 = vld [vmem:[%s1 + $0xc] sm:$0xf]
  %v35 = vld [vmem:[%s1 + $0x10] sm:$0xf]
  %v36 = vld [vmem:[%s1 + $0x14] sm:$0xf]
  %v37 = vld [vmem:[%s1 + $0x18] sm:$0xf]
  %v38 = vld [vmem:[%s1 + $0x1c] sm:$0xf]
  %v39 = vld [vmem:[%s1 + $0x20] sm:$0xf]
  %v40 = vld [vmem:[%s1 + $0x24] sm:$0xf]
  %v41 = vld [vmem:[%s1 + $0x28] sm:$0xf]
  %v42 = vld [vmem:[%s1 + $0x2c] sm:$0xf]
  %v43 = vld [vmem:[%s1 + $0x30] sm:$0xf]
  %v44 = vld [vmem:[%s1 + $0x34] sm:$0xf]
  %v45 = vld [vmem:[%s1 + $0x38] sm:$0xf]
  %v46 = vld [vmem:[%s1 + $0x3c] sm:$0xf]
  %v51 = vunpack.c.l.b16 %v27
  %v52 = vunpack.c.l.b16 %v28
  %v53 = vunpack.c.l.b16 %v29
  %v54 = vunpack.c.l.b16 %v30
  %v55 = vpack.c.b16 %v52, %v51
  %v56 = vpack.c.b16 %v54, %v53
  %v75 = vunpack.c.l.b16 %v31
  %v76 = vunpack.c.l.b16 %v32
  %v77 = vunpack.c.l.b16 %v33
  %v78 = vunpack.c.l.b16 %v34
  %v79 = vunpack.c.l.b16 %v35
  %v80 = vunpack.c.l.b16 %v36
  %v81 = vunpack.c.l.b16 %v37
  %v82 = vunpack.c.l.b16 %v38
  %v83 = vunpack.c.l.b16 %v39
  %v84 = vunpack.c.l.b16 %v40
  %v85 = vunpack.c.l.b16 %v41
  %v86 = vunpack.c.l.b16 %v42
  %v87 = vunpack.c.l.b16 %v43
  %v88 = vunpack.c.l.b16 %v44
  %v89 = vunpack.c.l.b16 %v45
  %v90 = vunpack.c.l.b16 %v46
  %v91 = vpack.c.b16 %v76, %v75
  %v92 = vpack.c.b16 %v78, %v77
  %v93 = vpack.c.b16 %v80, %v79
  %v94 = vpack.c.b16 %v82, %v81
  %v95 = vpack.c.b16 %v84, %v83
  %v96 = vpack.c.b16 %v86, %v85
  %v97 = vpack.c.b16 %v88, %v87
  %v98 = vpack.c.b16 %v90, %v89
  %107 = vmatprep.subr.bf16.mxu0 0
  %108 = vmatpush1.bf16.msra.mxu0 %v91
  %109 = vmatprep.subr.bf16.mxu0 0
  %110 = vmatpush1.bf16.msra.mxu0 %v92
  %111 = vmatprep.subr.bf16.mxu0 0
  %112 = vmatpush1.bf16.msra.mxu0 %v93
  %113 = vmatprep.subr.bf16.mxu0 0
  %114 = vmatpush1.bf16.msra.mxu0 %v94
  %115 = vmatprep.subr.bf16.mxu0 0
  %116 = vmatpush1.bf16.msra.mxu0 %v95
  %117 = vmatprep.subr.bf16.mxu0 0
  %118 = vmatpush1.bf16.msra.mxu0 %v96
  %119 = vmatprep.subr.bf16.mxu0 0
  %120 = vmatpush1.bf16.msra.mxu0 %v97
  %121 = vmatprep.subr.bf16.mxu0 0
  %122 = vmatpush1.bf16.msra.mxu0 %v98
  %123 = vmatprep.subr.bf16.mxu0 0
  %124 = vmatpush1.bf16.msra.mxu0 0
  %125 = vmatprep.subr.bf16.mxu0 0
  %126 = vmatpush1.bf16.msra.mxu0 0
  %127 = vmatprep.subr.bf16.mxu0 0
  %128 = vmatpush1.bf16.msra.mxu0 0
  %129 = vmatprep.subr.bf16.mxu0 0
  %130 = vmatpush1.bf16.msra.mxu0 0
  %131 = vmatprep.subr.bf16.mxu0 0
  %132 = vmatpush1.bf16.msra.mxu0 0
  %133 = vmatprep.subr.bf16.mxu0 0
  %134 = vmatpush1.bf16.msra.mxu0 0
  %135 = vmatprep.subr.bf16.mxu0 0
  %136 = vmatpush1.bf16.msra.mxu0 0
  %137 = vmatprep.subr.bf16.mxu0 0
  %138 = vmatpush1.bf16.msra.mxu0 0
  %139 = vmatprep.mubr.bf16.mxu0 0
  %140 = vmatmul.mubr.bf16.gmra.mrb[0].mxu0 %v55
  %v141 = vpop.f32.mrb[0].mxu0
  %v142 = vadd.f32 0.0, %v141
  %v143 = vpop.f32.mrb[0].mxu0
  %v144 = vpop.f32.mrb[0].mxu0
  %v145 = vadd.f32 0.0, %v144
  %v146 = vpop.f32.mrb[0].mxu0
  %147 = vmatprep.mubr.bf16.mxu0 0
  %148 = vmatmul.mubr.bf16.gmra.mrb[0].mxu0 %v56
  %v149 = vpop.f32.mrb[0].mxu0
  %v150 = vadd.f32 0.0, %v149
  %v151 = vpop.f32.mrb[0].mxu0
  %v152 = vpop.f32.mrb[0].mxu0
  %v153 = vadd.f32 0.0, %v152
  %v154 = vpop.f32.mrb[0].mxu0
  %155 = vdwg.mxu0
  %v156 = vadd.f32 %v23, %v142
  %v157 = vadd.f32 %v24, %v145
  %v158 = vadd.f32 %v25, %v150
  %v159 = vadd.f32 %v26, %v153
  %160 = vst [vmem:[#allocation2] sm:$0xff] %v156
  %161 = vst [vmem:[#allocation2 + $0x8] sm:$0xff] %v157
  %162 = vst [vmem:[#allocation2 + $0x10] sm:$0xff] %v158
  %163 = vst [vmem:[#allocation2 + $0x18] sm:$0xff] %v159
  // Predicated region
  $region18: #{fastspeech2_forward.188} parent=0 // pred_check
    %p164 = pneg %p15
  $region19: #{fastspeech2_forward.188} parent=0 // pred_check_branch
    %166 = sbr.rel (%p164) target = $region21
  $region20: #{fastspeech2_forward.188} parent=0 // pred_region
    %v167 = vld [vmem:[#allocation2] sm:$0xff]
    %v168 = vld [vmem:[#allocation2 + $0x8] sm:$0xff]
    %v169 = vld [vmem:[#allocation2 + $0x10] sm:$0xff]
    %v170 = vld [vmem:[#allocation2 + $0x18] sm:$0xff]
    %v171 = vld [vmem:[%s2] sm:$0x1]
    %v173 = vlaneseq
    %v174 = vshrl.u32 %v173, 7
    %v175 = vsub.s32 0, %v174
    %v176 = vrot.slane %v171, %v175
    %v178 = vadd.f32 %v167, %v176
    %v179 = vadd.f32 %v168, %v176
    %v180 = vadd.f32 %v169, %v176
    %v181 = vadd.f32 %v170, %v176
    %182 = vst [vmem:[%s3] sm:$0xff] %v178
    %183 = vst [vmem:[%s3 + $0x8] sm:$0xff] %v179
    %184 = vst [vmem:[%s3 + $0x10] sm:$0xff] %v180
    %185 = vst [vmem:[%s3 + $0x18] sm:$0xff] %v181
  $region21: #{fastspeech2_forward.188} parent=0 // pred_fallthru
    _
  // Predicated region
  $region22: #{fastspeech2_forward.188} parent=0 // pred_check
    _
  $region23: #{fastspeech2_forward.188} parent=0 // pred_check_branch
    %187 = sbr.rel (0) target = $region25
  $region24: #{fastspeech2_forward.188} parent=0 // pred_region
    _
  $region25: #{fastspeech2_forward.188} parent=0 // pred_fallthru
    _
  // Predicated region
  $region26: #{fastspeech2_forward.188} parent=0 // pred_check
    _
  $region27: #{fastspeech2_forward.188} parent=0 // pred_check_branch
    %189 = sbr.rel (0) target = $region29
  $region28: #{fastspeech2_forward.188} parent=0 // pred_region
    _
  $region29: #{fastspeech2_forward.188} parent=0 // pred_fallthru
    _

// kernel: fastspeech2_forward.189
$region0: #{fastspeech2_forward.189}
  #allocation0 [shape = 'u32[]', space=smem, size = 0x4, offset = 0x4, fixed_abs, tag = 'smem constant byte address 0x4 - core index']
  #allocation1 [shape = 'u32[144,128]{1,0:T(1,128)}', space=vmem, size = 0x12000, scoped, tag = 'internal scratch']
  #allocation2 [shape = 'f32[32,128]{1,0:T(8,128)}', space=vmem, size = 0x4000, scoped, tag = 'scratch operand']
  %s0 = inlined_call_operand.vmem [shape: bf16[32,128], index: 0, kind: input, shape index: {}]
  %s1 = inlined_call_operand.vmem [shape: bf16[128,128], index: 1, kind: input, shape index: {}]
  %s2 = inlined_call_operand.vmem [shape: f32[32,128], index: 2, kind: output, shape index: {}]
  %s3 = sld [smem:[#allocation0]]
  $region26: #{fastspeech2_forward.189} parent=0
    _
  %s5 = ssub.s32 1, %s3
  %s6 = scalar_select 0, %s5, %s3
  // Predicated region
  $region2: #{fastspeech2_forward.189} parent=0 // pred_check
    _
  $region3: #{fastspeech2_forward.189} parent=0 // pred_check_branch
    %8 = sbr.rel (0) target = $region5
  $region4: #{fastspeech2_forward.189} parent=0 // pred_region
    _
  $region5: #{fastspeech2_forward.189} parent=0 // pred_fallthru
    _
  // Predicated region
  $region6: #{fastspeech2_forward.189} parent=0 // pred_check
    _
  $region7: #{fastspeech2_forward.189} parent=0 // pred_check_branch
    %10 = sbr.rel (0) target = $region9
  $region8: #{fastspeech2_forward.189} parent=0 // pred_region
    _
  $region9: #{fastspeech2_forward.189} parent=0 // pred_fallthru
    _
  %p12 = scmp.eq.s32.totalorder 0, 0
  // Predicated region
  $region10: #{fastspeech2_forward.189} parent=0 // pred_check
    %p13 = pneg %p12
  $region11: #{fastspeech2_forward.189} parent=0 // pred_check_branch
    %15 = sbr.rel (%p13) target = $region13
  $region12: #{fastspeech2_forward.189} parent=0 // pred_region
    %16 = vst [vmem:[#allocation2] sm:$0xff] 0.0
    %17 = vst [vmem:[#allocation2 + $0x8] sm:$0xff] 0.0
    %18 = vst [vmem:[#allocation2 + $0x10] sm:$0xff] 0.0
    %19 = vst [vmem:[#allocation2 + $0x18] sm:$0xff] 0.0
  $region13: #{fastspeech2_forward.189} parent=0 // pred_fallthru
    _
  %v20 = vld [vmem:[#allocation2] sm:$0xff]
  %v21 = vld [vmem:[#allocation2 + $0x8] sm:$0xff]
  %v22 = vld [vmem:[#allocation2 + $0x10] sm:$0xff]
  %v23 = vld [vmem:[#allocation2 + $0x18] sm:$0xff]
  %v24 = vld [vmem:[%s0] sm:$0xf]
  %v25 = vld [vmem:[%s0 + $0x4] sm:$0xf]
  %v26 = vld [vmem:[%s0 + $0x8] sm:$0xf]
  %v27 = vld [vmem:[%s0 + $0xc] sm:$0xf]
  %v28 = vld [vmem:[%s1] sm:$0xf]
  %v29 = vld [vmem:[%s1 + $0x4] sm:$0xf]
  %v30 = vld [vmem:[%s1 + $0x8] sm:$0xf]
  %v31 = vld [vmem:[%s1 + $0xc] sm:$0xf]
  %v32 = vld [vmem:[%s1 + $0x10] sm:$0xf]
  %v33 = vld [vmem:[%s1 + $0x14] sm:$0xf]
  %v34 = vld [vmem:[%s1 + $0x18] sm:$0xf]
  %v35 = vld [vmem:[%s1 + $0x1c] sm:$0xf]
  %v36 = vld [vmem:[%s1 + $0x20] sm:$0xf]
  %v37 = vld [vmem:[%s1 + $0x24] sm:$0xf]
  %v38 = vld [vmem:[%s1 + $0x28] sm:$0xf]
  %v39 = vld [vmem:[%s1 + $0x2c] sm:$0xf]
  %v40 = vld [vmem:[%s1 + $0x30] sm:$0xf]
  %v41 = vld [vmem:[%s1 + $0x34] sm:$0xf]
  %v42 = vld [vmem:[%s1 + $0x38] sm:$0xf]
  %v43 = vld [vmem:[%s1 + $0x3c] sm:$0xf]
  %v48 = vunpack.c.l.b16 %v24
  %v49 = vunpack.c.l.b16 %v25
  %v50 = vunpack.c.l.b16 %v26
  %v51 = vunpack.c.l.b16 %v27
  %v52 = vpack.c.b16 %v49, %v48
  %v53 = vpack.c.b16 %v51, %v50
  %v72 = vunpack.c.l.b16 %v28
  %v73 = vunpack.c.l.b16 %v29
  %v74 = vunpack.c.l.b16 %v30
  %v75 = vunpack.c.l.b16 %v31
  %v76 = vunpack.c.l.b16 %v32
  %v77 = vunpack.c.l.b16 %v33
  %v78 = vunpack.c.l.b16 %v34
  %v79 = vunpack.c.l.b16 %v35
  %v80 = vunpack.c.l.b16 %v36
  %v81 = vunpack.c.l.b16 %v37
  %v82 = vunpack.c.l.b16 %v38
  %v83 = vunpack.c.l.b16 %v39
  %v84 = vunpack.c.l.b16 %v40
  %v85 = vunpack.c.l.b16 %v41
  %v86 = vunpack.c.l.b16 %v42
  %v87 = vunpack.c.l.b16 %v43
  %v88 = vpack.c.b16 %v73, %v72
  %v89 = vpack.c.b16 %v75, %v74
  %v90 = vpack.c.b16 %v77, %v76
  %v91 = vpack.c.b16 %v79, %v78
  %v92 = vpack.c.b16 %v81, %v80
  %v93 = vpack.c.b16 %v83, %v82
  %v94 = vpack.c.b16 %v85, %v84
  %v95 = vpack.c.b16 %v87, %v86
  %104 = vmatprep.subr.bf16.mxu0 0
  %105 = vmatpush1.bf16.msra.mxu0 %v88
  %106 = vmatprep.subr.bf16.mxu0 0
  %107 = vmatpush1.bf16.msra.mxu0 %v89
  %108 = vmatprep.subr.bf16.mxu0 0
  %109 = vmatpush1.bf16.msra.mxu0 %v90
  %110 = vmatprep.subr.bf16.mxu0 0
  %111 = vmatpush1.bf16.msra.mxu0 %v91
  %112 = vmatprep.subr.bf16.mxu0 0
  %113 = vmatpush1.bf16.msra.mxu0 %v92
  %114 = vmatprep.subr.bf16.mxu0 0
  %115 = vmatpush1.bf16.msra.mxu0 %v93
  %116 = vmatprep.subr.bf16.mxu0 0
  %117 = vmatpush1.bf16.msra.mxu0 %v94
  %118 = vmatprep.subr.bf16.mxu0 0
  %119 = vmatpush1.bf16.msra.mxu0 %v95
  %120 = vmatprep.subr.bf16.mxu0 0
  %121 = vmatpush1.bf16.msra.mxu0 0
  %122 = vmatprep.subr.bf16.mxu0 0
  %123 = vmatpush1.bf16.msra.mxu0 0
  %124 = vmatprep.subr.bf16.mxu0 0
  %125 = vmatpush1.bf16.msra.mxu0 0
  %126 = vmatprep.subr.bf16.mxu0 0
  %127 = vmatpush1.bf16.msra.mxu0 0
  %128 = vmatprep.subr.bf16.mxu0 0
  %129 = vmatpush1.bf16.msra.mxu0 0
  %130 = vmatprep.subr.bf16.mxu0 0
  %131 = vmatpush1.bf16.msra.mxu0 0
  %132 = vmatprep.subr.bf16.mxu0 0
  %133 = vmatpush1.bf16.msra.mxu0 0
  %134 = vmatprep.subr.bf16.mxu0 0
  %135 = vmatpush1.bf16.msra.mxu0 0
  %136 = vmatprep.mubr.bf16.mxu0 0
  %137 = vmatmul.mubr.bf16.gmra.mrb[0].mxu0 %v52
  %v138 = vpop.f32.mrb[0].mxu0
  %v139 = vadd.f32 0.0, %v138
  %v140 = vpop.f32.mrb[0].mxu0
  %v141 = vpop.f32.mrb[0].mxu0
  %v142 = vadd.f32 0.0, %v141
  %v143 = vpop.f32.mrb[0].mxu0
  %144 = vmatprep.mubr.bf16.mxu0 0
  %145 = vmatmul.mubr.bf16.gmra.mrb[0].mxu0 %v53
  %v146 = vpop.f32.mrb[0].mxu0
  %v147 = vadd.f32 0.0, %v146
  %v148 = vpop.f32.mrb[0].mxu0
  %v149 = vpop.f32.mrb[0].mxu0
  %v150 = vadd.f32 0.0, %v149
  %v151 = vpop.f32.mrb[0].mxu0
  %152 = vdwg.mxu0
  %v153 = vadd.f32 %v20, %v139
  %v154 = vadd.f32 %v21, %v142
  %v155 = vadd.f32 %v22, %v147
  %v156 = vadd.f32 %v23, %v150
  %157 = vst [vmem:[#allocation2] sm:$0xff] %v153
  %158 = vst [vmem:[#allocation2 + $0x8] sm:$0xff] %v154
  %159 = vst [vmem:[#allocation2 + $0x10] sm:$0xff] %v155
  %160 = vst [vmem:[#allocation2 + $0x18] sm:$0xff] %v156
  // Predicated region
  $region14: #{fastspeech2_forward.189} parent=0 // pred_check
    %p161 = pneg %p12
  $region15: #{fastspeech2_forward.189} parent=0 // pred_check_branch
    %163 = sbr.rel (%p161) target = $region17
  $region16: #{fastspeech2_forward.189} parent=0 // pred_region
    %v164 = vld [vmem:[#allocation2] sm:$0xff]
    %v165 = vld [vmem:[#allocation2 + $0x8] sm:$0xff]
    %v166 = vld [vmem:[#allocation2 + $0x10] sm:$0xff]
    %v167 = vld [vmem:[#allocation2 + $0x18] sm:$0xff]
    %168 = vst [vmem:[%s2] sm:$0xff] %v164
    %169 = vst [vmem:[%s2 + $0x8] sm:$0xff] %v165
    %170 = vst [vmem:[%s2 + $0x10] sm:$0xff] %v166
    %171 = vst [vmem:[%s2 + $0x18] sm:$0xff] %v167
  $region17: #{fastspeech2_forward.189} parent=0 // pred_fallthru
    _
  // Predicated region
  $region18: #{fastspeech2_forward.189} parent=0 // pred_check
    _
  $region19: #{fastspeech2_forward.189} parent=0 // pred_check_branch
    %173 = sbr.rel (0) target = $region21
  $region20: #{fastspeech2_forward.189} parent=0 // pred_region
    _
  $region21: #{fastspeech2_forward.189} parent=0 // pred_fallthru
    _
  // Predicated region
  $region22: #{fastspeech2_forward.189} parent=0 // pred_check
    _
  $region23: #{fastspeech2_forward.189} parent=0 // pred_check_branch
    %175 = sbr.rel (0) target = $region25
  $region24: #{fastspeech2_forward.189} parent=0 // pred_region
    _
  $region25: #{fastspeech2_forward.189} parent=0 // pred_fallthru
    _

// kernel: fastspeech2_forward.190
$region0: #{fastspeech2_forward.190}
  #allocation0 [shape = 'u32[]', space=smem, size = 0x4, offset = 0x4, fixed_abs, tag = 'smem constant byte address 0x4 - core index']
  #allocation1 [shape = 'u32[144,128]{1,0:T(1,128)}', space=vmem, size = 0x12000, scoped, tag = 'internal scratch']
  #allocation2 [shape = 'f32[32,128]{1,0:T(8,128)}', space=vmem, size = 0x4000, scoped, tag = 'scratch operand']
  %s0 = inlined_call_operand.vmem [shape: bf16[32,256], index: 0, kind: input, shape index: {}]
  %s1 = inlined_call_operand.vmem [shape: bf16[256,128], index: 1, kind: input, shape index: {}]
  %s2 = inlined_call_operand.vmem [shape: f32[32,128], index: 2, kind: output, shape index: {}]
  %s3 = sld [smem:[#allocation0]]
  $region26: #{fastspeech2_forward.190} parent=0
    _
  %s5 = ssub.s32 1, %s3
  %s6 = scalar_select 0, %s5, %s3
  // Predicated region
  $region2: #{fastspeech2_forward.190} parent=0 // pred_check
    _
  $region3: #{fastspeech2_forward.190} parent=0 // pred_check_branch
    %8 = sbr.rel (0) target = $region5
  $region4: #{fastspeech2_forward.190} parent=0 // pred_region
    _
  $region5: #{fastspeech2_forward.190} parent=0 // pred_fallthru
    _
  // Predicated region
  $region6: #{fastspeech2_forward.190} parent=0 // pred_check
    _
  $region7: #{fastspeech2_forward.190} parent=0 // pred_check_branch
    %10 = sbr.rel (0) target = $region9
  $region8: #{fastspeech2_forward.190} parent=0 // pred_region
    _
  $region9: #{fastspeech2_forward.190} parent=0 // pred_fallthru
    _
  %p12 = scmp.eq.s32.totalorder 0, 0
  // Predicated region
  $region10: #{fastspeech2_forward.190} parent=0 // pred_check
    %p13 = pneg %p12
  $region11: #{fastspeech2_forward.190} parent=0 // pred_check_branch
    %15 = sbr.rel (%p13) target = $region13
  $region12: #{fastspeech2_forward.190} parent=0 // pred_region
    %16 = vst [vmem:[#allocation2] sm:$0xff] 0.0
    %17 = vst [vmem:[#allocation2 + $0x8] sm:$0xff] 0.0
    %18 = vst [vmem:[#allocation2 + $0x10] sm:$0xff] 0.0
    %19 = vst [vmem:[#allocation2 + $0x18] sm:$0xff] 0.0
  $region13: #{fastspeech2_forward.190} parent=0 // pred_fallthru
    _
  %v20 = vld [vmem:[#allocation2] sm:$0xff]
  %v21 = vld [vmem:[#allocation2 + $0x8] sm:$0xff]
  %v22 = vld [vmem:[#allocation2 + $0x10] sm:$0xff]
  %v23 = vld [vmem:[#allocation2 + $0x18] sm:$0xff]
  %v24 = vld [vmem:[%s0] sm:$0xff]
  %v25 = vld [vmem:[%s0 + $0x8] sm:$0xff]
  %v26 = vld [vmem:[%s0 + $0x10] sm:$0xff]
  %v27 = vld [vmem:[%s0 + $0x18] sm:$0xff]
  %v28 = vld [vmem:[%s1] sm:$0xf]
  %v29 = vld [vmem:[%s1 + $0x4] sm:$0xf]
  %v30 = vld [vmem:[%s1 + $0x8] sm:$0xf]
  %v31 = vld [vmem:[%s1 + $0xc] sm:$0xf]
  %v32 = vld [vmem:[%s1 + $0x10] sm:$0xf]
  %v33 = vld [vmem:[%s1 + $0x14] sm:$0xf]
  %v34 = vld [vmem:[%s1 + $0x18] sm:$0xf]
  %v35 = vld [vmem:[%s1 + $0x1c] sm:$0xf]
  %v36 = vld [vmem:[%s1 + $0x20] sm:$0xf]
  %v37 = vld [vmem:[%s1 + $0x24] sm:$0xf]
  %v38 = vld [vmem:[%s1 + $0x28] sm:$0xf]
  %v39 = vld [vmem:[%s1 + $0x2c] sm:$0xf]
  %v40 = vld [vmem:[%s1 + $0x30] sm:$0xf]
  %v41 = vld [vmem:[%s1 + $0x34] sm:$0xf]
  %v42 = vld [vmem:[%s1 + $0x38] sm:$0xf]
  %v43 = vld [vmem:[%s1 + $0x3c] sm:$0xf]
  %v44 = vld [vmem:[%s1 + $0x40] sm:$0xf]
  %v45 = vld [vmem:[%s1 + $0x44] sm:$0xf]
  %v46 = vld [vmem:[%s1 + $0x48] sm:$0xf]
  %v47 = vld [vmem:[%s1 + $0x4c] sm:$0xf]
  %v48 = vld [vmem:[%s1 + $0x50] sm:$0xf]
  %v49 = vld [vmem:[%s1 + $0x54] sm:$0xf]
  %v50 = vld [vmem:[%s1 + $0x58] sm:$0xf]
  %v51 = vld [vmem:[%s1 + $0x5c] sm:$0xf]
  %v52 = vld [vmem:[%s1 + $0x60] sm:$0xf]
  %v53 = vld [vmem:[%s1 + $0x64] sm:$0xf]
  %v54 = vld [vmem:[%s1 + $0x68] sm:$0xf]
  %v55 = vld [vmem:[%s1 + $0x6c] sm:$0xf]
  %v56 = vld [vmem:[%s1 + $0x70] sm:$0xf]
  %v57 = vld [vmem:[%s1 + $0x74] sm:$0xf]
  %v58 = vld [vmem:[%s1 + $0x78] sm:$0xf]
  %v59 = vld [vmem:[%s1 + $0x7c] sm:$0xf]
  %v64 = vunpack.c.l.b16 %v24
  %v65 = vunpack.c.h.b16 %v24
  %v66 = vunpack.c.l.b16 %v25
  %v67 = vunpack.c.h.b16 %v25
  %v68 = vunpack.c.l.b16 %v26
  %v69 = vunpack.c.h.b16 %v26
  %v70 = vunpack.c.l.b16 %v27
  %v71 = vunpack.c.h.b16 %v27
  %v72 = vpack.c.b16 %v66, %v64
  %v73 = vpack.c.b16 %v67, %v65
  %v74 = vpack.c.b16 %v70, %v68
  %v75 = vpack.c.b16 %v71, %v69
  %v112 = vunpack.c.l.b16 %v28
  %v113 = vunpack.c.l.b16 %v29
  %v114 = vunpack.c.l.b16 %v30
  %v115 = vunpack.c.l.b16 %v31
  %v116 = vunpack.c.l.b16 %v32
  %v117 = vunpack.c.l.b16 %v33
  %v118 = vunpack.c.l.b16 %v34
  %v119 = vunpack.c.l.b16 %v35
  %v120 = vunpack.c.l.b16 %v36
  %v121 = vunpack.c.l.b16 %v37
  %v122 = vunpack.c.l.b16 %v38
  %v123 = vunpack.c.l.b16 %v39
  %v124 = vunpack.c.l.b16 %v40
  %v125 = vunpack.c.l.b16 %v41
  %v126 = vunpack.c.l.b16 %v42
  %v127 = vunpack.c.l.b16 %v43
  %v128 = vunpack.c.l.b16 %v44
  %v129 = vunpack.c.l.b16 %v45
  %v130 = vunpack.c.l.b16 %v46
  %v131 = vunpack.c.l.b16 %v47
  %v132 = vunpack.c.l.b16 %v48
  %v133 = vunpack.c.l.b16 %v49
  %v134 = vunpack.c.l.b16 %v50
  %v135 = vunpack.c.l.b16 %v51
  %v136 = vunpack.c.l.b16 %v52
  %v137 = vunpack.c.l.b16 %v53
  %v138 = vunpack.c.l.b16 %v54
  %v139 = vunpack.c.l.b16 %v55
  %v140 = vunpack.c.l.b16 %v56
  %v141 = vunpack.c.l.b16 %v57
  %v142 = vunpack.c.l.b16 %v58
  %v143 = vunpack.c.l.b16 %v59
  %v144 = vpack.c.b16 %v113, %v112
  %v145 = vpack.c.b16 %v115, %v114
  %v146 = vpack.c.b16 %v117, %v116
  %v147 = vpack.c.b16 %v119, %v118
  %v148 = vpack.c.b16 %v121, %v120
  %v149 = vpack.c.b16 %v123, %v122
  %v150 = vpack.c.b16 %v125, %v124
  %v151 = vpack.c.b16 %v127, %v126
  %v152 = vpack.c.b16 %v129, %v128
  %v153 = vpack.c.b16 %v131, %v130
  %v154 = vpack.c.b16 %v133, %v132
  %v155 = vpack.c.b16 %v135, %v134
  %v156 = vpack.c.b16 %v137, %v136
  %v157 = vpack.c.b16 %v139, %v138
  %v158 = vpack.c.b16 %v141, %v140
  %v159 = vpack.c.b16 %v143, %v142
  %176 = vmatprep.subr.bf16.mxu0 0
  %177 = vmatpush1.bf16.msra.mxu0 %v144
  %178 = vmatprep.subr.bf16.mxu0 0
  %179 = vmatpush1.bf16.msra.mxu0 %v145
  %180 = vmatprep.subr.bf16.mxu0 0
  %181 = vmatpush1.bf16.msra.mxu0 %v146
  %182 = vmatprep.subr.bf16.mxu0 0
  %183 = vmatpush1.bf16.msra.mxu0 %v147
  %184 = vmatprep.subr.bf16.mxu0 0
  %185 = vmatpush1.bf16.msra.mxu0 %v148
  %186 = vmatprep.subr.bf16.mxu0 0
  %187 = vmatpush1.bf16.msra.mxu0 %v149
  %188 = vmatprep.subr.bf16.mxu0 0
  %189 = vmatpush1.bf16.msra.mxu0 %v150
  %190 = vmatprep.subr.bf16.mxu0 0
  %191 = vmatpush1.bf16.msra.mxu0 %v151
  %192 = vmatprep.subr.bf16.mxu0 0
  %193 = vmatpush1.bf16.msra.mxu0 %v152
  %194 = vmatprep.subr.bf16.mxu0 0
  %195 = vmatpush1.bf16.msra.mxu0 %v153
  %196 = vmatprep.subr.bf16.mxu0 0
  %197 = vmatpush1.bf16.msra.mxu0 %v154
  %198 = vmatprep.subr.bf16.mxu0 0
  %199 = vmatpush1.bf16.msra.mxu0 %v155
  %200 = vmatprep.subr.bf16.mxu0 0
  %201 = vmatpush1.bf16.msra.mxu0 %v156
  %202 = vmatprep.subr.bf16.mxu0 0
  %203 = vmatpush1.bf16.msra.mxu0 %v157
  %204 = vmatprep.subr.bf16.mxu0 0
  %205 = vmatpush1.bf16.msra.mxu0 %v158
  %206 = vmatprep.subr.bf16.mxu0 0
  %207 = vmatpush1.bf16.msra.mxu0 %v159
  %208 = vmatprep.mubr.bf16.mxu0 %v73
  %209 = vmatmul.mubr.bf16.gmra.mrb[0].mxu0 %v72
  %v210 = vpop.f32.mrb[0].mxu0
  %v211 = vadd.f32 0.0, %v210
  %v212 = vpop.f32.mrb[0].mxu0
  %v213 = vpop.f32.mrb[0].mxu0
  %v214 = vadd.f32 0.0, %v213
  %v215 = vpop.f32.mrb[0].mxu0
  %216 = vmatprep.mubr.bf16.mxu0 %v75
  %217 = vmatmul.mubr.bf16.gmra.mrb[0].mxu0 %v74
  %v218 = vpop.f32.mrb[0].mxu0
  %v219 = vadd.f32 0.0, %v218
  %v220 = vpop.f32.mrb[0].mxu0
  %v221 = vpop.f32.mrb[0].mxu0
  %v222 = vadd.f32 0.0, %v221
  %v223 = vpop.f32.mrb[0].mxu0
  %224 = vdwg.mxu0
  %v225 = vadd.f32 %v20, %v211
  %v226 = vadd.f32 %v21, %v214
  %v227 = vadd.f32 %v22, %v219
  %v228 = vadd.f32 %v23, %v222
  %229 = vst [vmem:[#allocation2] sm:$0xff] %v225
  %230 = vst [vmem:[#allocation2 + $0x8] sm:$0xff] %v226
  %231 = vst [vmem:[#allocation2 + $0x10] sm:$0xff] %v227
  %232 = vst [vmem:[#allocation2 + $0x18] sm:$0xff] %v228
  // Predicated region
  $region14: #{fastspeech2_forward.190} parent=0 // pred_check
    %p233 = pneg %p12
  $region15: #{fastspeech2_forward.190} parent=0 // pred_check_branch
    %235 = sbr.rel (%p233) target = $region17
  $region16: #{fastspeech2_forward.190} parent=0 // pred_region
    %v236 = vld [vmem:[#allocation2] sm:$0xff]
    %v237 = vld [vmem:[#allocation2 + $0x8] sm:$0xff]
    %v238 = vld [vmem:[#allocation2 + $0x10] sm:$0xff]
    %v239 = vld [vmem:[#allocation2 + $0x18] sm:$0xff]
    %240 = vst [vmem:[%s2] sm:$0xff] %v236
    %241 = vst [vmem:[%s2 + $0x8] sm:$0xff] %v237
    %242 = vst [vmem:[%s2 + $0x10] sm:$0xff] %v238
    %243 = vst [vmem:[%s2 + $0x18] sm:$0xff] %v239
  $region17: #{fastspeech2_forward.190} parent=0 // pred_fallthru
    _
  // Predicated region
  $region18: #{fastspeech2_forward.190} parent=0 // pred_check
    _
  $region19: #{fastspeech2_forward.190} parent=0 // pred_check_branch
    %245 = sbr.rel (0) target = $region21
  $region20: #{fastspeech2_forward.190} parent=0 // pred_region
    _
  $region21: #{fastspeech2_forward.190} parent=0 // pred_fallthru
    _
  // Predicated region
  $region22: #{fastspeech2_forward.190} parent=0 // pred_check
    _
  $region23: #{fastspeech2_forward.190} parent=0 // pred_check_branch
    %247 = sbr.rel (0) target = $region25
  $region24: #{fastspeech2_forward.190} parent=0 // pred_region
    _
  $region25: #{fastspeech2_forward.190} parent=0 // pred_fallthru
    _

</llo_original>
